<compile_context>
chip_gen: v6e
topology: v6e:2x2x1
jax: 0.10.0
libtpu: 0.0.40
codegen_flags: <defaults>
</compile_context>

<pallas_src>
import functools

import jax
import jax.numpy as jnp
from jax.experimental import pallas as pl
from jax.experimental.pallas import tpu as pltpu

EMB = 512
NUM_CLASSES = 8
SPATIAL = 5
K_TOTAL = EMB * SPATIAL * SPATIAL  # 12800
EPS = 1e-5


def _head_kernel(x_ref, w_ref, b_ref, emb_ref):
    """Fused-head Linear as a K-tiled MXU matmul.

    Grid axis 0 ("parallel") tiles the EMB output columns (j; megacore split
    on v7x, size 1 elsewhere).  Grid axis 1 ("arbitrary") tiles the K = C*H*W
    reduction; the (N, tn) output block is VMEM-resident across it and acts as
    the f32 accumulator.  BatchNorm2d, Dropout(eval=identity), Flatten and
    BatchNorm1d were folded into the streamed weight / bias at prepare time.
    """
    k = pl.program_id(1)

    @pl.when(k == 0)
    def _():
        emb_ref[...] = jnp.zeros_like(emb_ref)

    # bf16 MXU operands, f32 accumulation directly into the resident output.
    emb_ref[...] += jnp.dot(
        x_ref[...].astype(jnp.bfloat16), w_ref[...],
        preferred_element_type=jnp.float32)

    @pl.when(k == pl.num_programs(1) - 1)
    def _():
        # Fused bias (Linear bias + folded BN shifts) applied once, in f32.
        emb_ref[...] = emb_ref[...] + b_ref[...]


def default_tn():
    """Full-width 512 on single-TC v5e/v6e; 2 x 256 j-split on dual-TC v7x."""
    try:
        kind = jax.devices()[0].device_kind.lower()
    except Exception:
        return EMB
    return 256 if "v7" in kind else EMB


def prepare_params(params, tn=None):
    """One-time (init-time) weight preparation -- NOT on the per-call path.

    Folds BatchNorm2d (per-K-row) and BatchNorm1d (per-output-column) running
    stats into the Linear(12800, 512) weight and bias, transposes to (K, EMB),
    relays out j-major (J, K, tn) so each parallel output-column block is a
    contiguous stream, and casts the weight to bf16.
    """
    if tn is None:
        tn = default_tn()
    assert EMB % tn == 0 and tn % 128 == 0
    hw = SPATIAL * SPATIAL

    # BatchNorm2d (eval): per-channel affine expanded to the flattened K axis
    # (repeat over the 5x5 spatial positions -- matches NCHW row-major flatten).
    s2 = params["bn2_gamma"] / jnp.sqrt(params["bn2_var"] + EPS)
    t2 = params["bn2_beta"] - params["bn2_mean"] * s2
    s2_flat = jnp.repeat(s2, hw)            # (K,)
    t2_flat = jnp.repeat(t2, hw)            # (K,)

    # BatchNorm1d (eval): per-output-column affine.
    s1 = params["bn1_gamma"] / jnp.sqrt(params["bn1_var"] + EPS)
    t1 = params["bn1_beta"] - params["bn1_mean"] * s1

    # torch Linear: y = x @ W^T + b.  Fold both BNs in f32, then cast.
    w1t = params["w1"].T                                  # (K, EMB) f32
    w_fused = (s2_flat[:, None] * w1t) * s1[None, :]      # (K, EMB)
    b_fused = (params["b1"] + t2_flat @ w1t) * s1 + t1    # (EMB,)

    j = EMB // tn
    # j-major relayout (J, K, tn): contiguous per-core weight halves on v7x;
    # identical to the plain (K, 512) layout when J == 1.
    w_fused = w_fused.reshape(K_TOTAL, j, tn).transpose(1, 0, 2)

    return {
        "w": jnp.asarray(w_fused, jnp.bfloat16),          # (J, K, tn) bf16
        "b": b_fused.reshape(1, EMB).astype(jnp.float32),
        "w2t": params["w2"].T.astype(jnp.float32),        # (EMB, 8)
        "b2": params["b2"].astype(jnp.float32),
    }


@functools.partial(jax.jit, static_argnames=("tk",))
def my_res50_head(x, prepared, tk=6400):
    """x: (N, 512, 5, 5) f32 NCHW trunk features -> (emb, logits)."""
    N, C, H, W = x.shape
    K = C * H * W
    assert K == K_TOTAL and K % tk == 0 and tk % 128 == 0
    J, Kw, tn = prepared["w"].shape
    assert Kw == K and J * tn == EMB

    x_flat = x.reshape(N, K)  # row-major == torch .view(N, -1) on NCHW

    grid = (J, K // tk)
    emb = pl.pallas_call(
        _head_kernel,
        out_shape=jax.ShapeDtypeStruct((N, EMB), jnp.float32),
        grid_spec=pltpu.PrefetchScalarGridSpec(
            num_scalar_prefetch=0,
            grid=grid,
            in_specs=[
                pl.BlockSpec((N, tk), lambda j, k: (0, k)),            # x
                pl.BlockSpec((None, tk, tn), lambda j, k: (j, k, 0)),  # W (bf16)
                pl.BlockSpec((1, tn), lambda j, k: (0, j)),            # fused bias
            ],
            out_specs=pl.BlockSpec((N, tn), lambda j, k: (0, j)),
        ),
        compiler_params=pltpu.CompilerParams(
            dimension_semantics=("parallel", "arbitrary"),
            vmem_limit_bytes=32 * 1024 * 1024,
        ),
    )(x_flat, prepared["w"], prepared["b"])

    # logits Linear(512 -> 8): ~16 KB of weights; plain XLA handles it at zero
    # marginal cost and keeps 8-lane masked stores out of the kernel.
    logits = emb @ prepared["w2t"] + prepared["b2"]
    return emb, logits


def init_params(key):
    """Deterministic init mirroring my_res50.__init__ (xavier_uniform_, BN=1/0)."""
    k1, k2 = jax.random.split(key)
    K = K_TOTAL

    def xavier(key, fan_out, fan_in):
        bound = (6.0 / (fan_in + fan_out)) ** 0.5
        return jax.random.uniform(key, (fan_out, fan_in), jnp.float32, -bound, bound)

    return {
        # BatchNorm2d(512): weight=1, bias=0, fresh running stats.
        "bn2_gamma": jnp.ones((EMB,), jnp.float32),
        "bn2_beta": jnp.zeros((EMB,), jnp.float32),
        "bn2_mean": jnp.zeros((EMB,), jnp.float32),
        "bn2_var": jnp.ones((EMB,), jnp.float32),
        # Linear(12800, 512): xavier_uniform_ weight, zero bias.
        "w1": xavier(k1, EMB, K),
        "b1": jnp.zeros((EMB,), jnp.float32),
        # BatchNorm1d(512): weight=1, bias=0, fresh running stats.
        "bn1_gamma": jnp.ones((EMB,), jnp.float32),
        "bn1_beta": jnp.zeros((EMB,), jnp.float32),
        "bn1_mean": jnp.zeros((EMB,), jnp.float32),
        "bn1_var": jnp.ones((EMB,), jnp.float32),
        # logits Linear(512, 8): xavier_uniform_ weight, zero bias.
        "w2": xavier(k2, NUM_CLASSES, EMB),
        "b2": jnp.zeros((NUM_CLASSES,), jnp.float32),
    }


def _reference(x, p):
    """Pure-JAX f32 reference of the same eval-mode forward."""
    N = x.shape[0]
    s = p["bn2_gamma"] / jnp.sqrt(p["bn2_var"] + EPS)
    t = p["bn2_beta"] - p["bn2_mean"] * s
    xb = x * s[None, :, None, None] + t[None, :, None, None]
    xf = xb.reshape(N, -1)
    y = xf @ p["w1"].T + p["b1"]
    s1 = p["bn1_gamma"] / jnp.sqrt(p["bn1_var"] + EPS)
    t1 = p["bn1_beta"] - p["bn1_mean"] * s1
    emb = y * s1 + t1
    logits = emb @ p["w2"].T + p["b2"]
    return emb, logits


if __name__ == "__main__":
    key = jax.random.PRNGKey(0)
    kx, kp = jax.random.split(key)

    # Trunk feature map the ResNet-50-IR body would produce for this head:
    # batch=2, channels=512, spatial=5x5 (embedding_dim * 5 * 5 flatten).
    x = jax.random.normal(kx, (2, EMB, SPATIAL, SPATIAL), jnp.float32)
    params = init_params(kp)

    # One-time prepare (BN folds + transpose + bf16 cast + j-major relayout),
    # outside the per-call jitted path.
    prepared = prepare_params(params, tn=default_tn())

    emb, logits = my_res50_head(x, prepared)
    jax.block_until_ready((emb, logits))

    ref_emb, ref_logits = _reference(x, params)
    assert emb.shape == (2, EMB) and logits.shape == (2, NUM_CLASSES)
    # bf16-streamed fused weight / bf16 MXU operands: loosen tolerance vs f32.
    assert jnp.allclose(emb, ref_emb, rtol=2e-2, atol=2e-2)
    assert jnp.allclose(logits, ref_logits, rtol=2e-2, atol=2e-2)

    print("KERNEL_OK")
</pallas_src>

<mosaic_0001>
module attributes {stable_mosaic.version = 11 : i64} {
  func.func @_head_kernel(%arg0: i32, %arg1: i32, %arg2: memref<2x6400xf32, #tpu.memory_space<vmem>>, %arg3: memref<1x6400x512xbf16, #tpu.memory_space<vmem>>, %arg4: memref<1x512xf32, #tpu.memory_space<vmem>>, %arg5: memref<2x512xf32, #tpu.memory_space<vmem>>) attributes {dimension_semantics = [#tpu.dimension_semantics<parallel>, #tpu.dimension_semantics<arbitrary>], iteration_bounds = array<i64: 1, 2>, scalar_prefetch = 0 : i64, scratch_operands = 0 : i64, tpu.core_type = #tpu.core_type<tc>, window_params = [{transform_indices = @transform_0, window_bounds = array<i64: 2, 6400>}, {transform_indices = @transform_1, window_bounds = array<i64: 1, 6400, 512>}, {transform_indices = @transform_2, window_bounds = array<i64: 1, 512>}, {transform_indices = @transform_3, window_bounds = array<i64: 2, 512>}]} {
    %c0_i32 = arith.constant 0 : i32
    %0 = arith.cmpi eq, %arg1, %c0_i32 : i32
    %1 = arith.extui %0 : i1 to i32
    %c0_i32_0 = arith.constant 0 : i32
    %2 = arith.cmpi ne, %1, %c0_i32_0 : i32
    scf.if %2 {
      %cst_10 = arith.constant 0.000000e+00 : f32
      %14 = vector.broadcast %cst_10 : f32 to vector<2x512xf32>
      %c0_11 = arith.constant 0 : index
      %c0_12 = arith.constant 0 : index
      %15 = vector.load %arg5[%c0_11, %c0_12] : memref<2x512xf32, #tpu.memory_space<vmem>>, vector<2x512xf32>
      tpu.vector_store %arg5[%c0_11, %c0_12], %14 {strides = array<i32>} : memref<2x512xf32, #tpu.memory_space<vmem>>, vector<2x512xf32>,
    } else {
    }
    %c0 = arith.constant 0 : index
    %c0_1 = arith.constant 0 : index
    %3 = vector.load %arg5[%c0, %c0_1] : memref<2x512xf32, #tpu.memory_space<vmem>>, vector<2x512xf32>
    %c0_2 = arith.constant 0 : index
    %c0_3 = arith.constant 0 : index
    %4 = vector.load %arg2[%c0_2, %c0_3] : memref<2x6400xf32, #tpu.memory_space<vmem>>, vector<2x6400xf32>
    %5 = arith.truncf %4 : vector<2x6400xf32> to vector<2x6400xbf16>
    %c0_4 = arith.constant 0 : index
    %c0_5 = arith.constant 0 : index
    %c0_6 = arith.constant 0 : index
    %6 = vector.load %arg3[%c0_4, %c0_5, %c0_6] : memref<1x6400x512xbf16, #tpu.memory_space<vmem>>, vector<1x6400x512xbf16>
    %7 = vector.shape_cast %6 : vector<1x6400x512xbf16> to vector<6400x512xbf16>
    %cst = arith.constant dense<0.000000e+00> : vector<2x512xf32>
    %8 = tpu.matmul %5, %7, %cst {dimension_numbers = #tpu.dot_dimension_numbers<[1], [0], [0], [1], [0, 0, 1, 1], [], []>} : vector<2x6400xbf16>, vector<6400x512xbf16>, vector<2x512xf32> -> vector<2x512xf32>
    %9 = arith.addf %3, %8 : vector<2x512xf32>
    %c0_7 = arith.constant 0 : index
    %c0_8 = arith.constant 0 : index
    %10 = vector.load %arg5[%c0_7, %c0_8] : memref<2x512xf32, #tpu.memory_space<vmem>>, vector<2x512xf32>
    tpu.vector_store %arg5[%c0_7, %c0_8], %9 {strides = array<i32>} : memref<2x512xf32, #tpu.memory_space<vmem>>, vector<2x512xf32>,
    %c1_i32 = arith.constant 1 : i32
    %11 = arith.cmpi eq, %arg1, %c1_i32 : i32
    %12 = arith.extui %11 : i1 to i32
    %c0_i32_9 = arith.constant 0 : i32
    %13 = arith.cmpi ne, %12, %c0_i32_9 : i32
    scf.if %13 {
      %c0_10 = arith.constant 0 : index
      %c0_11 = arith.constant 0 : index
      %14 = vector.load %arg5[%c0_10, %c0_11] : memref<2x512xf32, #tpu.memory_space<vmem>>, vector<2x512xf32>
      %c0_12 = arith.constant 0 : index
      %c0_13 = arith.constant 0 : index
      %15 = vector.load %arg4[%c0_12, %c0_13] : memref<1x512xf32, #tpu.memory_space<vmem>>, vector<1x512xf32>
      %16 = vector.broadcast %15 : vector<1x512xf32> to vector<2x512xf32>
      %17 = arith.addf %14, %16 : vector<2x512xf32>
      %c0_14 = arith.constant 0 : index
      %c0_15 = arith.constant 0 : index
      %18 = vector.load %arg5[%c0_14, %c0_15] : memref<2x512xf32, #tpu.memory_space<vmem>>, vector<2x512xf32>
      tpu.vector_store %arg5[%c0_14, %c0_15], %17 {strides = array<i32>} : memref<2x512xf32, #tpu.memory_space<vmem>>, vector<2x512xf32>,
    } else {
    }
    return
  }
  func.func @transform_0(%arg0: i32, %arg1: i32) -> (i32, i32) {
    %c0_i32 = arith.constant 0 : i32
    %c0_i32_0 = arith.constant 0 : i32
    return %c0_i32, %arg1 : i32, i32
  }
  func.func @transform_1(%arg0: i32, %arg1: i32) -> (i32, i32, i32) {
    %c0_i32 = arith.constant 0 : i32
    %c0_i32_0 = arith.constant 0 : i32
    return %arg0, %arg1, %c0_i32 : i32, i32, i32
  }
  func.func @transform_2(%arg0: i32, %arg1: i32) -> (i32, i32) {
    %c0_i32 = arith.constant 0 : i32
    %c0_i32_0 = arith.constant 0 : i32
    return %c0_i32, %arg0 : i32, i32
  }
  func.func @transform_3(%arg0: i32, %arg1: i32) -> (i32, i32) {
    %c0_i32 = arith.constant 0 : i32
    %c0_i32_0 = arith.constant 0 : i32
    return %c0_i32, %arg0 : i32, i32
  }
}

</mosaic_0001>

<llo_original>
// kernel: my_res50_head.1
$region0: #{my_res50_head.1}
  #allocation0 [shape = 'u32[]', space=smem, size = 0x4, offset = 0x4, fixed_abs, tag = 'smem constant byte address 0x4 - core index']
  #allocation1 [shape = 'u32[144,128]{1,0:T(1,128)}', space=vmem, size = 0x12000, scoped, tag = 'internal scratch']
  %s0 = inlined_call_operand.vmem [shape: f32[2,12800], index: 0, kind: input, shape index: {}]
  %s1 = inlined_call_operand.hbm [shape: bf16[1,12800,512], index: 1, kind: input, shape index: {}]
  %s2 = inlined_call_operand.hbm [shape: f32[1,512], index: 2, kind: input, shape index: {}]
  %s3 = inlined_call_operand.vmem [shape: f32[2,512], index: 3, kind: output, shape index: {}]
  %s4 = sld [smem:[#allocation0]]
  $region61: #{my_res50_head.1} parent=0
    _
  %s6 = ssub.s32 1, %s4
  %s7 = scalar_select 0, %s6, %s4
  $region1: #{my_res50_head.1} parent=0
    #allocation2 [shape = 'u8[13107200]{0}', space=vmem, size = 0xc80000, scoped, tag = 'input window, operand 1']
    #allocation3 [shape = 's32[2]{0}', space=sflag, size = 0x8, scoped, tag = 'scoped memory for my_res50_head.1']
    #allocation4 [shape = 'u8[2048]{0}', space=vmem, size = 0x800, scoped, tag = 'input window, operand 2, single buffered']
    #allocation5 [shape = 's32[1]{0}', space=sflag, size = 0x4, scoped, tag = 'scoped memory for my_res50_head.1']
    %8 = vsyncpa [#allocation3], 0
    %s9 = scalar_lea.sflag [#allocation3], 1
    %10 = vsyncpa %s9, 0
    %11 = vsyncpa [#allocation5], 0
    loop: start=0, step=1, limit=4
    $region2: #{my_res50_head.1} parent=1 // loop_pre_header
      _
    $region3: #{my_res50_head.1} parent=1 // loop_header
      %s13 = sphi 0, %s17
      %p14 = scmp.ge.s32.totalorder %s13, 4
      %s20 = sphi 0, %s32
      %s21 = sphi 0, %s28
      %s22 = sphi 0, %s20
      %s23 = sphi 0, %s21
      %s24 = sphi 0, %s22
      %s25 = sphi 0, %s23
      %s35 = sphi 0, %s37
      %s38 = sphi 0, %s35
      %s39 = sphi 0, %s38
      %s55 = sphi 0, %s39
      %s63 = sphi 0, %s65
      %s66 = sphi 0, %s63
      %s67 = sphi 0, %s66
      %s83 = sphi 0, %s67
      %s89 = sphi 0, %s91
      %s92 = sphi 0, %s89
      %s93 = sphi 0, %s92
      %s109 = sphi 0, %s93
      %s115 = sphi 0, %s117
      %s118 = sphi 0, %s115
      %s119 = sphi 0, %s118
      %s135 = sphi 0, %s119
    $region4: #{my_res50_head.1} parent=1 // loop_header_branch
      %16 = sbr.rel (%p14) target = $region8
    $region5: #{my_res50_head.1} parent=1 // loop_body
      %s18 = ssub.s32 %s13, 1
      %s19 = ssub.s32 %s13, 2
      %s26 = sadd.s32 1, %s21
      %p27 = scmp.ge.s32.totalorder %s26, 2
      %s28 = scalar_select %p27, 0, %s26
      %s29 = sadd.s32 1, %s20
      %s30 = scalar_select %p27, %s29, %s20
      %p31 = scmp.ge.s32.totalorder %s30, 1
      %s32 = scalar_select %p31, 0, %s30
      %s33 = ssub.s32 %s21, %s28
      %p34 = scmp.eq.s32.totalorder %s33, 0
      %s36 = sadd.s32 %s35, 1
      %s37 = scalar_select %p34, %s35, %s36
      %p40 = pneg %p34
      %p41 = scmp.eq.s32.totalorder %s13, 1
      %p42 = por %p40, %p41
      %p43 = scmp.ne.s32.totalorder %s35, %s38
      %p44 = scmp.eq.s32.totalorder %s13, 0
      %p45 = por %p43, %p44
      %p46 = scmp.ne.s32.totalorder %s35, %s38
      %p47 = scmp.eq.s32.totalorder %s18, 1
      %p48 = por %p46, %p47
      %p49 = scmp.ne.s32.totalorder %s38, %s39
      %p50 = scmp.eq.s32.totalorder %s18, 0
      %p51 = por %p49, %p50
      %p52 = scmp.ne.s32.totalorder %s38, %s39
      %p53 = scmp.eq.s32.totalorder %s19, 1
      %p54 = por %p52, %p53
      %p56 = scmp.ne.s32.totalorder %s39, %s55
      %p57 = scmp.eq.s32.totalorder %s19, 0
      %p58 = por %p56, %p57
      %s59 = ssub.s32 %s20, %s32
      %s60 = ssub.s32 %s21, %s28
      %s61 = sor.u32 %s59, %s60
      %p62 = scmp.eq.s32.totalorder %s61, 0
      %s64 = sadd.s32 %s63, 1
      %s65 = scalar_select %p62, %s63, %s64
      %p68 = pneg %p62
      %p69 = scmp.eq.s32.totalorder %s13, 1
      %p70 = por %p68, %p69
      %p71 = scmp.ne.s32.totalorder %s63, %s66
      %p72 = scmp.eq.s32.totalorder %s13, 0
      %p73 = por %p71, %p72
      %p74 = scmp.ne.s32.totalorder %s63, %s66
      %p75 = scmp.eq.s32.totalorder %s18, 1
      %p76 = por %p74, %p75
      %p77 = scmp.ne.s32.totalorder %s66, %s67
      %p78 = scmp.eq.s32.totalorder %s18, 0
      %p79 = por %p77, %p78
      %p80 = scmp.ne.s32.totalorder %s66, %s67
      %p81 = scmp.eq.s32.totalorder %s19, 1
      %p82 = por %p80, %p81
      %p84 = scmp.ne.s32.totalorder %s67, %s83
      %p85 = scmp.eq.s32.totalorder %s19, 0
      %p86 = por %p84, %p85
      %s87 = ssub.s32 %s20, %s32
      %p88 = scmp.eq.s32.totalorder %s87, 0
      %s90 = sadd.s32 %s89, 1
      %s91 = scalar_select %p88, %s89, %s90
      %p94 = pneg %p88
      %p95 = scmp.eq.s32.totalorder %s13, 1
      %p96 = por %p94, %p95
      %p97 = scmp.ne.s32.totalorder %s89, %s92
      %p98 = scmp.eq.s32.totalorder %s13, 0
      %p99 = por %p97, %p98
      %p100 = scmp.ne.s32.totalorder %s89, %s92
      %p101 = scmp.eq.s32.totalorder %s18, 1
      %p102 = por %p100, %p101
      %p103 = scmp.ne.s32.totalorder %s92, %s93
      %p104 = scmp.eq.s32.totalorder %s18, 0
      %p105 = por %p103, %p104
      %p106 = scmp.ne.s32.totalorder %s92, %s93
      %p107 = scmp.eq.s32.totalorder %s19, 1
      %p108 = por %p106, %p107
      %p110 = scmp.ne.s32.totalorder %s93, %s109
      %p111 = scmp.eq.s32.totalorder %s19, 0
      %p112 = por %p110, %p111
      %s113 = ssub.s32 %s20, %s32
      %p114 = scmp.eq.s32.totalorder %s113, 0
      %s116 = sadd.s32 %s115, 1
      %s117 = scalar_select %p114, %s115, %s116
      %p120 = pneg %p114
      %p121 = scmp.eq.s32.totalorder %s13, 1
      %p122 = por %p120, %p121
      %p123 = scmp.ne.s32.totalorder %s115, %s118
      %p124 = scmp.eq.s32.totalorder %s13, 0
      %p125 = por %p123, %p124
      %p126 = scmp.ne.s32.totalorder %s115, %s118
      %p127 = scmp.eq.s32.totalorder %s18, 1
      %p128 = por %p126, %p127
      %p129 = scmp.ne.s32.totalorder %s118, %s119
      %p130 = scmp.eq.s32.totalorder %s18, 0
      %p131 = por %p129, %p130
      %p132 = scmp.ne.s32.totalorder %s118, %s119
      %p133 = scmp.eq.s32.totalorder %s19, 1
      %p134 = por %p132, %p133
      %p136 = scmp.ne.s32.totalorder %s119, %s135
      %p137 = scmp.eq.s32.totalorder %s19, 0
      %p138 = por %p136, %p137
      %p139 = scmp.le.s32.totalorder 1, %s13
      %p140 = scmp.lt.s32.totalorder %s13, 3
      %p141 = pnand %p139, %p140
      %p142 = pneg %p141
      // Predicated region
      $region9: #{my_res50_head.1} parent=5 // pred_check
        _
      $region10: #{my_res50_head.1} parent=5 // pred_check_branch
        %144 = sbr.rel (%p141) target = $region12
      $region11: #{my_res50_head.1} parent=5 // pred_region
        %s145 = ssub.s32 %s13, 1
        // Predicated region
        $region13: #{my_res50_head.1} parent=11 // pred_check
          %p146 = pneg %p105
        $region14: #{my_res50_head.1} parent=11 // pred_check_branch
          %148 = sbr.rel (%p146) target = $region16
        $region15: #{my_res50_head.1} parent=11 // pred_region
          %s149 = smul.u32 4, %s22
          %s151 = ssub.s32 64, 64
          %152 = vsyncadd [#allocation5], %s151
          %s153 = smul.addr %s149, 16
          %s154 = scalar_lea.hbm %s2, %s153
          %s156 = sshll.u32 [#allocation4], 4
          %s157 = int_to_ptr.vmem [resolvable:$true] %s156
          %159 = dma.hbm_to_vmem [thread:$0]  %s154, 64, %s157, [#allocation5]
        $region16: #{my_res50_head.1} parent=11 // pred_fallthru
          _
      $region12: #{my_res50_head.1} parent=5 // pred_fallthru
        _
      %p160 = scmp.lt.s32.totalorder %s13, 2
      // Predicated region
      $region17: #{my_res50_head.1} parent=5 // pred_check
        %p161 = pneg %p160
      $region18: #{my_res50_head.1} parent=5 // pred_check_branch
        %163 = sbr.rel (%p161) target = $region20
      $region19: #{my_res50_head.1} parent=5 // pred_region
        // Predicated region
        $region21: #{my_res50_head.1} parent=19 // pred_check
          %p164 = pneg %p45
        $region22: #{my_res50_head.1} parent=19 // pred_check_branch
          %166 = sbr.rel (%p164) target = $region24
        $region23: #{my_res50_head.1} parent=19 // pred_region
          %s167 = smul.u32 50, %s21
          %p168 = scmp.lt.s32.totalorder %s167, 99
          %s169 = scalar_select %p168, %s167, 99
          %s170 = smul.addr %s169, 2
          %s171 = scalar_lea.vmem %s0, %s170
          %s172 = smul.u32 50, %s21
        $region24: #{my_res50_head.1} parent=19 // pred_fallthru
          _
        // Predicated region
        $region25: #{my_res50_head.1} parent=19 // pred_check
          %p173 = pneg %p73
        $region26: #{my_res50_head.1} parent=19 // pred_check_branch
          %175 = sbr.rel (%p173) target = $region28
        $region27: #{my_res50_head.1} parent=19 // pred_region
          %s176 = sand.u32 %s63, 1
          %s177 = scalar_lea.sflag [#allocation3], %s176
          %s178 = sand.u32 %s63, 1
          %s179 = smul.addr %s178, 12800
          %s180 = scalar_lea.vmem [#allocation2], %s179
          %s181 = smul.u32 800, %s21
          %s183 = ssub.s32 204800, 204800
          %184 = vsyncadd %s177, %s183
          %s185 = smul.addr %s181, 4
          %s186 = smul.addr %s20, 6400
          %s187 = sadd.s32 %s185, %s186
          %s188 = smul.addr %s187, 64
          %s189 = scalar_lea.hbm %s1, %s188
          %s190 = sshll.u32 %s180, 4
          %s191 = int_to_ptr.vmem [resolvable:$true] %s190
          %196 = dma.hbm_to_vmem [thread:$0]  %s189, 204800, %s191, %s177, 256, 256, 16
        $region28: #{my_res50_head.1} parent=19 // pred_fallthru
          _
      $region20: #{my_res50_head.1} parent=5 // pred_fallthru
        _
      %p197 = scmp.le.s32.totalorder 1, %s13
      %p198 = scmp.lt.s32.totalorder %s13, 3
      %p199 = pnand %p197, %p198
      %p200 = pneg %p199
      // Predicated region
      $region29: #{my_res50_head.1} parent=5 // pred_check
        _
      $region30: #{my_res50_head.1} parent=5 // pred_check_branch
        %202 = sbr.rel (%p199) target = $region32
      $region31: #{my_res50_head.1} parent=5 // pred_region
        %s203 = ssub.s32 %s13, 1
        %s204 = sand.u32 %s66, 1
        %s205 = scalar_lea.sflag [#allocation3], %s204
        %s206 = sand.u32 %s66, 1
        %s207 = smul.addr %s206, 12800
        %s208 = scalar_lea.vmem [#allocation2], %s207
        // Predicated region
        $region33: #{my_res50_head.1} parent=31 // pred_check
          %p209 = pneg %p79
        $region34: #{my_res50_head.1} parent=31 // pred_check_branch
          %211 = sbr.rel (%p209) target = $region36
        $region35: #{my_res50_head.1} parent=31 // pred_region
          %212 = dma.done %s205, 204800
        $region36: #{my_res50_head.1} parent=31 // pred_fallthru
          _
        // Predicated region
        $region37: #{my_res50_head.1} parent=31 // pred_check
          %p213 = pneg %p105
        $region38: #{my_res50_head.1} parent=31 // pred_check_branch
          %215 = sbr.rel (%p213) target = $region40
        $region39: #{my_res50_head.1} parent=31 // pred_region
          %216 = dma.done [#allocation5], 64
        $region40: #{my_res50_head.1} parent=31 // pred_fallthru
          _
        %s217 = smul.u32 50, %s23
        %p218 = scmp.lt.s32.totalorder %s217, 99
        %s219 = scalar_select %p218, %s217, 99
        %s220 = smul.addr %s219, 2
        %s221 = scalar_lea.vmem %s0, %s220
        %p222 = pneg %p51
        %p223 = pneg %p48
        %s224 = sand.u32 %s66, 1
        %s225 = scalar_lea.sflag [#allocation3], %s224
        %s226 = sand.u32 %s66, 1
        %s227 = smul.addr %s226, 12800
        %s228 = scalar_lea.vmem [#allocation2], %s227
        %p229 = pneg %p79
        %p230 = pneg %p76
        %p231 = pneg %p105
        %p232 = pneg %p102
        %p233 = pneg %p131
        %p234 = pneg %p128
        %s235 = smul.u32 4, %s22
        %p236 = scmp.lt.s32.totalorder %s235, 3
        %s237 = scalar_select %p236, %s235, 3
        %s238 = smul.addr %s237, 2
        %s239 = scalar_lea.vmem %s3, %s238
        %s240 = smul.u32 50, %s23
        %p241 = scmp.lt.s32.totalorder %s240, 99
        %s242 = scalar_select %p241, %s240, 99
        %s243 = smul.addr %s242, 2
        %s244 = scalar_lea.vmem %s0, %s243
        %s245 = smul.u32 50, %s23
        %s246 = smul.u32 800, %s23
        %s247 = smul.u32 4, %s22
        %s248 = smul.u32 4, %s22
        %p249 = scmp.lt.s32.totalorder %s248, 3
        %s250 = scalar_select %p249, %s248, 3
        %s251 = smul.addr %s250, 2
        %s252 = scalar_lea.vmem %s3, %s251
        %s253 = smul.u32 4, %s22
        %p254 = scmp.eq.s32.totalorder %s23, 0
        // Predicated region
        $region41: #{my_res50_head.1} parent=31 // pred_check
          %p255 = pneg %p254
        $region42: #{my_res50_head.1} parent=31 // pred_check_branch
          %257 = sbr.rel (%p255) target = $region44
        $region43: #{my_res50_head.1} parent=31 // pred_region
          %258 = vst [vmem:[%s252] sm:$0xff] 0.0
        $region44: #{my_res50_head.1} parent=31 // pred_fallthru
          _
        %v259 = vld [vmem:[%s252] sm:$0xff]
        %v260 = vld [vmem:[%s244] sm:$0xff]
        %v261 = vld [vmem:[%s244 + $0x8] sm:$0xff]
        %v262 = vld [vmem:[%s244 + $0x10] sm:$0xff]
        %v263 = vld [vmem:[%s244 + $0x18] sm:$0xff]
        %v264 = vld [vmem:[%s244 + $0x20] sm:$0xff]
        %v265 = vld [vmem:[%s244 + $0x28] sm:$0xff]
        %v266 = vld [vmem:[%s244 + $0x30] sm:$0xff]
        %v267 = vld [vmem:[%s244 + $0x38] sm:$0xff]
        %v268 = vld [vmem:[%s244 + $0x40] sm:$0xff]
        %v269 = vld [vmem:[%s244 + $0x48] sm:$0xff]
        %v270 = vld [vmem:[%s244 + $0x50] sm:$0xff]
        %v271 = vld [vmem:[%s244 + $0x58] sm:$0xff]
        %v272 = vld [vmem:[%s244 + $0x60] sm:$0xf]
        %v286 = vcombine.high %v260, %v260
        %v288 = vunpack.c.l.s4 1983009808
        %v289 = vunpack.c.0.s8 %v288
        %v290 = vlaneseq
        %v291 = vshrl.u32 %v290, 7
        %v292 = vsub.s32 %v289, %v291
        %v293 = vrot.slane %v260, %v292
        %v295 = vunpack.c.l.s4 1983009808
        %v296 = vunpack.c.0.s8 %v295
        %v297 = vlaneseq
        %v298 = vshrl.u32 %v297, 7
        %v299 = vsub.s32 %v296, %v298
        %v300 = vrot.slane %v286, %v299
        %v301 = vcombine.high %v293, %v293
        %v302 = vcombine.high %v300, %v300
        %v303 = vcombine.high %v261, %v261
        %v305 = vunpack.c.l.s4 1983009808
        %v306 = vunpack.c.0.s8 %v305
        %v307 = vlaneseq
        %v308 = vshrl.u32 %v307, 7
        %v309 = vsub.s32 %v306, %v308
        %v310 = vrot.slane %v261, %v309
        %v312 = vunpack.c.l.s4 1983009808
        %v313 = vunpack.c.0.s8 %v312
        %v314 = vlaneseq
        %v315 = vshrl.u32 %v314, 7
        %v316 = vsub.s32 %v313, %v315
        %v317 = vrot.slane %v303, %v316
        %v318 = vcombine.high %v310, %v310
        %v319 = vcombine.high %v317, %v317
        %v320 = vcombine.high %v262, %v262
        %v322 = vunpack.c.l.s4 1983009808
        %v323 = vunpack.c.0.s8 %v322
        %v324 = vlaneseq
        %v325 = vshrl.u32 %v324, 7
        %v326 = vsub.s32 %v323, %v325
        %v327 = vrot.slane %v262, %v326
        %v329 = vunpack.c.l.s4 1983009808
        %v330 = vunpack.c.0.s8 %v329
        %v331 = vlaneseq
        %v332 = vshrl.u32 %v331, 7
        %v333 = vsub.s32 %v330, %v332
        %v334 = vrot.slane %v320, %v333
        %v335 = vcombine.high %v327, %v327
        %v336 = vcombine.high %v334, %v334
        %v337 = vcombine.high %v263, %v263
        %v339 = vunpack.c.l.s4 1983009808
        %v340 = vunpack.c.0.s8 %v339
        %v341 = vlaneseq
        %v342 = vshrl.u32 %v341, 7
        %v343 = vsub.s32 %v340, %v342
        %v344 = vrot.slane %v263, %v343
        %v346 = vunpack.c.l.s4 1983009808
        %v347 = vunpack.c.0.s8 %v346
        %v348 = vlaneseq
        %v349 = vshrl.u32 %v348, 7
        %v350 = vsub.s32 %v347, %v349
        %v351 = vrot.slane %v337, %v350
        %v352 = vcombine.high %v344, %v344
        %v353 = vcombine.high %v351, %v351
        %v354 = vcombine.high %v264, %v264
        %v356 = vunpack.c.l.s4 1983009808
        %v357 = vunpack.c.0.s8 %v356
        %v358 = vlaneseq
        %v359 = vshrl.u32 %v358, 7
        %v360 = vsub.s32 %v357, %v359
        %v361 = vrot.slane %v264, %v360
        %v363 = vunpack.c.l.s4 1983009808
        %v364 = vunpack.c.0.s8 %v363
        %v365 = vlaneseq
        %v366 = vshrl.u32 %v365, 7
        %v367 = vsub.s32 %v364, %v366
        %v368 = vrot.slane %v354, %v367
        %v369 = vcombine.high %v361, %v361
        %v370 = vcombine.high %v368, %v368
        %v371 = vcombine.high %v265, %v265
        %v373 = vunpack.c.l.s4 1983009808
        %v374 = vunpack.c.0.s8 %v373
        %v375 = vlaneseq
        %v376 = vshrl.u32 %v375, 7
        %v377 = vsub.s32 %v374, %v376
        %v378 = vrot.slane %v265, %v377
        %v380 = vunpack.c.l.s4 1983009808
        %v381 = vunpack.c.0.s8 %v380
        %v382 = vlaneseq
        %v383 = vshrl.u32 %v382, 7
        %v384 = vsub.s32 %v381, %v383
        %v385 = vrot.slane %v371, %v384
        %v386 = vcombine.high %v378, %v378
        %v387 = vcombine.high %v385, %v385
        %v388 = vcombine.high %v266, %v266
        %v390 = vunpack.c.l.s4 1983009808
        %v391 = vunpack.c.0.s8 %v390
        %v392 = vlaneseq
        %v393 = vshrl.u32 %v392, 7
        %v394 = vsub.s32 %v391, %v393
        %v395 = vrot.slane %v266, %v394
        %v397 = vunpack.c.l.s4 1983009808
        %v398 = vunpack.c.0.s8 %v397
        %v399 = vlaneseq
        %v400 = vshrl.u32 %v399, 7
        %v401 = vsub.s32 %v398, %v400
        %v402 = vrot.slane %v388, %v401
        %v403 = vcombine.high %v395, %v395
        %v404 = vcombine.high %v402, %v402
        %v405 = vcombine.high %v267, %v267
        %v407 = vunpack.c.l.s4 1983009808
        %v408 = vunpack.c.0.s8 %v407
        %v409 = vlaneseq
        %v410 = vshrl.u32 %v409, 7
        %v411 = vsub.s32 %v408, %v410
        %v412 = vrot.slane %v267, %v411
        %v414 = vunpack.c.l.s4 1983009808
        %v415 = vunpack.c.0.s8 %v414
        %v416 = vlaneseq
        %v417 = vshrl.u32 %v416, 7
        %v418 = vsub.s32 %v415, %v417
        %v419 = vrot.slane %v405, %v418
        %v420 = vcombine.high %v412, %v412
        %v421 = vcombine.high %v419, %v419
        %v422 = vcombine.high %v268, %v268
        %v424 = vunpack.c.l.s4 1983009808
        %v425 = vunpack.c.0.s8 %v424
        %v426 = vlaneseq
        %v427 = vshrl.u32 %v426, 7
        %v428 = vsub.s32 %v425, %v427
        %v429 = vrot.slane %v268, %v428
        %v431 = vunpack.c.l.s4 1983009808
        %v432 = vunpack.c.0.s8 %v431
        %v433 = vlaneseq
        %v434 = vshrl.u32 %v433, 7
        %v435 = vsub.s32 %v432, %v434
        %v436 = vrot.slane %v422, %v435
        %v437 = vcombine.high %v429, %v429
        %v438 = vcombine.high %v436, %v436
        %v439 = vcombine.high %v269, %v269
        %v441 = vunpack.c.l.s4 1983009808
        %v442 = vunpack.c.0.s8 %v441
        %v443 = vlaneseq
        %v444 = vshrl.u32 %v443, 7
        %v445 = vsub.s32 %v442, %v444
        %v446 = vrot.slane %v269, %v445
        %v448 = vunpack.c.l.s4 1983009808
        %v449 = vunpack.c.0.s8 %v448
        %v450 = vlaneseq
        %v451 = vshrl.u32 %v450, 7
        %v452 = vsub.s32 %v449, %v451
        %v453 = vrot.slane %v439, %v452
        %v454 = vcombine.high %v446, %v446
        %v455 = vcombine.high %v453, %v453
        %v456 = vcombine.high %v270, %v270
        %v458 = vunpack.c.l.s4 1983009808
        %v459 = vunpack.c.0.s8 %v458
        %v460 = vlaneseq
        %v461 = vshrl.u32 %v460, 7
        %v462 = vsub.s32 %v459, %v461
        %v463 = vrot.slane %v270, %v462
        %v465 = vunpack.c.l.s4 1983009808
        %v466 = vunpack.c.0.s8 %v465
        %v467 = vlaneseq
        %v468 = vshrl.u32 %v467, 7
        %v469 = vsub.s32 %v466, %v468
        %v470 = vrot.slane %v456, %v469
        %v471 = vcombine.high %v463, %v463
        %v472 = vcombine.high %v470, %v470
        %v473 = vcombine.high %v271, %v271
        %v475 = vunpack.c.l.s4 1983009808
        %v476 = vunpack.c.0.s8 %v475
        %v477 = vlaneseq
        %v478 = vshrl.u32 %v477, 7
        %v479 = vsub.s32 %v476, %v478
        %v480 = vrot.slane %v271, %v479
        %v482 = vunpack.c.l.s4 1983009808
        %v483 = vunpack.c.0.s8 %v482
        %v484 = vlaneseq
        %v485 = vshrl.u32 %v484, 7
        %v486 = vsub.s32 %v483, %v485
        %v487 = vrot.slane %v473, %v486
        %v488 = vcombine.high %v480, %v480
        %v489 = vcombine.high %v487, %v487
        %v491 = vunpack.c.l.s4 1983009808
        %v492 = vunpack.c.0.s8 %v491
        %v493 = vlaneseq
        %v494 = vshrl.u32 %v493, 7
        %v495 = vsub.s32 %v492, %v494
        %v496 = vrot.slane %v272, %v495
        %v497 = vcombine.high %v496, %v496
        %v548 = vpack.c.bf16 %v293, %v293
        %v549 = vpack.c.bf16 %v301, %v301
        %v550 = vpack.c.bf16 %v300, %v300
        %v551 = vpack.c.bf16 %v302, %v302
        %v552 = vpack.c.bf16 %v310, %v310
        %v553 = vpack.c.bf16 %v318, %v318
        %v554 = vpack.c.bf16 %v317, %v317
        %v555 = vpack.c.bf16 %v319, %v319
        %v556 = vpack.c.bf16 %v327, %v327
        %v557 = vpack.c.bf16 %v335, %v335
        %v558 = vpack.c.bf16 %v334, %v334
        %v559 = vpack.c.bf16 %v336, %v336
        %v560 = vpack.c.bf16 %v344, %v344
        %v561 = vpack.c.bf16 %v352, %v352
        %v562 = vpack.c.bf16 %v351, %v351
        %v563 = vpack.c.bf16 %v353, %v353
        %v564 = vpack.c.bf16 %v361, %v361
        %v565 = vpack.c.bf16 %v369, %v369
        %v566 = vpack.c.bf16 %v368, %v368
        %v567 = vpack.c.bf16 %v370, %v370
        %v568 = vpack.c.bf16 %v378, %v378
        %v569 = vpack.c.bf16 %v386, %v386
        %v570 = vpack.c.bf16 %v385, %v385
        %v571 = vpack.c.bf16 %v387, %v387
        %v572 = vpack.c.bf16 %v395, %v395
        %v573 = vpack.c.bf16 %v403, %v403
        %v574 = vpack.c.bf16 %v402, %v402
        %v575 = vpack.c.bf16 %v404, %v404
        %v576 = vpack.c.bf16 %v412, %v412
        %v577 = vpack.c.bf16 %v420, %v420
        %v578 = vpack.c.bf16 %v419, %v419
        %v579 = vpack.c.bf16 %v421, %v421
        %v580 = vpack.c.bf16 %v429, %v429
        %v581 = vpack.c.bf16 %v437, %v437
        %v582 = vpack.c.bf16 %v436, %v436
        %v583 = vpack.c.bf16 %v438, %v438
        %v584 = vpack.c.bf16 %v446, %v446
        %v585 = vpack.c.bf16 %v454, %v454
        %v586 = vpack.c.bf16 %v453, %v453
        %v587 = vpack.c.bf16 %v455, %v455
        %v588 = vpack.c.bf16 %v463, %v463
        %v589 = vpack.c.bf16 %v471, %v471
        %v590 = vpack.c.bf16 %v470, %v470
        %v591 = vpack.c.bf16 %v472, %v472
        %v592 = vpack.c.bf16 %v480, %v480
        %v593 = vpack.c.bf16 %v488, %v488
        %v594 = vpack.c.bf16 %v487, %v487
        %v595 = vpack.c.bf16 %v489, %v489
        %v596 = vpack.c.bf16 %v496, %v496
        %v597 = vpack.c.bf16 %v497, %v497
        %v598 = vld [vmem:[%s208] sm:$0xff]
        %v599 = vld [vmem:[%s208 + $0x8] sm:$0xff]
        %v600 = vld [vmem:[%s208 + $0x10] sm:$0xff]
        %v601 = vld [vmem:[%s208 + $0x18] sm:$0xff]
        %v602 = vld [vmem:[%s208 + $0x20] sm:$0xff]
        %v603 = vld [vmem:[%s208 + $0x28] sm:$0xff]
        %v604 = vld [vmem:[%s208 + $0x30] sm:$0xff]
        %v605 = vld [vmem:[%s208 + $0x38] sm:$0xff]
        %v606 = vld [vmem:[%s208 + $0x40] sm:$0xff]
        %v607 = vld [vmem:[%s208 + $0x48] sm:$0xff]
        %v608 = vld [vmem:[%s208 + $0x50] sm:$0xff]
        %v609 = vld [vmem:[%s208 + $0x58] sm:$0xff]
        %v610 = vld [vmem:[%s208 + $0x60] sm:$0xff]
        %v611 = vld [vmem:[%s208 + $0x68] sm:$0xff]
        %v612 = vld [vmem:[%s208 + $0x70] sm:$0xff]
        %v613 = vld [vmem:[%s208 + $0x78] sm:$0xff]
        %v614 = vld [vmem:[%s208 + $0x80] sm:$0xff]
        %v615 = vld [vmem:[%s208 + $0x88] sm:$0xff]
        %v616 = vld [vmem:[%s208 + $0x90] sm:$0xff]
        %v617 = vld [vmem:[%s208 + $0x98] sm:$0xff]
        %v618 = vld [vmem:[%s208 + $0xa0] sm:$0xff]
        %v619 = vld [vmem:[%s208 + $0xa8] sm:$0xff]
        %v620 = vld [vmem:[%s208 + $0xb0] sm:$0xff]
        %v621 = vld [vmem:[%s208 + $0xb8] sm:$0xff]
        %v622 = vld [vmem:[%s208 + $0xc0] sm:$0xff]
        %v623 = vld [vmem:[%s208 + $0xc8] sm:$0xff]
        %v624 = vld [vmem:[%s208 + $0xd0] sm:$0xff]
        %v625 = vld [vmem:[%s208 + $0xd8] sm:$0xff]
        %v626 = vld [vmem:[%s208 + $0xe0] sm:$0xff]
        %v627 = vld [vmem:[%s208 + $0xe8] sm:$0xff]
        %v628 = vld [vmem:[%s208 + $0xf0] sm:$0xff]
        %v629 = vld [vmem:[%s208 + $0xf8] sm:$0xff]
        %v630 = vld [vmem:[%s208 + $0x100] sm:$0xff]
        %v631 = vld [vmem:[%s208 + $0x108] sm:$0xff]
        %v632 = vld [vmem:[%s208 + $0x110] sm:$0xff]
        %v633 = vld [vmem:[%s208 + $0x118] sm:$0xff]
        %v634 = vld [vmem:[%s208 + $0x120] sm:$0xff]
        %v635 = vld [vmem:[%s208 + $0x128] sm:$0xff]
        %v636 = vld [vmem:[%s208 + $0x130] sm:$0xff]
        %v637 = vld [vmem:[%s208 + $0x138] sm:$0xff]
        %v638 = vld [vmem:[%s208 + $0x140] sm:$0xff]
        %v639 = vld [vmem:[%s208 + $0x148] sm:$0xff]
        %v640 = vld [vmem:[%s208 + $0x150] sm:$0xff]
        %v641 = vld [vmem:[%s208 + $0x158] sm:$0xff]
        %v642 = vld [vmem:[%s208 + $0x160] sm:$0xff]
        %v643 = vld [vmem:[%s208 + $0x168] sm:$0xff]
        %v644 = vld [vmem:[%s208 + $0x170] sm:$0xff]
        %v645 = vld [vmem:[%s208 + $0x178] sm:$0xff]
        %v646 = vld [vmem:[%s208 + $0x180] sm:$0xff]
        %v647 = vld [vmem:[%s208 + $0x188] sm:$0xff]
        %v648 = vld [vmem:[%s208 + $0x190] sm:$0xff]
        %v649 = vld [vmem:[%s208 + $0x198] sm:$0xff]
        %v650 = vld [vmem:[%s208 + $0x1a0] sm:$0xff]
        %v651 = vld [vmem:[%s208 + $0x1a8] sm:$0xff]
        %v652 = vld [vmem:[%s208 + $0x1b0] sm:$0xff]
        %v653 = vld [vmem:[%s208 + $0x1b8] sm:$0xff]
        %v654 = vld [vmem:[%s208 + $0x1c0] sm:$0xff]
        %v655 = vld [vmem:[%s208 + $0x1c8] sm:$0xff]
        %v656 = vld [vmem:[%s208 + $0x1d0] sm:$0xff]
        %v657 = vld [vmem:[%s208 + $0x1d8] sm:$0xff]
        %v658 = vld [vmem:[%s208 + $0x1e0] sm:$0xff]
        %v659 = vld [vmem:[%s208 + $0x1e8] sm:$0xff]
        %v660 = vld [vmem:[%s208 + $0x1f0] sm:$0xff]
        %v661 = vld [vmem:[%s208 + $0x1f8] sm:$0xff]
        %v662 = vld [vmem:[%s208 + $0x200] sm:$0xff]
        %v663 = vld [vmem:[%s208 + $0x208] sm:$0xff]
        %v664 = vld [vmem:[%s208 + $0x210] sm:$0xff]
        %v665 = vld [vmem:[%s208 + $0x218] sm:$0xff]
        %v666 = vld [vmem:[%s208 + $0x220] sm:$0xff]
        %v667 = vld [vmem:[%s208 + $0x228] sm:$0xff]
        %v668 = vld [vmem:[%s208 + $0x230] sm:$0xff]
        %v669 = vld [vmem:[%s208 + $0x238] sm:$0xff]
        %v670 = vld [vmem:[%s208 + $0x240] sm:$0xff]
        %v671 = vld [vmem:[%s208 + $0x248] sm:$0xff]
        %v672 = vld [vmem:[%s208 + $0x250] sm:$0xff]
        %v673 = vld [vmem:[%s208 + $0x258] sm:$0xff]
        %v674 = vld [vmem:[%s208 + $0x260] sm:$0xff]
        %v675 = vld [vmem:[%s208 + $0x268] sm:$0xff]
        %v676 = vld [vmem:[%s208 + $0x270] sm:$0xff]
        %v677 = vld [vmem:[%s208 + $0x278] sm:$0xff]
        %v678 = vld [vmem:[%s208 + $0x280] sm:$0xff]
        %v679 = vld [vmem:[%s208 + $0x288] sm:$0xff]
        %v680 = vld [vmem:[%s208 + $0x290] sm:$0xff]
        %v681 = vld [vmem:[%s208 + $0x298] sm:$0xff]
        %v682 = vld [vmem:[%s208 + $0x2a0] sm:$0xff]
        %v683 = vld [vmem:[%s208 + $0x2a8] sm:$0xff]
        %v684 = vld [vmem:[%s208 + $0x2b0] sm:$0xff]
        %v685 = vld [vmem:[%s208 + $0x2b8] sm:$0xff]
        %v686 = vld [vmem:[%s208 + $0x2c0] sm:$0xff]
        %v687 = vld [vmem:[%s208 + $0x2c8] sm:$0xff]
        %v688 = vld [vmem:[%s208 + $0x2d0] sm:$0xff]
        %v689 = vld [vmem:[%s208 + $0x2d8] sm:$0xff]
        %v690 = vld [vmem:[%s208 + $0x2e0] sm:$0xff]
        %v691 = vld [vmem:[%s208 + $0x2e8] sm:$0xff]
        %v692 = vld [vmem:[%s208 + $0x2f0] sm:$0xff]
        %v693 = vld [vmem:[%s208 + $0x2f8] sm:$0xff]
        %v694 = vld [vmem:[%s208 + $0x300] sm:$0xff]
        %v695 = vld [vmem:[%s208 + $0x308] sm:$0xff]
        %v696 = vld [vmem:[%s208 + $0x310] sm:$0xff]
        %v697 = vld [vmem:[%s208 + $0x318] sm:$0xff]
        %v698 = vld [vmem:[%s208 + $0x320] sm:$0xff]
        %v699 = vld [vmem:[%s208 + $0x328] sm:$0xff]
        %v700 = vld [vmem:[%s208 + $0x330] sm:$0xff]
        %v701 = vld [vmem:[%s208 + $0x338] sm:$0xff]
        %v702 = vld [vmem:[%s208 + $0x340] sm:$0xff]
        %v703 = vld [vmem:[%s208 + $0x348] sm:$0xff]
        %v704 = vld [vmem:[%s208 + $0x350] sm:$0xff]
        %v705 = vld [vmem:[%s208 + $0x358] sm:$0xff]
        %v706 = vld [vmem:[%s208 + $0x360] sm:$0xff]
        %v707 = vld [vmem:[%s208 + $0x368] sm:$0xff]
        %v708 = vld [vmem:[%s208 + $0x370] sm:$0xff]
        %v709 = vld [vmem:[%s208 + $0x378] sm:$0xff]
        %v710 = vld [vmem:[%s208 + $0x380] sm:$0xff]
        %v711 = vld [vmem:[%s208 + $0x388] sm:$0xff]
        %v712 = vld [vmem:[%s208 + $0x390] sm:$0xff]
        %v713 = vld [vmem:[%s208 + $0x398] sm:$0xff]
        %v714 = vld [vmem:[%s208 + $0x3a0] sm:$0xff]
        %v715 = vld [vmem:[%s208 + $0x3a8] sm:$0xff]
        %v716 = vld [vmem:[%s208 + $0x3b0] sm:$0xff]
        %v717 = vld [vmem:[%s208 + $0x3b8] sm:$0xff]
        %v718 = vld [vmem:[%s208 + $0x3c0] sm:$0xff]
        %v719 = vld [vmem:[%s208 + $0x3c8] sm:$0xff]
        %v720 = vld [vmem:[%s208 + $0x3d0] sm:$0xff]
        %v721 = vld [vmem:[%s208 + $0x3d8] sm:$0xff]
        %v722 = vld [vmem:[%s208 + $0x3e0] sm:$0xff]
        %v723 = vld [vmem:[%s208 + $0x3e8] sm:$0xff]
        %v724 = vld [vmem:[%s208 + $0x3f0] sm:$0xff]
        %v725 = vld [vmem:[%s208 + $0x3f8] sm:$0xff]
        %v726 = vld [vmem:[%s208 + $0x400] sm:$0xff]
        %v727 = vld [vmem:[%s208 + $0x408] sm:$0xff]
        %v728 = vld [vmem:[%s208 + $0x410] sm:$0xff]
        %v729 = vld [vmem:[%s208 + $0x418] sm:$0xff]
        %v730 = vld [vmem:[%s208 + $0x420] sm:$0xff]
        %v731 = vld [vmem:[%s208 + $0x428] sm:$0xff]
        %v732 = vld [vmem:[%s208 + $0x430] sm:$0xff]
        %v733 = vld [vmem:[%s208 + $0x438] sm:$0xff]
        %v734 = vld [vmem:[%s208 + $0x440] sm:$0xff]
        %v735 = vld [vmem:[%s208 + $0x448] sm:$0xff]
        %v736 = vld [vmem:[%s208 + $0x450] sm:$0xff]
        %v737 = vld [vmem:[%s208 + $0x458] sm:$0xff]
        %v738 = vld [vmem:[%s208 + $0x460] sm:$0xff]
        %v739 = vld [vmem:[%s208 + $0x468] sm:$0xff]
        %v740 = vld [vmem:[%s208 + $0x470] sm:$0xff]
        %v741 = vld [vmem:[%s208 + $0x478] sm:$0xff]
        %v742 = vld [vmem:[%s208 + $0x480] sm:$0xff]
        %v743 = vld [vmem:[%s208 + $0x488] sm:$0xff]
        %v744 = vld [vmem:[%s208 + $0x490] sm:$0xff]
        %v745 = vld [vmem:[%s208 + $0x498] sm:$0xff]
        %v746 = vld [vmem:[%s208 + $0x4a0] sm:$0xff]
        %v747 = vld [vmem:[%s208 + $0x4a8] sm:$0xff]
        %v748 = vld [vmem:[%s208 + $0x4b0] sm:$0xff]
        %v749 = vld [vmem:[%s208 + $0x4b8] sm:$0xff]
        %v750 = vld [vmem:[%s208 + $0x4c0] sm:$0xff]
        %v751 = vld [vmem:[%s208 + $0x4c8] sm:$0xff]
        %v752 = vld [vmem:[%s208 + $0x4d0] sm:$0xff]
        %v753 = vld [vmem:[%s208 + $0x4d8] sm:$0xff]
        %v754 = vld [vmem:[%s208 + $0x4e0] sm:$0xff]
        %v755 = vld [vmem:[%s208 + $0x4e8] sm:$0xff]
        %v756 = vld [vmem:[%s208 + $0x4f0] sm:$0xff]
        %v757 = vld [vmem:[%s208 + $0x4f8] sm:$0xff]
        %v758 = vld [vmem:[%s208 + $0x500] sm:$0xff]
        %v759 = vld [vmem:[%s208 + $0x508] sm:$0xff]
        %v760 = vld [vmem:[%s208 + $0x510] sm:$0xff]
        %v761 = vld [vmem:[%s208 + $0x518] sm:$0xff]
        %v762 = vld [vmem:[%s208 + $0x520] sm:$0xff]
        %v763 = vld [vmem:[%s208 + $0x528] sm:$0xff]
        %v764 = vld [vmem:[%s208 + $0x530] sm:$0xff]
        %v765 = vld [vmem:[%s208 + $0x538] sm:$0xff]
        %v766 = vld [vmem:[%s208 + $0x540] sm:$0xff]
        %v767 = vld [vmem:[%s208 + $0x548] sm:$0xff]
        %v768 = vld [vmem:[%s208 + $0x550] sm:$0xff]
        %v769 = vld [vmem:[%s208 + $0x558] sm:$0xff]
        %v770 = vld [vmem:[%s208 + $0x560] sm:$0xff]
        %v771 = vld [vmem:[%s208 + $0x568] sm:$0xff]
        %v772 = vld [vmem:[%s208 + $0x570] sm:$0xff]
        %v773 = vld [vmem:[%s208 + $0x578] sm:$0xff]
        %v774 = vld [vmem:[%s208 + $0x580] sm:$0xff]
        %v775 = vld [vmem:[%s208 + $0x588] sm:$0xff]
        %v776 = vld [vmem:[%s208 + $0x590] sm:$0xff]
        %v777 = vld [vmem:[%s208 + $0x598] sm:$0xff]
        %v778 = vld [vmem:[%s208 + $0x5a0] sm:$0xff]
        %v779 = vld [vmem:[%s208 + $0x5a8] sm:$0xff]
        %v780 = vld [vmem:[%s208 + $0x5b0] sm:$0xff]
        %v781 = vld [vmem:[%s208 + $0x5b8] sm:$0xff]
        %v782 = vld [vmem:[%s208 + $0x5c0] sm:$0xff]
        %v783 = vld [vmem:[%s208 + $0x5c8] sm:$0xff]
        %v784 = vld [vmem:[%s208 + $0x5d0] sm:$0xff]
        %v785 = vld [vmem:[%s208 + $0x5d8] sm:$0xff]
        %v786 = vld [vmem:[%s208 + $0x5e0] sm:$0xff]
        %v787 = vld [vmem:[%s208 + $0x5e8] sm:$0xff]
        %v788 = vld [vmem:[%s208 + $0x5f0] sm:$0xff]
        %v789 = vld [vmem:[%s208 + $0x5f8] sm:$0xff]
        %v790 = vld [vmem:[%s208 + $0x600] sm:$0xff]
        %v791 = vld [vmem:[%s208 + $0x608] sm:$0xff]
        %v792 = vld [vmem:[%s208 + $0x610] sm:$0xff]
        %v793 = vld [vmem:[%s208 + $0x618] sm:$0xff]
        %v794 = vld [vmem:[%s208 + $0x620] sm:$0xff]
        %v795 = vld [vmem:[%s208 + $0x628] sm:$0xff]
        %v796 = vld [vmem:[%s208 + $0x630] sm:$0xff]
        %v797 = vld [vmem:[%s208 + $0x638] sm:$0xff]
        %v798 = vld [vmem:[%s208 + $0x640] sm:$0xff]
        %v799 = vld [vmem:[%s208 + $0x648] sm:$0xff]
        %v800 = vld [vmem:[%s208 + $0x650] sm:$0xff]
        %v801 = vld [vmem:[%s208 + $0x658] sm:$0xff]
        %v802 = vld [vmem:[%s208 + $0x660] sm:$0xff]
        %v803 = vld [vmem:[%s208 + $0x668] sm:$0xff]
        %v804 = vld [vmem:[%s208 + $0x670] sm:$0xff]
        %v805 = vld [vmem:[%s208 + $0x678] sm:$0xff]
        %v806 = vld [vmem:[%s208 + $0x680] sm:$0xff]
        %v807 = vld [vmem:[%s208 + $0x688] sm:$0xff]
        %v808 = vld [vmem:[%s208 + $0x690] sm:$0xff]
        %v809 = vld [vmem:[%s208 + $0x698] sm:$0xff]
        %v810 = vld [vmem:[%s208 + $0x6a0] sm:$0xff]
        %v811 = vld [vmem:[%s208 + $0x6a8] sm:$0xff]
        %v812 = vld [vmem:[%s208 + $0x6b0] sm:$0xff]
        %v813 = vld [vmem:[%s208 + $0x6b8] sm:$0xff]
        %v814 = vld [vmem:[%s208 + $0x6c0] sm:$0xff]
        %v815 = vld [vmem:[%s208 + $0x6c8] sm:$0xff]
        %v816 = vld [vmem:[%s208 + $0x6d0] sm:$0xff]
        %v817 = vld [vmem:[%s208 + $0x6d8] sm:$0xff]
        %v818 = vld [vmem:[%s208 + $0x6e0] sm:$0xff]
        %v819 = vld [vmem:[%s208 + $0x6e8] sm:$0xff]
        %v820 = vld [vmem:[%s208 + $0x6f0] sm:$0xff]
        %v821 = vld [vmem:[%s208 + $0x6f8] sm:$0xff]
        %v822 = vld [vmem:[%s208 + $0x700] sm:$0xff]
        %v823 = vld [vmem:[%s208 + $0x708] sm:$0xff]
        %v824 = vld [vmem:[%s208 + $0x710] sm:$0xff]
        %v825 = vld [vmem:[%s208 + $0x718] sm:$0xff]
        %v826 = vld [vmem:[%s208 + $0x720] sm:$0xff]
        %v827 = vld [vmem:[%s208 + $0x728] sm:$0xff]
        %v828 = vld [vmem:[%s208 + $0x730] sm:$0xff]
        %v829 = vld [vmem:[%s208 + $0x738] sm:$0xff]
        %v830 = vld [vmem:[%s208 + $0x740] sm:$0xff]
        %v831 = vld [vmem:[%s208 + $0x748] sm:$0xff]
        %v832 = vld [vmem:[%s208 + $0x750] sm:$0xff]
        %v833 = vld [vmem:[%s208 + $0x758] sm:$0xff]
        %v834 = vld [vmem:[%s208 + $0x760] sm:$0xff]
        %v835 = vld [vmem:[%s208 + $0x768] sm:$0xff]
        %v836 = vld [vmem:[%s208 + $0x770] sm:$0xff]
        %v837 = vld [vmem:[%s208 + $0x778] sm:$0xff]
        %v838 = vld [vmem:[%s208 + $0x780] sm:$0xff]
        %v839 = vld [vmem:[%s208 + $0x788] sm:$0xff]
        %v840 = vld [vmem:[%s208 + $0x790] sm:$0xff]
        %v841 = vld [vmem:[%s208 + $0x798] sm:$0xff]
        %v842 = vld [vmem:[%s208 + $0x7a0] sm:$0xff]
        %v843 = vld [vmem:[%s208 + $0x7a8] sm:$0xff]
        %v844 = vld [vmem:[%s208 + $0x7b0] sm:$0xff]
        %v845 = vld [vmem:[%s208 + $0x7b8] sm:$0xff]
        %v846 = vld [vmem:[%s208 + $0x7c0] sm:$0xff]
        %v847 = vld [vmem:[%s208 + $0x7c8] sm:$0xff]
        %v848 = vld [vmem:[%s208 + $0x7d0] sm:$0xff]
        %v849 = vld [vmem:[%s208 + $0x7d8] sm:$0xff]
        %v850 = vld [vmem:[%s208 + $0x7e0] sm:$0xff]
        %v851 = vld [vmem:[%s208 + $0x7e8] sm:$0xff]
        %v852 = vld [vmem:[%s208 + $0x7f0] sm:$0xff]
        %v853 = vld [vmem:[%s208 + $0x7f8] sm:$0xff]
        %v854 = vld [vmem:[%s208 + $0x800] sm:$0xff]
        %v855 = vld [vmem:[%s208 + $0x808] sm:$0xff]
        %v856 = vld [vmem:[%s208 + $0x810] sm:$0xff]
        %v857 = vld [vmem:[%s208 + $0x818] sm:$0xff]
        %v858 = vld [vmem:[%s208 + $0x820] sm:$0xff]
        %v859 = vld [vmem:[%s208 + $0x828] sm:$0xff]
        %v860 = vld [vmem:[%s208 + $0x830] sm:$0xff]
        %v861 = vld [vmem:[%s208 + $0x838] sm:$0xff]
        %v862 = vld [vmem:[%s208 + $0x840] sm:$0xff]
        %v863 = vld [vmem:[%s208 + $0x848] sm:$0xff]
        %v864 = vld [vmem:[%s208 + $0x850] sm:$0xff]
        %v865 = vld [vmem:[%s208 + $0x858] sm:$0xff]
        %v866 = vld [vmem:[%s208 + $0x860] sm:$0xff]
        %v867 = vld [vmem:[%s208 + $0x868] sm:$0xff]
        %v868 = vld [vmem:[%s208 + $0x870] sm:$0xff]
        %v869 = vld [vmem:[%s208 + $0x878] sm:$0xff]
        %v870 = vld [vmem:[%s208 + $0x880] sm:$0xff]
        %v871 = vld [vmem:[%s208 + $0x888] sm:$0xff]
        %v872 = vld [vmem:[%s208 + $0x890] sm:$0xff]
        %v873 = vld [vmem:[%s208 + $0x898] sm:$0xff]
        %v874 = vld [vmem:[%s208 + $0x8a0] sm:$0xff]
        %v875 = vld [vmem:[%s208 + $0x8a8] sm:$0xff]
        %v876 = vld [vmem:[%s208 + $0x8b0] sm:$0xff]
        %v877 = vld [vmem:[%s208 + $0x8b8] sm:$0xff]
        %v878 = vld [vmem:[%s208 + $0x8c0] sm:$0xff]
        %v879 = vld [vmem:[%s208 + $0x8c8] sm:$0xff]
        %v880 = vld [vmem:[%s208 + $0x8d0] sm:$0xff]
        %v881 = vld [vmem:[%s208 + $0x8d8] sm:$0xff]
        %v882 = vld [vmem:[%s208 + $0x8e0] sm:$0xff]
        %v883 = vld [vmem:[%s208 + $0x8e8] sm:$0xff]
        %v884 = vld [vmem:[%s208 + $0x8f0] sm:$0xff]
        %v885 = vld [vmem:[%s208 + $0x8f8] sm:$0xff]
        %v886 = vld [vmem:[%s208 + $0x900] sm:$0xff]
        %v887 = vld [vmem:[%s208 + $0x908] sm:$0xff]
        %v888 = vld [vmem:[%s208 + $0x910] sm:$0xff]
        %v889 = vld [vmem:[%s208 + $0x918] sm:$0xff]
        %v890 = vld [vmem:[%s208 + $0x920] sm:$0xff]
        %v891 = vld [vmem:[%s208 + $0x928] sm:$0xff]
        %v892 = vld [vmem:[%s208 + $0x930] sm:$0xff]
        %v893 = vld [vmem:[%s208 + $0x938] sm:$0xff]
        %v894 = vld [vmem:[%s208 + $0x940] sm:$0xff]
        %v895 = vld [vmem:[%s208 + $0x948] sm:$0xff]
        %v896 = vld [vmem:[%s208 + $0x950] sm:$0xff]
        %v897 = vld [vmem:[%s208 + $0x958] sm:$0xff]
        %v898 = vld [vmem:[%s208 + $0x960] sm:$0xff]
        %v899 = vld [vmem:[%s208 + $0x968] sm:$0xff]
        %v900 = vld [vmem:[%s208 + $0x970] sm:$0xff]
        %v901 = vld [vmem:[%s208 + $0x978] sm:$0xff]
        %v902 = vld [vmem:[%s208 + $0x980] sm:$0xff]
        %v903 = vld [vmem:[%s208 + $0x988] sm:$0xff]
        %v904 = vld [vmem:[%s208 + $0x990] sm:$0xff]
        %v905 = vld [vmem:[%s208 + $0x998] sm:$0xff]
        %v906 = vld [vmem:[%s208 + $0x9a0] sm:$0xff]
        %v907 = vld [vmem:[%s208 + $0x9a8] sm:$0xff]
        %v908 = vld [vmem:[%s208 + $0x9b0] sm:$0xff]
        %v909 = vld [vmem:[%s208 + $0x9b8] sm:$0xff]
        %v910 = vld [vmem:[%s208 + $0x9c0] sm:$0xff]
        %v911 = vld [vmem:[%s208 + $0x9c8] sm:$0xff]
        %v912 = vld [vmem:[%s208 + $0x9d0] sm:$0xff]
        %v913 = vld [vmem:[%s208 + $0x9d8] sm:$0xff]
        %v914 = vld [vmem:[%s208 + $0x9e0] sm:$0xff]
        %v915 = vld [vmem:[%s208 + $0x9e8] sm:$0xff]
        %v916 = vld [vmem:[%s208 + $0x9f0] sm:$0xff]
        %v917 = vld [vmem:[%s208 + $0x9f8] sm:$0xff]
        %v918 = vld [vmem:[%s208 + $0xa00] sm:$0xff]
        %v919 = vld [vmem:[%s208 + $0xa08] sm:$0xff]
        %v920 = vld [vmem:[%s208 + $0xa10] sm:$0xff]
        %v921 = vld [vmem:[%s208 + $0xa18] sm:$0xff]
        %v922 = vld [vmem:[%s208 + $0xa20] sm:$0xff]
        %v923 = vld [vmem:[%s208 + $0xa28] sm:$0xff]
        %v924 = vld [vmem:[%s208 + $0xa30] sm:$0xff]
        %v925 = vld [vmem:[%s208 + $0xa38] sm:$0xff]
        %v926 = vld [vmem:[%s208 + $0xa40] sm:$0xff]
        %v927 = vld [vmem:[%s208 + $0xa48] sm:$0xff]
        %v928 = vld [vmem:[%s208 + $0xa50] sm:$0xff]
        %v929 = vld [vmem:[%s208 + $0xa58] sm:$0xff]
        %v930 = vld [vmem:[%s208 + $0xa60] sm:$0xff]
        %v931 = vld [vmem:[%s208 + $0xa68] sm:$0xff]
        %v932 = vld [vmem:[%s208 + $0xa70] sm:$0xff]
        %v933 = vld [vmem:[%s208 + $0xa78] sm:$0xff]
        %v934 = vld [vmem:[%s208 + $0xa80] sm:$0xff]
        %v935 = vld [vmem:[%s208 + $0xa88] sm:$0xff]
        %v936 = vld [vmem:[%s208 + $0xa90] sm:$0xff]
        %v937 = vld [vmem:[%s208 + $0xa98] sm:$0xff]
        %v938 = vld [vmem:[%s208 + $0xaa0] sm:$0xff]
        %v939 = vld [vmem:[%s208 + $0xaa8] sm:$0xff]
        %v940 = vld [vmem:[%s208 + $0xab0] sm:$0xff]
        %v941 = vld [vmem:[%s208 + $0xab8] sm:$0xff]
        %v942 = vld [vmem:[%s208 + $0xac0] sm:$0xff]
        %v943 = vld [vmem:[%s208 + $0xac8] sm:$0xff]
        %v944 = vld [vmem:[%s208 + $0xad0] sm:$0xff]
        %v945 = vld [vmem:[%s208 + $0xad8] sm:$0xff]
        %v946 = vld [vmem:[%s208 + $0xae0] sm:$0xff]
        %v947 = vld [vmem:[%s208 + $0xae8] sm:$0xff]
        %v948 = vld [vmem:[%s208 + $0xaf0] sm:$0xff]
        %v949 = vld [vmem:[%s208 + $0xaf8] sm:$0xff]
        %v950 = vld [vmem:[%s208 + $0xb00] sm:$0xff]
        %v951 = vld [vmem:[%s208 + $0xb08] sm:$0xff]
        %v952 = vld [vmem:[%s208 + $0xb10] sm:$0xff]
        %v953 = vld [vmem:[%s208 + $0xb18] sm:$0xff]
        %v954 = vld [vmem:[%s208 + $0xb20] sm:$0xff]
        %v955 = vld [vmem:[%s208 + $0xb28] sm:$0xff]
        %v956 = vld [vmem:[%s208 + $0xb30] sm:$0xff]
        %v957 = vld [vmem:[%s208 + $0xb38] sm:$0xff]
        %v958 = vld [vmem:[%s208 + $0xb40] sm:$0xff]
        %v959 = vld [vmem:[%s208 + $0xb48] sm:$0xff]
        %v960 = vld [vmem:[%s208 + $0xb50] sm:$0xff]
        %v961 = vld [vmem:[%s208 + $0xb58] sm:$0xff]
        %v962 = vld [vmem:[%s208 + $0xb60] sm:$0xff]
        %v963 = vld [vmem:[%s208 + $0xb68] sm:$0xff]
        %v964 = vld [vmem:[%s208 + $0xb70] sm:$0xff]
        %v965 = vld [vmem:[%s208 + $0xb78] sm:$0xff]
        %v966 = vld [vmem:[%s208 + $0xb80] sm:$0xff]
        %v967 = vld [vmem:[%s208 + $0xb88] sm:$0xff]
        %v968 = vld [vmem:[%s208 + $0xb90] sm:$0xff]
        %v969 = vld [vmem:[%s208 + $0xb98] sm:$0xff]
        %v970 = vld [vmem:[%s208 + $0xba0] sm:$0xff]
        %v971 = vld [vmem:[%s208 + $0xba8] sm:$0xff]
        %v972 = vld [vmem:[%s208 + $0xbb0] sm:$0xff]
        %v973 = vld [vmem:[%s208 + $0xbb8] sm:$0xff]
        %v974 = vld [vmem:[%s208 + $0xbc0] sm:$0xff]
        %v975 = vld [vmem:[%s208 + $0xbc8] sm:$0xff]
        %v976 = vld [vmem:[%s208 + $0xbd0] sm:$0xff]
        %v977 = vld [vmem:[%s208 + $0xbd8] sm:$0xff]
        %v978 = vld [vmem:[%s208 + $0xbe0] sm:$0xff]
        %v979 = vld [vmem:[%s208 + $0xbe8] sm:$0xff]
        %v980 = vld [vmem:[%s208 + $0xbf0] sm:$0xff]
        %v981 = vld [vmem:[%s208 + $0xbf8] sm:$0xff]
        %v982 = vld [vmem:[%s208 + $0xc00] sm:$0xff]
        %v983 = vld [vmem:[%s208 + $0xc08] sm:$0xff]
        %v984 = vld [vmem:[%s208 + $0xc10] sm:$0xff]
        %v985 = vld [vmem:[%s208 + $0xc18] sm:$0xff]
        %v986 = vld [vmem:[%s208 + $0xc20] sm:$0xff]
        %v987 = vld [vmem:[%s208 + $0xc28] sm:$0xff]
        %v988 = vld [vmem:[%s208 + $0xc30] sm:$0xff]
        %v989 = vld [vmem:[%s208 + $0xc38] sm:$0xff]
        %v990 = vld [vmem:[%s208 + $0xc40] sm:$0xff]
        %v991 = vld [vmem:[%s208 + $0xc48] sm:$0xff]
        %v992 = vld [vmem:[%s208 + $0xc50] sm:$0xff]
        %v993 = vld [vmem:[%s208 + $0xc58] sm:$0xff]
        %v994 = vld [vmem:[%s208 + $0xc60] sm:$0xff]
        %v995 = vld [vmem:[%s208 + $0xc68] sm:$0xff]
        %v996 = vld [vmem:[%s208 + $0xc70] sm:$0xff]
        %v997 = vld [vmem:[%s208 + $0xc78] sm:$0xff]
        %v998 = vld [vmem:[%s208 + $0xc80] sm:$0xff]
        %v999 = vld [vmem:[%s208 + $0xc88] sm:$0xff]
        %v1000 = vld [vmem:[%s208 + $0xc90] sm:$0xff]
        %v1001 = vld [vmem:[%s208 + $0xc98] sm:$0xff]
        %v1002 = vld [vmem:[%s208 + $0xca0] sm:$0xff]
        %v1003 = vld [vmem:[%s208 + $0xca8] sm:$0xff]
        %v1004 = vld [vmem:[%s208 + $0xcb0] sm:$0xff]
        %v1005 = vld [vmem:[%s208 + $0xcb8] sm:$0xff]
        %v1006 = vld [vmem:[%s208 + $0xcc0] sm:$0xff]
        %v1007 = vld [vmem:[%s208 + $0xcc8] sm:$0xff]
        %v1008 = vld [vmem:[%s208 + $0xcd0] sm:$0xff]
        %v1009 = vld [vmem:[%s208 + $0xcd8] sm:$0xff]
        %v1010 = vld [vmem:[%s208 + $0xce0] sm:$0xff]
        %v1011 = vld [vmem:[%s208 + $0xce8] sm:$0xff]
        %v1012 = vld [vmem:[%s208 + $0xcf0] sm:$0xff]
        %v1013 = vld [vmem:[%s208 + $0xcf8] sm:$0xff]
        %v1014 = vld [vmem:[%s208 + $0xd00] sm:$0xff]
        %v1015 = vld [vmem:[%s208 + $0xd08] sm:$0xff]
        %v1016 = vld [vmem:[%s208 + $0xd10] sm:$0xff]
        %v1017 = vld [vmem:[%s208 + $0xd18] sm:$0xff]
        %v1018 = vld [vmem:[%s208 + $0xd20] sm:$0xff]
        %v1019 = vld [vmem:[%s208 + $0xd28] sm:$0xff]
        %v1020 = vld [vmem:[%s208 + $0xd30] sm:$0xff]
        %v1021 = vld [vmem:[%s208 + $0xd38] sm:$0xff]
        %v1022 = vld [vmem:[%s208 + $0xd40] sm:$0xff]
        %v1023 = vld [vmem:[%s208 + $0xd48] sm:$0xff]
        %v1024 = vld [vmem:[%s208 + $0xd50] sm:$0xff]
        %v1025 = vld [vmem:[%s208 + $0xd58] sm:$0xff]
        %v1026 = vld [vmem:[%s208 + $0xd60] sm:$0xff]
        %v1027 = vld [vmem:[%s208 + $0xd68] sm:$0xff]
        %v1028 = vld [vmem:[%s208 + $0xd70] sm:$0xff]
        %v1029 = vld [vmem:[%s208 + $0xd78] sm:$0xff]
        %v1030 = vld [vmem:[%s208 + $0xd80] sm:$0xff]
        %v1031 = vld [vmem:[%s208 + $0xd88] sm:$0xff]
        %v1032 = vld [vmem:[%s208 + $0xd90] sm:$0xff]
        %v1033 = vld [vmem:[%s208 + $0xd98] sm:$0xff]
        %v1034 = vld [vmem:[%s208 + $0xda0] sm:$0xff]
        %v1035 = vld [vmem:[%s208 + $0xda8] sm:$0xff]
        %v1036 = vld [vmem:[%s208 + $0xdb0] sm:$0xff]
        %v1037 = vld [vmem:[%s208 + $0xdb8] sm:$0xff]
        %v1038 = vld [vmem:[%s208 + $0xdc0] sm:$0xff]
        %v1039 = vld [vmem:[%s208 + $0xdc8] sm:$0xff]
        %v1040 = vld [vmem:[%s208 + $0xdd0] sm:$0xff]
        %v1041 = vld [vmem:[%s208 + $0xdd8] sm:$0xff]
        %v1042 = vld [vmem:[%s208 + $0xde0] sm:$0xff]
        %v1043 = vld [vmem:[%s208 + $0xde8] sm:$0xff]
        %v1044 = vld [vmem:[%s208 + $0xdf0] sm:$0xff]
        %v1045 = vld [vmem:[%s208 + $0xdf8] sm:$0xff]
        %v1046 = vld [vmem:[%s208 + $0xe00] sm:$0xff]
        %v1047 = vld [vmem:[%s208 + $0xe08] sm:$0xff]
        %v1048 = vld [vmem:[%s208 + $0xe10] sm:$0xff]
        %v1049 = vld [vmem:[%s208 + $0xe18] sm:$0xff]
        %v1050 = vld [vmem:[%s208 + $0xe20] sm:$0xff]
        %v1051 = vld [vmem:[%s208 + $0xe28] sm:$0xff]
        %v1052 = vld [vmem:[%s208 + $0xe30] sm:$0xff]
        %v1053 = vld [vmem:[%s208 + $0xe38] sm:$0xff]
        %v1054 = vld [vmem:[%s208 + $0xe40] sm:$0xff]
        %v1055 = vld [vmem:[%s208 + $0xe48] sm:$0xff]
        %v1056 = vld [vmem:[%s208 + $0xe50] sm:$0xff]
        %v1057 = vld [vmem:[%s208 + $0xe58] sm:$0xff]
        %v1058 = vld [vmem:[%s208 + $0xe60] sm:$0xff]
        %v1059 = vld [vmem:[%s208 + $0xe68] sm:$0xff]
        %v1060 = vld [vmem:[%s208 + $0xe70] sm:$0xff]
        %v1061 = vld [vmem:[%s208 + $0xe78] sm:$0xff]
        %v1062 = vld [vmem:[%s208 + $0xe80] sm:$0xff]
        %v1063 = vld [vmem:[%s208 + $0xe88] sm:$0xff]
        %v1064 = vld [vmem:[%s208 + $0xe90] sm:$0xff]
        %v1065 = vld [vmem:[%s208 + $0xe98] sm:$0xff]
        %v1066 = vld [vmem:[%s208 + $0xea0] sm:$0xff]
        %v1067 = vld [vmem:[%s208 + $0xea8] sm:$0xff]
        %v1068 = vld [vmem:[%s208 + $0xeb0] sm:$0xff]
        %v1069 = vld [vmem:[%s208 + $0xeb8] sm:$0xff]
        %v1070 = vld [vmem:[%s208 + $0xec0] sm:$0xff]
        %v1071 = vld [vmem:[%s208 + $0xec8] sm:$0xff]
        %v1072 = vld [vmem:[%s208 + $0xed0] sm:$0xff]
        %v1073 = vld [vmem:[%s208 + $0xed8] sm:$0xff]
        %v1074 = vld [vmem:[%s208 + $0xee0] sm:$0xff]
        %v1075 = vld [vmem:[%s208 + $0xee8] sm:$0xff]
        %v1076 = vld [vmem:[%s208 + $0xef0] sm:$0xff]
        %v1077 = vld [vmem:[%s208 + $0xef8] sm:$0xff]
        %v1078 = vld [vmem:[%s208 + $0xf00] sm:$0xff]
        %v1079 = vld [vmem:[%s208 + $0xf08] sm:$0xff]
        %v1080 = vld [vmem:[%s208 + $0xf10] sm:$0xff]
        %v1081 = vld [vmem:[%s208 + $0xf18] sm:$0xff]
        %v1082 = vld [vmem:[%s208 + $0xf20] sm:$0xff]
        %v1083 = vld [vmem:[%s208 + $0xf28] sm:$0xff]
        %v1084 = vld [vmem:[%s208 + $0xf30] sm:$0xff]
        %v1085 = vld [vmem:[%s208 + $0xf38] sm:$0xff]
        %v1086 = vld [vmem:[%s208 + $0xf40] sm:$0xff]
        %v1087 = vld [vmem:[%s208 + $0xf48] sm:$0xff]
        %v1088 = vld [vmem:[%s208 + $0xf50] sm:$0xff]
        %v1089 = vld [vmem:[%s208 + $0xf58] sm:$0xff]
        %v1090 = vld [vmem:[%s208 + $0xf60] sm:$0xff]
        %v1091 = vld [vmem:[%s208 + $0xf68] sm:$0xff]
        %v1092 = vld [vmem:[%s208 + $0xf70] sm:$0xff]
        %v1093 = vld [vmem:[%s208 + $0xf78] sm:$0xff]
        %v1094 = vld [vmem:[%s208 + $0xf80] sm:$0xff]
        %v1095 = vld [vmem:[%s208 + $0xf88] sm:$0xff]
        %v1096 = vld [vmem:[%s208 + $0xf90] sm:$0xff]
        %v1097 = vld [vmem:[%s208 + $0xf98] sm:$0xff]
        %v1098 = vld [vmem:[%s208 + $0xfa0] sm:$0xff]
        %v1099 = vld [vmem:[%s208 + $0xfa8] sm:$0xff]
        %v1100 = vld [vmem:[%s208 + $0xfb0] sm:$0xff]
        %v1101 = vld [vmem:[%s208 + $0xfb8] sm:$0xff]
        %v1102 = vld [vmem:[%s208 + $0xfc0] sm:$0xff]
        %v1103 = vld [vmem:[%s208 + $0xfc8] sm:$0xff]
        %v1104 = vld [vmem:[%s208 + $0xfd0] sm:$0xff]
        %v1105 = vld [vmem:[%s208 + $0xfd8] sm:$0xff]
        %v1106 = vld [vmem:[%s208 + $0xfe0] sm:$0xff]
        %v1107 = vld [vmem:[%s208 + $0xfe8] sm:$0xff]
        %v1108 = vld [vmem:[%s208 + $0xff0] sm:$0xff]
        %v1109 = vld [vmem:[%s208 + $0xff8] sm:$0xff]
        %v1110 = vld [vmem:[%s208 + $0x1000] sm:$0xff]
        %v1111 = vld [vmem:[%s208 + $0x1008] sm:$0xff]
        %v1112 = vld [vmem:[%s208 + $0x1010] sm:$0xff]
        %v1113 = vld [vmem:[%s208 + $0x1018] sm:$0xff]
        %v1114 = vld [vmem:[%s208 + $0x1020] sm:$0xff]
        %v1115 = vld [vmem:[%s208 + $0x1028] sm:$0xff]
        %v1116 = vld [vmem:[%s208 + $0x1030] sm:$0xff]
        %v1117 = vld [vmem:[%s208 + $0x1038] sm:$0xff]
        %v1118 = vld [vmem:[%s208 + $0x1040] sm:$0xff]
        %v1119 = vld [vmem:[%s208 + $0x1048] sm:$0xff]
        %v1120 = vld [vmem:[%s208 + $0x1050] sm:$0xff]
        %v1121 = vld [vmem:[%s208 + $0x1058] sm:$0xff]
        %v1122 = vld [vmem:[%s208 + $0x1060] sm:$0xff]
        %v1123 = vld [vmem:[%s208 + $0x1068] sm:$0xff]
        %v1124 = vld [vmem:[%s208 + $0x1070] sm:$0xff]
        %v1125 = vld [vmem:[%s208 + $0x1078] sm:$0xff]
        %v1126 = vld [vmem:[%s208 + $0x1080] sm:$0xff]
        %v1127 = vld [vmem:[%s208 + $0x1088] sm:$0xff]
        %v1128 = vld [vmem:[%s208 + $0x1090] sm:$0xff]
        %v1129 = vld [vmem:[%s208 + $0x1098] sm:$0xff]
        %v1130 = vld [vmem:[%s208 + $0x10a0] sm:$0xff]
        %v1131 = vld [vmem:[%s208 + $0x10a8] sm:$0xff]
        %v1132 = vld [vmem:[%s208 + $0x10b0] sm:$0xff]
        %v1133 = vld [vmem:[%s208 + $0x10b8] sm:$0xff]
        %v1134 = vld [vmem:[%s208 + $0x10c0] sm:$0xff]
        %v1135 = vld [vmem:[%s208 + $0x10c8] sm:$0xff]
        %v1136 = vld [vmem:[%s208 + $0x10d0] sm:$0xff]
        %v1137 = vld [vmem:[%s208 + $0x10d8] sm:$0xff]
        %v1138 = vld [vmem:[%s208 + $0x10e0] sm:$0xff]
        %v1139 = vld [vmem:[%s208 + $0x10e8] sm:$0xff]
        %v1140 = vld [vmem:[%s208 + $0x10f0] sm:$0xff]
        %v1141 = vld [vmem:[%s208 + $0x10f8] sm:$0xff]
        %v1142 = vld [vmem:[%s208 + $0x1100] sm:$0xff]
        %v1143 = vld [vmem:[%s208 + $0x1108] sm:$0xff]
        %v1144 = vld [vmem:[%s208 + $0x1110] sm:$0xff]
        %v1145 = vld [vmem:[%s208 + $0x1118] sm:$0xff]
        %v1146 = vld [vmem:[%s208 + $0x1120] sm:$0xff]
        %v1147 = vld [vmem:[%s208 + $0x1128] sm:$0xff]
        %v1148 = vld [vmem:[%s208 + $0x1130] sm:$0xff]
        %v1149 = vld [vmem:[%s208 + $0x1138] sm:$0xff]
        %v1150 = vld [vmem:[%s208 + $0x1140] sm:$0xff]
        %v1151 = vld [vmem:[%s208 + $0x1148] sm:$0xff]
        %v1152 = vld [vmem:[%s208 + $0x1150] sm:$0xff]
        %v1153 = vld [vmem:[%s208 + $0x1158] sm:$0xff]
        %v1154 = vld [vmem:[%s208 + $0x1160] sm:$0xff]
        %v1155 = vld [vmem:[%s208 + $0x1168] sm:$0xff]
        %v1156 = vld [vmem:[%s208 + $0x1170] sm:$0xff]
        %v1157 = vld [vmem:[%s208 + $0x1178] sm:$0xff]
        %v1158 = vld [vmem:[%s208 + $0x1180] sm:$0xff]
        %v1159 = vld [vmem:[%s208 + $0x1188] sm:$0xff]
        %v1160 = vld [vmem:[%s208 + $0x1190] sm:$0xff]
        %v1161 = vld [vmem:[%s208 + $0x1198] sm:$0xff]
        %v1162 = vld [vmem:[%s208 + $0x11a0] sm:$0xff]
        %v1163 = vld [vmem:[%s208 + $0x11a8] sm:$0xff]
        %v1164 = vld [vmem:[%s208 + $0x11b0] sm:$0xff]
        %v1165 = vld [vmem:[%s208 + $0x11b8] sm:$0xff]
        %v1166 = vld [vmem:[%s208 + $0x11c0] sm:$0xff]
        %v1167 = vld [vmem:[%s208 + $0x11c8] sm:$0xff]
        %v1168 = vld [vmem:[%s208 + $0x11d0] sm:$0xff]
        %v1169 = vld [vmem:[%s208 + $0x11d8] sm:$0xff]
        %v1170 = vld [vmem:[%s208 + $0x11e0] sm:$0xff]
        %v1171 = vld [vmem:[%s208 + $0x11e8] sm:$0xff]
        %v1172 = vld [vmem:[%s208 + $0x11f0] sm:$0xff]
        %v1173 = vld [vmem:[%s208 + $0x11f8] sm:$0xff]
        %v1174 = vld [vmem:[%s208 + $0x1200] sm:$0xff]
        %v1175 = vld [vmem:[%s208 + $0x1208] sm:$0xff]
        %v1176 = vld [vmem:[%s208 + $0x1210] sm:$0xff]
        %v1177 = vld [vmem:[%s208 + $0x1218] sm:$0xff]
        %v1178 = vld [vmem:[%s208 + $0x1220] sm:$0xff]
        %v1179 = vld [vmem:[%s208 + $0x1228] sm:$0xff]
        %v1180 = vld [vmem:[%s208 + $0x1230] sm:$0xff]
        %v1181 = vld [vmem:[%s208 + $0x1238] sm:$0xff]
        %v1182 = vld [vmem:[%s208 + $0x1240] sm:$0xff]
        %v1183 = vld [vmem:[%s208 + $0x1248] sm:$0xff]
        %v1184 = vld [vmem:[%s208 + $0x1250] sm:$0xff]
        %v1185 = vld [vmem:[%s208 + $0x1258] sm:$0xff]
        %v1186 = vld [vmem:[%s208 + $0x1260] sm:$0xff]
        %v1187 = vld [vmem:[%s208 + $0x1268] sm:$0xff]
        %v1188 = vld [vmem:[%s208 + $0x1270] sm:$0xff]
        %v1189 = vld [vmem:[%s208 + $0x1278] sm:$0xff]
        %v1190 = vld [vmem:[%s208 + $0x1280] sm:$0xff]
        %v1191 = vld [vmem:[%s208 + $0x1288] sm:$0xff]
        %v1192 = vld [vmem:[%s208 + $0x1290] sm:$0xff]
        %v1193 = vld [vmem:[%s208 + $0x1298] sm:$0xff]
        %v1194 = vld [vmem:[%s208 + $0x12a0] sm:$0xff]
        %v1195 = vld [vmem:[%s208 + $0x12a8] sm:$0xff]
        %v1196 = vld [vmem:[%s208 + $0x12b0] sm:$0xff]
        %v1197 = vld [vmem:[%s208 + $0x12b8] sm:$0xff]
        %v1198 = vld [vmem:[%s208 + $0x12c0] sm:$0xff]
        %v1199 = vld [vmem:[%s208 + $0x12c8] sm:$0xff]
        %v1200 = vld [vmem:[%s208 + $0x12d0] sm:$0xff]
        %v1201 = vld [vmem:[%s208 + $0x12d8] sm:$0xff]
        %v1202 = vld [vmem:[%s208 + $0x12e0] sm:$0xff]
        %v1203 = vld [vmem:[%s208 + $0x12e8] sm:$0xff]
        %v1204 = vld [vmem:[%s208 + $0x12f0] sm:$0xff]
        %v1205 = vld [vmem:[%s208 + $0x12f8] sm:$0xff]
        %v1206 = vld [vmem:[%s208 + $0x1300] sm:$0xff]
        %v1207 = vld [vmem:[%s208 + $0x1308] sm:$0xff]
        %v1208 = vld [vmem:[%s208 + $0x1310] sm:$0xff]
        %v1209 = vld [vmem:[%s208 + $0x1318] sm:$0xff]
        %v1210 = vld [vmem:[%s208 + $0x1320] sm:$0xff]
        %v1211 = vld [vmem:[%s208 + $0x1328] sm:$0xff]
        %v1212 = vld [vmem:[%s208 + $0x1330] sm:$0xff]
        %v1213 = vld [vmem:[%s208 + $0x1338] sm:$0xff]
        %v1214 = vld [vmem:[%s208 + $0x1340] sm:$0xff]
        %v1215 = vld [vmem:[%s208 + $0x1348] sm:$0xff]
        %v1216 = vld [vmem:[%s208 + $0x1350] sm:$0xff]
        %v1217 = vld [vmem:[%s208 + $0x1358] sm:$0xff]
        %v1218 = vld [vmem:[%s208 + $0x1360] sm:$0xff]
        %v1219 = vld [vmem:[%s208 + $0x1368] sm:$0xff]
        %v1220 = vld [vmem:[%s208 + $0x1370] sm:$0xff]
        %v1221 = vld [vmem:[%s208 + $0x1378] sm:$0xff]
        %v1222 = vld [vmem:[%s208 + $0x1380] sm:$0xff]
        %v1223 = vld [vmem:[%s208 + $0x1388] sm:$0xff]
        %v1224 = vld [vmem:[%s208 + $0x1390] sm:$0xff]
        %v1225 = vld [vmem:[%s208 + $0x1398] sm:$0xff]
        %v1226 = vld [vmem:[%s208 + $0x13a0] sm:$0xff]
        %v1227 = vld [vmem:[%s208 + $0x13a8] sm:$0xff]
        %v1228 = vld [vmem:[%s208 + $0x13b0] sm:$0xff]
        %v1229 = vld [vmem:[%s208 + $0x13b8] sm:$0xff]
        %v1230 = vld [vmem:[%s208 + $0x13c0] sm:$0xff]
        %v1231 = vld [vmem:[%s208 + $0x13c8] sm:$0xff]
        %v1232 = vld [vmem:[%s208 + $0x13d0] sm:$0xff]
        %v1233 = vld [vmem:[%s208 + $0x13d8] sm:$0xff]
        %v1234 = vld [vmem:[%s208 + $0x13e0] sm:$0xff]
        %v1235 = vld [vmem:[%s208 + $0x13e8] sm:$0xff]
        %v1236 = vld [vmem:[%s208 + $0x13f0] sm:$0xff]
        %v1237 = vld [vmem:[%s208 + $0x13f8] sm:$0xff]
        %v1238 = vld [vmem:[%s208 + $0x1400] sm:$0xff]
        %v1239 = vld [vmem:[%s208 + $0x1408] sm:$0xff]
        %v1240 = vld [vmem:[%s208 + $0x1410] sm:$0xff]
        %v1241 = vld [vmem:[%s208 + $0x1418] sm:$0xff]
        %v1242 = vld [vmem:[%s208 + $0x1420] sm:$0xff]
        %v1243 = vld [vmem:[%s208 + $0x1428] sm:$0xff]
        %v1244 = vld [vmem:[%s208 + $0x1430] sm:$0xff]
        %v1245 = vld [vmem:[%s208 + $0x1438] sm:$0xff]
        %v1246 = vld [vmem:[%s208 + $0x1440] sm:$0xff]
        %v1247 = vld [vmem:[%s208 + $0x1448] sm:$0xff]
        %v1248 = vld [vmem:[%s208 + $0x1450] sm:$0xff]
        %v1249 = vld [vmem:[%s208 + $0x1458] sm:$0xff]
        %v1250 = vld [vmem:[%s208 + $0x1460] sm:$0xff]
        %v1251 = vld [vmem:[%s208 + $0x1468] sm:$0xff]
        %v1252 = vld [vmem:[%s208 + $0x1470] sm:$0xff]
        %v1253 = vld [vmem:[%s208 + $0x1478] sm:$0xff]
        %v1254 = vld [vmem:[%s208 + $0x1480] sm:$0xff]
        %v1255 = vld [vmem:[%s208 + $0x1488] sm:$0xff]
        %v1256 = vld [vmem:[%s208 + $0x1490] sm:$0xff]
        %v1257 = vld [vmem:[%s208 + $0x1498] sm:$0xff]
        %v1258 = vld [vmem:[%s208 + $0x14a0] sm:$0xff]
        %v1259 = vld [vmem:[%s208 + $0x14a8] sm:$0xff]
        %v1260 = vld [vmem:[%s208 + $0x14b0] sm:$0xff]
        %v1261 = vld [vmem:[%s208 + $0x14b8] sm:$0xff]
        %v1262 = vld [vmem:[%s208 + $0x14c0] sm:$0xff]
        %v1263 = vld [vmem:[%s208 + $0x14c8] sm:$0xff]
        %v1264 = vld [vmem:[%s208 + $0x14d0] sm:$0xff]
        %v1265 = vld [vmem:[%s208 + $0x14d8] sm:$0xff]
        %v1266 = vld [vmem:[%s208 + $0x14e0] sm:$0xff]
        %v1267 = vld [vmem:[%s208 + $0x14e8] sm:$0xff]
        %v1268 = vld [vmem:[%s208 + $0x14f0] sm:$0xff]
        %v1269 = vld [vmem:[%s208 + $0x14f8] sm:$0xff]
        %v1270 = vld [vmem:[%s208 + $0x1500] sm:$0xff]
        %v1271 = vld [vmem:[%s208 + $0x1508] sm:$0xff]
        %v1272 = vld [vmem:[%s208 + $0x1510] sm:$0xff]
        %v1273 = vld [vmem:[%s208 + $0x1518] sm:$0xff]
        %v1274 = vld [vmem:[%s208 + $0x1520] sm:$0xff]
        %v1275 = vld [vmem:[%s208 + $0x1528] sm:$0xff]
        %v1276 = vld [vmem:[%s208 + $0x1530] sm:$0xff]
        %v1277 = vld [vmem:[%s208 + $0x1538] sm:$0xff]
        %v1278 = vld [vmem:[%s208 + $0x1540] sm:$0xff]
        %v1279 = vld [vmem:[%s208 + $0x1548] sm:$0xff]
        %v1280 = vld [vmem:[%s208 + $0x1550] sm:$0xff]
        %v1281 = vld [vmem:[%s208 + $0x1558] sm:$0xff]
        %v1282 = vld [vmem:[%s208 + $0x1560] sm:$0xff]
        %v1283 = vld [vmem:[%s208 + $0x1568] sm:$0xff]
        %v1284 = vld [vmem:[%s208 + $0x1570] sm:$0xff]
        %v1285 = vld [vmem:[%s208 + $0x1578] sm:$0xff]
        %v1286 = vld [vmem:[%s208 + $0x1580] sm:$0xff]
        %v1287 = vld [vmem:[%s208 + $0x1588] sm:$0xff]
        %v1288 = vld [vmem:[%s208 + $0x1590] sm:$0xff]
        %v1289 = vld [vmem:[%s208 + $0x1598] sm:$0xff]
        %v1290 = vld [vmem:[%s208 + $0x15a0] sm:$0xff]
        %v1291 = vld [vmem:[%s208 + $0x15a8] sm:$0xff]
        %v1292 = vld [vmem:[%s208 + $0x15b0] sm:$0xff]
        %v1293 = vld [vmem:[%s208 + $0x15b8] sm:$0xff]
        %v1294 = vld [vmem:[%s208 + $0x15c0] sm:$0xff]
        %v1295 = vld [vmem:[%s208 + $0x15c8] sm:$0xff]
        %v1296 = vld [vmem:[%s208 + $0x15d0] sm:$0xff]
        %v1297 = vld [vmem:[%s208 + $0x15d8] sm:$0xff]
        %v1298 = vld [vmem:[%s208 + $0x15e0] sm:$0xff]
        %v1299 = vld [vmem:[%s208 + $0x15e8] sm:$0xff]
        %v1300 = vld [vmem:[%s208 + $0x15f0] sm:$0xff]
        %v1301 = vld [vmem:[%s208 + $0x15f8] sm:$0xff]
        %v1302 = vld [vmem:[%s208 + $0x1600] sm:$0xff]
        %v1303 = vld [vmem:[%s208 + $0x1608] sm:$0xff]
        %v1304 = vld [vmem:[%s208 + $0x1610] sm:$0xff]
        %v1305 = vld [vmem:[%s208 + $0x1618] sm:$0xff]
        %v1306 = vld [vmem:[%s208 + $0x1620] sm:$0xff]
        %v1307 = vld [vmem:[%s208 + $0x1628] sm:$0xff]
        %v1308 = vld [vmem:[%s208 + $0x1630] sm:$0xff]
        %v1309 = vld [vmem:[%s208 + $0x1638] sm:$0xff]
        %v1310 = vld [vmem:[%s208 + $0x1640] sm:$0xff]
        %v1311 = vld [vmem:[%s208 + $0x1648] sm:$0xff]
        %v1312 = vld [vmem:[%s208 + $0x1650] sm:$0xff]
        %v1313 = vld [vmem:[%s208 + $0x1658] sm:$0xff]
        %v1314 = vld [vmem:[%s208 + $0x1660] sm:$0xff]
        %v1315 = vld [vmem:[%s208 + $0x1668] sm:$0xff]
        %v1316 = vld [vmem:[%s208 + $0x1670] sm:$0xff]
        %v1317 = vld [vmem:[%s208 + $0x1678] sm:$0xff]
        %v1318 = vld [vmem:[%s208 + $0x1680] sm:$0xff]
        %v1319 = vld [vmem:[%s208 + $0x1688] sm:$0xff]
        %v1320 = vld [vmem:[%s208 + $0x1690] sm:$0xff]
        %v1321 = vld [vmem:[%s208 + $0x1698] sm:$0xff]
        %v1322 = vld [vmem:[%s208 + $0x16a0] sm:$0xff]
        %v1323 = vld [vmem:[%s208 + $0x16a8] sm:$0xff]
        %v1324 = vld [vmem:[%s208 + $0x16b0] sm:$0xff]
        %v1325 = vld [vmem:[%s208 + $0x16b8] sm:$0xff]
        %v1326 = vld [vmem:[%s208 + $0x16c0] sm:$0xff]
        %v1327 = vld [vmem:[%s208 + $0x16c8] sm:$0xff]
        %v1328 = vld [vmem:[%s208 + $0x16d0] sm:$0xff]
        %v1329 = vld [vmem:[%s208 + $0x16d8] sm:$0xff]
        %v1330 = vld [vmem:[%s208 + $0x16e0] sm:$0xff]
        %v1331 = vld [vmem:[%s208 + $0x16e8] sm:$0xff]
        %v1332 = vld [vmem:[%s208 + $0x16f0] sm:$0xff]
        %v1333 = vld [vmem:[%s208 + $0x16f8] sm:$0xff]
        %v1334 = vld [vmem:[%s208 + $0x1700] sm:$0xff]
        %v1335 = vld [vmem:[%s208 + $0x1708] sm:$0xff]
        %v1336 = vld [vmem:[%s208 + $0x1710] sm:$0xff]
        %v1337 = vld [vmem:[%s208 + $0x1718] sm:$0xff]
        %v1338 = vld [vmem:[%s208 + $0x1720] sm:$0xff]
        %v1339 = vld [vmem:[%s208 + $0x1728] sm:$0xff]
        %v1340 = vld [vmem:[%s208 + $0x1730] sm:$0xff]
        %v1341 = vld [vmem:[%s208 + $0x1738] sm:$0xff]
        %v1342 = vld [vmem:[%s208 + $0x1740] sm:$0xff]
        %v1343 = vld [vmem:[%s208 + $0x1748] sm:$0xff]
        %v1344 = vld [vmem:[%s208 + $0x1750] sm:$0xff]
        %v1345 = vld [vmem:[%s208 + $0x1758] sm:$0xff]
        %v1346 = vld [vmem:[%s208 + $0x1760] sm:$0xff]
        %v1347 = vld [vmem:[%s208 + $0x1768] sm:$0xff]
        %v1348 = vld [vmem:[%s208 + $0x1770] sm:$0xff]
        %v1349 = vld [vmem:[%s208 + $0x1778] sm:$0xff]
        %v1350 = vld [vmem:[%s208 + $0x1780] sm:$0xff]
        %v1351 = vld [vmem:[%s208 + $0x1788] sm:$0xff]
        %v1352 = vld [vmem:[%s208 + $0x1790] sm:$0xff]
        %v1353 = vld [vmem:[%s208 + $0x1798] sm:$0xff]
        %v1354 = vld [vmem:[%s208 + $0x17a0] sm:$0xff]
        %v1355 = vld [vmem:[%s208 + $0x17a8] sm:$0xff]
        %v1356 = vld [vmem:[%s208 + $0x17b0] sm:$0xff]
        %v1357 = vld [vmem:[%s208 + $0x17b8] sm:$0xff]
        %v1358 = vld [vmem:[%s208 + $0x17c0] sm:$0xff]
        %v1359 = vld [vmem:[%s208 + $0x17c8] sm:$0xff]
        %v1360 = vld [vmem:[%s208 + $0x17d0] sm:$0xff]
        %v1361 = vld [vmem:[%s208 + $0x17d8] sm:$0xff]
        %v1362 = vld [vmem:[%s208 + $0x17e0] sm:$0xff]
        %v1363 = vld [vmem:[%s208 + $0x17e8] sm:$0xff]
        %v1364 = vld [vmem:[%s208 + $0x17f0] sm:$0xff]
        %v1365 = vld [vmem:[%s208 + $0x17f8] sm:$0xff]
        %v1366 = vld [vmem:[%s208 + $0x1800] sm:$0xff]
        %v1367 = vld [vmem:[%s208 + $0x1808] sm:$0xff]
        %v1368 = vld [vmem:[%s208 + $0x1810] sm:$0xff]
        %v1369 = vld [vmem:[%s208 + $0x1818] sm:$0xff]
        %v1370 = vld [vmem:[%s208 + $0x1820] sm:$0xff]
        %v1371 = vld [vmem:[%s208 + $0x1828] sm:$0xff]
        %v1372 = vld [vmem:[%s208 + $0x1830] sm:$0xff]
        %v1373 = vld [vmem:[%s208 + $0x1838] sm:$0xff]
        %v1374 = vld [vmem:[%s208 + $0x1840] sm:$0xff]
        %v1375 = vld [vmem:[%s208 + $0x1848] sm:$0xff]
        %v1376 = vld [vmem:[%s208 + $0x1850] sm:$0xff]
        %v1377 = vld [vmem:[%s208 + $0x1858] sm:$0xff]
        %v1378 = vld [vmem:[%s208 + $0x1860] sm:$0xff]
        %v1379 = vld [vmem:[%s208 + $0x1868] sm:$0xff]
        %v1380 = vld [vmem:[%s208 + $0x1870] sm:$0xff]
        %v1381 = vld [vmem:[%s208 + $0x1878] sm:$0xff]
        %v1382 = vld [vmem:[%s208 + $0x1880] sm:$0xff]
        %v1383 = vld [vmem:[%s208 + $0x1888] sm:$0xff]
        %v1384 = vld [vmem:[%s208 + $0x1890] sm:$0xff]
        %v1385 = vld [vmem:[%s208 + $0x1898] sm:$0xff]
        %v1386 = vld [vmem:[%s208 + $0x18a0] sm:$0xff]
        %v1387 = vld [vmem:[%s208 + $0x18a8] sm:$0xff]
        %v1388 = vld [vmem:[%s208 + $0x18b0] sm:$0xff]
        %v1389 = vld [vmem:[%s208 + $0x18b8] sm:$0xff]
        %v1390 = vld [vmem:[%s208 + $0x18c0] sm:$0xff]
        %v1391 = vld [vmem:[%s208 + $0x18c8] sm:$0xff]
        %v1392 = vld [vmem:[%s208 + $0x18d0] sm:$0xff]
        %v1393 = vld [vmem:[%s208 + $0x18d8] sm:$0xff]
        %v1394 = vld [vmem:[%s208 + $0x18e0] sm:$0xff]
        %v1395 = vld [vmem:[%s208 + $0x18e8] sm:$0xff]
        %v1396 = vld [vmem:[%s208 + $0x18f0] sm:$0xff]
        %v1397 = vld [vmem:[%s208 + $0x18f8] sm:$0xff]
        %v1398 = vld [vmem:[%s208 + $0x1900] sm:$0xff]
        %v1399 = vld [vmem:[%s208 + $0x1908] sm:$0xff]
        %v1400 = vld [vmem:[%s208 + $0x1910] sm:$0xff]
        %v1401 = vld [vmem:[%s208 + $0x1918] sm:$0xff]
        %v1402 = vld [vmem:[%s208 + $0x1920] sm:$0xff]
        %v1403 = vld [vmem:[%s208 + $0x1928] sm:$0xff]
        %v1404 = vld [vmem:[%s208 + $0x1930] sm:$0xff]
        %v1405 = vld [vmem:[%s208 + $0x1938] sm:$0xff]
        %v1406 = vld [vmem:[%s208 + $0x1940] sm:$0xff]
        %v1407 = vld [vmem:[%s208 + $0x1948] sm:$0xff]
        %v1408 = vld [vmem:[%s208 + $0x1950] sm:$0xff]
        %v1409 = vld [vmem:[%s208 + $0x1958] sm:$0xff]
        %v1410 = vld [vmem:[%s208 + $0x1960] sm:$0xff]
        %v1411 = vld [vmem:[%s208 + $0x1968] sm:$0xff]
        %v1412 = vld [vmem:[%s208 + $0x1970] sm:$0xff]
        %v1413 = vld [vmem:[%s208 + $0x1978] sm:$0xff]
        %v1414 = vld [vmem:[%s208 + $0x1980] sm:$0xff]
        %v1415 = vld [vmem:[%s208 + $0x1988] sm:$0xff]
        %v1416 = vld [vmem:[%s208 + $0x1990] sm:$0xff]
        %v1417 = vld [vmem:[%s208 + $0x1998] sm:$0xff]
        %v1418 = vld [vmem:[%s208 + $0x19a0] sm:$0xff]
        %v1419 = vld [vmem:[%s208 + $0x19a8] sm:$0xff]
        %v1420 = vld [vmem:[%s208 + $0x19b0] sm:$0xff]
        %v1421 = vld [vmem:[%s208 + $0x19b8] sm:$0xff]
        %v1422 = vld [vmem:[%s208 + $0x19c0] sm:$0xff]
        %v1423 = vld [vmem:[%s208 + $0x19c8] sm:$0xff]
        %v1424 = vld [vmem:[%s208 + $0x19d0] sm:$0xff]
        %v1425 = vld [vmem:[%s208 + $0x19d8] sm:$0xff]
        %v1426 = vld [vmem:[%s208 + $0x19e0] sm:$0xff]
        %v1427 = vld [vmem:[%s208 + $0x19e8] sm:$0xff]
        %v1428 = vld [vmem:[%s208 + $0x19f0] sm:$0xff]
        %v1429 = vld [vmem:[%s208 + $0x19f8] sm:$0xff]
        %v1430 = vld [vmem:[%s208 + $0x1a00] sm:$0xff]
        %v1431 = vld [vmem:[%s208 + $0x1a08] sm:$0xff]
        %v1432 = vld [vmem:[%s208 + $0x1a10] sm:$0xff]
        %v1433 = vld [vmem:[%s208 + $0x1a18] sm:$0xff]
        %v1434 = vld [vmem:[%s208 + $0x1a20] sm:$0xff]
        %v1435 = vld [vmem:[%s208 + $0x1a28] sm:$0xff]
        %v1436 = vld [vmem:[%s208 + $0x1a30] sm:$0xff]
        %v1437 = vld [vmem:[%s208 + $0x1a38] sm:$0xff]
        %v1438 = vld [vmem:[%s208 + $0x1a40] sm:$0xff]
        %v1439 = vld [vmem:[%s208 + $0x1a48] sm:$0xff]
        %v1440 = vld [vmem:[%s208 + $0x1a50] sm:$0xff]
        %v1441 = vld [vmem:[%s208 + $0x1a58] sm:$0xff]
        %v1442 = vld [vmem:[%s208 + $0x1a60] sm:$0xff]
        %v1443 = vld [vmem:[%s208 + $0x1a68] sm:$0xff]
        %v1444 = vld [vmem:[%s208 + $0x1a70] sm:$0xff]
        %v1445 = vld [vmem:[%s208 + $0x1a78] sm:$0xff]
        %v1446 = vld [vmem:[%s208 + $0x1a80] sm:$0xff]
        %v1447 = vld [vmem:[%s208 + $0x1a88] sm:$0xff]
        %v1448 = vld [vmem:[%s208 + $0x1a90] sm:$0xff]
        %v1449 = vld [vmem:[%s208 + $0x1a98] sm:$0xff]
        %v1450 = vld [vmem:[%s208 + $0x1aa0] sm:$0xff]
        %v1451 = vld [vmem:[%s208 + $0x1aa8] sm:$0xff]
        %v1452 = vld [vmem:[%s208 + $0x1ab0] sm:$0xff]
        %v1453 = vld [vmem:[%s208 + $0x1ab8] sm:$0xff]
        %v1454 = vld [vmem:[%s208 + $0x1ac0] sm:$0xff]
        %v1455 = vld [vmem:[%s208 + $0x1ac8] sm:$0xff]
        %v1456 = vld [vmem:[%s208 + $0x1ad0] sm:$0xff]
        %v1457 = vld [vmem:[%s208 + $0x1ad8] sm:$0xff]
        %v1458 = vld [vmem:[%s208 + $0x1ae0] sm:$0xff]
        %v1459 = vld [vmem:[%s208 + $0x1ae8] sm:$0xff]
        %v1460 = vld [vmem:[%s208 + $0x1af0] sm:$0xff]
        %v1461 = vld [vmem:[%s208 + $0x1af8] sm:$0xff]
        %v1462 = vld [vmem:[%s208 + $0x1b00] sm:$0xff]
        %v1463 = vld [vmem:[%s208 + $0x1b08] sm:$0xff]
        %v1464 = vld [vmem:[%s208 + $0x1b10] sm:$0xff]
        %v1465 = vld [vmem:[%s208 + $0x1b18] sm:$0xff]
        %v1466 = vld [vmem:[%s208 + $0x1b20] sm:$0xff]
        %v1467 = vld [vmem:[%s208 + $0x1b28] sm:$0xff]
        %v1468 = vld [vmem:[%s208 + $0x1b30] sm:$0xff]
        %v1469 = vld [vmem:[%s208 + $0x1b38] sm:$0xff]
        %v1470 = vld [vmem:[%s208 + $0x1b40] sm:$0xff]
        %v1471 = vld [vmem:[%s208 + $0x1b48] sm:$0xff]
        %v1472 = vld [vmem:[%s208 + $0x1b50] sm:$0xff]
        %v1473 = vld [vmem:[%s208 + $0x1b58] sm:$0xff]
        %v1474 = vld [vmem:[%s208 + $0x1b60] sm:$0xff]
        %v1475 = vld [vmem:[%s208 + $0x1b68] sm:$0xff]
        %v1476 = vld [vmem:[%s208 + $0x1b70] sm:$0xff]
        %v1477 = vld [vmem:[%s208 + $0x1b78] sm:$0xff]
        %v1478 = vld [vmem:[%s208 + $0x1b80] sm:$0xff]
        %v1479 = vld [vmem:[%s208 + $0x1b88] sm:$0xff]
        %v1480 = vld [vmem:[%s208 + $0x1b90] sm:$0xff]
        %v1481 = vld [vmem:[%s208 + $0x1b98] sm:$0xff]
        %v1482 = vld [vmem:[%s208 + $0x1ba0] sm:$0xff]
        %v1483 = vld [vmem:[%s208 + $0x1ba8] sm:$0xff]
        %v1484 = vld [vmem:[%s208 + $0x1bb0] sm:$0xff]
        %v1485 = vld [vmem:[%s208 + $0x1bb8] sm:$0xff]
        %v1486 = vld [vmem:[%s208 + $0x1bc0] sm:$0xff]
        %v1487 = vld [vmem:[%s208 + $0x1bc8] sm:$0xff]
        %v1488 = vld [vmem:[%s208 + $0x1bd0] sm:$0xff]
        %v1489 = vld [vmem:[%s208 + $0x1bd8] sm:$0xff]
        %v1490 = vld [vmem:[%s208 + $0x1be0] sm:$0xff]
        %v1491 = vld [vmem:[%s208 + $0x1be8] sm:$0xff]
        %v1492 = vld [vmem:[%s208 + $0x1bf0] sm:$0xff]
        %v1493 = vld [vmem:[%s208 + $0x1bf8] sm:$0xff]
        %v1494 = vld [vmem:[%s208 + $0x1c00] sm:$0xff]
        %v1495 = vld [vmem:[%s208 + $0x1c08] sm:$0xff]
        %v1496 = vld [vmem:[%s208 + $0x1c10] sm:$0xff]
        %v1497 = vld [vmem:[%s208 + $0x1c18] sm:$0xff]
        %v1498 = vld [vmem:[%s208 + $0x1c20] sm:$0xff]
        %v1499 = vld [vmem:[%s208 + $0x1c28] sm:$0xff]
        %v1500 = vld [vmem:[%s208 + $0x1c30] sm:$0xff]
        %v1501 = vld [vmem:[%s208 + $0x1c38] sm:$0xff]
        %v1502 = vld [vmem:[%s208 + $0x1c40] sm:$0xff]
        %v1503 = vld [vmem:[%s208 + $0x1c48] sm:$0xff]
        %v1504 = vld [vmem:[%s208 + $0x1c50] sm:$0xff]
        %v1505 = vld [vmem:[%s208 + $0x1c58] sm:$0xff]
        %v1506 = vld [vmem:[%s208 + $0x1c60] sm:$0xff]
        %v1507 = vld [vmem:[%s208 + $0x1c68] sm:$0xff]
        %v1508 = vld [vmem:[%s208 + $0x1c70] sm:$0xff]
        %v1509 = vld [vmem:[%s208 + $0x1c78] sm:$0xff]
        %v1510 = vld [vmem:[%s208 + $0x1c80] sm:$0xff]
        %v1511 = vld [vmem:[%s208 + $0x1c88] sm:$0xff]
        %v1512 = vld [vmem:[%s208 + $0x1c90] sm:$0xff]
        %v1513 = vld [vmem:[%s208 + $0x1c98] sm:$0xff]
        %v1514 = vld [vmem:[%s208 + $0x1ca0] sm:$0xff]
        %v1515 = vld [vmem:[%s208 + $0x1ca8] sm:$0xff]
        %v1516 = vld [vmem:[%s208 + $0x1cb0] sm:$0xff]
        %v1517 = vld [vmem:[%s208 + $0x1cb8] sm:$0xff]
        %v1518 = vld [vmem:[%s208 + $0x1cc0] sm:$0xff]
        %v1519 = vld [vmem:[%s208 + $0x1cc8] sm:$0xff]
        %v1520 = vld [vmem:[%s208 + $0x1cd0] sm:$0xff]
        %v1521 = vld [vmem:[%s208 + $0x1cd8] sm:$0xff]
        %v1522 = vld [vmem:[%s208 + $0x1ce0] sm:$0xff]
        %v1523 = vld [vmem:[%s208 + $0x1ce8] sm:$0xff]
        %v1524 = vld [vmem:[%s208 + $0x1cf0] sm:$0xff]
        %v1525 = vld [vmem:[%s208 + $0x1cf8] sm:$0xff]
        %v1526 = vld [vmem:[%s208 + $0x1d00] sm:$0xff]
        %v1527 = vld [vmem:[%s208 + $0x1d08] sm:$0xff]
        %v1528 = vld [vmem:[%s208 + $0x1d10] sm:$0xff]
        %v1529 = vld [vmem:[%s208 + $0x1d18] sm:$0xff]
        %v1530 = vld [vmem:[%s208 + $0x1d20] sm:$0xff]
        %v1531 = vld [vmem:[%s208 + $0x1d28] sm:$0xff]
        %v1532 = vld [vmem:[%s208 + $0x1d30] sm:$0xff]
        %v1533 = vld [vmem:[%s208 + $0x1d38] sm:$0xff]
        %v1534 = vld [vmem:[%s208 + $0x1d40] sm:$0xff]
        %v1535 = vld [vmem:[%s208 + $0x1d48] sm:$0xff]
        %v1536 = vld [vmem:[%s208 + $0x1d50] sm:$0xff]
        %v1537 = vld [vmem:[%s208 + $0x1d58] sm:$0xff]
        %v1538 = vld [vmem:[%s208 + $0x1d60] sm:$0xff]
        %v1539 = vld [vmem:[%s208 + $0x1d68] sm:$0xff]
        %v1540 = vld [vmem:[%s208 + $0x1d70] sm:$0xff]
        %v1541 = vld [vmem:[%s208 + $0x1d78] sm:$0xff]
        %v1542 = vld [vmem:[%s208 + $0x1d80] sm:$0xff]
        %v1543 = vld [vmem:[%s208 + $0x1d88] sm:$0xff]
        %v1544 = vld [vmem:[%s208 + $0x1d90] sm:$0xff]
        %v1545 = vld [vmem:[%s208 + $0x1d98] sm:$0xff]
        %v1546 = vld [vmem:[%s208 + $0x1da0] sm:$0xff]
        %v1547 = vld [vmem:[%s208 + $0x1da8] sm:$0xff]
        %v1548 = vld [vmem:[%s208 + $0x1db0] sm:$0xff]
        %v1549 = vld [vmem:[%s208 + $0x1db8] sm:$0xff]
        %v1550 = vld [vmem:[%s208 + $0x1dc0] sm:$0xff]
        %v1551 = vld [vmem:[%s208 + $0x1dc8] sm:$0xff]
        %v1552 = vld [vmem:[%s208 + $0x1dd0] sm:$0xff]
        %v1553 = vld [vmem:[%s208 + $0x1dd8] sm:$0xff]
        %v1554 = vld [vmem:[%s208 + $0x1de0] sm:$0xff]
        %v1555 = vld [vmem:[%s208 + $0x1de8] sm:$0xff]
        %v1556 = vld [vmem:[%s208 + $0x1df0] sm:$0xff]
        %v1557 = vld [vmem:[%s208 + $0x1df8] sm:$0xff]
        %v1558 = vld [vmem:[%s208 + $0x1e00] sm:$0xff]
        %v1559 = vld [vmem:[%s208 + $0x1e08] sm:$0xff]
        %v1560 = vld [vmem:[%s208 + $0x1e10] sm:$0xff]
        %v1561 = vld [vmem:[%s208 + $0x1e18] sm:$0xff]
        %v1562 = vld [vmem:[%s208 + $0x1e20] sm:$0xff]
        %v1563 = vld [vmem:[%s208 + $0x1e28] sm:$0xff]
        %v1564 = vld [vmem:[%s208 + $0x1e30] sm:$0xff]
        %v1565 = vld [vmem:[%s208 + $0x1e38] sm:$0xff]
        %v1566 = vld [vmem:[%s208 + $0x1e40] sm:$0xff]
        %v1567 = vld [vmem:[%s208 + $0x1e48] sm:$0xff]
        %v1568 = vld [vmem:[%s208 + $0x1e50] sm:$0xff]
        %v1569 = vld [vmem:[%s208 + $0x1e58] sm:$0xff]
        %v1570 = vld [vmem:[%s208 + $0x1e60] sm:$0xff]
        %v1571 = vld [vmem:[%s208 + $0x1e68] sm:$0xff]
        %v1572 = vld [vmem:[%s208 + $0x1e70] sm:$0xff]
        %v1573 = vld [vmem:[%s208 + $0x1e78] sm:$0xff]
        %v1574 = vld [vmem:[%s208 + $0x1e80] sm:$0xff]
        %v1575 = vld [vmem:[%s208 + $0x1e88] sm:$0xff]
        %v1576 = vld [vmem:[%s208 + $0x1e90] sm:$0xff]
        %v1577 = vld [vmem:[%s208 + $0x1e98] sm:$0xff]
        %v1578 = vld [vmem:[%s208 + $0x1ea0] sm:$0xff]
        %v1579 = vld [vmem:[%s208 + $0x1ea8] sm:$0xff]
        %v1580 = vld [vmem:[%s208 + $0x1eb0] sm:$0xff]
        %v1581 = vld [vmem:[%s208 + $0x1eb8] sm:$0xff]
        %v1582 = vld [vmem:[%s208 + $0x1ec0] sm:$0xff]
        %v1583 = vld [vmem:[%s208 + $0x1ec8] sm:$0xff]
        %v1584 = vld [vmem:[%s208 + $0x1ed0] sm:$0xff]
        %v1585 = vld [vmem:[%s208 + $0x1ed8] sm:$0xff]
        %v1586 = vld [vmem:[%s208 + $0x1ee0] sm:$0xff]
        %v1587 = vld [vmem:[%s208 + $0x1ee8] sm:$0xff]
        %v1588 = vld [vmem:[%s208 + $0x1ef0] sm:$0xff]
        %v1589 = vld [vmem:[%s208 + $0x1ef8] sm:$0xff]
        %v1590 = vld [vmem:[%s208 + $0x1f00] sm:$0xff]
        %v1591 = vld [vmem:[%s208 + $0x1f08] sm:$0xff]
        %v1592 = vld [vmem:[%s208 + $0x1f10] sm:$0xff]
        %v1593 = vld [vmem:[%s208 + $0x1f18] sm:$0xff]
        %v1594 = vld [vmem:[%s208 + $0x1f20] sm:$0xff]
        %v1595 = vld [vmem:[%s208 + $0x1f28] sm:$0xff]
        %v1596 = vld [vmem:[%s208 + $0x1f30] sm:$0xff]
        %v1597 = vld [vmem:[%s208 + $0x1f38] sm:$0xff]
        %v1598 = vld [vmem:[%s208 + $0x1f40] sm:$0xff]
        %v1599 = vld [vmem:[%s208 + $0x1f48] sm:$0xff]
        %v1600 = vld [vmem:[%s208 + $0x1f50] sm:$0xff]
        %v1601 = vld [vmem:[%s208 + $0x1f58] sm:$0xff]
        %v1602 = vld [vmem:[%s208 + $0x1f60] sm:$0xff]
        %v1603 = vld [vmem:[%s208 + $0x1f68] sm:$0xff]
        %v1604 = vld [vmem:[%s208 + $0x1f70] sm:$0xff]
        %v1605 = vld [vmem:[%s208 + $0x1f78] sm:$0xff]
        %v1606 = vld [vmem:[%s208 + $0x1f80] sm:$0xff]
        %v1607 = vld [vmem:[%s208 + $0x1f88] sm:$0xff]
        %v1608 = vld [vmem:[%s208 + $0x1f90] sm:$0xff]
        %v1609 = vld [vmem:[%s208 + $0x1f98] sm:$0xff]
        %v1610 = vld [vmem:[%s208 + $0x1fa0] sm:$0xff]
        %v1611 = vld [vmem:[%s208 + $0x1fa8] sm:$0xff]
        %v1612 = vld [vmem:[%s208 + $0x1fb0] sm:$0xff]
        %v1613 = vld [vmem:[%s208 + $0x1fb8] sm:$0xff]
        %v1614 = vld [vmem:[%s208 + $0x1fc0] sm:$0xff]
        %v1615 = vld [vmem:[%s208 + $0x1fc8] sm:$0xff]
        %v1616 = vld [vmem:[%s208 + $0x1fd0] sm:$0xff]
        %v1617 = vld [vmem:[%s208 + $0x1fd8] sm:$0xff]
        %v1618 = vld [vmem:[%s208 + $0x1fe0] sm:$0xff]
        %v1619 = vld [vmem:[%s208 + $0x1fe8] sm:$0xff]
        %v1620 = vld [vmem:[%s208 + $0x1ff0] sm:$0xff]
        %v1621 = vld [vmem:[%s208 + $0x1ff8] sm:$0xff]
        %v1622 = vld [vmem:[%s208 + $0x2000] sm:$0xff]
        %v1623 = vld [vmem:[%s208 + $0x2008] sm:$0xff]
        %v1624 = vld [vmem:[%s208 + $0x2010] sm:$0xff]
        %v1625 = vld [vmem:[%s208 + $0x2018] sm:$0xff]
        %v1626 = vld [vmem:[%s208 + $0x2020] sm:$0xff]
        %v1627 = vld [vmem:[%s208 + $0x2028] sm:$0xff]
        %v1628 = vld [vmem:[%s208 + $0x2030] sm:$0xff]
        %v1629 = vld [vmem:[%s208 + $0x2038] sm:$0xff]
        %v1630 = vld [vmem:[%s208 + $0x2040] sm:$0xff]
        %v1631 = vld [vmem:[%s208 + $0x2048] sm:$0xff]
        %v1632 = vld [vmem:[%s208 + $0x2050] sm:$0xff]
        %v1633 = vld [vmem:[%s208 + $0x2058] sm:$0xff]
        %v1634 = vld [vmem:[%s208 + $0x2060] sm:$0xff]
        %v1635 = vld [vmem:[%s208 + $0x2068] sm:$0xff]
        %v1636 = vld [vmem:[%s208 + $0x2070] sm:$0xff]
        %v1637 = vld [vmem:[%s208 + $0x2078] sm:$0xff]
        %v1638 = vld [vmem:[%s208 + $0x2080] sm:$0xff]
        %v1639 = vld [vmem:[%s208 + $0x2088] sm:$0xff]
        %v1640 = vld [vmem:[%s208 + $0x2090] sm:$0xff]
        %v1641 = vld [vmem:[%s208 + $0x2098] sm:$0xff]
        %v1642 = vld [vmem:[%s208 + $0x20a0] sm:$0xff]
        %v1643 = vld [vmem:[%s208 + $0x20a8] sm:$0xff]
        %v1644 = vld [vmem:[%s208 + $0x20b0] sm:$0xff]
        %v1645 = vld [vmem:[%s208 + $0x20b8] sm:$0xff]
        %v1646 = vld [vmem:[%s208 + $0x20c0] sm:$0xff]
        %v1647 = vld [vmem:[%s208 + $0x20c8] sm:$0xff]
        %v1648 = vld [vmem:[%s208 + $0x20d0] sm:$0xff]
        %v1649 = vld [vmem:[%s208 + $0x20d8] sm:$0xff]
        %v1650 = vld [vmem:[%s208 + $0x20e0] sm:$0xff]
        %v1651 = vld [vmem:[%s208 + $0x20e8] sm:$0xff]
        %v1652 = vld [vmem:[%s208 + $0x20f0] sm:$0xff]
        %v1653 = vld [vmem:[%s208 + $0x20f8] sm:$0xff]
        %v1654 = vld [vmem:[%s208 + $0x2100] sm:$0xff]
        %v1655 = vld [vmem:[%s208 + $0x2108] sm:$0xff]
        %v1656 = vld [vmem:[%s208 + $0x2110] sm:$0xff]
        %v1657 = vld [vmem:[%s208 + $0x2118] sm:$0xff]
        %v1658 = vld [vmem:[%s208 + $0x2120] sm:$0xff]
        %v1659 = vld [vmem:[%s208 + $0x2128] sm:$0xff]
        %v1660 = vld [vmem:[%s208 + $0x2130] sm:$0xff]
        %v1661 = vld [vmem:[%s208 + $0x2138] sm:$0xff]
        %v1662 = vld [vmem:[%s208 + $0x2140] sm:$0xff]
        %v1663 = vld [vmem:[%s208 + $0x2148] sm:$0xff]
        %v1664 = vld [vmem:[%s208 + $0x2150] sm:$0xff]
        %v1665 = vld [vmem:[%s208 + $0x2158] sm:$0xff]
        %v1666 = vld [vmem:[%s208 + $0x2160] sm:$0xff]
        %v1667 = vld [vmem:[%s208 + $0x2168] sm:$0xff]
        %v1668 = vld [vmem:[%s208 + $0x2170] sm:$0xff]
        %v1669 = vld [vmem:[%s208 + $0x2178] sm:$0xff]
        %v1670 = vld [vmem:[%s208 + $0x2180] sm:$0xff]
        %v1671 = vld [vmem:[%s208 + $0x2188] sm:$0xff]
        %v1672 = vld [vmem:[%s208 + $0x2190] sm:$0xff]
        %v1673 = vld [vmem:[%s208 + $0x2198] sm:$0xff]
        %v1674 = vld [vmem:[%s208 + $0x21a0] sm:$0xff]
        %v1675 = vld [vmem:[%s208 + $0x21a8] sm:$0xff]
        %v1676 = vld [vmem:[%s208 + $0x21b0] sm:$0xff]
        %v1677 = vld [vmem:[%s208 + $0x21b8] sm:$0xff]
        %v1678 = vld [vmem:[%s208 + $0x21c0] sm:$0xff]
        %v1679 = vld [vmem:[%s208 + $0x21c8] sm:$0xff]
        %v1680 = vld [vmem:[%s208 + $0x21d0] sm:$0xff]
        %v1681 = vld [vmem:[%s208 + $0x21d8] sm:$0xff]
        %v1682 = vld [vmem:[%s208 + $0x21e0] sm:$0xff]
        %v1683 = vld [vmem:[%s208 + $0x21e8] sm:$0xff]
        %v1684 = vld [vmem:[%s208 + $0x21f0] sm:$0xff]
        %v1685 = vld [vmem:[%s208 + $0x21f8] sm:$0xff]
        %v1686 = vld [vmem:[%s208 + $0x2200] sm:$0xff]
        %v1687 = vld [vmem:[%s208 + $0x2208] sm:$0xff]
        %v1688 = vld [vmem:[%s208 + $0x2210] sm:$0xff]
        %v1689 = vld [vmem:[%s208 + $0x2218] sm:$0xff]
        %v1690 = vld [vmem:[%s208 + $0x2220] sm:$0xff]
        %v1691 = vld [vmem:[%s208 + $0x2228] sm:$0xff]
        %v1692 = vld [vmem:[%s208 + $0x2230] sm:$0xff]
        %v1693 = vld [vmem:[%s208 + $0x2238] sm:$0xff]
        %v1694 = vld [vmem:[%s208 + $0x2240] sm:$0xff]
        %v1695 = vld [vmem:[%s208 + $0x2248] sm:$0xff]
        %v1696 = vld [vmem:[%s208 + $0x2250] sm:$0xff]
        %v1697 = vld [vmem:[%s208 + $0x2258] sm:$0xff]
        %v1698 = vld [vmem:[%s208 + $0x2260] sm:$0xff]
        %v1699 = vld [vmem:[%s208 + $0x2268] sm:$0xff]
        %v1700 = vld [vmem:[%s208 + $0x2270] sm:$0xff]
        %v1701 = vld [vmem:[%s208 + $0x2278] sm:$0xff]
        %v1702 = vld [vmem:[%s208 + $0x2280] sm:$0xff]
        %v1703 = vld [vmem:[%s208 + $0x2288] sm:$0xff]
        %v1704 = vld [vmem:[%s208 + $0x2290] sm:$0xff]
        %v1705 = vld [vmem:[%s208 + $0x2298] sm:$0xff]
        %v1706 = vld [vmem:[%s208 + $0x22a0] sm:$0xff]
        %v1707 = vld [vmem:[%s208 + $0x22a8] sm:$0xff]
        %v1708 = vld [vmem:[%s208 + $0x22b0] sm:$0xff]
        %v1709 = vld [vmem:[%s208 + $0x22b8] sm:$0xff]
        %v1710 = vld [vmem:[%s208 + $0x22c0] sm:$0xff]
        %v1711 = vld [vmem:[%s208 + $0x22c8] sm:$0xff]
        %v1712 = vld [vmem:[%s208 + $0x22d0] sm:$0xff]
        %v1713 = vld [vmem:[%s208 + $0x22d8] sm:$0xff]
        %v1714 = vld [vmem:[%s208 + $0x22e0] sm:$0xff]
        %v1715 = vld [vmem:[%s208 + $0x22e8] sm:$0xff]
        %v1716 = vld [vmem:[%s208 + $0x22f0] sm:$0xff]
        %v1717 = vld [vmem:[%s208 + $0x22f8] sm:$0xff]
        %v1718 = vld [vmem:[%s208 + $0x2300] sm:$0xff]
        %v1719 = vld [vmem:[%s208 + $0x2308] sm:$0xff]
        %v1720 = vld [vmem:[%s208 + $0x2310] sm:$0xff]
        %v1721 = vld [vmem:[%s208 + $0x2318] sm:$0xff]
        %v1722 = vld [vmem:[%s208 + $0x2320] sm:$0xff]
        %v1723 = vld [vmem:[%s208 + $0x2328] sm:$0xff]
        %v1724 = vld [vmem:[%s208 + $0x2330] sm:$0xff]
        %v1725 = vld [vmem:[%s208 + $0x2338] sm:$0xff]
        %v1726 = vld [vmem:[%s208 + $0x2340] sm:$0xff]
        %v1727 = vld [vmem:[%s208 + $0x2348] sm:$0xff]
        %v1728 = vld [vmem:[%s208 + $0x2350] sm:$0xff]
        %v1729 = vld [vmem:[%s208 + $0x2358] sm:$0xff]
        %v1730 = vld [vmem:[%s208 + $0x2360] sm:$0xff]
        %v1731 = vld [vmem:[%s208 + $0x2368] sm:$0xff]
        %v1732 = vld [vmem:[%s208 + $0x2370] sm:$0xff]
        %v1733 = vld [vmem:[%s208 + $0x2378] sm:$0xff]
        %v1734 = vld [vmem:[%s208 + $0x2380] sm:$0xff]
        %v1735 = vld [vmem:[%s208 + $0x2388] sm:$0xff]
        %v1736 = vld [vmem:[%s208 + $0x2390] sm:$0xff]
        %v1737 = vld [vmem:[%s208 + $0x2398] sm:$0xff]
        %v1738 = vld [vmem:[%s208 + $0x23a0] sm:$0xff]
        %v1739 = vld [vmem:[%s208 + $0x23a8] sm:$0xff]
        %v1740 = vld [vmem:[%s208 + $0x23b0] sm:$0xff]
        %v1741 = vld [vmem:[%s208 + $0x23b8] sm:$0xff]
        %v1742 = vld [vmem:[%s208 + $0x23c0] sm:$0xff]
        %v1743 = vld [vmem:[%s208 + $0x23c8] sm:$0xff]
        %v1744 = vld [vmem:[%s208 + $0x23d0] sm:$0xff]
        %v1745 = vld [vmem:[%s208 + $0x23d8] sm:$0xff]
        %v1746 = vld [vmem:[%s208 + $0x23e0] sm:$0xff]
        %v1747 = vld [vmem:[%s208 + $0x23e8] sm:$0xff]
        %v1748 = vld [vmem:[%s208 + $0x23f0] sm:$0xff]
        %v1749 = vld [vmem:[%s208 + $0x23f8] sm:$0xff]
        %v1750 = vld [vmem:[%s208 + $0x2400] sm:$0xff]
        %v1751 = vld [vmem:[%s208 + $0x2408] sm:$0xff]
        %v1752 = vld [vmem:[%s208 + $0x2410] sm:$0xff]
        %v1753 = vld [vmem:[%s208 + $0x2418] sm:$0xff]
        %v1754 = vld [vmem:[%s208 + $0x2420] sm:$0xff]
        %v1755 = vld [vmem:[%s208 + $0x2428] sm:$0xff]
        %v1756 = vld [vmem:[%s208 + $0x2430] sm:$0xff]
        %v1757 = vld [vmem:[%s208 + $0x2438] sm:$0xff]
        %v1758 = vld [vmem:[%s208 + $0x2440] sm:$0xff]
        %v1759 = vld [vmem:[%s208 + $0x2448] sm:$0xff]
        %v1760 = vld [vmem:[%s208 + $0x2450] sm:$0xff]
        %v1761 = vld [vmem:[%s208 + $0x2458] sm:$0xff]
        %v1762 = vld [vmem:[%s208 + $0x2460] sm:$0xff]
        %v1763 = vld [vmem:[%s208 + $0x2468] sm:$0xff]
        %v1764 = vld [vmem:[%s208 + $0x2470] sm:$0xff]
        %v1765 = vld [vmem:[%s208 + $0x2478] sm:$0xff]
        %v1766 = vld [vmem:[%s208 + $0x2480] sm:$0xff]
        %v1767 = vld [vmem:[%s208 + $0x2488] sm:$0xff]
        %v1768 = vld [vmem:[%s208 + $0x2490] sm:$0xff]
        %v1769 = vld [vmem:[%s208 + $0x2498] sm:$0xff]
        %v1770 = vld [vmem:[%s208 + $0x24a0] sm:$0xff]
        %v1771 = vld [vmem:[%s208 + $0x24a8] sm:$0xff]
        %v1772 = vld [vmem:[%s208 + $0x24b0] sm:$0xff]
        %v1773 = vld [vmem:[%s208 + $0x24b8] sm:$0xff]
        %v1774 = vld [vmem:[%s208 + $0x24c0] sm:$0xff]
        %v1775 = vld [vmem:[%s208 + $0x24c8] sm:$0xff]
        %v1776 = vld [vmem:[%s208 + $0x24d0] sm:$0xff]
        %v1777 = vld [vmem:[%s208 + $0x24d8] sm:$0xff]
        %v1778 = vld [vmem:[%s208 + $0x24e0] sm:$0xff]
        %v1779 = vld [vmem:[%s208 + $0x24e8] sm:$0xff]
        %v1780 = vld [vmem:[%s208 + $0x24f0] sm:$0xff]
        %v1781 = vld [vmem:[%s208 + $0x24f8] sm:$0xff]
        %v1782 = vld [vmem:[%s208 + $0x2500] sm:$0xff]
        %v1783 = vld [vmem:[%s208 + $0x2508] sm:$0xff]
        %v1784 = vld [vmem:[%s208 + $0x2510] sm:$0xff]
        %v1785 = vld [vmem:[%s208 + $0x2518] sm:$0xff]
        %v1786 = vld [vmem:[%s208 + $0x2520] sm:$0xff]
        %v1787 = vld [vmem:[%s208 + $0x2528] sm:$0xff]
        %v1788 = vld [vmem:[%s208 + $0x2530] sm:$0xff]
        %v1789 = vld [vmem:[%s208 + $0x2538] sm:$0xff]
        %v1790 = vld [vmem:[%s208 + $0x2540] sm:$0xff]
        %v1791 = vld [vmem:[%s208 + $0x2548] sm:$0xff]
        %v1792 = vld [vmem:[%s208 + $0x2550] sm:$0xff]
        %v1793 = vld [vmem:[%s208 + $0x2558] sm:$0xff]
        %v1794 = vld [vmem:[%s208 + $0x2560] sm:$0xff]
        %v1795 = vld [vmem:[%s208 + $0x2568] sm:$0xff]
        %v1796 = vld [vmem:[%s208 + $0x2570] sm:$0xff]
        %v1797 = vld [vmem:[%s208 + $0x2578] sm:$0xff]
        %v1798 = vld [vmem:[%s208 + $0x2580] sm:$0xff]
        %v1799 = vld [vmem:[%s208 + $0x2588] sm:$0xff]
        %v1800 = vld [vmem:[%s208 + $0x2590] sm:$0xff]
        %v1801 = vld [vmem:[%s208 + $0x2598] sm:$0xff]
        %v1802 = vld [vmem:[%s208 + $0x25a0] sm:$0xff]
        %v1803 = vld [vmem:[%s208 + $0x25a8] sm:$0xff]
        %v1804 = vld [vmem:[%s208 + $0x25b0] sm:$0xff]
        %v1805 = vld [vmem:[%s208 + $0x25b8] sm:$0xff]
        %v1806 = vld [vmem:[%s208 + $0x25c0] sm:$0xff]
        %v1807 = vld [vmem:[%s208 + $0x25c8] sm:$0xff]
        %v1808 = vld [vmem:[%s208 + $0x25d0] sm:$0xff]
        %v1809 = vld [vmem:[%s208 + $0x25d8] sm:$0xff]
        %v1810 = vld [vmem:[%s208 + $0x25e0] sm:$0xff]
        %v1811 = vld [vmem:[%s208 + $0x25e8] sm:$0xff]
        %v1812 = vld [vmem:[%s208 + $0x25f0] sm:$0xff]
        %v1813 = vld [vmem:[%s208 + $0x25f8] sm:$0xff]
        %v1814 = vld [vmem:[%s208 + $0x2600] sm:$0xff]
        %v1815 = vld [vmem:[%s208 + $0x2608] sm:$0xff]
        %v1816 = vld [vmem:[%s208 + $0x2610] sm:$0xff]
        %v1817 = vld [vmem:[%s208 + $0x2618] sm:$0xff]
        %v1818 = vld [vmem:[%s208 + $0x2620] sm:$0xff]
        %v1819 = vld [vmem:[%s208 + $0x2628] sm:$0xff]
        %v1820 = vld [vmem:[%s208 + $0x2630] sm:$0xff]
        %v1821 = vld [vmem:[%s208 + $0x2638] sm:$0xff]
        %v1822 = vld [vmem:[%s208 + $0x2640] sm:$0xff]
        %v1823 = vld [vmem:[%s208 + $0x2648] sm:$0xff]
        %v1824 = vld [vmem:[%s208 + $0x2650] sm:$0xff]
        %v1825 = vld [vmem:[%s208 + $0x2658] sm:$0xff]
        %v1826 = vld [vmem:[%s208 + $0x2660] sm:$0xff]
        %v1827 = vld [vmem:[%s208 + $0x2668] sm:$0xff]
        %v1828 = vld [vmem:[%s208 + $0x2670] sm:$0xff]
        %v1829 = vld [vmem:[%s208 + $0x2678] sm:$0xff]
        %v1830 = vld [vmem:[%s208 + $0x2680] sm:$0xff]
        %v1831 = vld [vmem:[%s208 + $0x2688] sm:$0xff]
        %v1832 = vld [vmem:[%s208 + $0x2690] sm:$0xff]
        %v1833 = vld [vmem:[%s208 + $0x2698] sm:$0xff]
        %v1834 = vld [vmem:[%s208 + $0x26a0] sm:$0xff]
        %v1835 = vld [vmem:[%s208 + $0x26a8] sm:$0xff]
        %v1836 = vld [vmem:[%s208 + $0x26b0] sm:$0xff]
        %v1837 = vld [vmem:[%s208 + $0x26b8] sm:$0xff]
        %v1838 = vld [vmem:[%s208 + $0x26c0] sm:$0xff]
        %v1839 = vld [vmem:[%s208 + $0x26c8] sm:$0xff]
        %v1840 = vld [vmem:[%s208 + $0x26d0] sm:$0xff]
        %v1841 = vld [vmem:[%s208 + $0x26d8] sm:$0xff]
        %v1842 = vld [vmem:[%s208 + $0x26e0] sm:$0xff]
        %v1843 = vld [vmem:[%s208 + $0x26e8] sm:$0xff]
        %v1844 = vld [vmem:[%s208 + $0x26f0] sm:$0xff]
        %v1845 = vld [vmem:[%s208 + $0x26f8] sm:$0xff]
        %v1846 = vld [vmem:[%s208 + $0x2700] sm:$0xff]
        %v1847 = vld [vmem:[%s208 + $0x2708] sm:$0xff]
        %v1848 = vld [vmem:[%s208 + $0x2710] sm:$0xff]
        %v1849 = vld [vmem:[%s208 + $0x2718] sm:$0xff]
        %v1850 = vld [vmem:[%s208 + $0x2720] sm:$0xff]
        %v1851 = vld [vmem:[%s208 + $0x2728] sm:$0xff]
        %v1852 = vld [vmem:[%s208 + $0x2730] sm:$0xff]
        %v1853 = vld [vmem:[%s208 + $0x2738] sm:$0xff]
        %v1854 = vld [vmem:[%s208 + $0x2740] sm:$0xff]
        %v1855 = vld [vmem:[%s208 + $0x2748] sm:$0xff]
        %v1856 = vld [vmem:[%s208 + $0x2750] sm:$0xff]
        %v1857 = vld [vmem:[%s208 + $0x2758] sm:$0xff]
        %v1858 = vld [vmem:[%s208 + $0x2760] sm:$0xff]
        %v1859 = vld [vmem:[%s208 + $0x2768] sm:$0xff]
        %v1860 = vld [vmem:[%s208 + $0x2770] sm:$0xff]
        %v1861 = vld [vmem:[%s208 + $0x2778] sm:$0xff]
        %v1862 = vld [vmem:[%s208 + $0x2780] sm:$0xff]
        %v1863 = vld [vmem:[%s208 + $0x2788] sm:$0xff]
        %v1864 = vld [vmem:[%s208 + $0x2790] sm:$0xff]
        %v1865 = vld [vmem:[%s208 + $0x2798] sm:$0xff]
        %v1866 = vld [vmem:[%s208 + $0x27a0] sm:$0xff]
        %v1867 = vld [vmem:[%s208 + $0x27a8] sm:$0xff]
        %v1868 = vld [vmem:[%s208 + $0x27b0] sm:$0xff]
        %v1869 = vld [vmem:[%s208 + $0x27b8] sm:$0xff]
        %v1870 = vld [vmem:[%s208 + $0x27c0] sm:$0xff]
        %v1871 = vld [vmem:[%s208 + $0x27c8] sm:$0xff]
        %v1872 = vld [vmem:[%s208 + $0x27d0] sm:$0xff]
        %v1873 = vld [vmem:[%s208 + $0x27d8] sm:$0xff]
        %v1874 = vld [vmem:[%s208 + $0x27e0] sm:$0xff]
        %v1875 = vld [vmem:[%s208 + $0x27e8] sm:$0xff]
        %v1876 = vld [vmem:[%s208 + $0x27f0] sm:$0xff]
        %v1877 = vld [vmem:[%s208 + $0x27f8] sm:$0xff]
        %v1878 = vld [vmem:[%s208 + $0x2800] sm:$0xff]
        %v1879 = vld [vmem:[%s208 + $0x2808] sm:$0xff]
        %v1880 = vld [vmem:[%s208 + $0x2810] sm:$0xff]
        %v1881 = vld [vmem:[%s208 + $0x2818] sm:$0xff]
        %v1882 = vld [vmem:[%s208 + $0x2820] sm:$0xff]
        %v1883 = vld [vmem:[%s208 + $0x2828] sm:$0xff]
        %v1884 = vld [vmem:[%s208 + $0x2830] sm:$0xff]
        %v1885 = vld [vmem:[%s208 + $0x2838] sm:$0xff]
        %v1886 = vld [vmem:[%s208 + $0x2840] sm:$0xff]
        %v1887 = vld [vmem:[%s208 + $0x2848] sm:$0xff]
        %v1888 = vld [vmem:[%s208 + $0x2850] sm:$0xff]
        %v1889 = vld [vmem:[%s208 + $0x2858] sm:$0xff]
        %v1890 = vld [vmem:[%s208 + $0x2860] sm:$0xff]
        %v1891 = vld [vmem:[%s208 + $0x2868] sm:$0xff]
        %v1892 = vld [vmem:[%s208 + $0x2870] sm:$0xff]
        %v1893 = vld [vmem:[%s208 + $0x2878] sm:$0xff]
        %v1894 = vld [vmem:[%s208 + $0x2880] sm:$0xff]
        %v1895 = vld [vmem:[%s208 + $0x2888] sm:$0xff]
        %v1896 = vld [vmem:[%s208 + $0x2890] sm:$0xff]
        %v1897 = vld [vmem:[%s208 + $0x2898] sm:$0xff]
        %v1898 = vld [vmem:[%s208 + $0x28a0] sm:$0xff]
        %v1899 = vld [vmem:[%s208 + $0x28a8] sm:$0xff]
        %v1900 = vld [vmem:[%s208 + $0x28b0] sm:$0xff]
        %v1901 = vld [vmem:[%s208 + $0x28b8] sm:$0xff]
        %v1902 = vld [vmem:[%s208 + $0x28c0] sm:$0xff]
        %v1903 = vld [vmem:[%s208 + $0x28c8] sm:$0xff]
        %v1904 = vld [vmem:[%s208 + $0x28d0] sm:$0xff]
        %v1905 = vld [vmem:[%s208 + $0x28d8] sm:$0xff]
        %v1906 = vld [vmem:[%s208 + $0x28e0] sm:$0xff]
        %v1907 = vld [vmem:[%s208 + $0x28e8] sm:$0xff]
        %v1908 = vld [vmem:[%s208 + $0x28f0] sm:$0xff]
        %v1909 = vld [vmem:[%s208 + $0x28f8] sm:$0xff]
        %v1910 = vld [vmem:[%s208 + $0x2900] sm:$0xff]
        %v1911 = vld [vmem:[%s208 + $0x2908] sm:$0xff]
        %v1912 = vld [vmem:[%s208 + $0x2910] sm:$0xff]
        %v1913 = vld [vmem:[%s208 + $0x2918] sm:$0xff]
        %v1914 = vld [vmem:[%s208 + $0x2920] sm:$0xff]
        %v1915 = vld [vmem:[%s208 + $0x2928] sm:$0xff]
        %v1916 = vld [vmem:[%s208 + $0x2930] sm:$0xff]
        %v1917 = vld [vmem:[%s208 + $0x2938] sm:$0xff]
        %v1918 = vld [vmem:[%s208 + $0x2940] sm:$0xff]
        %v1919 = vld [vmem:[%s208 + $0x2948] sm:$0xff]
        %v1920 = vld [vmem:[%s208 + $0x2950] sm:$0xff]
        %v1921 = vld [vmem:[%s208 + $0x2958] sm:$0xff]
        %v1922 = vld [vmem:[%s208 + $0x2960] sm:$0xff]
        %v1923 = vld [vmem:[%s208 + $0x2968] sm:$0xff]
        %v1924 = vld [vmem:[%s208 + $0x2970] sm:$0xff]
        %v1925 = vld [vmem:[%s208 + $0x2978] sm:$0xff]
        %v1926 = vld [vmem:[%s208 + $0x2980] sm:$0xff]
        %v1927 = vld [vmem:[%s208 + $0x2988] sm:$0xff]
        %v1928 = vld [vmem:[%s208 + $0x2990] sm:$0xff]
        %v1929 = vld [vmem:[%s208 + $0x2998] sm:$0xff]
        %v1930 = vld [vmem:[%s208 + $0x29a0] sm:$0xff]
        %v1931 = vld [vmem:[%s208 + $0x29a8] sm:$0xff]
        %v1932 = vld [vmem:[%s208 + $0x29b0] sm:$0xff]
        %v1933 = vld [vmem:[%s208 + $0x29b8] sm:$0xff]
        %v1934 = vld [vmem:[%s208 + $0x29c0] sm:$0xff]
        %v1935 = vld [vmem:[%s208 + $0x29c8] sm:$0xff]
        %v1936 = vld [vmem:[%s208 + $0x29d0] sm:$0xff]
        %v1937 = vld [vmem:[%s208 + $0x29d8] sm:$0xff]
        %v1938 = vld [vmem:[%s208 + $0x29e0] sm:$0xff]
        %v1939 = vld [vmem:[%s208 + $0x29e8] sm:$0xff]
        %v1940 = vld [vmem:[%s208 + $0x29f0] sm:$0xff]
        %v1941 = vld [vmem:[%s208 + $0x29f8] sm:$0xff]
        %v1942 = vld [vmem:[%s208 + $0x2a00] sm:$0xff]
        %v1943 = vld [vmem:[%s208 + $0x2a08] sm:$0xff]
        %v1944 = vld [vmem:[%s208 + $0x2a10] sm:$0xff]
        %v1945 = vld [vmem:[%s208 + $0x2a18] sm:$0xff]
        %v1946 = vld [vmem:[%s208 + $0x2a20] sm:$0xff]
        %v1947 = vld [vmem:[%s208 + $0x2a28] sm:$0xff]
        %v1948 = vld [vmem:[%s208 + $0x2a30] sm:$0xff]
        %v1949 = vld [vmem:[%s208 + $0x2a38] sm:$0xff]
        %v1950 = vld [vmem:[%s208 + $0x2a40] sm:$0xff]
        %v1951 = vld [vmem:[%s208 + $0x2a48] sm:$0xff]
        %v1952 = vld [vmem:[%s208 + $0x2a50] sm:$0xff]
        %v1953 = vld [vmem:[%s208 + $0x2a58] sm:$0xff]
        %v1954 = vld [vmem:[%s208 + $0x2a60] sm:$0xff]
        %v1955 = vld [vmem:[%s208 + $0x2a68] sm:$0xff]
        %v1956 = vld [vmem:[%s208 + $0x2a70] sm:$0xff]
        %v1957 = vld [vmem:[%s208 + $0x2a78] sm:$0xff]
        %v1958 = vld [vmem:[%s208 + $0x2a80] sm:$0xff]
        %v1959 = vld [vmem:[%s208 + $0x2a88] sm:$0xff]
        %v1960 = vld [vmem:[%s208 + $0x2a90] sm:$0xff]
        %v1961 = vld [vmem:[%s208 + $0x2a98] sm:$0xff]
        %v1962 = vld [vmem:[%s208 + $0x2aa0] sm:$0xff]
        %v1963 = vld [vmem:[%s208 + $0x2aa8] sm:$0xff]
        %v1964 = vld [vmem:[%s208 + $0x2ab0] sm:$0xff]
        %v1965 = vld [vmem:[%s208 + $0x2ab8] sm:$0xff]
        %v1966 = vld [vmem:[%s208 + $0x2ac0] sm:$0xff]
        %v1967 = vld [vmem:[%s208 + $0x2ac8] sm:$0xff]
        %v1968 = vld [vmem:[%s208 + $0x2ad0] sm:$0xff]
        %v1969 = vld [vmem:[%s208 + $0x2ad8] sm:$0xff]
        %v1970 = vld [vmem:[%s208 + $0x2ae0] sm:$0xff]
        %v1971 = vld [vmem:[%s208 + $0x2ae8] sm:$0xff]
        %v1972 = vld [vmem:[%s208 + $0x2af0] sm:$0xff]
        %v1973 = vld [vmem:[%s208 + $0x2af8] sm:$0xff]
        %v1974 = vld [vmem:[%s208 + $0x2b00] sm:$0xff]
        %v1975 = vld [vmem:[%s208 + $0x2b08] sm:$0xff]
        %v1976 = vld [vmem:[%s208 + $0x2b10] sm:$0xff]
        %v1977 = vld [vmem:[%s208 + $0x2b18] sm:$0xff]
        %v1978 = vld [vmem:[%s208 + $0x2b20] sm:$0xff]
        %v1979 = vld [vmem:[%s208 + $0x2b28] sm:$0xff]
        %v1980 = vld [vmem:[%s208 + $0x2b30] sm:$0xff]
        %v1981 = vld [vmem:[%s208 + $0x2b38] sm:$0xff]
        %v1982 = vld [vmem:[%s208 + $0x2b40] sm:$0xff]
        %v1983 = vld [vmem:[%s208 + $0x2b48] sm:$0xff]
        %v1984 = vld [vmem:[%s208 + $0x2b50] sm:$0xff]
        %v1985 = vld [vmem:[%s208 + $0x2b58] sm:$0xff]
        %v1986 = vld [vmem:[%s208 + $0x2b60] sm:$0xff]
        %v1987 = vld [vmem:[%s208 + $0x2b68] sm:$0xff]
        %v1988 = vld [vmem:[%s208 + $0x2b70] sm:$0xff]
        %v1989 = vld [vmem:[%s208 + $0x2b78] sm:$0xff]
        %v1990 = vld [vmem:[%s208 + $0x2b80] sm:$0xff]
        %v1991 = vld [vmem:[%s208 + $0x2b88] sm:$0xff]
        %v1992 = vld [vmem:[%s208 + $0x2b90] sm:$0xff]
        %v1993 = vld [vmem:[%s208 + $0x2b98] sm:$0xff]
        %v1994 = vld [vmem:[%s208 + $0x2ba0] sm:$0xff]
        %v1995 = vld [vmem:[%s208 + $0x2ba8] sm:$0xff]
        %v1996 = vld [vmem:[%s208 + $0x2bb0] sm:$0xff]
        %v1997 = vld [vmem:[%s208 + $0x2bb8] sm:$0xff]
        %v1998 = vld [vmem:[%s208 + $0x2bc0] sm:$0xff]
        %v1999 = vld [vmem:[%s208 + $0x2bc8] sm:$0xff]
        %v2000 = vld [vmem:[%s208 + $0x2bd0] sm:$0xff]
        %v2001 = vld [vmem:[%s208 + $0x2bd8] sm:$0xff]
        %v2002 = vld [vmem:[%s208 + $0x2be0] sm:$0xff]
        %v2003 = vld [vmem:[%s208 + $0x2be8] sm:$0xff]
        %v2004 = vld [vmem:[%s208 + $0x2bf0] sm:$0xff]
        %v2005 = vld [vmem:[%s208 + $0x2bf8] sm:$0xff]
        %v2006 = vld [vmem:[%s208 + $0x2c00] sm:$0xff]
        %v2007 = vld [vmem:[%s208 + $0x2c08] sm:$0xff]
        %v2008 = vld [vmem:[%s208 + $0x2c10] sm:$0xff]
        %v2009 = vld [vmem:[%s208 + $0x2c18] sm:$0xff]
        %v2010 = vld [vmem:[%s208 + $0x2c20] sm:$0xff]
        %v2011 = vld [vmem:[%s208 + $0x2c28] sm:$0xff]
        %v2012 = vld [vmem:[%s208 + $0x2c30] sm:$0xff]
        %v2013 = vld [vmem:[%s208 + $0x2c38] sm:$0xff]
        %v2014 = vld [vmem:[%s208 + $0x2c40] sm:$0xff]
        %v2015 = vld [vmem:[%s208 + $0x2c48] sm:$0xff]
        %v2016 = vld [vmem:[%s208 + $0x2c50] sm:$0xff]
        %v2017 = vld [vmem:[%s208 + $0x2c58] sm:$0xff]
        %v2018 = vld [vmem:[%s208 + $0x2c60] sm:$0xff]
        %v2019 = vld [vmem:[%s208 + $0x2c68] sm:$0xff]
        %v2020 = vld [vmem:[%s208 + $0x2c70] sm:$0xff]
        %v2021 = vld [vmem:[%s208 + $0x2c78] sm:$0xff]
        %v2022 = vld [vmem:[%s208 + $0x2c80] sm:$0xff]
        %v2023 = vld [vmem:[%s208 + $0x2c88] sm:$0xff]
        %v2024 = vld [vmem:[%s208 + $0x2c90] sm:$0xff]
        %v2025 = vld [vmem:[%s208 + $0x2c98] sm:$0xff]
        %v2026 = vld [vmem:[%s208 + $0x2ca0] sm:$0xff]
        %v2027 = vld [vmem:[%s208 + $0x2ca8] sm:$0xff]
        %v2028 = vld [vmem:[%s208 + $0x2cb0] sm:$0xff]
        %v2029 = vld [vmem:[%s208 + $0x2cb8] sm:$0xff]
        %v2030 = vld [vmem:[%s208 + $0x2cc0] sm:$0xff]
        %v2031 = vld [vmem:[%s208 + $0x2cc8] sm:$0xff]
        %v2032 = vld [vmem:[%s208 + $0x2cd0] sm:$0xff]
        %v2033 = vld [vmem:[%s208 + $0x2cd8] sm:$0xff]
        %v2034 = vld [vmem:[%s208 + $0x2ce0] sm:$0xff]
        %v2035 = vld [vmem:[%s208 + $0x2ce8] sm:$0xff]
        %v2036 = vld [vmem:[%s208 + $0x2cf0] sm:$0xff]
        %v2037 = vld [vmem:[%s208 + $0x2cf8] sm:$0xff]
        %v2038 = vld [vmem:[%s208 + $0x2d00] sm:$0xff]
        %v2039 = vld [vmem:[%s208 + $0x2d08] sm:$0xff]
        %v2040 = vld [vmem:[%s208 + $0x2d10] sm:$0xff]
        %v2041 = vld [vmem:[%s208 + $0x2d18] sm:$0xff]
        %v2042 = vld [vmem:[%s208 + $0x2d20] sm:$0xff]
        %v2043 = vld [vmem:[%s208 + $0x2d28] sm:$0xff]
        %v2044 = vld [vmem:[%s208 + $0x2d30] sm:$0xff]
        %v2045 = vld [vmem:[%s208 + $0x2d38] sm:$0xff]
        %v2046 = vld [vmem:[%s208 + $0x2d40] sm:$0xff]
        %v2047 = vld [vmem:[%s208 + $0x2d48] sm:$0xff]
        %v2048 = vld [vmem:[%s208 + $0x2d50] sm:$0xff]
        %v2049 = vld [vmem:[%s208 + $0x2d58] sm:$0xff]
        %v2050 = vld [vmem:[%s208 + $0x2d60] sm:$0xff]
        %v2051 = vld [vmem:[%s208 + $0x2d68] sm:$0xff]
        %v2052 = vld [vmem:[%s208 + $0x2d70] sm:$0xff]
        %v2053 = vld [vmem:[%s208 + $0x2d78] sm:$0xff]
        %v2054 = vld [vmem:[%s208 + $0x2d80] sm:$0xff]
        %v2055 = vld [vmem:[%s208 + $0x2d88] sm:$0xff]
        %v2056 = vld [vmem:[%s208 + $0x2d90] sm:$0xff]
        %v2057 = vld [vmem:[%s208 + $0x2d98] sm:$0xff]
        %v2058 = vld [vmem:[%s208 + $0x2da0] sm:$0xff]
        %v2059 = vld [vmem:[%s208 + $0x2da8] sm:$0xff]
        %v2060 = vld [vmem:[%s208 + $0x2db0] sm:$0xff]
        %v2061 = vld [vmem:[%s208 + $0x2db8] sm:$0xff]
        %v2062 = vld [vmem:[%s208 + $0x2dc0] sm:$0xff]
        %v2063 = vld [vmem:[%s208 + $0x2dc8] sm:$0xff]
        %v2064 = vld [vmem:[%s208 + $0x2dd0] sm:$0xff]
        %v2065 = vld [vmem:[%s208 + $0x2dd8] sm:$0xff]
        %v2066 = vld [vmem:[%s208 + $0x2de0] sm:$0xff]
        %v2067 = vld [vmem:[%s208 + $0x2de8] sm:$0xff]
        %v2068 = vld [vmem:[%s208 + $0x2df0] sm:$0xff]
        %v2069 = vld [vmem:[%s208 + $0x2df8] sm:$0xff]
        %v2070 = vld [vmem:[%s208 + $0x2e00] sm:$0xff]
        %v2071 = vld [vmem:[%s208 + $0x2e08] sm:$0xff]
        %v2072 = vld [vmem:[%s208 + $0x2e10] sm:$0xff]
        %v2073 = vld [vmem:[%s208 + $0x2e18] sm:$0xff]
        %v2074 = vld [vmem:[%s208 + $0x2e20] sm:$0xff]
        %v2075 = vld [vmem:[%s208 + $0x2e28] sm:$0xff]
        %v2076 = vld [vmem:[%s208 + $0x2e30] sm:$0xff]
        %v2077 = vld [vmem:[%s208 + $0x2e38] sm:$0xff]
        %v2078 = vld [vmem:[%s208 + $0x2e40] sm:$0xff]
        %v2079 = vld [vmem:[%s208 + $0x2e48] sm:$0xff]
        %v2080 = vld [vmem:[%s208 + $0x2e50] sm:$0xff]
        %v2081 = vld [vmem:[%s208 + $0x2e58] sm:$0xff]
        %v2082 = vld [vmem:[%s208 + $0x2e60] sm:$0xff]
        %v2083 = vld [vmem:[%s208 + $0x2e68] sm:$0xff]
        %v2084 = vld [vmem:[%s208 + $0x2e70] sm:$0xff]
        %v2085 = vld [vmem:[%s208 + $0x2e78] sm:$0xff]
        %v2086 = vld [vmem:[%s208 + $0x2e80] sm:$0xff]
        %v2087 = vld [vmem:[%s208 + $0x2e88] sm:$0xff]
        %v2088 = vld [vmem:[%s208 + $0x2e90] sm:$0xff]
        %v2089 = vld [vmem:[%s208 + $0x2e98] sm:$0xff]
        %v2090 = vld [vmem:[%s208 + $0x2ea0] sm:$0xff]
        %v2091 = vld [vmem:[%s208 + $0x2ea8] sm:$0xff]
        %v2092 = vld [vmem:[%s208 + $0x2eb0] sm:$0xff]
        %v2093 = vld [vmem:[%s208 + $0x2eb8] sm:$0xff]
        %v2094 = vld [vmem:[%s208 + $0x2ec0] sm:$0xff]
        %v2095 = vld [vmem:[%s208 + $0x2ec8] sm:$0xff]
        %v2096 = vld [vmem:[%s208 + $0x2ed0] sm:$0xff]
        %v2097 = vld [vmem:[%s208 + $0x2ed8] sm:$0xff]
        %v2098 = vld [vmem:[%s208 + $0x2ee0] sm:$0xff]
        %v2099 = vld [vmem:[%s208 + $0x2ee8] sm:$0xff]
        %v2100 = vld [vmem:[%s208 + $0x2ef0] sm:$0xff]
        %v2101 = vld [vmem:[%s208 + $0x2ef8] sm:$0xff]
        %v2102 = vld [vmem:[%s208 + $0x2f00] sm:$0xff]
        %v2103 = vld [vmem:[%s208 + $0x2f08] sm:$0xff]
        %v2104 = vld [vmem:[%s208 + $0x2f10] sm:$0xff]
        %v2105 = vld [vmem:[%s208 + $0x2f18] sm:$0xff]
        %v2106 = vld [vmem:[%s208 + $0x2f20] sm:$0xff]
        %v2107 = vld [vmem:[%s208 + $0x2f28] sm:$0xff]
        %v2108 = vld [vmem:[%s208 + $0x2f30] sm:$0xff]
        %v2109 = vld [vmem:[%s208 + $0x2f38] sm:$0xff]
        %v2110 = vld [vmem:[%s208 + $0x2f40] sm:$0xff]
        %v2111 = vld [vmem:[%s208 + $0x2f48] sm:$0xff]
        %v2112 = vld [vmem:[%s208 + $0x2f50] sm:$0xff]
        %v2113 = vld [vmem:[%s208 + $0x2f58] sm:$0xff]
        %v2114 = vld [vmem:[%s208 + $0x2f60] sm:$0xff]
        %v2115 = vld [vmem:[%s208 + $0x2f68] sm:$0xff]
        %v2116 = vld [vmem:[%s208 + $0x2f70] sm:$0xff]
        %v2117 = vld [vmem:[%s208 + $0x2f78] sm:$0xff]
        %v2118 = vld [vmem:[%s208 + $0x2f80] sm:$0xff]
        %v2119 = vld [vmem:[%s208 + $0x2f88] sm:$0xff]
        %v2120 = vld [vmem:[%s208 + $0x2f90] sm:$0xff]
        %v2121 = vld [vmem:[%s208 + $0x2f98] sm:$0xff]
        %v2122 = vld [vmem:[%s208 + $0x2fa0] sm:$0xff]
        %v2123 = vld [vmem:[%s208 + $0x2fa8] sm:$0xff]
        %v2124 = vld [vmem:[%s208 + $0x2fb0] sm:$0xff]
        %v2125 = vld [vmem:[%s208 + $0x2fb8] sm:$0xff]
        %v2126 = vld [vmem:[%s208 + $0x2fc0] sm:$0xff]
        %v2127 = vld [vmem:[%s208 + $0x2fc8] sm:$0xff]
        %v2128 = vld [vmem:[%s208 + $0x2fd0] sm:$0xff]
        %v2129 = vld [vmem:[%s208 + $0x2fd8] sm:$0xff]
        %v2130 = vld [vmem:[%s208 + $0x2fe0] sm:$0xff]
        %v2131 = vld [vmem:[%s208 + $0x2fe8] sm:$0xff]
        %v2132 = vld [vmem:[%s208 + $0x2ff0] sm:$0xff]
        %v2133 = vld [vmem:[%s208 + $0x2ff8] sm:$0xff]
        %v2134 = vld [vmem:[%s208 + $0x3000] sm:$0xff]
        %v2135 = vld [vmem:[%s208 + $0x3008] sm:$0xff]
        %v2136 = vld [vmem:[%s208 + $0x3010] sm:$0xff]
        %v2137 = vld [vmem:[%s208 + $0x3018] sm:$0xff]
        %v2138 = vld [vmem:[%s208 + $0x3020] sm:$0xff]
        %v2139 = vld [vmem:[%s208 + $0x3028] sm:$0xff]
        %v2140 = vld [vmem:[%s208 + $0x3030] sm:$0xff]
        %v2141 = vld [vmem:[%s208 + $0x3038] sm:$0xff]
        %v2142 = vld [vmem:[%s208 + $0x3040] sm:$0xff]
        %v2143 = vld [vmem:[%s208 + $0x3048] sm:$0xff]
        %v2144 = vld [vmem:[%s208 + $0x3050] sm:$0xff]
        %v2145 = vld [vmem:[%s208 + $0x3058] sm:$0xff]
        %v2146 = vld [vmem:[%s208 + $0x3060] sm:$0xff]
        %v2147 = vld [vmem:[%s208 + $0x3068] sm:$0xff]
        %v2148 = vld [vmem:[%s208 + $0x3070] sm:$0xff]
        %v2149 = vld [vmem:[%s208 + $0x3078] sm:$0xff]
        %v2150 = vld [vmem:[%s208 + $0x3080] sm:$0xff]
        %v2151 = vld [vmem:[%s208 + $0x3088] sm:$0xff]
        %v2152 = vld [vmem:[%s208 + $0x3090] sm:$0xff]
        %v2153 = vld [vmem:[%s208 + $0x3098] sm:$0xff]
        %v2154 = vld [vmem:[%s208 + $0x30a0] sm:$0xff]
        %v2155 = vld [vmem:[%s208 + $0x30a8] sm:$0xff]
        %v2156 = vld [vmem:[%s208 + $0x30b0] sm:$0xff]
        %v2157 = vld [vmem:[%s208 + $0x30b8] sm:$0xff]
        %v2158 = vld [vmem:[%s208 + $0x30c0] sm:$0xff]
        %v2159 = vld [vmem:[%s208 + $0x30c8] sm:$0xff]
        %v2160 = vld [vmem:[%s208 + $0x30d0] sm:$0xff]
        %v2161 = vld [vmem:[%s208 + $0x30d8] sm:$0xff]
        %v2162 = vld [vmem:[%s208 + $0x30e0] sm:$0xff]
        %v2163 = vld [vmem:[%s208 + $0x30e8] sm:$0xff]
        %v2164 = vld [vmem:[%s208 + $0x30f0] sm:$0xff]
        %v2165 = vld [vmem:[%s208 + $0x30f8] sm:$0xff]
        %v2166 = vld [vmem:[%s208 + $0x3100] sm:$0xff]
        %v2167 = vld [vmem:[%s208 + $0x3108] sm:$0xff]
        %v2168 = vld [vmem:[%s208 + $0x3110] sm:$0xff]
        %v2169 = vld [vmem:[%s208 + $0x3118] sm:$0xff]
        %v2170 = vld [vmem:[%s208 + $0x3120] sm:$0xff]
        %v2171 = vld [vmem:[%s208 + $0x3128] sm:$0xff]
        %v2172 = vld [vmem:[%s208 + $0x3130] sm:$0xff]
        %v2173 = vld [vmem:[%s208 + $0x3138] sm:$0xff]
        %v2174 = vld [vmem:[%s208 + $0x3140] sm:$0xff]
        %v2175 = vld [vmem:[%s208 + $0x3148] sm:$0xff]
        %v2176 = vld [vmem:[%s208 + $0x3150] sm:$0xff]
        %v2177 = vld [vmem:[%s208 + $0x3158] sm:$0xff]
        %v2178 = vld [vmem:[%s208 + $0x3160] sm:$0xff]
        %v2179 = vld [vmem:[%s208 + $0x3168] sm:$0xff]
        %v2180 = vld [vmem:[%s208 + $0x3170] sm:$0xff]
        %v2181 = vld [vmem:[%s208 + $0x3178] sm:$0xff]
        %v2182 = vld [vmem:[%s208 + $0x3180] sm:$0xff]
        %v2183 = vld [vmem:[%s208 + $0x3188] sm:$0xff]
        %v2184 = vld [vmem:[%s208 + $0x3190] sm:$0xff]
        %v2185 = vld [vmem:[%s208 + $0x3198] sm:$0xff]
        %v2186 = vld [vmem:[%s208 + $0x31a0] sm:$0xff]
        %v2187 = vld [vmem:[%s208 + $0x31a8] sm:$0xff]
        %v2188 = vld [vmem:[%s208 + $0x31b0] sm:$0xff]
        %v2189 = vld [vmem:[%s208 + $0x31b8] sm:$0xff]
        %v2190 = vld [vmem:[%s208 + $0x31c0] sm:$0xff]
        %v2191 = vld [vmem:[%s208 + $0x31c8] sm:$0xff]
        %v2192 = vld [vmem:[%s208 + $0x31d0] sm:$0xff]
        %v2193 = vld [vmem:[%s208 + $0x31d8] sm:$0xff]
        %v2194 = vld [vmem:[%s208 + $0x31e0] sm:$0xff]
        %v2195 = vld [vmem:[%s208 + $0x31e8] sm:$0xff]
        %v2196 = vld [vmem:[%s208 + $0x31f0] sm:$0xff]
        %v2197 = vld [vmem:[%s208 + $0x31f8] sm:$0xff]
        %v3798 = vunpack.c.l.b16 %v598
        %v3799 = vunpack.c.h.b16 %v598
        %v3800 = vunpack.c.l.b16 %v599
        %v3801 = vunpack.c.h.b16 %v599
        %v3802 = vunpack.c.l.b16 %v600
        %v3803 = vunpack.c.h.b16 %v600
        %v3804 = vunpack.c.l.b16 %v601
        %v3805 = vunpack.c.h.b16 %v601
        %v3806 = vunpack.c.l.b16 %v602
        %v3807 = vunpack.c.h.b16 %v602
        %v3808 = vunpack.c.l.b16 %v603
        %v3809 = vunpack.c.h.b16 %v603
        %v3810 = vunpack.c.l.b16 %v604
        %v3811 = vunpack.c.h.b16 %v604
        %v3812 = vunpack.c.l.b16 %v605
        %v3813 = vunpack.c.h.b16 %v605
        %v3814 = vunpack.c.l.b16 %v606
        %v3815 = vunpack.c.h.b16 %v606
        %v3816 = vunpack.c.l.b16 %v607
        %v3817 = vunpack.c.h.b16 %v607
        %v3818 = vunpack.c.l.b16 %v608
        %v3819 = vunpack.c.h.b16 %v608
        %v3820 = vunpack.c.l.b16 %v609
        %v3821 = vunpack.c.h.b16 %v609
        %v3822 = vunpack.c.l.b16 %v610
        %v3823 = vunpack.c.h.b16 %v610
        %v3824 = vunpack.c.l.b16 %v611
        %v3825 = vunpack.c.h.b16 %v611
        %v3826 = vunpack.c.l.b16 %v612
        %v3827 = vunpack.c.h.b16 %v612
        %v3828 = vunpack.c.l.b16 %v613
        %v3829 = vunpack.c.h.b16 %v613
        %v3830 = vunpack.c.l.b16 %v614
        %v3831 = vunpack.c.h.b16 %v614
        %v3832 = vunpack.c.l.b16 %v615
        %v3833 = vunpack.c.h.b16 %v615
        %v3834 = vunpack.c.l.b16 %v616
        %v3835 = vunpack.c.h.b16 %v616
        %v3836 = vunpack.c.l.b16 %v617
        %v3837 = vunpack.c.h.b16 %v617
        %v3838 = vunpack.c.l.b16 %v618
        %v3839 = vunpack.c.h.b16 %v618
        %v3840 = vunpack.c.l.b16 %v619
        %v3841 = vunpack.c.h.b16 %v619
        %v3842 = vunpack.c.l.b16 %v620
        %v3843 = vunpack.c.h.b16 %v620
        %v3844 = vunpack.c.l.b16 %v621
        %v3845 = vunpack.c.h.b16 %v621
        %v3846 = vunpack.c.l.b16 %v622
        %v3847 = vunpack.c.h.b16 %v622
        %v3848 = vunpack.c.l.b16 %v623
        %v3849 = vunpack.c.h.b16 %v623
        %v3850 = vunpack.c.l.b16 %v624
        %v3851 = vunpack.c.h.b16 %v624
        %v3852 = vunpack.c.l.b16 %v625
        %v3853 = vunpack.c.h.b16 %v625
        %v3854 = vunpack.c.l.b16 %v626
        %v3855 = vunpack.c.h.b16 %v626
        %v3856 = vunpack.c.l.b16 %v627
        %v3857 = vunpack.c.h.b16 %v627
        %v3858 = vunpack.c.l.b16 %v628
        %v3859 = vunpack.c.h.b16 %v628
        %v3860 = vunpack.c.l.b16 %v629
        %v3861 = vunpack.c.h.b16 %v629
        %v3862 = vunpack.c.l.b16 %v630
        %v3863 = vunpack.c.h.b16 %v630
        %v3864 = vunpack.c.l.b16 %v631
        %v3865 = vunpack.c.h.b16 %v631
        %v3866 = vunpack.c.l.b16 %v632
        %v3867 = vunpack.c.h.b16 %v632
        %v3868 = vunpack.c.l.b16 %v633
        %v3869 = vunpack.c.h.b16 %v633
        %v3870 = vunpack.c.l.b16 %v634
        %v3871 = vunpack.c.h.b16 %v634
        %v3872 = vunpack.c.l.b16 %v635
        %v3873 = vunpack.c.h.b16 %v635
        %v3874 = vunpack.c.l.b16 %v636
        %v3875 = vunpack.c.h.b16 %v636
        %v3876 = vunpack.c.l.b16 %v637
        %v3877 = vunpack.c.h.b16 %v637
        %v3878 = vunpack.c.l.b16 %v638
        %v3879 = vunpack.c.h.b16 %v638
        %v3880 = vunpack.c.l.b16 %v639
        %v3881 = vunpack.c.h.b16 %v639
        %v3882 = vunpack.c.l.b16 %v640
        %v3883 = vunpack.c.h.b16 %v640
        %v3884 = vunpack.c.l.b16 %v641
        %v3885 = vunpack.c.h.b16 %v641
        %v3886 = vunpack.c.l.b16 %v642
        %v3887 = vunpack.c.h.b16 %v642
        %v3888 = vunpack.c.l.b16 %v643
        %v3889 = vunpack.c.h.b16 %v643
        %v3890 = vunpack.c.l.b16 %v644
        %v3891 = vunpack.c.h.b16 %v644
        %v3892 = vunpack.c.l.b16 %v645
        %v3893 = vunpack.c.h.b16 %v645
        %v3894 = vunpack.c.l.b16 %v646
        %v3895 = vunpack.c.h.b16 %v646
        %v3896 = vunpack.c.l.b16 %v647
        %v3897 = vunpack.c.h.b16 %v647
        %v3898 = vunpack.c.l.b16 %v648
        %v3899 = vunpack.c.h.b16 %v648
        %v3900 = vunpack.c.l.b16 %v649
        %v3901 = vunpack.c.h.b16 %v649
        %v3902 = vunpack.c.l.b16 %v650
        %v3903 = vunpack.c.h.b16 %v650
        %v3904 = vunpack.c.l.b16 %v651
        %v3905 = vunpack.c.h.b16 %v651
        %v3906 = vunpack.c.l.b16 %v652
        %v3907 = vunpack.c.h.b16 %v652
        %v3908 = vunpack.c.l.b16 %v653
        %v3909 = vunpack.c.h.b16 %v653
        %v3910 = vunpack.c.l.b16 %v654
        %v3911 = vunpack.c.h.b16 %v654
        %v3912 = vunpack.c.l.b16 %v655
        %v3913 = vunpack.c.h.b16 %v655
        %v3914 = vunpack.c.l.b16 %v656
        %v3915 = vunpack.c.h.b16 %v656
        %v3916 = vunpack.c.l.b16 %v657
        %v3917 = vunpack.c.h.b16 %v657
        %v3918 = vunpack.c.l.b16 %v658
        %v3919 = vunpack.c.h.b16 %v658
        %v3920 = vunpack.c.l.b16 %v659
        %v3921 = vunpack.c.h.b16 %v659
        %v3922 = vunpack.c.l.b16 %v660
        %v3923 = vunpack.c.h.b16 %v660
        %v3924 = vunpack.c.l.b16 %v661
        %v3925 = vunpack.c.h.b16 %v661
        %v3926 = vunpack.c.l.b16 %v662
        %v3927 = vunpack.c.h.b16 %v662
        %v3928 = vunpack.c.l.b16 %v663
        %v3929 = vunpack.c.h.b16 %v663
        %v3930 = vunpack.c.l.b16 %v664
        %v3931 = vunpack.c.h.b16 %v664
        %v3932 = vunpack.c.l.b16 %v665
        %v3933 = vunpack.c.h.b16 %v665
        %v3934 = vunpack.c.l.b16 %v666
        %v3935 = vunpack.c.h.b16 %v666
        %v3936 = vunpack.c.l.b16 %v667
        %v3937 = vunpack.c.h.b16 %v667
        %v3938 = vunpack.c.l.b16 %v668
        %v3939 = vunpack.c.h.b16 %v668
        %v3940 = vunpack.c.l.b16 %v669
        %v3941 = vunpack.c.h.b16 %v669
        %v3942 = vunpack.c.l.b16 %v670
        %v3943 = vunpack.c.h.b16 %v670
        %v3944 = vunpack.c.l.b16 %v671
        %v3945 = vunpack.c.h.b16 %v671
        %v3946 = vunpack.c.l.b16 %v672
        %v3947 = vunpack.c.h.b16 %v672
        %v3948 = vunpack.c.l.b16 %v673
        %v3949 = vunpack.c.h.b16 %v673
        %v3950 = vunpack.c.l.b16 %v674
        %v3951 = vunpack.c.h.b16 %v674
        %v3952 = vunpack.c.l.b16 %v675
        %v3953 = vunpack.c.h.b16 %v675
        %v3954 = vunpack.c.l.b16 %v676
        %v3955 = vunpack.c.h.b16 %v676
        %v3956 = vunpack.c.l.b16 %v677
        %v3957 = vunpack.c.h.b16 %v677
        %v3958 = vunpack.c.l.b16 %v678
        %v3959 = vunpack.c.h.b16 %v678
        %v3960 = vunpack.c.l.b16 %v679
        %v3961 = vunpack.c.h.b16 %v679
        %v3962 = vunpack.c.l.b16 %v680
        %v3963 = vunpack.c.h.b16 %v680
        %v3964 = vunpack.c.l.b16 %v681
        %v3965 = vunpack.c.h.b16 %v681
        %v3966 = vunpack.c.l.b16 %v682
        %v3967 = vunpack.c.h.b16 %v682
        %v3968 = vunpack.c.l.b16 %v683
        %v3969 = vunpack.c.h.b16 %v683
        %v3970 = vunpack.c.l.b16 %v684
        %v3971 = vunpack.c.h.b16 %v684
        %v3972 = vunpack.c.l.b16 %v685
        %v3973 = vunpack.c.h.b16 %v685
        %v3974 = vunpack.c.l.b16 %v686
        %v3975 = vunpack.c.h.b16 %v686
        %v3976 = vunpack.c.l.b16 %v687
        %v3977 = vunpack.c.h.b16 %v687
        %v3978 = vunpack.c.l.b16 %v688
        %v3979 = vunpack.c.h.b16 %v688
        %v3980 = vunpack.c.l.b16 %v689
        %v3981 = vunpack.c.h.b16 %v689
        %v3982 = vunpack.c.l.b16 %v690
        %v3983 = vunpack.c.h.b16 %v690
        %v3984 = vunpack.c.l.b16 %v691
        %v3985 = vunpack.c.h.b16 %v691
        %v3986 = vunpack.c.l.b16 %v692
        %v3987 = vunpack.c.h.b16 %v692
        %v3988 = vunpack.c.l.b16 %v693
        %v3989 = vunpack.c.h.b16 %v693
        %v3990 = vunpack.c.l.b16 %v694
        %v3991 = vunpack.c.h.b16 %v694
        %v3992 = vunpack.c.l.b16 %v695
        %v3993 = vunpack.c.h.b16 %v695
        %v3994 = vunpack.c.l.b16 %v696
        %v3995 = vunpack.c.h.b16 %v696
        %v3996 = vunpack.c.l.b16 %v697
        %v3997 = vunpack.c.h.b16 %v697
        %v3998 = vunpack.c.l.b16 %v698
        %v3999 = vunpack.c.h.b16 %v698
        %v4000 = vunpack.c.l.b16 %v699
        %v4001 = vunpack.c.h.b16 %v699
        %v4002 = vunpack.c.l.b16 %v700
        %v4003 = vunpack.c.h.b16 %v700
        %v4004 = vunpack.c.l.b16 %v701
        %v4005 = vunpack.c.h.b16 %v701
        %v4006 = vunpack.c.l.b16 %v702
        %v4007 = vunpack.c.h.b16 %v702
        %v4008 = vunpack.c.l.b16 %v703
        %v4009 = vunpack.c.h.b16 %v703
        %v4010 = vunpack.c.l.b16 %v704
        %v4011 = vunpack.c.h.b16 %v704
        %v4012 = vunpack.c.l.b16 %v705
        %v4013 = vunpack.c.h.b16 %v705
        %v4014 = vunpack.c.l.b16 %v706
        %v4015 = vunpack.c.h.b16 %v706
        %v4016 = vunpack.c.l.b16 %v707
        %v4017 = vunpack.c.h.b16 %v707
        %v4018 = vunpack.c.l.b16 %v708
        %v4019 = vunpack.c.h.b16 %v708
        %v4020 = vunpack.c.l.b16 %v709
        %v4021 = vunpack.c.h.b16 %v709
        %v4022 = vunpack.c.l.b16 %v710
        %v4023 = vunpack.c.h.b16 %v710
        %v4024 = vunpack.c.l.b16 %v711
        %v4025 = vunpack.c.h.b16 %v711
        %v4026 = vunpack.c.l.b16 %v712
        %v4027 = vunpack.c.h.b16 %v712
        %v4028 = vunpack.c.l.b16 %v713
        %v4029 = vunpack.c.h.b16 %v713
        %v4030 = vunpack.c.l.b16 %v714
        %v4031 = vunpack.c.h.b16 %v714
        %v4032 = vunpack.c.l.b16 %v715
        %v4033 = vunpack.c.h.b16 %v715
        %v4034 = vunpack.c.l.b16 %v716
        %v4035 = vunpack.c.h.b16 %v716
        %v4036 = vunpack.c.l.b16 %v717
        %v4037 = vunpack.c.h.b16 %v717
        %v4038 = vunpack.c.l.b16 %v718
        %v4039 = vunpack.c.h.b16 %v718
        %v4040 = vunpack.c.l.b16 %v719
        %v4041 = vunpack.c.h.b16 %v719
        %v4042 = vunpack.c.l.b16 %v720
        %v4043 = vunpack.c.h.b16 %v720
        %v4044 = vunpack.c.l.b16 %v721
        %v4045 = vunpack.c.h.b16 %v721
        %v4046 = vunpack.c.l.b16 %v722
        %v4047 = vunpack.c.h.b16 %v722
        %v4048 = vunpack.c.l.b16 %v723
        %v4049 = vunpack.c.h.b16 %v723
        %v4050 = vunpack.c.l.b16 %v724
        %v4051 = vunpack.c.h.b16 %v724
        %v4052 = vunpack.c.l.b16 %v725
        %v4053 = vunpack.c.h.b16 %v725
        %v4054 = vunpack.c.l.b16 %v726
        %v4055 = vunpack.c.h.b16 %v726
        %v4056 = vunpack.c.l.b16 %v727
        %v4057 = vunpack.c.h.b16 %v727
        %v4058 = vunpack.c.l.b16 %v728
        %v4059 = vunpack.c.h.b16 %v728
        %v4060 = vunpack.c.l.b16 %v729
        %v4061 = vunpack.c.h.b16 %v729
        %v4062 = vunpack.c.l.b16 %v730
        %v4063 = vunpack.c.h.b16 %v730
        %v4064 = vunpack.c.l.b16 %v731
        %v4065 = vunpack.c.h.b16 %v731
        %v4066 = vunpack.c.l.b16 %v732
        %v4067 = vunpack.c.h.b16 %v732
        %v4068 = vunpack.c.l.b16 %v733
        %v4069 = vunpack.c.h.b16 %v733
        %v4070 = vunpack.c.l.b16 %v734
        %v4071 = vunpack.c.h.b16 %v734
        %v4072 = vunpack.c.l.b16 %v735
        %v4073 = vunpack.c.h.b16 %v735
        %v4074 = vunpack.c.l.b16 %v736
        %v4075 = vunpack.c.h.b16 %v736
        %v4076 = vunpack.c.l.b16 %v737
        %v4077 = vunpack.c.h.b16 %v737
        %v4078 = vunpack.c.l.b16 %v738
        %v4079 = vunpack.c.h.b16 %v738
        %v4080 = vunpack.c.l.b16 %v739
        %v4081 = vunpack.c.h.b16 %v739
        %v4082 = vunpack.c.l.b16 %v740
        %v4083 = vunpack.c.h.b16 %v740
        %v4084 = vunpack.c.l.b16 %v741
        %v4085 = vunpack.c.h.b16 %v741
        %v4086 = vunpack.c.l.b16 %v742
        %v4087 = vunpack.c.h.b16 %v742
        %v4088 = vunpack.c.l.b16 %v743
        %v4089 = vunpack.c.h.b16 %v743
        %v4090 = vunpack.c.l.b16 %v744
        %v4091 = vunpack.c.h.b16 %v744
        %v4092 = vunpack.c.l.b16 %v745
        %v4093 = vunpack.c.h.b16 %v745
        %v4094 = vunpack.c.l.b16 %v746
        %v4095 = vunpack.c.h.b16 %v746
        %v4096 = vunpack.c.l.b16 %v747
        %v4097 = vunpack.c.h.b16 %v747
        %v4098 = vunpack.c.l.b16 %v748
        %v4099 = vunpack.c.h.b16 %v748
        %v4100 = vunpack.c.l.b16 %v749
        %v4101 = vunpack.c.h.b16 %v749
        %v4102 = vunpack.c.l.b16 %v750
        %v4103 = vunpack.c.h.b16 %v750
        %v4104 = vunpack.c.l.b16 %v751
        %v4105 = vunpack.c.h.b16 %v751
        %v4106 = vunpack.c.l.b16 %v752
        %v4107 = vunpack.c.h.b16 %v752
        %v4108 = vunpack.c.l.b16 %v753
        %v4109 = vunpack.c.h.b16 %v753
        %v4110 = vunpack.c.l.b16 %v754
        %v4111 = vunpack.c.h.b16 %v754
        %v4112 = vunpack.c.l.b16 %v755
        %v4113 = vunpack.c.h.b16 %v755
        %v4114 = vunpack.c.l.b16 %v756
        %v4115 = vunpack.c.h.b16 %v756
        %v4116 = vunpack.c.l.b16 %v757
        %v4117 = vunpack.c.h.b16 %v757
        %v4118 = vunpack.c.l.b16 %v758
        %v4119 = vunpack.c.h.b16 %v758
        %v4120 = vunpack.c.l.b16 %v759
        %v4121 = vunpack.c.h.b16 %v759
        %v4122 = vunpack.c.l.b16 %v760
        %v4123 = vunpack.c.h.b16 %v760
        %v4124 = vunpack.c.l.b16 %v761
        %v4125 = vunpack.c.h.b16 %v761
        %v4126 = vunpack.c.l.b16 %v762
        %v4127 = vunpack.c.h.b16 %v762
        %v4128 = vunpack.c.l.b16 %v763
        %v4129 = vunpack.c.h.b16 %v763
        %v4130 = vunpack.c.l.b16 %v764
        %v4131 = vunpack.c.h.b16 %v764
        %v4132 = vunpack.c.l.b16 %v765
        %v4133 = vunpack.c.h.b16 %v765
        %v4134 = vunpack.c.l.b16 %v766
        %v4135 = vunpack.c.h.b16 %v766
        %v4136 = vunpack.c.l.b16 %v767
        %v4137 = vunpack.c.h.b16 %v767
        %v4138 = vunpack.c.l.b16 %v768
        %v4139 = vunpack.c.h.b16 %v768
        %v4140 = vunpack.c.l.b16 %v769
        %v4141 = vunpack.c.h.b16 %v769
        %v4142 = vunpack.c.l.b16 %v770
        %v4143 = vunpack.c.h.b16 %v770
        %v4144 = vunpack.c.l.b16 %v771
        %v4145 = vunpack.c.h.b16 %v771
        %v4146 = vunpack.c.l.b16 %v772
        %v4147 = vunpack.c.h.b16 %v772
        %v4148 = vunpack.c.l.b16 %v773
        %v4149 = vunpack.c.h.b16 %v773
        %v4150 = vunpack.c.l.b16 %v774
        %v4151 = vunpack.c.h.b16 %v774
        %v4152 = vunpack.c.l.b16 %v775
        %v4153 = vunpack.c.h.b16 %v775
        %v4154 = vunpack.c.l.b16 %v776
        %v4155 = vunpack.c.h.b16 %v776
        %v4156 = vunpack.c.l.b16 %v777
        %v4157 = vunpack.c.h.b16 %v777
        %v4158 = vunpack.c.l.b16 %v778
        %v4159 = vunpack.c.h.b16 %v778
        %v4160 = vunpack.c.l.b16 %v779
        %v4161 = vunpack.c.h.b16 %v779
        %v4162 = vunpack.c.l.b16 %v780
        %v4163 = vunpack.c.h.b16 %v780
        %v4164 = vunpack.c.l.b16 %v781
        %v4165 = vunpack.c.h.b16 %v781
        %v4166 = vunpack.c.l.b16 %v782
        %v4167 = vunpack.c.h.b16 %v782
        %v4168 = vunpack.c.l.b16 %v783
        %v4169 = vunpack.c.h.b16 %v783
        %v4170 = vunpack.c.l.b16 %v784
        %v4171 = vunpack.c.h.b16 %v784
        %v4172 = vunpack.c.l.b16 %v785
        %v4173 = vunpack.c.h.b16 %v785
        %v4174 = vunpack.c.l.b16 %v786
        %v4175 = vunpack.c.h.b16 %v786
        %v4176 = vunpack.c.l.b16 %v787
        %v4177 = vunpack.c.h.b16 %v787
        %v4178 = vunpack.c.l.b16 %v788
        %v4179 = vunpack.c.h.b16 %v788
        %v4180 = vunpack.c.l.b16 %v789
        %v4181 = vunpack.c.h.b16 %v789
        %v4182 = vunpack.c.l.b16 %v790
        %v4183 = vunpack.c.h.b16 %v790
        %v4184 = vunpack.c.l.b16 %v791
        %v4185 = vunpack.c.h.b16 %v791
        %v4186 = vunpack.c.l.b16 %v792
        %v4187 = vunpack.c.h.b16 %v792
        %v4188 = vunpack.c.l.b16 %v793
        %v4189 = vunpack.c.h.b16 %v793
        %v4190 = vunpack.c.l.b16 %v794
        %v4191 = vunpack.c.h.b16 %v794
        %v4192 = vunpack.c.l.b16 %v795
        %v4193 = vunpack.c.h.b16 %v795
        %v4194 = vunpack.c.l.b16 %v796
        %v4195 = vunpack.c.h.b16 %v796
        %v4196 = vunpack.c.l.b16 %v797
        %v4197 = vunpack.c.h.b16 %v797
        %v4198 = vunpack.c.l.b16 %v798
        %v4199 = vunpack.c.h.b16 %v798
        %v4200 = vunpack.c.l.b16 %v799
        %v4201 = vunpack.c.h.b16 %v799
        %v4202 = vunpack.c.l.b16 %v800
        %v4203 = vunpack.c.h.b16 %v800
        %v4204 = vunpack.c.l.b16 %v801
        %v4205 = vunpack.c.h.b16 %v801
        %v4206 = vunpack.c.l.b16 %v802
        %v4207 = vunpack.c.h.b16 %v802
        %v4208 = vunpack.c.l.b16 %v803
        %v4209 = vunpack.c.h.b16 %v803
        %v4210 = vunpack.c.l.b16 %v804
        %v4211 = vunpack.c.h.b16 %v804
        %v4212 = vunpack.c.l.b16 %v805
        %v4213 = vunpack.c.h.b16 %v805
        %v4214 = vunpack.c.l.b16 %v806
        %v4215 = vunpack.c.h.b16 %v806
        %v4216 = vunpack.c.l.b16 %v807
        %v4217 = vunpack.c.h.b16 %v807
        %v4218 = vunpack.c.l.b16 %v808
        %v4219 = vunpack.c.h.b16 %v808
        %v4220 = vunpack.c.l.b16 %v809
        %v4221 = vunpack.c.h.b16 %v809
        %v4222 = vunpack.c.l.b16 %v810
        %v4223 = vunpack.c.h.b16 %v810
        %v4224 = vunpack.c.l.b16 %v811
        %v4225 = vunpack.c.h.b16 %v811
        %v4226 = vunpack.c.l.b16 %v812
        %v4227 = vunpack.c.h.b16 %v812
        %v4228 = vunpack.c.l.b16 %v813
        %v4229 = vunpack.c.h.b16 %v813
        %v4230 = vunpack.c.l.b16 %v814
        %v4231 = vunpack.c.h.b16 %v814
        %v4232 = vunpack.c.l.b16 %v815
        %v4233 = vunpack.c.h.b16 %v815
        %v4234 = vunpack.c.l.b16 %v816
        %v4235 = vunpack.c.h.b16 %v816
        %v4236 = vunpack.c.l.b16 %v817
        %v4237 = vunpack.c.h.b16 %v817
        %v4238 = vunpack.c.l.b16 %v818
        %v4239 = vunpack.c.h.b16 %v818
        %v4240 = vunpack.c.l.b16 %v819
        %v4241 = vunpack.c.h.b16 %v819
        %v4242 = vunpack.c.l.b16 %v820
        %v4243 = vunpack.c.h.b16 %v820
        %v4244 = vunpack.c.l.b16 %v821
        %v4245 = vunpack.c.h.b16 %v821
        %v4246 = vunpack.c.l.b16 %v822
        %v4247 = vunpack.c.h.b16 %v822
        %v4248 = vunpack.c.l.b16 %v823
        %v4249 = vunpack.c.h.b16 %v823
        %v4250 = vunpack.c.l.b16 %v824
        %v4251 = vunpack.c.h.b16 %v824
        %v4252 = vunpack.c.l.b16 %v825
        %v4253 = vunpack.c.h.b16 %v825
        %v4254 = vunpack.c.l.b16 %v826
        %v4255 = vunpack.c.h.b16 %v826
        %v4256 = vunpack.c.l.b16 %v827
        %v4257 = vunpack.c.h.b16 %v827
        %v4258 = vunpack.c.l.b16 %v828
        %v4259 = vunpack.c.h.b16 %v828
        %v4260 = vunpack.c.l.b16 %v829
        %v4261 = vunpack.c.h.b16 %v829
        %v4262 = vunpack.c.l.b16 %v830
        %v4263 = vunpack.c.h.b16 %v830
        %v4264 = vunpack.c.l.b16 %v831
        %v4265 = vunpack.c.h.b16 %v831
        %v4266 = vunpack.c.l.b16 %v832
        %v4267 = vunpack.c.h.b16 %v832
        %v4268 = vunpack.c.l.b16 %v833
        %v4269 = vunpack.c.h.b16 %v833
        %v4270 = vunpack.c.l.b16 %v834
        %v4271 = vunpack.c.h.b16 %v834
        %v4272 = vunpack.c.l.b16 %v835
        %v4273 = vunpack.c.h.b16 %v835
        %v4274 = vunpack.c.l.b16 %v836
        %v4275 = vunpack.c.h.b16 %v836
        %v4276 = vunpack.c.l.b16 %v837
        %v4277 = vunpack.c.h.b16 %v837
        %v4278 = vunpack.c.l.b16 %v838
        %v4279 = vunpack.c.h.b16 %v838
        %v4280 = vunpack.c.l.b16 %v839
        %v4281 = vunpack.c.h.b16 %v839
        %v4282 = vunpack.c.l.b16 %v840
        %v4283 = vunpack.c.h.b16 %v840
        %v4284 = vunpack.c.l.b16 %v841
        %v4285 = vunpack.c.h.b16 %v841
        %v4286 = vunpack.c.l.b16 %v842
        %v4287 = vunpack.c.h.b16 %v842
        %v4288 = vunpack.c.l.b16 %v843
        %v4289 = vunpack.c.h.b16 %v843
        %v4290 = vunpack.c.l.b16 %v844
        %v4291 = vunpack.c.h.b16 %v844
        %v4292 = vunpack.c.l.b16 %v845
        %v4293 = vunpack.c.h.b16 %v845
        %v4294 = vunpack.c.l.b16 %v846
        %v4295 = vunpack.c.h.b16 %v846
        %v4296 = vunpack.c.l.b16 %v847
        %v4297 = vunpack.c.h.b16 %v847
        %v4298 = vunpack.c.l.b16 %v848
        %v4299 = vunpack.c.h.b16 %v848
        %v4300 = vunpack.c.l.b16 %v849
        %v4301 = vunpack.c.h.b16 %v849
        %v4302 = vunpack.c.l.b16 %v850
        %v4303 = vunpack.c.h.b16 %v850
        %v4304 = vunpack.c.l.b16 %v851
        %v4305 = vunpack.c.h.b16 %v851
        %v4306 = vunpack.c.l.b16 %v852
        %v4307 = vunpack.c.h.b16 %v852
        %v4308 = vunpack.c.l.b16 %v853
        %v4309 = vunpack.c.h.b16 %v853
        %v4310 = vunpack.c.l.b16 %v854
        %v4311 = vunpack.c.h.b16 %v854
        %v4312 = vunpack.c.l.b16 %v855
        %v4313 = vunpack.c.h.b16 %v855
        %v4314 = vunpack.c.l.b16 %v856
        %v4315 = vunpack.c.h.b16 %v856
        %v4316 = vunpack.c.l.b16 %v857
        %v4317 = vunpack.c.h.b16 %v857
        %v4318 = vunpack.c.l.b16 %v858
        %v4319 = vunpack.c.h.b16 %v858
        %v4320 = vunpack.c.l.b16 %v859
        %v4321 = vunpack.c.h.b16 %v859
        %v4322 = vunpack.c.l.b16 %v860
        %v4323 = vunpack.c.h.b16 %v860
        %v4324 = vunpack.c.l.b16 %v861
        %v4325 = vunpack.c.h.b16 %v861
        %v4326 = vunpack.c.l.b16 %v862
        %v4327 = vunpack.c.h.b16 %v862
        %v4328 = vunpack.c.l.b16 %v863
        %v4329 = vunpack.c.h.b16 %v863
        %v4330 = vunpack.c.l.b16 %v864
        %v4331 = vunpack.c.h.b16 %v864
        %v4332 = vunpack.c.l.b16 %v865
        %v4333 = vunpack.c.h.b16 %v865
        %v4334 = vunpack.c.l.b16 %v866
        %v4335 = vunpack.c.h.b16 %v866
        %v4336 = vunpack.c.l.b16 %v867
        %v4337 = vunpack.c.h.b16 %v867
        %v4338 = vunpack.c.l.b16 %v868
        %v4339 = vunpack.c.h.b16 %v868
        %v4340 = vunpack.c.l.b16 %v869
        %v4341 = vunpack.c.h.b16 %v869
        %v4342 = vunpack.c.l.b16 %v870
        %v4343 = vunpack.c.h.b16 %v870
        %v4344 = vunpack.c.l.b16 %v871
        %v4345 = vunpack.c.h.b16 %v871
        %v4346 = vunpack.c.l.b16 %v872
        %v4347 = vunpack.c.h.b16 %v872
        %v4348 = vunpack.c.l.b16 %v873
        %v4349 = vunpack.c.h.b16 %v873
        %v4350 = vunpack.c.l.b16 %v874
        %v4351 = vunpack.c.h.b16 %v874
        %v4352 = vunpack.c.l.b16 %v875
        %v4353 = vunpack.c.h.b16 %v875
        %v4354 = vunpack.c.l.b16 %v876
        %v4355 = vunpack.c.h.b16 %v876
        %v4356 = vunpack.c.l.b16 %v877
        %v4357 = vunpack.c.h.b16 %v877
        %v4358 = vunpack.c.l.b16 %v878
        %v4359 = vunpack.c.h.b16 %v878
        %v4360 = vunpack.c.l.b16 %v879
        %v4361 = vunpack.c.h.b16 %v879
        %v4362 = vunpack.c.l.b16 %v880
        %v4363 = vunpack.c.h.b16 %v880
        %v4364 = vunpack.c.l.b16 %v881
        %v4365 = vunpack.c.h.b16 %v881
        %v4366 = vunpack.c.l.b16 %v882
        %v4367 = vunpack.c.h.b16 %v882
        %v4368 = vunpack.c.l.b16 %v883
        %v4369 = vunpack.c.h.b16 %v883
        %v4370 = vunpack.c.l.b16 %v884
        %v4371 = vunpack.c.h.b16 %v884
        %v4372 = vunpack.c.l.b16 %v885
        %v4373 = vunpack.c.h.b16 %v885
        %v4374 = vunpack.c.l.b16 %v886
        %v4375 = vunpack.c.h.b16 %v886
        %v4376 = vunpack.c.l.b16 %v887
        %v4377 = vunpack.c.h.b16 %v887
        %v4378 = vunpack.c.l.b16 %v888
        %v4379 = vunpack.c.h.b16 %v888
        %v4380 = vunpack.c.l.b16 %v889
        %v4381 = vunpack.c.h.b16 %v889
        %v4382 = vunpack.c.l.b16 %v890
        %v4383 = vunpack.c.h.b16 %v890
        %v4384 = vunpack.c.l.b16 %v891
        %v4385 = vunpack.c.h.b16 %v891
        %v4386 = vunpack.c.l.b16 %v892
        %v4387 = vunpack.c.h.b16 %v892
        %v4388 = vunpack.c.l.b16 %v893
        %v4389 = vunpack.c.h.b16 %v893
        %v4390 = vunpack.c.l.b16 %v894
        %v4391 = vunpack.c.h.b16 %v894
        %v4392 = vunpack.c.l.b16 %v895
        %v4393 = vunpack.c.h.b16 %v895
        %v4394 = vunpack.c.l.b16 %v896
        %v4395 = vunpack.c.h.b16 %v896
        %v4396 = vunpack.c.l.b16 %v897
        %v4397 = vunpack.c.h.b16 %v897
        %v4398 = vunpack.c.l.b16 %v898
        %v4399 = vunpack.c.h.b16 %v898
        %v4400 = vunpack.c.l.b16 %v899
        %v4401 = vunpack.c.h.b16 %v899
        %v4402 = vunpack.c.l.b16 %v900
        %v4403 = vunpack.c.h.b16 %v900
        %v4404 = vunpack.c.l.b16 %v901
        %v4405 = vunpack.c.h.b16 %v901
        %v4406 = vunpack.c.l.b16 %v902
        %v4407 = vunpack.c.h.b16 %v902
        %v4408 = vunpack.c.l.b16 %v903
        %v4409 = vunpack.c.h.b16 %v903
        %v4410 = vunpack.c.l.b16 %v904
        %v4411 = vunpack.c.h.b16 %v904
        %v4412 = vunpack.c.l.b16 %v905
        %v4413 = vunpack.c.h.b16 %v905
        %v4414 = vunpack.c.l.b16 %v906
        %v4415 = vunpack.c.h.b16 %v906
        %v4416 = vunpack.c.l.b16 %v907
        %v4417 = vunpack.c.h.b16 %v907
        %v4418 = vunpack.c.l.b16 %v908
        %v4419 = vunpack.c.h.b16 %v908
        %v4420 = vunpack.c.l.b16 %v909
        %v4421 = vunpack.c.h.b16 %v909
        %v4422 = vunpack.c.l.b16 %v910
        %v4423 = vunpack.c.h.b16 %v910
        %v4424 = vunpack.c.l.b16 %v911
        %v4425 = vunpack.c.h.b16 %v911
        %v4426 = vunpack.c.l.b16 %v912
        %v4427 = vunpack.c.h.b16 %v912
        %v4428 = vunpack.c.l.b16 %v913
        %v4429 = vunpack.c.h.b16 %v913
        %v4430 = vunpack.c.l.b16 %v914
        %v4431 = vunpack.c.h.b16 %v914
        %v4432 = vunpack.c.l.b16 %v915
        %v4433 = vunpack.c.h.b16 %v915
        %v4434 = vunpack.c.l.b16 %v916
        %v4435 = vunpack.c.h.b16 %v916
        %v4436 = vunpack.c.l.b16 %v917
        %v4437 = vunpack.c.h.b16 %v917
        %v4438 = vunpack.c.l.b16 %v918
        %v4439 = vunpack.c.h.b16 %v918
        %v4440 = vunpack.c.l.b16 %v919
        %v4441 = vunpack.c.h.b16 %v919
        %v4442 = vunpack.c.l.b16 %v920
        %v4443 = vunpack.c.h.b16 %v920
        %v4444 = vunpack.c.l.b16 %v921
        %v4445 = vunpack.c.h.b16 %v921
        %v4446 = vunpack.c.l.b16 %v922
        %v4447 = vunpack.c.h.b16 %v922
        %v4448 = vunpack.c.l.b16 %v923
        %v4449 = vunpack.c.h.b16 %v923
        %v4450 = vunpack.c.l.b16 %v924
        %v4451 = vunpack.c.h.b16 %v924
        %v4452 = vunpack.c.l.b16 %v925
        %v4453 = vunpack.c.h.b16 %v925
        %v4454 = vunpack.c.l.b16 %v926
        %v4455 = vunpack.c.h.b16 %v926
        %v4456 = vunpack.c.l.b16 %v927
        %v4457 = vunpack.c.h.b16 %v927
        %v4458 = vunpack.c.l.b16 %v928
        %v4459 = vunpack.c.h.b16 %v928
        %v4460 = vunpack.c.l.b16 %v929
        %v4461 = vunpack.c.h.b16 %v929
        %v4462 = vunpack.c.l.b16 %v930
        %v4463 = vunpack.c.h.b16 %v930
        %v4464 = vunpack.c.l.b16 %v931
        %v4465 = vunpack.c.h.b16 %v931
        %v4466 = vunpack.c.l.b16 %v932
        %v4467 = vunpack.c.h.b16 %v932
        %v4468 = vunpack.c.l.b16 %v933
        %v4469 = vunpack.c.h.b16 %v933
        %v4470 = vunpack.c.l.b16 %v934
        %v4471 = vunpack.c.h.b16 %v934
        %v4472 = vunpack.c.l.b16 %v935
        %v4473 = vunpack.c.h.b16 %v935
        %v4474 = vunpack.c.l.b16 %v936
        %v4475 = vunpack.c.h.b16 %v936
        %v4476 = vunpack.c.l.b16 %v937
        %v4477 = vunpack.c.h.b16 %v937
        %v4478 = vunpack.c.l.b16 %v938
        %v4479 = vunpack.c.h.b16 %v938
        %v4480 = vunpack.c.l.b16 %v939
        %v4481 = vunpack.c.h.b16 %v939
        %v4482 = vunpack.c.l.b16 %v940
        %v4483 = vunpack.c.h.b16 %v940
        %v4484 = vunpack.c.l.b16 %v941
        %v4485 = vunpack.c.h.b16 %v941
        %v4486 = vunpack.c.l.b16 %v942
        %v4487 = vunpack.c.h.b16 %v942
        %v4488 = vunpack.c.l.b16 %v943
        %v4489 = vunpack.c.h.b16 %v943
        %v4490 = vunpack.c.l.b16 %v944
        %v4491 = vunpack.c.h.b16 %v944
        %v4492 = vunpack.c.l.b16 %v945
        %v4493 = vunpack.c.h.b16 %v945
        %v4494 = vunpack.c.l.b16 %v946
        %v4495 = vunpack.c.h.b16 %v946
        %v4496 = vunpack.c.l.b16 %v947
        %v4497 = vunpack.c.h.b16 %v947
        %v4498 = vunpack.c.l.b16 %v948
        %v4499 = vunpack.c.h.b16 %v948
        %v4500 = vunpack.c.l.b16 %v949
        %v4501 = vunpack.c.h.b16 %v949
        %v4502 = vunpack.c.l.b16 %v950
        %v4503 = vunpack.c.h.b16 %v950
        %v4504 = vunpack.c.l.b16 %v951
        %v4505 = vunpack.c.h.b16 %v951
        %v4506 = vunpack.c.l.b16 %v952
        %v4507 = vunpack.c.h.b16 %v952
        %v4508 = vunpack.c.l.b16 %v953
        %v4509 = vunpack.c.h.b16 %v953
        %v4510 = vunpack.c.l.b16 %v954
        %v4511 = vunpack.c.h.b16 %v954
        %v4512 = vunpack.c.l.b16 %v955
        %v4513 = vunpack.c.h.b16 %v955
        %v4514 = vunpack.c.l.b16 %v956
        %v4515 = vunpack.c.h.b16 %v956
        %v4516 = vunpack.c.l.b16 %v957
        %v4517 = vunpack.c.h.b16 %v957
        %v4518 = vunpack.c.l.b16 %v958
        %v4519 = vunpack.c.h.b16 %v958
        %v4520 = vunpack.c.l.b16 %v959
        %v4521 = vunpack.c.h.b16 %v959
        %v4522 = vunpack.c.l.b16 %v960
        %v4523 = vunpack.c.h.b16 %v960
        %v4524 = vunpack.c.l.b16 %v961
        %v4525 = vunpack.c.h.b16 %v961
        %v4526 = vunpack.c.l.b16 %v962
        %v4527 = vunpack.c.h.b16 %v962
        %v4528 = vunpack.c.l.b16 %v963
        %v4529 = vunpack.c.h.b16 %v963
        %v4530 = vunpack.c.l.b16 %v964
        %v4531 = vunpack.c.h.b16 %v964
        %v4532 = vunpack.c.l.b16 %v965
        %v4533 = vunpack.c.h.b16 %v965
        %v4534 = vunpack.c.l.b16 %v966
        %v4535 = vunpack.c.h.b16 %v966
        %v4536 = vunpack.c.l.b16 %v967
        %v4537 = vunpack.c.h.b16 %v967
        %v4538 = vunpack.c.l.b16 %v968
        %v4539 = vunpack.c.h.b16 %v968
        %v4540 = vunpack.c.l.b16 %v969
        %v4541 = vunpack.c.h.b16 %v969
        %v4542 = vunpack.c.l.b16 %v970
        %v4543 = vunpack.c.h.b16 %v970
        %v4544 = vunpack.c.l.b16 %v971
        %v4545 = vunpack.c.h.b16 %v971
        %v4546 = vunpack.c.l.b16 %v972
        %v4547 = vunpack.c.h.b16 %v972
        %v4548 = vunpack.c.l.b16 %v973
        %v4549 = vunpack.c.h.b16 %v973
        %v4550 = vunpack.c.l.b16 %v974
        %v4551 = vunpack.c.h.b16 %v974
        %v4552 = vunpack.c.l.b16 %v975
        %v4553 = vunpack.c.h.b16 %v975
        %v4554 = vunpack.c.l.b16 %v976
        %v4555 = vunpack.c.h.b16 %v976
        %v4556 = vunpack.c.l.b16 %v977
        %v4557 = vunpack.c.h.b16 %v977
        %v4558 = vunpack.c.l.b16 %v978
        %v4559 = vunpack.c.h.b16 %v978
        %v4560 = vunpack.c.l.b16 %v979
        %v4561 = vunpack.c.h.b16 %v979
        %v4562 = vunpack.c.l.b16 %v980
        %v4563 = vunpack.c.h.b16 %v980
        %v4564 = vunpack.c.l.b16 %v981
        %v4565 = vunpack.c.h.b16 %v981
        %v4566 = vunpack.c.l.b16 %v982
        %v4567 = vunpack.c.h.b16 %v982
        %v4568 = vunpack.c.l.b16 %v983
        %v4569 = vunpack.c.h.b16 %v983
        %v4570 = vunpack.c.l.b16 %v984
        %v4571 = vunpack.c.h.b16 %v984
        %v4572 = vunpack.c.l.b16 %v985
        %v4573 = vunpack.c.h.b16 %v985
        %v4574 = vunpack.c.l.b16 %v986
        %v4575 = vunpack.c.h.b16 %v986
        %v4576 = vunpack.c.l.b16 %v987
        %v4577 = vunpack.c.h.b16 %v987
        %v4578 = vunpack.c.l.b16 %v988
        %v4579 = vunpack.c.h.b16 %v988
        %v4580 = vunpack.c.l.b16 %v989
        %v4581 = vunpack.c.h.b16 %v989
        %v4582 = vunpack.c.l.b16 %v990
        %v4583 = vunpack.c.h.b16 %v990
        %v4584 = vunpack.c.l.b16 %v991
        %v4585 = vunpack.c.h.b16 %v991
        %v4586 = vunpack.c.l.b16 %v992
        %v4587 = vunpack.c.h.b16 %v992
        %v4588 = vunpack.c.l.b16 %v993
        %v4589 = vunpack.c.h.b16 %v993
        %v4590 = vunpack.c.l.b16 %v994
        %v4591 = vunpack.c.h.b16 %v994
        %v4592 = vunpack.c.l.b16 %v995
        %v4593 = vunpack.c.h.b16 %v995
        %v4594 = vunpack.c.l.b16 %v996
        %v4595 = vunpack.c.h.b16 %v996
        %v4596 = vunpack.c.l.b16 %v997
        %v4597 = vunpack.c.h.b16 %v997
        %v4598 = vunpack.c.l.b16 %v998
        %v4599 = vunpack.c.h.b16 %v998
        %v4600 = vunpack.c.l.b16 %v999
        %v4601 = vunpack.c.h.b16 %v999
        %v4602 = vunpack.c.l.b16 %v1000
        %v4603 = vunpack.c.h.b16 %v1000
        %v4604 = vunpack.c.l.b16 %v1001
        %v4605 = vunpack.c.h.b16 %v1001
        %v4606 = vunpack.c.l.b16 %v1002
        %v4607 = vunpack.c.h.b16 %v1002
        %v4608 = vunpack.c.l.b16 %v1003
        %v4609 = vunpack.c.h.b16 %v1003
        %v4610 = vunpack.c.l.b16 %v1004
        %v4611 = vunpack.c.h.b16 %v1004
        %v4612 = vunpack.c.l.b16 %v1005
        %v4613 = vunpack.c.h.b16 %v1005
        %v4614 = vunpack.c.l.b16 %v1006
        %v4615 = vunpack.c.h.b16 %v1006
        %v4616 = vunpack.c.l.b16 %v1007
        %v4617 = vunpack.c.h.b16 %v1007
        %v4618 = vunpack.c.l.b16 %v1008
        %v4619 = vunpack.c.h.b16 %v1008
        %v4620 = vunpack.c.l.b16 %v1009
        %v4621 = vunpack.c.h.b16 %v1009
        %v4622 = vunpack.c.l.b16 %v1010
        %v4623 = vunpack.c.h.b16 %v1010
        %v4624 = vunpack.c.l.b16 %v1011
        %v4625 = vunpack.c.h.b16 %v1011
        %v4626 = vunpack.c.l.b16 %v1012
        %v4627 = vunpack.c.h.b16 %v1012
        %v4628 = vunpack.c.l.b16 %v1013
        %v4629 = vunpack.c.h.b16 %v1013
        %v4630 = vunpack.c.l.b16 %v1014
        %v4631 = vunpack.c.h.b16 %v1014
        %v4632 = vunpack.c.l.b16 %v1015
        %v4633 = vunpack.c.h.b16 %v1015
        %v4634 = vunpack.c.l.b16 %v1016
        %v4635 = vunpack.c.h.b16 %v1016
        %v4636 = vunpack.c.l.b16 %v1017
        %v4637 = vunpack.c.h.b16 %v1017
        %v4638 = vunpack.c.l.b16 %v1018
        %v4639 = vunpack.c.h.b16 %v1018
        %v4640 = vunpack.c.l.b16 %v1019
        %v4641 = vunpack.c.h.b16 %v1019
        %v4642 = vunpack.c.l.b16 %v1020
        %v4643 = vunpack.c.h.b16 %v1020
        %v4644 = vunpack.c.l.b16 %v1021
        %v4645 = vunpack.c.h.b16 %v1021
        %v4646 = vunpack.c.l.b16 %v1022
        %v4647 = vunpack.c.h.b16 %v1022
        %v4648 = vunpack.c.l.b16 %v1023
        %v4649 = vunpack.c.h.b16 %v1023
        %v4650 = vunpack.c.l.b16 %v1024
        %v4651 = vunpack.c.h.b16 %v1024
        %v4652 = vunpack.c.l.b16 %v1025
        %v4653 = vunpack.c.h.b16 %v1025
        %v4654 = vunpack.c.l.b16 %v1026
        %v4655 = vunpack.c.h.b16 %v1026
        %v4656 = vunpack.c.l.b16 %v1027
        %v4657 = vunpack.c.h.b16 %v1027
        %v4658 = vunpack.c.l.b16 %v1028
        %v4659 = vunpack.c.h.b16 %v1028
        %v4660 = vunpack.c.l.b16 %v1029
        %v4661 = vunpack.c.h.b16 %v1029
        %v4662 = vunpack.c.l.b16 %v1030
        %v4663 = vunpack.c.h.b16 %v1030
        %v4664 = vunpack.c.l.b16 %v1031
        %v4665 = vunpack.c.h.b16 %v1031
        %v4666 = vunpack.c.l.b16 %v1032
        %v4667 = vunpack.c.h.b16 %v1032
        %v4668 = vunpack.c.l.b16 %v1033
        %v4669 = vunpack.c.h.b16 %v1033
        %v4670 = vunpack.c.l.b16 %v1034
        %v4671 = vunpack.c.h.b16 %v1034
        %v4672 = vunpack.c.l.b16 %v1035
        %v4673 = vunpack.c.h.b16 %v1035
        %v4674 = vunpack.c.l.b16 %v1036
        %v4675 = vunpack.c.h.b16 %v1036
        %v4676 = vunpack.c.l.b16 %v1037
        %v4677 = vunpack.c.h.b16 %v1037
        %v4678 = vunpack.c.l.b16 %v1038
        %v4679 = vunpack.c.h.b16 %v1038
        %v4680 = vunpack.c.l.b16 %v1039
        %v4681 = vunpack.c.h.b16 %v1039
        %v4682 = vunpack.c.l.b16 %v1040
        %v4683 = vunpack.c.h.b16 %v1040
        %v4684 = vunpack.c.l.b16 %v1041
        %v4685 = vunpack.c.h.b16 %v1041
        %v4686 = vunpack.c.l.b16 %v1042
        %v4687 = vunpack.c.h.b16 %v1042
        %v4688 = vunpack.c.l.b16 %v1043
        %v4689 = vunpack.c.h.b16 %v1043
        %v4690 = vunpack.c.l.b16 %v1044
        %v4691 = vunpack.c.h.b16 %v1044
        %v4692 = vunpack.c.l.b16 %v1045
        %v4693 = vunpack.c.h.b16 %v1045
        %v4694 = vunpack.c.l.b16 %v1046
        %v4695 = vunpack.c.h.b16 %v1046
        %v4696 = vunpack.c.l.b16 %v1047
        %v4697 = vunpack.c.h.b16 %v1047
        %v4698 = vunpack.c.l.b16 %v1048
        %v4699 = vunpack.c.h.b16 %v1048
        %v4700 = vunpack.c.l.b16 %v1049
        %v4701 = vunpack.c.h.b16 %v1049
        %v4702 = vunpack.c.l.b16 %v1050
        %v4703 = vunpack.c.h.b16 %v1050
        %v4704 = vunpack.c.l.b16 %v1051
        %v4705 = vunpack.c.h.b16 %v1051
        %v4706 = vunpack.c.l.b16 %v1052
        %v4707 = vunpack.c.h.b16 %v1052
        %v4708 = vunpack.c.l.b16 %v1053
        %v4709 = vunpack.c.h.b16 %v1053
        %v4710 = vunpack.c.l.b16 %v1054
        %v4711 = vunpack.c.h.b16 %v1054
        %v4712 = vunpack.c.l.b16 %v1055
        %v4713 = vunpack.c.h.b16 %v1055
        %v4714 = vunpack.c.l.b16 %v1056
        %v4715 = vunpack.c.h.b16 %v1056
        %v4716 = vunpack.c.l.b16 %v1057
        %v4717 = vunpack.c.h.b16 %v1057
        %v4718 = vunpack.c.l.b16 %v1058
        %v4719 = vunpack.c.h.b16 %v1058
        %v4720 = vunpack.c.l.b16 %v1059
        %v4721 = vunpack.c.h.b16 %v1059
        %v4722 = vunpack.c.l.b16 %v1060
        %v4723 = vunpack.c.h.b16 %v1060
        %v4724 = vunpack.c.l.b16 %v1061
        %v4725 = vunpack.c.h.b16 %v1061
        %v4726 = vunpack.c.l.b16 %v1062
        %v4727 = vunpack.c.h.b16 %v1062
        %v4728 = vunpack.c.l.b16 %v1063
        %v4729 = vunpack.c.h.b16 %v1063
        %v4730 = vunpack.c.l.b16 %v1064
        %v4731 = vunpack.c.h.b16 %v1064
        %v4732 = vunpack.c.l.b16 %v1065
        %v4733 = vunpack.c.h.b16 %v1065
        %v4734 = vunpack.c.l.b16 %v1066
        %v4735 = vunpack.c.h.b16 %v1066
        %v4736 = vunpack.c.l.b16 %v1067
        %v4737 = vunpack.c.h.b16 %v1067
        %v4738 = vunpack.c.l.b16 %v1068
        %v4739 = vunpack.c.h.b16 %v1068
        %v4740 = vunpack.c.l.b16 %v1069
        %v4741 = vunpack.c.h.b16 %v1069
        %v4742 = vunpack.c.l.b16 %v1070
        %v4743 = vunpack.c.h.b16 %v1070
        %v4744 = vunpack.c.l.b16 %v1071
        %v4745 = vunpack.c.h.b16 %v1071
        %v4746 = vunpack.c.l.b16 %v1072
        %v4747 = vunpack.c.h.b16 %v1072
        %v4748 = vunpack.c.l.b16 %v1073
        %v4749 = vunpack.c.h.b16 %v1073
        %v4750 = vunpack.c.l.b16 %v1074
        %v4751 = vunpack.c.h.b16 %v1074
        %v4752 = vunpack.c.l.b16 %v1075
        %v4753 = vunpack.c.h.b16 %v1075
        %v4754 = vunpack.c.l.b16 %v1076
        %v4755 = vunpack.c.h.b16 %v1076
        %v4756 = vunpack.c.l.b16 %v1077
        %v4757 = vunpack.c.h.b16 %v1077
        %v4758 = vunpack.c.l.b16 %v1078
        %v4759 = vunpack.c.h.b16 %v1078
        %v4760 = vunpack.c.l.b16 %v1079
        %v4761 = vunpack.c.h.b16 %v1079
        %v4762 = vunpack.c.l.b16 %v1080
        %v4763 = vunpack.c.h.b16 %v1080
        %v4764 = vunpack.c.l.b16 %v1081
        %v4765 = vunpack.c.h.b16 %v1081
        %v4766 = vunpack.c.l.b16 %v1082
        %v4767 = vunpack.c.h.b16 %v1082
        %v4768 = vunpack.c.l.b16 %v1083
        %v4769 = vunpack.c.h.b16 %v1083
        %v4770 = vunpack.c.l.b16 %v1084
        %v4771 = vunpack.c.h.b16 %v1084
        %v4772 = vunpack.c.l.b16 %v1085
        %v4773 = vunpack.c.h.b16 %v1085
        %v4774 = vunpack.c.l.b16 %v1086
        %v4775 = vunpack.c.h.b16 %v1086
        %v4776 = vunpack.c.l.b16 %v1087
        %v4777 = vunpack.c.h.b16 %v1087
        %v4778 = vunpack.c.l.b16 %v1088
        %v4779 = vunpack.c.h.b16 %v1088
        %v4780 = vunpack.c.l.b16 %v1089
        %v4781 = vunpack.c.h.b16 %v1089
        %v4782 = vunpack.c.l.b16 %v1090
        %v4783 = vunpack.c.h.b16 %v1090
        %v4784 = vunpack.c.l.b16 %v1091
        %v4785 = vunpack.c.h.b16 %v1091
        %v4786 = vunpack.c.l.b16 %v1092
        %v4787 = vunpack.c.h.b16 %v1092
        %v4788 = vunpack.c.l.b16 %v1093
        %v4789 = vunpack.c.h.b16 %v1093
        %v4790 = vunpack.c.l.b16 %v1094
        %v4791 = vunpack.c.h.b16 %v1094
        %v4792 = vunpack.c.l.b16 %v1095
        %v4793 = vunpack.c.h.b16 %v1095
        %v4794 = vunpack.c.l.b16 %v1096
        %v4795 = vunpack.c.h.b16 %v1096
        %v4796 = vunpack.c.l.b16 %v1097
        %v4797 = vunpack.c.h.b16 %v1097
        %v4798 = vunpack.c.l.b16 %v1098
        %v4799 = vunpack.c.h.b16 %v1098
        %v4800 = vunpack.c.l.b16 %v1099
        %v4801 = vunpack.c.h.b16 %v1099
        %v4802 = vunpack.c.l.b16 %v1100
        %v4803 = vunpack.c.h.b16 %v1100
        %v4804 = vunpack.c.l.b16 %v1101
        %v4805 = vunpack.c.h.b16 %v1101
        %v4806 = vunpack.c.l.b16 %v1102
        %v4807 = vunpack.c.h.b16 %v1102
        %v4808 = vunpack.c.l.b16 %v1103
        %v4809 = vunpack.c.h.b16 %v1103
        %v4810 = vunpack.c.l.b16 %v1104
        %v4811 = vunpack.c.h.b16 %v1104
        %v4812 = vunpack.c.l.b16 %v1105
        %v4813 = vunpack.c.h.b16 %v1105
        %v4814 = vunpack.c.l.b16 %v1106
        %v4815 = vunpack.c.h.b16 %v1106
        %v4816 = vunpack.c.l.b16 %v1107
        %v4817 = vunpack.c.h.b16 %v1107
        %v4818 = vunpack.c.l.b16 %v1108
        %v4819 = vunpack.c.h.b16 %v1108
        %v4820 = vunpack.c.l.b16 %v1109
        %v4821 = vunpack.c.h.b16 %v1109
        %v4822 = vunpack.c.l.b16 %v1110
        %v4823 = vunpack.c.h.b16 %v1110
        %v4824 = vunpack.c.l.b16 %v1111
        %v4825 = vunpack.c.h.b16 %v1111
        %v4826 = vunpack.c.l.b16 %v1112
        %v4827 = vunpack.c.h.b16 %v1112
        %v4828 = vunpack.c.l.b16 %v1113
        %v4829 = vunpack.c.h.b16 %v1113
        %v4830 = vunpack.c.l.b16 %v1114
        %v4831 = vunpack.c.h.b16 %v1114
        %v4832 = vunpack.c.l.b16 %v1115
        %v4833 = vunpack.c.h.b16 %v1115
        %v4834 = vunpack.c.l.b16 %v1116
        %v4835 = vunpack.c.h.b16 %v1116
        %v4836 = vunpack.c.l.b16 %v1117
        %v4837 = vunpack.c.h.b16 %v1117
        %v4838 = vunpack.c.l.b16 %v1118
        %v4839 = vunpack.c.h.b16 %v1118
        %v4840 = vunpack.c.l.b16 %v1119
        %v4841 = vunpack.c.h.b16 %v1119
        %v4842 = vunpack.c.l.b16 %v1120
        %v4843 = vunpack.c.h.b16 %v1120
        %v4844 = vunpack.c.l.b16 %v1121
        %v4845 = vunpack.c.h.b16 %v1121
        %v4846 = vunpack.c.l.b16 %v1122
        %v4847 = vunpack.c.h.b16 %v1122
        %v4848 = vunpack.c.l.b16 %v1123
        %v4849 = vunpack.c.h.b16 %v1123
        %v4850 = vunpack.c.l.b16 %v1124
        %v4851 = vunpack.c.h.b16 %v1124
        %v4852 = vunpack.c.l.b16 %v1125
        %v4853 = vunpack.c.h.b16 %v1125
        %v4854 = vunpack.c.l.b16 %v1126
        %v4855 = vunpack.c.h.b16 %v1126
        %v4856 = vunpack.c.l.b16 %v1127
        %v4857 = vunpack.c.h.b16 %v1127
        %v4858 = vunpack.c.l.b16 %v1128
        %v4859 = vunpack.c.h.b16 %v1128
        %v4860 = vunpack.c.l.b16 %v1129
        %v4861 = vunpack.c.h.b16 %v1129
        %v4862 = vunpack.c.l.b16 %v1130
        %v4863 = vunpack.c.h.b16 %v1130
        %v4864 = vunpack.c.l.b16 %v1131
        %v4865 = vunpack.c.h.b16 %v1131
        %v4866 = vunpack.c.l.b16 %v1132
        %v4867 = vunpack.c.h.b16 %v1132
        %v4868 = vunpack.c.l.b16 %v1133
        %v4869 = vunpack.c.h.b16 %v1133
        %v4870 = vunpack.c.l.b16 %v1134
        %v4871 = vunpack.c.h.b16 %v1134
        %v4872 = vunpack.c.l.b16 %v1135
        %v4873 = vunpack.c.h.b16 %v1135
        %v4874 = vunpack.c.l.b16 %v1136
        %v4875 = vunpack.c.h.b16 %v1136
        %v4876 = vunpack.c.l.b16 %v1137
        %v4877 = vunpack.c.h.b16 %v1137
        %v4878 = vunpack.c.l.b16 %v1138
        %v4879 = vunpack.c.h.b16 %v1138
        %v4880 = vunpack.c.l.b16 %v1139
        %v4881 = vunpack.c.h.b16 %v1139
        %v4882 = vunpack.c.l.b16 %v1140
        %v4883 = vunpack.c.h.b16 %v1140
        %v4884 = vunpack.c.l.b16 %v1141
        %v4885 = vunpack.c.h.b16 %v1141
        %v4886 = vunpack.c.l.b16 %v1142
        %v4887 = vunpack.c.h.b16 %v1142
        %v4888 = vunpack.c.l.b16 %v1143
        %v4889 = vunpack.c.h.b16 %v1143
        %v4890 = vunpack.c.l.b16 %v1144
        %v4891 = vunpack.c.h.b16 %v1144
        %v4892 = vunpack.c.l.b16 %v1145
        %v4893 = vunpack.c.h.b16 %v1145
        %v4894 = vunpack.c.l.b16 %v1146
        %v4895 = vunpack.c.h.b16 %v1146
        %v4896 = vunpack.c.l.b16 %v1147
        %v4897 = vunpack.c.h.b16 %v1147
        %v4898 = vunpack.c.l.b16 %v1148
        %v4899 = vunpack.c.h.b16 %v1148
        %v4900 = vunpack.c.l.b16 %v1149
        %v4901 = vunpack.c.h.b16 %v1149
        %v4902 = vunpack.c.l.b16 %v1150
        %v4903 = vunpack.c.h.b16 %v1150
        %v4904 = vunpack.c.l.b16 %v1151
        %v4905 = vunpack.c.h.b16 %v1151
        %v4906 = vunpack.c.l.b16 %v1152
        %v4907 = vunpack.c.h.b16 %v1152
        %v4908 = vunpack.c.l.b16 %v1153
        %v4909 = vunpack.c.h.b16 %v1153
        %v4910 = vunpack.c.l.b16 %v1154
        %v4911 = vunpack.c.h.b16 %v1154
        %v4912 = vunpack.c.l.b16 %v1155
        %v4913 = vunpack.c.h.b16 %v1155
        %v4914 = vunpack.c.l.b16 %v1156
        %v4915 = vunpack.c.h.b16 %v1156
        %v4916 = vunpack.c.l.b16 %v1157
        %v4917 = vunpack.c.h.b16 %v1157
        %v4918 = vunpack.c.l.b16 %v1158
        %v4919 = vunpack.c.h.b16 %v1158
        %v4920 = vunpack.c.l.b16 %v1159
        %v4921 = vunpack.c.h.b16 %v1159
        %v4922 = vunpack.c.l.b16 %v1160
        %v4923 = vunpack.c.h.b16 %v1160
        %v4924 = vunpack.c.l.b16 %v1161
        %v4925 = vunpack.c.h.b16 %v1161
        %v4926 = vunpack.c.l.b16 %v1162
        %v4927 = vunpack.c.h.b16 %v1162
        %v4928 = vunpack.c.l.b16 %v1163
        %v4929 = vunpack.c.h.b16 %v1163
        %v4930 = vunpack.c.l.b16 %v1164
        %v4931 = vunpack.c.h.b16 %v1164
        %v4932 = vunpack.c.l.b16 %v1165
        %v4933 = vunpack.c.h.b16 %v1165
        %v4934 = vunpack.c.l.b16 %v1166
        %v4935 = vunpack.c.h.b16 %v1166
        %v4936 = vunpack.c.l.b16 %v1167
        %v4937 = vunpack.c.h.b16 %v1167
        %v4938 = vunpack.c.l.b16 %v1168
        %v4939 = vunpack.c.h.b16 %v1168
        %v4940 = vunpack.c.l.b16 %v1169
        %v4941 = vunpack.c.h.b16 %v1169
        %v4942 = vunpack.c.l.b16 %v1170
        %v4943 = vunpack.c.h.b16 %v1170
        %v4944 = vunpack.c.l.b16 %v1171
        %v4945 = vunpack.c.h.b16 %v1171
        %v4946 = vunpack.c.l.b16 %v1172
        %v4947 = vunpack.c.h.b16 %v1172
        %v4948 = vunpack.c.l.b16 %v1173
        %v4949 = vunpack.c.h.b16 %v1173
        %v4950 = vunpack.c.l.b16 %v1174
        %v4951 = vunpack.c.h.b16 %v1174
        %v4952 = vunpack.c.l.b16 %v1175
        %v4953 = vunpack.c.h.b16 %v1175
        %v4954 = vunpack.c.l.b16 %v1176
        %v4955 = vunpack.c.h.b16 %v1176
        %v4956 = vunpack.c.l.b16 %v1177
        %v4957 = vunpack.c.h.b16 %v1177
        %v4958 = vunpack.c.l.b16 %v1178
        %v4959 = vunpack.c.h.b16 %v1178
        %v4960 = vunpack.c.l.b16 %v1179
        %v4961 = vunpack.c.h.b16 %v1179
        %v4962 = vunpack.c.l.b16 %v1180
        %v4963 = vunpack.c.h.b16 %v1180
        %v4964 = vunpack.c.l.b16 %v1181
        %v4965 = vunpack.c.h.b16 %v1181
        %v4966 = vunpack.c.l.b16 %v1182
        %v4967 = vunpack.c.h.b16 %v1182
        %v4968 = vunpack.c.l.b16 %v1183
        %v4969 = vunpack.c.h.b16 %v1183
        %v4970 = vunpack.c.l.b16 %v1184
        %v4971 = vunpack.c.h.b16 %v1184
        %v4972 = vunpack.c.l.b16 %v1185
        %v4973 = vunpack.c.h.b16 %v1185
        %v4974 = vunpack.c.l.b16 %v1186
        %v4975 = vunpack.c.h.b16 %v1186
        %v4976 = vunpack.c.l.b16 %v1187
        %v4977 = vunpack.c.h.b16 %v1187
        %v4978 = vunpack.c.l.b16 %v1188
        %v4979 = vunpack.c.h.b16 %v1188
        %v4980 = vunpack.c.l.b16 %v1189
        %v4981 = vunpack.c.h.b16 %v1189
        %v4982 = vunpack.c.l.b16 %v1190
        %v4983 = vunpack.c.h.b16 %v1190
        %v4984 = vunpack.c.l.b16 %v1191
        %v4985 = vunpack.c.h.b16 %v1191
        %v4986 = vunpack.c.l.b16 %v1192
        %v4987 = vunpack.c.h.b16 %v1192
        %v4988 = vunpack.c.l.b16 %v1193
        %v4989 = vunpack.c.h.b16 %v1193
        %v4990 = vunpack.c.l.b16 %v1194
        %v4991 = vunpack.c.h.b16 %v1194
        %v4992 = vunpack.c.l.b16 %v1195
        %v4993 = vunpack.c.h.b16 %v1195
        %v4994 = vunpack.c.l.b16 %v1196
        %v4995 = vunpack.c.h.b16 %v1196
        %v4996 = vunpack.c.l.b16 %v1197
        %v4997 = vunpack.c.h.b16 %v1197
        %v4998 = vunpack.c.l.b16 %v1198
        %v4999 = vunpack.c.h.b16 %v1198
        %v5000 = vunpack.c.l.b16 %v1199
        %v5001 = vunpack.c.h.b16 %v1199
        %v5002 = vunpack.c.l.b16 %v1200
        %v5003 = vunpack.c.h.b16 %v1200
        %v5004 = vunpack.c.l.b16 %v1201
        %v5005 = vunpack.c.h.b16 %v1201
        %v5006 = vunpack.c.l.b16 %v1202
        %v5007 = vunpack.c.h.b16 %v1202
        %v5008 = vunpack.c.l.b16 %v1203
        %v5009 = vunpack.c.h.b16 %v1203
        %v5010 = vunpack.c.l.b16 %v1204
        %v5011 = vunpack.c.h.b16 %v1204
        %v5012 = vunpack.c.l.b16 %v1205
        %v5013 = vunpack.c.h.b16 %v1205
        %v5014 = vunpack.c.l.b16 %v1206
        %v5015 = vunpack.c.h.b16 %v1206
        %v5016 = vunpack.c.l.b16 %v1207
        %v5017 = vunpack.c.h.b16 %v1207
        %v5018 = vunpack.c.l.b16 %v1208
        %v5019 = vunpack.c.h.b16 %v1208
        %v5020 = vunpack.c.l.b16 %v1209
        %v5021 = vunpack.c.h.b16 %v1209
        %v5022 = vunpack.c.l.b16 %v1210
        %v5023 = vunpack.c.h.b16 %v1210
        %v5024 = vunpack.c.l.b16 %v1211
        %v5025 = vunpack.c.h.b16 %v1211
        %v5026 = vunpack.c.l.b16 %v1212
        %v5027 = vunpack.c.h.b16 %v1212
        %v5028 = vunpack.c.l.b16 %v1213
        %v5029 = vunpack.c.h.b16 %v1213
        %v5030 = vunpack.c.l.b16 %v1214
        %v5031 = vunpack.c.h.b16 %v1214
        %v5032 = vunpack.c.l.b16 %v1215
        %v5033 = vunpack.c.h.b16 %v1215
        %v5034 = vunpack.c.l.b16 %v1216
        %v5035 = vunpack.c.h.b16 %v1216
        %v5036 = vunpack.c.l.b16 %v1217
        %v5037 = vunpack.c.h.b16 %v1217
        %v5038 = vunpack.c.l.b16 %v1218
        %v5039 = vunpack.c.h.b16 %v1218
        %v5040 = vunpack.c.l.b16 %v1219
        %v5041 = vunpack.c.h.b16 %v1219
        %v5042 = vunpack.c.l.b16 %v1220
        %v5043 = vunpack.c.h.b16 %v1220
        %v5044 = vunpack.c.l.b16 %v1221
        %v5045 = vunpack.c.h.b16 %v1221
        %v5046 = vunpack.c.l.b16 %v1222
        %v5047 = vunpack.c.h.b16 %v1222
        %v5048 = vunpack.c.l.b16 %v1223
        %v5049 = vunpack.c.h.b16 %v1223
        %v5050 = vunpack.c.l.b16 %v1224
        %v5051 = vunpack.c.h.b16 %v1224
        %v5052 = vunpack.c.l.b16 %v1225
        %v5053 = vunpack.c.h.b16 %v1225
        %v5054 = vunpack.c.l.b16 %v1226
        %v5055 = vunpack.c.h.b16 %v1226
        %v5056 = vunpack.c.l.b16 %v1227
        %v5057 = vunpack.c.h.b16 %v1227
        %v5058 = vunpack.c.l.b16 %v1228
        %v5059 = vunpack.c.h.b16 %v1228
        %v5060 = vunpack.c.l.b16 %v1229
        %v5061 = vunpack.c.h.b16 %v1229
        %v5062 = vunpack.c.l.b16 %v1230
        %v5063 = vunpack.c.h.b16 %v1230
        %v5064 = vunpack.c.l.b16 %v1231
        %v5065 = vunpack.c.h.b16 %v1231
        %v5066 = vunpack.c.l.b16 %v1232
        %v5067 = vunpack.c.h.b16 %v1232
        %v5068 = vunpack.c.l.b16 %v1233
        %v5069 = vunpack.c.h.b16 %v1233
        %v5070 = vunpack.c.l.b16 %v1234
        %v5071 = vunpack.c.h.b16 %v1234
        %v5072 = vunpack.c.l.b16 %v1235
        %v5073 = vunpack.c.h.b16 %v1235
        %v5074 = vunpack.c.l.b16 %v1236
        %v5075 = vunpack.c.h.b16 %v1236
        %v5076 = vunpack.c.l.b16 %v1237
        %v5077 = vunpack.c.h.b16 %v1237
        %v5078 = vunpack.c.l.b16 %v1238
        %v5079 = vunpack.c.h.b16 %v1238
        %v5080 = vunpack.c.l.b16 %v1239
        %v5081 = vunpack.c.h.b16 %v1239
        %v5082 = vunpack.c.l.b16 %v1240
        %v5083 = vunpack.c.h.b16 %v1240
        %v5084 = vunpack.c.l.b16 %v1241
        %v5085 = vunpack.c.h.b16 %v1241
        %v5086 = vunpack.c.l.b16 %v1242
        %v5087 = vunpack.c.h.b16 %v1242
        %v5088 = vunpack.c.l.b16 %v1243
        %v5089 = vunpack.c.h.b16 %v1243
        %v5090 = vunpack.c.l.b16 %v1244
        %v5091 = vunpack.c.h.b16 %v1244
        %v5092 = vunpack.c.l.b16 %v1245
        %v5093 = vunpack.c.h.b16 %v1245
        %v5094 = vunpack.c.l.b16 %v1246
        %v5095 = vunpack.c.h.b16 %v1246
        %v5096 = vunpack.c.l.b16 %v1247
        %v5097 = vunpack.c.h.b16 %v1247
        %v5098 = vunpack.c.l.b16 %v1248
        %v5099 = vunpack.c.h.b16 %v1248
        %v5100 = vunpack.c.l.b16 %v1249
        %v5101 = vunpack.c.h.b16 %v1249
        %v5102 = vunpack.c.l.b16 %v1250
        %v5103 = vunpack.c.h.b16 %v1250
        %v5104 = vunpack.c.l.b16 %v1251
        %v5105 = vunpack.c.h.b16 %v1251
        %v5106 = vunpack.c.l.b16 %v1252
        %v5107 = vunpack.c.h.b16 %v1252
        %v5108 = vunpack.c.l.b16 %v1253
        %v5109 = vunpack.c.h.b16 %v1253
        %v5110 = vunpack.c.l.b16 %v1254
        %v5111 = vunpack.c.h.b16 %v1254
        %v5112 = vunpack.c.l.b16 %v1255
        %v5113 = vunpack.c.h.b16 %v1255
        %v5114 = vunpack.c.l.b16 %v1256
        %v5115 = vunpack.c.h.b16 %v1256
        %v5116 = vunpack.c.l.b16 %v1257
        %v5117 = vunpack.c.h.b16 %v1257
        %v5118 = vunpack.c.l.b16 %v1258
        %v5119 = vunpack.c.h.b16 %v1258
        %v5120 = vunpack.c.l.b16 %v1259
        %v5121 = vunpack.c.h.b16 %v1259
        %v5122 = vunpack.c.l.b16 %v1260
        %v5123 = vunpack.c.h.b16 %v1260
        %v5124 = vunpack.c.l.b16 %v1261
        %v5125 = vunpack.c.h.b16 %v1261
        %v5126 = vunpack.c.l.b16 %v1262
        %v5127 = vunpack.c.h.b16 %v1262
        %v5128 = vunpack.c.l.b16 %v1263
        %v5129 = vunpack.c.h.b16 %v1263
        %v5130 = vunpack.c.l.b16 %v1264
        %v5131 = vunpack.c.h.b16 %v1264
        %v5132 = vunpack.c.l.b16 %v1265
        %v5133 = vunpack.c.h.b16 %v1265
        %v5134 = vunpack.c.l.b16 %v1266
        %v5135 = vunpack.c.h.b16 %v1266
        %v5136 = vunpack.c.l.b16 %v1267
        %v5137 = vunpack.c.h.b16 %v1267
        %v5138 = vunpack.c.l.b16 %v1268
        %v5139 = vunpack.c.h.b16 %v1268
        %v5140 = vunpack.c.l.b16 %v1269
        %v5141 = vunpack.c.h.b16 %v1269
        %v5142 = vunpack.c.l.b16 %v1270
        %v5143 = vunpack.c.h.b16 %v1270
        %v5144 = vunpack.c.l.b16 %v1271
        %v5145 = vunpack.c.h.b16 %v1271
        %v5146 = vunpack.c.l.b16 %v1272
        %v5147 = vunpack.c.h.b16 %v1272
        %v5148 = vunpack.c.l.b16 %v1273
        %v5149 = vunpack.c.h.b16 %v1273
        %v5150 = vunpack.c.l.b16 %v1274
        %v5151 = vunpack.c.h.b16 %v1274
        %v5152 = vunpack.c.l.b16 %v1275
        %v5153 = vunpack.c.h.b16 %v1275
        %v5154 = vunpack.c.l.b16 %v1276
        %v5155 = vunpack.c.h.b16 %v1276
        %v5156 = vunpack.c.l.b16 %v1277
        %v5157 = vunpack.c.h.b16 %v1277
        %v5158 = vunpack.c.l.b16 %v1278
        %v5159 = vunpack.c.h.b16 %v1278
        %v5160 = vunpack.c.l.b16 %v1279
        %v5161 = vunpack.c.h.b16 %v1279
        %v5162 = vunpack.c.l.b16 %v1280
        %v5163 = vunpack.c.h.b16 %v1280
        %v5164 = vunpack.c.l.b16 %v1281
        %v5165 = vunpack.c.h.b16 %v1281
        %v5166 = vunpack.c.l.b16 %v1282
        %v5167 = vunpack.c.h.b16 %v1282
        %v5168 = vunpack.c.l.b16 %v1283
        %v5169 = vunpack.c.h.b16 %v1283
        %v5170 = vunpack.c.l.b16 %v1284
        %v5171 = vunpack.c.h.b16 %v1284
        %v5172 = vunpack.c.l.b16 %v1285
        %v5173 = vunpack.c.h.b16 %v1285
        %v5174 = vunpack.c.l.b16 %v1286
        %v5175 = vunpack.c.h.b16 %v1286
        %v5176 = vunpack.c.l.b16 %v1287
        %v5177 = vunpack.c.h.b16 %v1287
        %v5178 = vunpack.c.l.b16 %v1288
        %v5179 = vunpack.c.h.b16 %v1288
        %v5180 = vunpack.c.l.b16 %v1289
        %v5181 = vunpack.c.h.b16 %v1289
        %v5182 = vunpack.c.l.b16 %v1290
        %v5183 = vunpack.c.h.b16 %v1290
        %v5184 = vunpack.c.l.b16 %v1291
        %v5185 = vunpack.c.h.b16 %v1291
        %v5186 = vunpack.c.l.b16 %v1292
        %v5187 = vunpack.c.h.b16 %v1292
        %v5188 = vunpack.c.l.b16 %v1293
        %v5189 = vunpack.c.h.b16 %v1293
        %v5190 = vunpack.c.l.b16 %v1294
        %v5191 = vunpack.c.h.b16 %v1294
        %v5192 = vunpack.c.l.b16 %v1295
        %v5193 = vunpack.c.h.b16 %v1295
        %v5194 = vunpack.c.l.b16 %v1296
        %v5195 = vunpack.c.h.b16 %v1296
        %v5196 = vunpack.c.l.b16 %v1297
        %v5197 = vunpack.c.h.b16 %v1297
        %v5198 = vunpack.c.l.b16 %v1298
        %v5199 = vunpack.c.h.b16 %v1298
        %v5200 = vunpack.c.l.b16 %v1299
        %v5201 = vunpack.c.h.b16 %v1299
        %v5202 = vunpack.c.l.b16 %v1300
        %v5203 = vunpack.c.h.b16 %v1300
        %v5204 = vunpack.c.l.b16 %v1301
        %v5205 = vunpack.c.h.b16 %v1301
        %v5206 = vunpack.c.l.b16 %v1302
        %v5207 = vunpack.c.h.b16 %v1302
        %v5208 = vunpack.c.l.b16 %v1303
        %v5209 = vunpack.c.h.b16 %v1303
        %v5210 = vunpack.c.l.b16 %v1304
        %v5211 = vunpack.c.h.b16 %v1304
        %v5212 = vunpack.c.l.b16 %v1305
        %v5213 = vunpack.c.h.b16 %v1305
        %v5214 = vunpack.c.l.b16 %v1306
        %v5215 = vunpack.c.h.b16 %v1306
        %v5216 = vunpack.c.l.b16 %v1307
        %v5217 = vunpack.c.h.b16 %v1307
        %v5218 = vunpack.c.l.b16 %v1308
        %v5219 = vunpack.c.h.b16 %v1308
        %v5220 = vunpack.c.l.b16 %v1309
        %v5221 = vunpack.c.h.b16 %v1309
        %v5222 = vunpack.c.l.b16 %v1310
        %v5223 = vunpack.c.h.b16 %v1310
        %v5224 = vunpack.c.l.b16 %v1311
        %v5225 = vunpack.c.h.b16 %v1311
        %v5226 = vunpack.c.l.b16 %v1312
        %v5227 = vunpack.c.h.b16 %v1312
        %v5228 = vunpack.c.l.b16 %v1313
        %v5229 = vunpack.c.h.b16 %v1313
        %v5230 = vunpack.c.l.b16 %v1314
        %v5231 = vunpack.c.h.b16 %v1314
        %v5232 = vunpack.c.l.b16 %v1315
        %v5233 = vunpack.c.h.b16 %v1315
        %v5234 = vunpack.c.l.b16 %v1316
        %v5235 = vunpack.c.h.b16 %v1316
        %v5236 = vunpack.c.l.b16 %v1317
        %v5237 = vunpack.c.h.b16 %v1317
        %v5238 = vunpack.c.l.b16 %v1318
        %v5239 = vunpack.c.h.b16 %v1318
        %v5240 = vunpack.c.l.b16 %v1319
        %v5241 = vunpack.c.h.b16 %v1319
        %v5242 = vunpack.c.l.b16 %v1320
        %v5243 = vunpack.c.h.b16 %v1320
        %v5244 = vunpack.c.l.b16 %v1321
        %v5245 = vunpack.c.h.b16 %v1321
        %v5246 = vunpack.c.l.b16 %v1322
        %v5247 = vunpack.c.h.b16 %v1322
        %v5248 = vunpack.c.l.b16 %v1323
        %v5249 = vunpack.c.h.b16 %v1323
        %v5250 = vunpack.c.l.b16 %v1324
        %v5251 = vunpack.c.h.b16 %v1324
        %v5252 = vunpack.c.l.b16 %v1325
        %v5253 = vunpack.c.h.b16 %v1325
        %v5254 = vunpack.c.l.b16 %v1326
        %v5255 = vunpack.c.h.b16 %v1326
        %v5256 = vunpack.c.l.b16 %v1327
        %v5257 = vunpack.c.h.b16 %v1327
        %v5258 = vunpack.c.l.b16 %v1328
        %v5259 = vunpack.c.h.b16 %v1328
        %v5260 = vunpack.c.l.b16 %v1329
        %v5261 = vunpack.c.h.b16 %v1329
        %v5262 = vunpack.c.l.b16 %v1330
        %v5263 = vunpack.c.h.b16 %v1330
        %v5264 = vunpack.c.l.b16 %v1331
        %v5265 = vunpack.c.h.b16 %v1331
        %v5266 = vunpack.c.l.b16 %v1332
        %v5267 = vunpack.c.h.b16 %v1332
        %v5268 = vunpack.c.l.b16 %v1333
        %v5269 = vunpack.c.h.b16 %v1333
        %v5270 = vunpack.c.l.b16 %v1334
        %v5271 = vunpack.c.h.b16 %v1334
        %v5272 = vunpack.c.l.b16 %v1335
        %v5273 = vunpack.c.h.b16 %v1335
        %v5274 = vunpack.c.l.b16 %v1336
        %v5275 = vunpack.c.h.b16 %v1336
        %v5276 = vunpack.c.l.b16 %v1337
        %v5277 = vunpack.c.h.b16 %v1337
        %v5278 = vunpack.c.l.b16 %v1338
        %v5279 = vunpack.c.h.b16 %v1338
        %v5280 = vunpack.c.l.b16 %v1339
        %v5281 = vunpack.c.h.b16 %v1339
        %v5282 = vunpack.c.l.b16 %v1340
        %v5283 = vunpack.c.h.b16 %v1340
        %v5284 = vunpack.c.l.b16 %v1341
        %v5285 = vunpack.c.h.b16 %v1341
        %v5286 = vunpack.c.l.b16 %v1342
        %v5287 = vunpack.c.h.b16 %v1342
        %v5288 = vunpack.c.l.b16 %v1343
        %v5289 = vunpack.c.h.b16 %v1343
        %v5290 = vunpack.c.l.b16 %v1344
        %v5291 = vunpack.c.h.b16 %v1344
        %v5292 = vunpack.c.l.b16 %v1345
        %v5293 = vunpack.c.h.b16 %v1345
        %v5294 = vunpack.c.l.b16 %v1346
        %v5295 = vunpack.c.h.b16 %v1346
        %v5296 = vunpack.c.l.b16 %v1347
        %v5297 = vunpack.c.h.b16 %v1347
        %v5298 = vunpack.c.l.b16 %v1348
        %v5299 = vunpack.c.h.b16 %v1348
        %v5300 = vunpack.c.l.b16 %v1349
        %v5301 = vunpack.c.h.b16 %v1349
        %v5302 = vunpack.c.l.b16 %v1350
        %v5303 = vunpack.c.h.b16 %v1350
        %v5304 = vunpack.c.l.b16 %v1351
        %v5305 = vunpack.c.h.b16 %v1351
        %v5306 = vunpack.c.l.b16 %v1352
        %v5307 = vunpack.c.h.b16 %v1352
        %v5308 = vunpack.c.l.b16 %v1353
        %v5309 = vunpack.c.h.b16 %v1353
        %v5310 = vunpack.c.l.b16 %v1354
        %v5311 = vunpack.c.h.b16 %v1354
        %v5312 = vunpack.c.l.b16 %v1355
        %v5313 = vunpack.c.h.b16 %v1355
        %v5314 = vunpack.c.l.b16 %v1356
        %v5315 = vunpack.c.h.b16 %v1356
        %v5316 = vunpack.c.l.b16 %v1357
        %v5317 = vunpack.c.h.b16 %v1357
        %v5318 = vunpack.c.l.b16 %v1358
        %v5319 = vunpack.c.h.b16 %v1358
        %v5320 = vunpack.c.l.b16 %v1359
        %v5321 = vunpack.c.h.b16 %v1359
        %v5322 = vunpack.c.l.b16 %v1360
        %v5323 = vunpack.c.h.b16 %v1360
        %v5324 = vunpack.c.l.b16 %v1361
        %v5325 = vunpack.c.h.b16 %v1361
        %v5326 = vunpack.c.l.b16 %v1362
        %v5327 = vunpack.c.h.b16 %v1362
        %v5328 = vunpack.c.l.b16 %v1363
        %v5329 = vunpack.c.h.b16 %v1363
        %v5330 = vunpack.c.l.b16 %v1364
        %v5331 = vunpack.c.h.b16 %v1364
        %v5332 = vunpack.c.l.b16 %v1365
        %v5333 = vunpack.c.h.b16 %v1365
        %v5334 = vunpack.c.l.b16 %v1366
        %v5335 = vunpack.c.h.b16 %v1366
        %v5336 = vunpack.c.l.b16 %v1367
        %v5337 = vunpack.c.h.b16 %v1367
        %v5338 = vunpack.c.l.b16 %v1368
        %v5339 = vunpack.c.h.b16 %v1368
        %v5340 = vunpack.c.l.b16 %v1369
        %v5341 = vunpack.c.h.b16 %v1369
        %v5342 = vunpack.c.l.b16 %v1370
        %v5343 = vunpack.c.h.b16 %v1370
        %v5344 = vunpack.c.l.b16 %v1371
        %v5345 = vunpack.c.h.b16 %v1371
        %v5346 = vunpack.c.l.b16 %v1372
        %v5347 = vunpack.c.h.b16 %v1372
        %v5348 = vunpack.c.l.b16 %v1373
        %v5349 = vunpack.c.h.b16 %v1373
        %v5350 = vunpack.c.l.b16 %v1374
        %v5351 = vunpack.c.h.b16 %v1374
        %v5352 = vunpack.c.l.b16 %v1375
        %v5353 = vunpack.c.h.b16 %v1375
        %v5354 = vunpack.c.l.b16 %v1376
        %v5355 = vunpack.c.h.b16 %v1376
        %v5356 = vunpack.c.l.b16 %v1377
        %v5357 = vunpack.c.h.b16 %v1377
        %v5358 = vunpack.c.l.b16 %v1378
        %v5359 = vunpack.c.h.b16 %v1378
        %v5360 = vunpack.c.l.b16 %v1379
        %v5361 = vunpack.c.h.b16 %v1379
        %v5362 = vunpack.c.l.b16 %v1380
        %v5363 = vunpack.c.h.b16 %v1380
        %v5364 = vunpack.c.l.b16 %v1381
        %v5365 = vunpack.c.h.b16 %v1381
        %v5366 = vunpack.c.l.b16 %v1382
        %v5367 = vunpack.c.h.b16 %v1382
        %v5368 = vunpack.c.l.b16 %v1383
        %v5369 = vunpack.c.h.b16 %v1383
        %v5370 = vunpack.c.l.b16 %v1384
        %v5371 = vunpack.c.h.b16 %v1384
        %v5372 = vunpack.c.l.b16 %v1385
        %v5373 = vunpack.c.h.b16 %v1385
        %v5374 = vunpack.c.l.b16 %v1386
        %v5375 = vunpack.c.h.b16 %v1386
        %v5376 = vunpack.c.l.b16 %v1387
        %v5377 = vunpack.c.h.b16 %v1387
        %v5378 = vunpack.c.l.b16 %v1388
        %v5379 = vunpack.c.h.b16 %v1388
        %v5380 = vunpack.c.l.b16 %v1389
        %v5381 = vunpack.c.h.b16 %v1389
        %v5382 = vunpack.c.l.b16 %v1390
        %v5383 = vunpack.c.h.b16 %v1390
        %v5384 = vunpack.c.l.b16 %v1391
        %v5385 = vunpack.c.h.b16 %v1391
        %v5386 = vunpack.c.l.b16 %v1392
        %v5387 = vunpack.c.h.b16 %v1392
        %v5388 = vunpack.c.l.b16 %v1393
        %v5389 = vunpack.c.h.b16 %v1393
        %v5390 = vunpack.c.l.b16 %v1394
        %v5391 = vunpack.c.h.b16 %v1394
        %v5392 = vunpack.c.l.b16 %v1395
        %v5393 = vunpack.c.h.b16 %v1395
        %v5394 = vunpack.c.l.b16 %v1396
        %v5395 = vunpack.c.h.b16 %v1396
        %v5396 = vunpack.c.l.b16 %v1397
        %v5397 = vunpack.c.h.b16 %v1397
        %v5398 = vunpack.c.l.b16 %v1398
        %v5399 = vunpack.c.h.b16 %v1398
        %v5400 = vunpack.c.l.b16 %v1399
        %v5401 = vunpack.c.h.b16 %v1399
        %v5402 = vunpack.c.l.b16 %v1400
        %v5403 = vunpack.c.h.b16 %v1400
        %v5404 = vunpack.c.l.b16 %v1401
        %v5405 = vunpack.c.h.b16 %v1401
        %v5406 = vunpack.c.l.b16 %v1402
        %v5407 = vunpack.c.h.b16 %v1402
        %v5408 = vunpack.c.l.b16 %v1403
        %v5409 = vunpack.c.h.b16 %v1403
        %v5410 = vunpack.c.l.b16 %v1404
        %v5411 = vunpack.c.h.b16 %v1404
        %v5412 = vunpack.c.l.b16 %v1405
        %v5413 = vunpack.c.h.b16 %v1405
        %v5414 = vunpack.c.l.b16 %v1406
        %v5415 = vunpack.c.h.b16 %v1406
        %v5416 = vunpack.c.l.b16 %v1407
        %v5417 = vunpack.c.h.b16 %v1407
        %v5418 = vunpack.c.l.b16 %v1408
        %v5419 = vunpack.c.h.b16 %v1408
        %v5420 = vunpack.c.l.b16 %v1409
        %v5421 = vunpack.c.h.b16 %v1409
        %v5422 = vunpack.c.l.b16 %v1410
        %v5423 = vunpack.c.h.b16 %v1410
        %v5424 = vunpack.c.l.b16 %v1411
        %v5425 = vunpack.c.h.b16 %v1411
        %v5426 = vunpack.c.l.b16 %v1412
        %v5427 = vunpack.c.h.b16 %v1412
        %v5428 = vunpack.c.l.b16 %v1413
        %v5429 = vunpack.c.h.b16 %v1413
        %v5430 = vunpack.c.l.b16 %v1414
        %v5431 = vunpack.c.h.b16 %v1414
        %v5432 = vunpack.c.l.b16 %v1415
        %v5433 = vunpack.c.h.b16 %v1415
        %v5434 = vunpack.c.l.b16 %v1416
        %v5435 = vunpack.c.h.b16 %v1416
        %v5436 = vunpack.c.l.b16 %v1417
        %v5437 = vunpack.c.h.b16 %v1417
        %v5438 = vunpack.c.l.b16 %v1418
        %v5439 = vunpack.c.h.b16 %v1418
        %v5440 = vunpack.c.l.b16 %v1419
        %v5441 = vunpack.c.h.b16 %v1419
        %v5442 = vunpack.c.l.b16 %v1420
        %v5443 = vunpack.c.h.b16 %v1420
        %v5444 = vunpack.c.l.b16 %v1421
        %v5445 = vunpack.c.h.b16 %v1421
        %v5446 = vunpack.c.l.b16 %v1422
        %v5447 = vunpack.c.h.b16 %v1422
        %v5448 = vunpack.c.l.b16 %v1423
        %v5449 = vunpack.c.h.b16 %v1423
        %v5450 = vunpack.c.l.b16 %v1424
        %v5451 = vunpack.c.h.b16 %v1424
        %v5452 = vunpack.c.l.b16 %v1425
        %v5453 = vunpack.c.h.b16 %v1425
        %v5454 = vunpack.c.l.b16 %v1426
        %v5455 = vunpack.c.h.b16 %v1426
        %v5456 = vunpack.c.l.b16 %v1427
        %v5457 = vunpack.c.h.b16 %v1427
        %v5458 = vunpack.c.l.b16 %v1428
        %v5459 = vunpack.c.h.b16 %v1428
        %v5460 = vunpack.c.l.b16 %v1429
        %v5461 = vunpack.c.h.b16 %v1429
        %v5462 = vunpack.c.l.b16 %v1430
        %v5463 = vunpack.c.h.b16 %v1430
        %v5464 = vunpack.c.l.b16 %v1431
        %v5465 = vunpack.c.h.b16 %v1431
        %v5466 = vunpack.c.l.b16 %v1432
        %v5467 = vunpack.c.h.b16 %v1432
        %v5468 = vunpack.c.l.b16 %v1433
        %v5469 = vunpack.c.h.b16 %v1433
        %v5470 = vunpack.c.l.b16 %v1434
        %v5471 = vunpack.c.h.b16 %v1434
        %v5472 = vunpack.c.l.b16 %v1435
        %v5473 = vunpack.c.h.b16 %v1435
        %v5474 = vunpack.c.l.b16 %v1436
        %v5475 = vunpack.c.h.b16 %v1436
        %v5476 = vunpack.c.l.b16 %v1437
        %v5477 = vunpack.c.h.b16 %v1437
        %v5478 = vunpack.c.l.b16 %v1438
        %v5479 = vunpack.c.h.b16 %v1438
        %v5480 = vunpack.c.l.b16 %v1439
        %v5481 = vunpack.c.h.b16 %v1439
        %v5482 = vunpack.c.l.b16 %v1440
        %v5483 = vunpack.c.h.b16 %v1440
        %v5484 = vunpack.c.l.b16 %v1441
        %v5485 = vunpack.c.h.b16 %v1441
        %v5486 = vunpack.c.l.b16 %v1442
        %v5487 = vunpack.c.h.b16 %v1442
        %v5488 = vunpack.c.l.b16 %v1443
        %v5489 = vunpack.c.h.b16 %v1443
        %v5490 = vunpack.c.l.b16 %v1444
        %v5491 = vunpack.c.h.b16 %v1444
        %v5492 = vunpack.c.l.b16 %v1445
        %v5493 = vunpack.c.h.b16 %v1445
        %v5494 = vunpack.c.l.b16 %v1446
        %v5495 = vunpack.c.h.b16 %v1446
        %v5496 = vunpack.c.l.b16 %v1447
        %v5497 = vunpack.c.h.b16 %v1447
        %v5498 = vunpack.c.l.b16 %v1448
        %v5499 = vunpack.c.h.b16 %v1448
        %v5500 = vunpack.c.l.b16 %v1449
        %v5501 = vunpack.c.h.b16 %v1449
        %v5502 = vunpack.c.l.b16 %v1450
        %v5503 = vunpack.c.h.b16 %v1450
        %v5504 = vunpack.c.l.b16 %v1451
        %v5505 = vunpack.c.h.b16 %v1451
        %v5506 = vunpack.c.l.b16 %v1452
        %v5507 = vunpack.c.h.b16 %v1452
        %v5508 = vunpack.c.l.b16 %v1453
        %v5509 = vunpack.c.h.b16 %v1453
        %v5510 = vunpack.c.l.b16 %v1454
        %v5511 = vunpack.c.h.b16 %v1454
        %v5512 = vunpack.c.l.b16 %v1455
        %v5513 = vunpack.c.h.b16 %v1455
        %v5514 = vunpack.c.l.b16 %v1456
        %v5515 = vunpack.c.h.b16 %v1456
        %v5516 = vunpack.c.l.b16 %v1457
        %v5517 = vunpack.c.h.b16 %v1457
        %v5518 = vunpack.c.l.b16 %v1458
        %v5519 = vunpack.c.h.b16 %v1458
        %v5520 = vunpack.c.l.b16 %v1459
        %v5521 = vunpack.c.h.b16 %v1459
        %v5522 = vunpack.c.l.b16 %v1460
        %v5523 = vunpack.c.h.b16 %v1460
        %v5524 = vunpack.c.l.b16 %v1461
        %v5525 = vunpack.c.h.b16 %v1461
        %v5526 = vunpack.c.l.b16 %v1462
        %v5527 = vunpack.c.h.b16 %v1462
        %v5528 = vunpack.c.l.b16 %v1463
        %v5529 = vunpack.c.h.b16 %v1463
        %v5530 = vunpack.c.l.b16 %v1464
        %v5531 = vunpack.c.h.b16 %v1464
        %v5532 = vunpack.c.l.b16 %v1465
        %v5533 = vunpack.c.h.b16 %v1465
        %v5534 = vunpack.c.l.b16 %v1466
        %v5535 = vunpack.c.h.b16 %v1466
        %v5536 = vunpack.c.l.b16 %v1467
        %v5537 = vunpack.c.h.b16 %v1467
        %v5538 = vunpack.c.l.b16 %v1468
        %v5539 = vunpack.c.h.b16 %v1468
        %v5540 = vunpack.c.l.b16 %v1469
        %v5541 = vunpack.c.h.b16 %v1469
        %v5542 = vunpack.c.l.b16 %v1470
        %v5543 = vunpack.c.h.b16 %v1470
        %v5544 = vunpack.c.l.b16 %v1471
        %v5545 = vunpack.c.h.b16 %v1471
        %v5546 = vunpack.c.l.b16 %v1472
        %v5547 = vunpack.c.h.b16 %v1472
        %v5548 = vunpack.c.l.b16 %v1473
        %v5549 = vunpack.c.h.b16 %v1473
        %v5550 = vunpack.c.l.b16 %v1474
        %v5551 = vunpack.c.h.b16 %v1474
        %v5552 = vunpack.c.l.b16 %v1475
        %v5553 = vunpack.c.h.b16 %v1475
        %v5554 = vunpack.c.l.b16 %v1476
        %v5555 = vunpack.c.h.b16 %v1476
        %v5556 = vunpack.c.l.b16 %v1477
        %v5557 = vunpack.c.h.b16 %v1477
        %v5558 = vunpack.c.l.b16 %v1478
        %v5559 = vunpack.c.h.b16 %v1478
        %v5560 = vunpack.c.l.b16 %v1479
        %v5561 = vunpack.c.h.b16 %v1479
        %v5562 = vunpack.c.l.b16 %v1480
        %v5563 = vunpack.c.h.b16 %v1480
        %v5564 = vunpack.c.l.b16 %v1481
        %v5565 = vunpack.c.h.b16 %v1481
        %v5566 = vunpack.c.l.b16 %v1482
        %v5567 = vunpack.c.h.b16 %v1482
        %v5568 = vunpack.c.l.b16 %v1483
        %v5569 = vunpack.c.h.b16 %v1483
        %v5570 = vunpack.c.l.b16 %v1484
        %v5571 = vunpack.c.h.b16 %v1484
        %v5572 = vunpack.c.l.b16 %v1485
        %v5573 = vunpack.c.h.b16 %v1485
        %v5574 = vunpack.c.l.b16 %v1486
        %v5575 = vunpack.c.h.b16 %v1486
        %v5576 = vunpack.c.l.b16 %v1487
        %v5577 = vunpack.c.h.b16 %v1487
        %v5578 = vunpack.c.l.b16 %v1488
        %v5579 = vunpack.c.h.b16 %v1488
        %v5580 = vunpack.c.l.b16 %v1489
        %v5581 = vunpack.c.h.b16 %v1489
        %v5582 = vunpack.c.l.b16 %v1490
        %v5583 = vunpack.c.h.b16 %v1490
        %v5584 = vunpack.c.l.b16 %v1491
        %v5585 = vunpack.c.h.b16 %v1491
        %v5586 = vunpack.c.l.b16 %v1492
        %v5587 = vunpack.c.h.b16 %v1492
        %v5588 = vunpack.c.l.b16 %v1493
        %v5589 = vunpack.c.h.b16 %v1493
        %v5590 = vunpack.c.l.b16 %v1494
        %v5591 = vunpack.c.h.b16 %v1494
        %v5592 = vunpack.c.l.b16 %v1495
        %v5593 = vunpack.c.h.b16 %v1495
        %v5594 = vunpack.c.l.b16 %v1496
        %v5595 = vunpack.c.h.b16 %v1496
        %v5596 = vunpack.c.l.b16 %v1497
        %v5597 = vunpack.c.h.b16 %v1497
        %v5598 = vunpack.c.l.b16 %v1498
        %v5599 = vunpack.c.h.b16 %v1498
        %v5600 = vunpack.c.l.b16 %v1499
        %v5601 = vunpack.c.h.b16 %v1499
        %v5602 = vunpack.c.l.b16 %v1500
        %v5603 = vunpack.c.h.b16 %v1500
        %v5604 = vunpack.c.l.b16 %v1501
        %v5605 = vunpack.c.h.b16 %v1501
        %v5606 = vunpack.c.l.b16 %v1502
        %v5607 = vunpack.c.h.b16 %v1502
        %v5608 = vunpack.c.l.b16 %v1503
        %v5609 = vunpack.c.h.b16 %v1503
        %v5610 = vunpack.c.l.b16 %v1504
        %v5611 = vunpack.c.h.b16 %v1504
        %v5612 = vunpack.c.l.b16 %v1505
        %v5613 = vunpack.c.h.b16 %v1505
        %v5614 = vunpack.c.l.b16 %v1506
        %v5615 = vunpack.c.h.b16 %v1506
        %v5616 = vunpack.c.l.b16 %v1507
        %v5617 = vunpack.c.h.b16 %v1507
        %v5618 = vunpack.c.l.b16 %v1508
        %v5619 = vunpack.c.h.b16 %v1508
        %v5620 = vunpack.c.l.b16 %v1509
        %v5621 = vunpack.c.h.b16 %v1509
        %v5622 = vunpack.c.l.b16 %v1510
        %v5623 = vunpack.c.h.b16 %v1510
        %v5624 = vunpack.c.l.b16 %v1511
        %v5625 = vunpack.c.h.b16 %v1511
        %v5626 = vunpack.c.l.b16 %v1512
        %v5627 = vunpack.c.h.b16 %v1512
        %v5628 = vunpack.c.l.b16 %v1513
        %v5629 = vunpack.c.h.b16 %v1513
        %v5630 = vunpack.c.l.b16 %v1514
        %v5631 = vunpack.c.h.b16 %v1514
        %v5632 = vunpack.c.l.b16 %v1515
        %v5633 = vunpack.c.h.b16 %v1515
        %v5634 = vunpack.c.l.b16 %v1516
        %v5635 = vunpack.c.h.b16 %v1516
        %v5636 = vunpack.c.l.b16 %v1517
        %v5637 = vunpack.c.h.b16 %v1517
        %v5638 = vunpack.c.l.b16 %v1518
        %v5639 = vunpack.c.h.b16 %v1518
        %v5640 = vunpack.c.l.b16 %v1519
        %v5641 = vunpack.c.h.b16 %v1519
        %v5642 = vunpack.c.l.b16 %v1520
        %v5643 = vunpack.c.h.b16 %v1520
        %v5644 = vunpack.c.l.b16 %v1521
        %v5645 = vunpack.c.h.b16 %v1521
        %v5646 = vunpack.c.l.b16 %v1522
        %v5647 = vunpack.c.h.b16 %v1522
        %v5648 = vunpack.c.l.b16 %v1523
        %v5649 = vunpack.c.h.b16 %v1523
        %v5650 = vunpack.c.l.b16 %v1524
        %v5651 = vunpack.c.h.b16 %v1524
        %v5652 = vunpack.c.l.b16 %v1525
        %v5653 = vunpack.c.h.b16 %v1525
        %v5654 = vunpack.c.l.b16 %v1526
        %v5655 = vunpack.c.h.b16 %v1526
        %v5656 = vunpack.c.l.b16 %v1527
        %v5657 = vunpack.c.h.b16 %v1527
        %v5658 = vunpack.c.l.b16 %v1528
        %v5659 = vunpack.c.h.b16 %v1528
        %v5660 = vunpack.c.l.b16 %v1529
        %v5661 = vunpack.c.h.b16 %v1529
        %v5662 = vunpack.c.l.b16 %v1530
        %v5663 = vunpack.c.h.b16 %v1530
        %v5664 = vunpack.c.l.b16 %v1531
        %v5665 = vunpack.c.h.b16 %v1531
        %v5666 = vunpack.c.l.b16 %v1532
        %v5667 = vunpack.c.h.b16 %v1532
        %v5668 = vunpack.c.l.b16 %v1533
        %v5669 = vunpack.c.h.b16 %v1533
        %v5670 = vunpack.c.l.b16 %v1534
        %v5671 = vunpack.c.h.b16 %v1534
        %v5672 = vunpack.c.l.b16 %v1535
        %v5673 = vunpack.c.h.b16 %v1535
        %v5674 = vunpack.c.l.b16 %v1536
        %v5675 = vunpack.c.h.b16 %v1536
        %v5676 = vunpack.c.l.b16 %v1537
        %v5677 = vunpack.c.h.b16 %v1537
        %v5678 = vunpack.c.l.b16 %v1538
        %v5679 = vunpack.c.h.b16 %v1538
        %v5680 = vunpack.c.l.b16 %v1539
        %v5681 = vunpack.c.h.b16 %v1539
        %v5682 = vunpack.c.l.b16 %v1540
        %v5683 = vunpack.c.h.b16 %v1540
        %v5684 = vunpack.c.l.b16 %v1541
        %v5685 = vunpack.c.h.b16 %v1541
        %v5686 = vunpack.c.l.b16 %v1542
        %v5687 = vunpack.c.h.b16 %v1542
        %v5688 = vunpack.c.l.b16 %v1543
        %v5689 = vunpack.c.h.b16 %v1543
        %v5690 = vunpack.c.l.b16 %v1544
        %v5691 = vunpack.c.h.b16 %v1544
        %v5692 = vunpack.c.l.b16 %v1545
        %v5693 = vunpack.c.h.b16 %v1545
        %v5694 = vunpack.c.l.b16 %v1546
        %v5695 = vunpack.c.h.b16 %v1546
        %v5696 = vunpack.c.l.b16 %v1547
        %v5697 = vunpack.c.h.b16 %v1547
        %v5698 = vunpack.c.l.b16 %v1548
        %v5699 = vunpack.c.h.b16 %v1548
        %v5700 = vunpack.c.l.b16 %v1549
        %v5701 = vunpack.c.h.b16 %v1549
        %v5702 = vunpack.c.l.b16 %v1550
        %v5703 = vunpack.c.h.b16 %v1550
        %v5704 = vunpack.c.l.b16 %v1551
        %v5705 = vunpack.c.h.b16 %v1551
        %v5706 = vunpack.c.l.b16 %v1552
        %v5707 = vunpack.c.h.b16 %v1552
        %v5708 = vunpack.c.l.b16 %v1553
        %v5709 = vunpack.c.h.b16 %v1553
        %v5710 = vunpack.c.l.b16 %v1554
        %v5711 = vunpack.c.h.b16 %v1554
        %v5712 = vunpack.c.l.b16 %v1555
        %v5713 = vunpack.c.h.b16 %v1555
        %v5714 = vunpack.c.l.b16 %v1556
        %v5715 = vunpack.c.h.b16 %v1556
        %v5716 = vunpack.c.l.b16 %v1557
        %v5717 = vunpack.c.h.b16 %v1557
        %v5718 = vunpack.c.l.b16 %v1558
        %v5719 = vunpack.c.h.b16 %v1558
        %v5720 = vunpack.c.l.b16 %v1559
        %v5721 = vunpack.c.h.b16 %v1559
        %v5722 = vunpack.c.l.b16 %v1560
        %v5723 = vunpack.c.h.b16 %v1560
        %v5724 = vunpack.c.l.b16 %v1561
        %v5725 = vunpack.c.h.b16 %v1561
        %v5726 = vunpack.c.l.b16 %v1562
        %v5727 = vunpack.c.h.b16 %v1562
        %v5728 = vunpack.c.l.b16 %v1563
        %v5729 = vunpack.c.h.b16 %v1563
        %v5730 = vunpack.c.l.b16 %v1564
        %v5731 = vunpack.c.h.b16 %v1564
        %v5732 = vunpack.c.l.b16 %v1565
        %v5733 = vunpack.c.h.b16 %v1565
        %v5734 = vunpack.c.l.b16 %v1566
        %v5735 = vunpack.c.h.b16 %v1566
        %v5736 = vunpack.c.l.b16 %v1567
        %v5737 = vunpack.c.h.b16 %v1567
        %v5738 = vunpack.c.l.b16 %v1568
        %v5739 = vunpack.c.h.b16 %v1568
        %v5740 = vunpack.c.l.b16 %v1569
        %v5741 = vunpack.c.h.b16 %v1569
        %v5742 = vunpack.c.l.b16 %v1570
        %v5743 = vunpack.c.h.b16 %v1570
        %v5744 = vunpack.c.l.b16 %v1571
        %v5745 = vunpack.c.h.b16 %v1571
        %v5746 = vunpack.c.l.b16 %v1572
        %v5747 = vunpack.c.h.b16 %v1572
        %v5748 = vunpack.c.l.b16 %v1573
        %v5749 = vunpack.c.h.b16 %v1573
        %v5750 = vunpack.c.l.b16 %v1574
        %v5751 = vunpack.c.h.b16 %v1574
        %v5752 = vunpack.c.l.b16 %v1575
        %v5753 = vunpack.c.h.b16 %v1575
        %v5754 = vunpack.c.l.b16 %v1576
        %v5755 = vunpack.c.h.b16 %v1576
        %v5756 = vunpack.c.l.b16 %v1577
        %v5757 = vunpack.c.h.b16 %v1577
        %v5758 = vunpack.c.l.b16 %v1578
        %v5759 = vunpack.c.h.b16 %v1578
        %v5760 = vunpack.c.l.b16 %v1579
        %v5761 = vunpack.c.h.b16 %v1579
        %v5762 = vunpack.c.l.b16 %v1580
        %v5763 = vunpack.c.h.b16 %v1580
        %v5764 = vunpack.c.l.b16 %v1581
        %v5765 = vunpack.c.h.b16 %v1581
        %v5766 = vunpack.c.l.b16 %v1582
        %v5767 = vunpack.c.h.b16 %v1582
        %v5768 = vunpack.c.l.b16 %v1583
        %v5769 = vunpack.c.h.b16 %v1583
        %v5770 = vunpack.c.l.b16 %v1584
        %v5771 = vunpack.c.h.b16 %v1584
        %v5772 = vunpack.c.l.b16 %v1585
        %v5773 = vunpack.c.h.b16 %v1585
        %v5774 = vunpack.c.l.b16 %v1586
        %v5775 = vunpack.c.h.b16 %v1586
        %v5776 = vunpack.c.l.b16 %v1587
        %v5777 = vunpack.c.h.b16 %v1587
        %v5778 = vunpack.c.l.b16 %v1588
        %v5779 = vunpack.c.h.b16 %v1588
        %v5780 = vunpack.c.l.b16 %v1589
        %v5781 = vunpack.c.h.b16 %v1589
        %v5782 = vunpack.c.l.b16 %v1590
        %v5783 = vunpack.c.h.b16 %v1590
        %v5784 = vunpack.c.l.b16 %v1591
        %v5785 = vunpack.c.h.b16 %v1591
        %v5786 = vunpack.c.l.b16 %v1592
        %v5787 = vunpack.c.h.b16 %v1592
        %v5788 = vunpack.c.l.b16 %v1593
        %v5789 = vunpack.c.h.b16 %v1593
        %v5790 = vunpack.c.l.b16 %v1594
        %v5791 = vunpack.c.h.b16 %v1594
        %v5792 = vunpack.c.l.b16 %v1595
        %v5793 = vunpack.c.h.b16 %v1595
        %v5794 = vunpack.c.l.b16 %v1596
        %v5795 = vunpack.c.h.b16 %v1596
        %v5796 = vunpack.c.l.b16 %v1597
        %v5797 = vunpack.c.h.b16 %v1597
        %v5798 = vunpack.c.l.b16 %v1598
        %v5799 = vunpack.c.h.b16 %v1598
        %v5800 = vunpack.c.l.b16 %v1599
        %v5801 = vunpack.c.h.b16 %v1599
        %v5802 = vunpack.c.l.b16 %v1600
        %v5803 = vunpack.c.h.b16 %v1600
        %v5804 = vunpack.c.l.b16 %v1601
        %v5805 = vunpack.c.h.b16 %v1601
        %v5806 = vunpack.c.l.b16 %v1602
        %v5807 = vunpack.c.h.b16 %v1602
        %v5808 = vunpack.c.l.b16 %v1603
        %v5809 = vunpack.c.h.b16 %v1603
        %v5810 = vunpack.c.l.b16 %v1604
        %v5811 = vunpack.c.h.b16 %v1604
        %v5812 = vunpack.c.l.b16 %v1605
        %v5813 = vunpack.c.h.b16 %v1605
        %v5814 = vunpack.c.l.b16 %v1606
        %v5815 = vunpack.c.h.b16 %v1606
        %v5816 = vunpack.c.l.b16 %v1607
        %v5817 = vunpack.c.h.b16 %v1607
        %v5818 = vunpack.c.l.b16 %v1608
        %v5819 = vunpack.c.h.b16 %v1608
        %v5820 = vunpack.c.l.b16 %v1609
        %v5821 = vunpack.c.h.b16 %v1609
        %v5822 = vunpack.c.l.b16 %v1610
        %v5823 = vunpack.c.h.b16 %v1610
        %v5824 = vunpack.c.l.b16 %v1611
        %v5825 = vunpack.c.h.b16 %v1611
        %v5826 = vunpack.c.l.b16 %v1612
        %v5827 = vunpack.c.h.b16 %v1612
        %v5828 = vunpack.c.l.b16 %v1613
        %v5829 = vunpack.c.h.b16 %v1613
        %v5830 = vunpack.c.l.b16 %v1614
        %v5831 = vunpack.c.h.b16 %v1614
        %v5832 = vunpack.c.l.b16 %v1615
        %v5833 = vunpack.c.h.b16 %v1615
        %v5834 = vunpack.c.l.b16 %v1616
        %v5835 = vunpack.c.h.b16 %v1616
        %v5836 = vunpack.c.l.b16 %v1617
        %v5837 = vunpack.c.h.b16 %v1617
        %v5838 = vunpack.c.l.b16 %v1618
        %v5839 = vunpack.c.h.b16 %v1618
        %v5840 = vunpack.c.l.b16 %v1619
        %v5841 = vunpack.c.h.b16 %v1619
        %v5842 = vunpack.c.l.b16 %v1620
        %v5843 = vunpack.c.h.b16 %v1620
        %v5844 = vunpack.c.l.b16 %v1621
        %v5845 = vunpack.c.h.b16 %v1621
        %v5846 = vunpack.c.l.b16 %v1622
        %v5847 = vunpack.c.h.b16 %v1622
        %v5848 = vunpack.c.l.b16 %v1623
        %v5849 = vunpack.c.h.b16 %v1623
        %v5850 = vunpack.c.l.b16 %v1624
        %v5851 = vunpack.c.h.b16 %v1624
        %v5852 = vunpack.c.l.b16 %v1625
        %v5853 = vunpack.c.h.b16 %v1625
        %v5854 = vunpack.c.l.b16 %v1626
        %v5855 = vunpack.c.h.b16 %v1626
        %v5856 = vunpack.c.l.b16 %v1627
        %v5857 = vunpack.c.h.b16 %v1627
        %v5858 = vunpack.c.l.b16 %v1628
        %v5859 = vunpack.c.h.b16 %v1628
        %v5860 = vunpack.c.l.b16 %v1629
        %v5861 = vunpack.c.h.b16 %v1629
        %v5862 = vunpack.c.l.b16 %v1630
        %v5863 = vunpack.c.h.b16 %v1630
        %v5864 = vunpack.c.l.b16 %v1631
        %v5865 = vunpack.c.h.b16 %v1631
        %v5866 = vunpack.c.l.b16 %v1632
        %v5867 = vunpack.c.h.b16 %v1632
        %v5868 = vunpack.c.l.b16 %v1633
        %v5869 = vunpack.c.h.b16 %v1633
        %v5870 = vunpack.c.l.b16 %v1634
        %v5871 = vunpack.c.h.b16 %v1634
        %v5872 = vunpack.c.l.b16 %v1635
        %v5873 = vunpack.c.h.b16 %v1635
        %v5874 = vunpack.c.l.b16 %v1636
        %v5875 = vunpack.c.h.b16 %v1636
        %v5876 = vunpack.c.l.b16 %v1637
        %v5877 = vunpack.c.h.b16 %v1637
        %v5878 = vunpack.c.l.b16 %v1638
        %v5879 = vunpack.c.h.b16 %v1638
        %v5880 = vunpack.c.l.b16 %v1639
        %v5881 = vunpack.c.h.b16 %v1639
        %v5882 = vunpack.c.l.b16 %v1640
        %v5883 = vunpack.c.h.b16 %v1640
        %v5884 = vunpack.c.l.b16 %v1641
        %v5885 = vunpack.c.h.b16 %v1641
        %v5886 = vunpack.c.l.b16 %v1642
        %v5887 = vunpack.c.h.b16 %v1642
        %v5888 = vunpack.c.l.b16 %v1643
        %v5889 = vunpack.c.h.b16 %v1643
        %v5890 = vunpack.c.l.b16 %v1644
        %v5891 = vunpack.c.h.b16 %v1644
        %v5892 = vunpack.c.l.b16 %v1645
        %v5893 = vunpack.c.h.b16 %v1645
        %v5894 = vunpack.c.l.b16 %v1646
        %v5895 = vunpack.c.h.b16 %v1646
        %v5896 = vunpack.c.l.b16 %v1647
        %v5897 = vunpack.c.h.b16 %v1647
        %v5898 = vunpack.c.l.b16 %v1648
        %v5899 = vunpack.c.h.b16 %v1648
        %v5900 = vunpack.c.l.b16 %v1649
        %v5901 = vunpack.c.h.b16 %v1649
        %v5902 = vunpack.c.l.b16 %v1650
        %v5903 = vunpack.c.h.b16 %v1650
        %v5904 = vunpack.c.l.b16 %v1651
        %v5905 = vunpack.c.h.b16 %v1651
        %v5906 = vunpack.c.l.b16 %v1652
        %v5907 = vunpack.c.h.b16 %v1652
        %v5908 = vunpack.c.l.b16 %v1653
        %v5909 = vunpack.c.h.b16 %v1653
        %v5910 = vunpack.c.l.b16 %v1654
        %v5911 = vunpack.c.h.b16 %v1654
        %v5912 = vunpack.c.l.b16 %v1655
        %v5913 = vunpack.c.h.b16 %v1655
        %v5914 = vunpack.c.l.b16 %v1656
        %v5915 = vunpack.c.h.b16 %v1656
        %v5916 = vunpack.c.l.b16 %v1657
        %v5917 = vunpack.c.h.b16 %v1657
        %v5918 = vunpack.c.l.b16 %v1658
        %v5919 = vunpack.c.h.b16 %v1658
        %v5920 = vunpack.c.l.b16 %v1659
        %v5921 = vunpack.c.h.b16 %v1659
        %v5922 = vunpack.c.l.b16 %v1660
        %v5923 = vunpack.c.h.b16 %v1660
        %v5924 = vunpack.c.l.b16 %v1661
        %v5925 = vunpack.c.h.b16 %v1661
        %v5926 = vunpack.c.l.b16 %v1662
        %v5927 = vunpack.c.h.b16 %v1662
        %v5928 = vunpack.c.l.b16 %v1663
        %v5929 = vunpack.c.h.b16 %v1663
        %v5930 = vunpack.c.l.b16 %v1664
        %v5931 = vunpack.c.h.b16 %v1664
        %v5932 = vunpack.c.l.b16 %v1665
        %v5933 = vunpack.c.h.b16 %v1665
        %v5934 = vunpack.c.l.b16 %v1666
        %v5935 = vunpack.c.h.b16 %v1666
        %v5936 = vunpack.c.l.b16 %v1667
        %v5937 = vunpack.c.h.b16 %v1667
        %v5938 = vunpack.c.l.b16 %v1668
        %v5939 = vunpack.c.h.b16 %v1668
        %v5940 = vunpack.c.l.b16 %v1669
        %v5941 = vunpack.c.h.b16 %v1669
        %v5942 = vunpack.c.l.b16 %v1670
        %v5943 = vunpack.c.h.b16 %v1670
        %v5944 = vunpack.c.l.b16 %v1671
        %v5945 = vunpack.c.h.b16 %v1671
        %v5946 = vunpack.c.l.b16 %v1672
        %v5947 = vunpack.c.h.b16 %v1672
        %v5948 = vunpack.c.l.b16 %v1673
        %v5949 = vunpack.c.h.b16 %v1673
        %v5950 = vunpack.c.l.b16 %v1674
        %v5951 = vunpack.c.h.b16 %v1674
        %v5952 = vunpack.c.l.b16 %v1675
        %v5953 = vunpack.c.h.b16 %v1675
        %v5954 = vunpack.c.l.b16 %v1676
        %v5955 = vunpack.c.h.b16 %v1676
        %v5956 = vunpack.c.l.b16 %v1677
        %v5957 = vunpack.c.h.b16 %v1677
        %v5958 = vunpack.c.l.b16 %v1678
        %v5959 = vunpack.c.h.b16 %v1678
        %v5960 = vunpack.c.l.b16 %v1679
        %v5961 = vunpack.c.h.b16 %v1679
        %v5962 = vunpack.c.l.b16 %v1680
        %v5963 = vunpack.c.h.b16 %v1680
        %v5964 = vunpack.c.l.b16 %v1681
        %v5965 = vunpack.c.h.b16 %v1681
        %v5966 = vunpack.c.l.b16 %v1682
        %v5967 = vunpack.c.h.b16 %v1682
        %v5968 = vunpack.c.l.b16 %v1683
        %v5969 = vunpack.c.h.b16 %v1683
        %v5970 = vunpack.c.l.b16 %v1684
        %v5971 = vunpack.c.h.b16 %v1684
        %v5972 = vunpack.c.l.b16 %v1685
        %v5973 = vunpack.c.h.b16 %v1685
        %v5974 = vunpack.c.l.b16 %v1686
        %v5975 = vunpack.c.h.b16 %v1686
        %v5976 = vunpack.c.l.b16 %v1687
        %v5977 = vunpack.c.h.b16 %v1687
        %v5978 = vunpack.c.l.b16 %v1688
        %v5979 = vunpack.c.h.b16 %v1688
        %v5980 = vunpack.c.l.b16 %v1689
        %v5981 = vunpack.c.h.b16 %v1689
        %v5982 = vunpack.c.l.b16 %v1690
        %v5983 = vunpack.c.h.b16 %v1690
        %v5984 = vunpack.c.l.b16 %v1691
        %v5985 = vunpack.c.h.b16 %v1691
        %v5986 = vunpack.c.l.b16 %v1692
        %v5987 = vunpack.c.h.b16 %v1692
        %v5988 = vunpack.c.l.b16 %v1693
        %v5989 = vunpack.c.h.b16 %v1693
        %v5990 = vunpack.c.l.b16 %v1694
        %v5991 = vunpack.c.h.b16 %v1694
        %v5992 = vunpack.c.l.b16 %v1695
        %v5993 = vunpack.c.h.b16 %v1695
        %v5994 = vunpack.c.l.b16 %v1696
        %v5995 = vunpack.c.h.b16 %v1696
        %v5996 = vunpack.c.l.b16 %v1697
        %v5997 = vunpack.c.h.b16 %v1697
        %v5998 = vunpack.c.l.b16 %v1698
        %v5999 = vunpack.c.h.b16 %v1698
        %v6000 = vunpack.c.l.b16 %v1699
        %v6001 = vunpack.c.h.b16 %v1699
        %v6002 = vunpack.c.l.b16 %v1700
        %v6003 = vunpack.c.h.b16 %v1700
        %v6004 = vunpack.c.l.b16 %v1701
        %v6005 = vunpack.c.h.b16 %v1701
        %v6006 = vunpack.c.l.b16 %v1702
        %v6007 = vunpack.c.h.b16 %v1702
        %v6008 = vunpack.c.l.b16 %v1703
        %v6009 = vunpack.c.h.b16 %v1703
        %v6010 = vunpack.c.l.b16 %v1704
        %v6011 = vunpack.c.h.b16 %v1704
        %v6012 = vunpack.c.l.b16 %v1705
        %v6013 = vunpack.c.h.b16 %v1705
        %v6014 = vunpack.c.l.b16 %v1706
        %v6015 = vunpack.c.h.b16 %v1706
        %v6016 = vunpack.c.l.b16 %v1707
        %v6017 = vunpack.c.h.b16 %v1707
        %v6018 = vunpack.c.l.b16 %v1708
        %v6019 = vunpack.c.h.b16 %v1708
        %v6020 = vunpack.c.l.b16 %v1709
        %v6021 = vunpack.c.h.b16 %v1709
        %v6022 = vunpack.c.l.b16 %v1710
        %v6023 = vunpack.c.h.b16 %v1710
        %v6024 = vunpack.c.l.b16 %v1711
        %v6025 = vunpack.c.h.b16 %v1711
        %v6026 = vunpack.c.l.b16 %v1712
        %v6027 = vunpack.c.h.b16 %v1712
        %v6028 = vunpack.c.l.b16 %v1713
        %v6029 = vunpack.c.h.b16 %v1713
        %v6030 = vunpack.c.l.b16 %v1714
        %v6031 = vunpack.c.h.b16 %v1714
        %v6032 = vunpack.c.l.b16 %v1715
        %v6033 = vunpack.c.h.b16 %v1715
        %v6034 = vunpack.c.l.b16 %v1716
        %v6035 = vunpack.c.h.b16 %v1716
        %v6036 = vunpack.c.l.b16 %v1717
        %v6037 = vunpack.c.h.b16 %v1717
        %v6038 = vunpack.c.l.b16 %v1718
        %v6039 = vunpack.c.h.b16 %v1718
        %v6040 = vunpack.c.l.b16 %v1719
        %v6041 = vunpack.c.h.b16 %v1719
        %v6042 = vunpack.c.l.b16 %v1720
        %v6043 = vunpack.c.h.b16 %v1720
        %v6044 = vunpack.c.l.b16 %v1721
        %v6045 = vunpack.c.h.b16 %v1721
        %v6046 = vunpack.c.l.b16 %v1722
        %v6047 = vunpack.c.h.b16 %v1722
        %v6048 = vunpack.c.l.b16 %v1723
        %v6049 = vunpack.c.h.b16 %v1723
        %v6050 = vunpack.c.l.b16 %v1724
        %v6051 = vunpack.c.h.b16 %v1724
        %v6052 = vunpack.c.l.b16 %v1725
        %v6053 = vunpack.c.h.b16 %v1725
        %v6054 = vunpack.c.l.b16 %v1726
        %v6055 = vunpack.c.h.b16 %v1726
        %v6056 = vunpack.c.l.b16 %v1727
        %v6057 = vunpack.c.h.b16 %v1727
        %v6058 = vunpack.c.l.b16 %v1728
        %v6059 = vunpack.c.h.b16 %v1728
        %v6060 = vunpack.c.l.b16 %v1729
        %v6061 = vunpack.c.h.b16 %v1729
        %v6062 = vunpack.c.l.b16 %v1730
        %v6063 = vunpack.c.h.b16 %v1730
        %v6064 = vunpack.c.l.b16 %v1731
        %v6065 = vunpack.c.h.b16 %v1731
        %v6066 = vunpack.c.l.b16 %v1732
        %v6067 = vunpack.c.h.b16 %v1732
        %v6068 = vunpack.c.l.b16 %v1733
        %v6069 = vunpack.c.h.b16 %v1733
        %v6070 = vunpack.c.l.b16 %v1734
        %v6071 = vunpack.c.h.b16 %v1734
        %v6072 = vunpack.c.l.b16 %v1735
        %v6073 = vunpack.c.h.b16 %v1735
        %v6074 = vunpack.c.l.b16 %v1736
        %v6075 = vunpack.c.h.b16 %v1736
        %v6076 = vunpack.c.l.b16 %v1737
        %v6077 = vunpack.c.h.b16 %v1737
        %v6078 = vunpack.c.l.b16 %v1738
        %v6079 = vunpack.c.h.b16 %v1738
        %v6080 = vunpack.c.l.b16 %v1739
        %v6081 = vunpack.c.h.b16 %v1739
        %v6082 = vunpack.c.l.b16 %v1740
        %v6083 = vunpack.c.h.b16 %v1740
        %v6084 = vunpack.c.l.b16 %v1741
        %v6085 = vunpack.c.h.b16 %v1741
        %v6086 = vunpack.c.l.b16 %v1742
        %v6087 = vunpack.c.h.b16 %v1742
        %v6088 = vunpack.c.l.b16 %v1743
        %v6089 = vunpack.c.h.b16 %v1743
        %v6090 = vunpack.c.l.b16 %v1744
        %v6091 = vunpack.c.h.b16 %v1744
        %v6092 = vunpack.c.l.b16 %v1745
        %v6093 = vunpack.c.h.b16 %v1745
        %v6094 = vunpack.c.l.b16 %v1746
        %v6095 = vunpack.c.h.b16 %v1746
        %v6096 = vunpack.c.l.b16 %v1747
        %v6097 = vunpack.c.h.b16 %v1747
        %v6098 = vunpack.c.l.b16 %v1748
        %v6099 = vunpack.c.h.b16 %v1748
        %v6100 = vunpack.c.l.b16 %v1749
        %v6101 = vunpack.c.h.b16 %v1749
        %v6102 = vunpack.c.l.b16 %v1750
        %v6103 = vunpack.c.h.b16 %v1750
        %v6104 = vunpack.c.l.b16 %v1751
        %v6105 = vunpack.c.h.b16 %v1751
        %v6106 = vunpack.c.l.b16 %v1752
        %v6107 = vunpack.c.h.b16 %v1752
        %v6108 = vunpack.c.l.b16 %v1753
        %v6109 = vunpack.c.h.b16 %v1753
        %v6110 = vunpack.c.l.b16 %v1754
        %v6111 = vunpack.c.h.b16 %v1754
        %v6112 = vunpack.c.l.b16 %v1755
        %v6113 = vunpack.c.h.b16 %v1755
        %v6114 = vunpack.c.l.b16 %v1756
        %v6115 = vunpack.c.h.b16 %v1756
        %v6116 = vunpack.c.l.b16 %v1757
        %v6117 = vunpack.c.h.b16 %v1757
        %v6118 = vunpack.c.l.b16 %v1758
        %v6119 = vunpack.c.h.b16 %v1758
        %v6120 = vunpack.c.l.b16 %v1759
        %v6121 = vunpack.c.h.b16 %v1759
        %v6122 = vunpack.c.l.b16 %v1760
        %v6123 = vunpack.c.h.b16 %v1760
        %v6124 = vunpack.c.l.b16 %v1761
        %v6125 = vunpack.c.h.b16 %v1761
        %v6126 = vunpack.c.l.b16 %v1762
        %v6127 = vunpack.c.h.b16 %v1762
        %v6128 = vunpack.c.l.b16 %v1763
        %v6129 = vunpack.c.h.b16 %v1763
        %v6130 = vunpack.c.l.b16 %v1764
        %v6131 = vunpack.c.h.b16 %v1764
        %v6132 = vunpack.c.l.b16 %v1765
        %v6133 = vunpack.c.h.b16 %v1765
        %v6134 = vunpack.c.l.b16 %v1766
        %v6135 = vunpack.c.h.b16 %v1766
        %v6136 = vunpack.c.l.b16 %v1767
        %v6137 = vunpack.c.h.b16 %v1767
        %v6138 = vunpack.c.l.b16 %v1768
        %v6139 = vunpack.c.h.b16 %v1768
        %v6140 = vunpack.c.l.b16 %v1769
        %v6141 = vunpack.c.h.b16 %v1769
        %v6142 = vunpack.c.l.b16 %v1770
        %v6143 = vunpack.c.h.b16 %v1770
        %v6144 = vunpack.c.l.b16 %v1771
        %v6145 = vunpack.c.h.b16 %v1771
        %v6146 = vunpack.c.l.b16 %v1772
        %v6147 = vunpack.c.h.b16 %v1772
        %v6148 = vunpack.c.l.b16 %v1773
        %v6149 = vunpack.c.h.b16 %v1773
        %v6150 = vunpack.c.l.b16 %v1774
        %v6151 = vunpack.c.h.b16 %v1774
        %v6152 = vunpack.c.l.b16 %v1775
        %v6153 = vunpack.c.h.b16 %v1775
        %v6154 = vunpack.c.l.b16 %v1776
        %v6155 = vunpack.c.h.b16 %v1776
        %v6156 = vunpack.c.l.b16 %v1777
        %v6157 = vunpack.c.h.b16 %v1777
        %v6158 = vunpack.c.l.b16 %v1778
        %v6159 = vunpack.c.h.b16 %v1778
        %v6160 = vunpack.c.l.b16 %v1779
        %v6161 = vunpack.c.h.b16 %v1779
        %v6162 = vunpack.c.l.b16 %v1780
        %v6163 = vunpack.c.h.b16 %v1780
        %v6164 = vunpack.c.l.b16 %v1781
        %v6165 = vunpack.c.h.b16 %v1781
        %v6166 = vunpack.c.l.b16 %v1782
        %v6167 = vunpack.c.h.b16 %v1782
        %v6168 = vunpack.c.l.b16 %v1783
        %v6169 = vunpack.c.h.b16 %v1783
        %v6170 = vunpack.c.l.b16 %v1784
        %v6171 = vunpack.c.h.b16 %v1784
        %v6172 = vunpack.c.l.b16 %v1785
        %v6173 = vunpack.c.h.b16 %v1785
        %v6174 = vunpack.c.l.b16 %v1786
        %v6175 = vunpack.c.h.b16 %v1786
        %v6176 = vunpack.c.l.b16 %v1787
        %v6177 = vunpack.c.h.b16 %v1787
        %v6178 = vunpack.c.l.b16 %v1788
        %v6179 = vunpack.c.h.b16 %v1788
        %v6180 = vunpack.c.l.b16 %v1789
        %v6181 = vunpack.c.h.b16 %v1789
        %v6182 = vunpack.c.l.b16 %v1790
        %v6183 = vunpack.c.h.b16 %v1790
        %v6184 = vunpack.c.l.b16 %v1791
        %v6185 = vunpack.c.h.b16 %v1791
        %v6186 = vunpack.c.l.b16 %v1792
        %v6187 = vunpack.c.h.b16 %v1792
        %v6188 = vunpack.c.l.b16 %v1793
        %v6189 = vunpack.c.h.b16 %v1793
        %v6190 = vunpack.c.l.b16 %v1794
        %v6191 = vunpack.c.h.b16 %v1794
        %v6192 = vunpack.c.l.b16 %v1795
        %v6193 = vunpack.c.h.b16 %v1795
        %v6194 = vunpack.c.l.b16 %v1796
        %v6195 = vunpack.c.h.b16 %v1796
        %v6196 = vunpack.c.l.b16 %v1797
        %v6197 = vunpack.c.h.b16 %v1797
        %v6198 = vunpack.c.l.b16 %v1798
        %v6199 = vunpack.c.h.b16 %v1798
        %v6200 = vunpack.c.l.b16 %v1799
        %v6201 = vunpack.c.h.b16 %v1799
        %v6202 = vunpack.c.l.b16 %v1800
        %v6203 = vunpack.c.h.b16 %v1800
        %v6204 = vunpack.c.l.b16 %v1801
        %v6205 = vunpack.c.h.b16 %v1801
        %v6206 = vunpack.c.l.b16 %v1802
        %v6207 = vunpack.c.h.b16 %v1802
        %v6208 = vunpack.c.l.b16 %v1803
        %v6209 = vunpack.c.h.b16 %v1803
        %v6210 = vunpack.c.l.b16 %v1804
        %v6211 = vunpack.c.h.b16 %v1804
        %v6212 = vunpack.c.l.b16 %v1805
        %v6213 = vunpack.c.h.b16 %v1805
        %v6214 = vunpack.c.l.b16 %v1806
        %v6215 = vunpack.c.h.b16 %v1806
        %v6216 = vunpack.c.l.b16 %v1807
        %v6217 = vunpack.c.h.b16 %v1807
        %v6218 = vunpack.c.l.b16 %v1808
        %v6219 = vunpack.c.h.b16 %v1808
        %v6220 = vunpack.c.l.b16 %v1809
        %v6221 = vunpack.c.h.b16 %v1809
        %v6222 = vunpack.c.l.b16 %v1810
        %v6223 = vunpack.c.h.b16 %v1810
        %v6224 = vunpack.c.l.b16 %v1811
        %v6225 = vunpack.c.h.b16 %v1811
        %v6226 = vunpack.c.l.b16 %v1812
        %v6227 = vunpack.c.h.b16 %v1812
        %v6228 = vunpack.c.l.b16 %v1813
        %v6229 = vunpack.c.h.b16 %v1813
        %v6230 = vunpack.c.l.b16 %v1814
        %v6231 = vunpack.c.h.b16 %v1814
        %v6232 = vunpack.c.l.b16 %v1815
        %v6233 = vunpack.c.h.b16 %v1815
        %v6234 = vunpack.c.l.b16 %v1816
        %v6235 = vunpack.c.h.b16 %v1816
        %v6236 = vunpack.c.l.b16 %v1817
        %v6237 = vunpack.c.h.b16 %v1817
        %v6238 = vunpack.c.l.b16 %v1818
        %v6239 = vunpack.c.h.b16 %v1818
        %v6240 = vunpack.c.l.b16 %v1819
        %v6241 = vunpack.c.h.b16 %v1819
        %v6242 = vunpack.c.l.b16 %v1820
        %v6243 = vunpack.c.h.b16 %v1820
        %v6244 = vunpack.c.l.b16 %v1821
        %v6245 = vunpack.c.h.b16 %v1821
        %v6246 = vunpack.c.l.b16 %v1822
        %v6247 = vunpack.c.h.b16 %v1822
        %v6248 = vunpack.c.l.b16 %v1823
        %v6249 = vunpack.c.h.b16 %v1823
        %v6250 = vunpack.c.l.b16 %v1824
        %v6251 = vunpack.c.h.b16 %v1824
        %v6252 = vunpack.c.l.b16 %v1825
        %v6253 = vunpack.c.h.b16 %v1825
        %v6254 = vunpack.c.l.b16 %v1826
        %v6255 = vunpack.c.h.b16 %v1826
        %v6256 = vunpack.c.l.b16 %v1827
        %v6257 = vunpack.c.h.b16 %v1827
        %v6258 = vunpack.c.l.b16 %v1828
        %v6259 = vunpack.c.h.b16 %v1828
        %v6260 = vunpack.c.l.b16 %v1829
        %v6261 = vunpack.c.h.b16 %v1829
        %v6262 = vunpack.c.l.b16 %v1830
        %v6263 = vunpack.c.h.b16 %v1830
        %v6264 = vunpack.c.l.b16 %v1831
        %v6265 = vunpack.c.h.b16 %v1831
        %v6266 = vunpack.c.l.b16 %v1832
        %v6267 = vunpack.c.h.b16 %v1832
        %v6268 = vunpack.c.l.b16 %v1833
        %v6269 = vunpack.c.h.b16 %v1833
        %v6270 = vunpack.c.l.b16 %v1834
        %v6271 = vunpack.c.h.b16 %v1834
        %v6272 = vunpack.c.l.b16 %v1835
        %v6273 = vunpack.c.h.b16 %v1835
        %v6274 = vunpack.c.l.b16 %v1836
        %v6275 = vunpack.c.h.b16 %v1836
        %v6276 = vunpack.c.l.b16 %v1837
        %v6277 = vunpack.c.h.b16 %v1837
        %v6278 = vunpack.c.l.b16 %v1838
        %v6279 = vunpack.c.h.b16 %v1838
        %v6280 = vunpack.c.l.b16 %v1839
        %v6281 = vunpack.c.h.b16 %v1839
        %v6282 = vunpack.c.l.b16 %v1840
        %v6283 = vunpack.c.h.b16 %v1840
        %v6284 = vunpack.c.l.b16 %v1841
        %v6285 = vunpack.c.h.b16 %v1841
        %v6286 = vunpack.c.l.b16 %v1842
        %v6287 = vunpack.c.h.b16 %v1842
        %v6288 = vunpack.c.l.b16 %v1843
        %v6289 = vunpack.c.h.b16 %v1843
        %v6290 = vunpack.c.l.b16 %v1844
        %v6291 = vunpack.c.h.b16 %v1844
        %v6292 = vunpack.c.l.b16 %v1845
        %v6293 = vunpack.c.h.b16 %v1845
        %v6294 = vunpack.c.l.b16 %v1846
        %v6295 = vunpack.c.h.b16 %v1846
        %v6296 = vunpack.c.l.b16 %v1847
        %v6297 = vunpack.c.h.b16 %v1847
        %v6298 = vunpack.c.l.b16 %v1848
        %v6299 = vunpack.c.h.b16 %v1848
        %v6300 = vunpack.c.l.b16 %v1849
        %v6301 = vunpack.c.h.b16 %v1849
        %v6302 = vunpack.c.l.b16 %v1850
        %v6303 = vunpack.c.h.b16 %v1850
        %v6304 = vunpack.c.l.b16 %v1851
        %v6305 = vunpack.c.h.b16 %v1851
        %v6306 = vunpack.c.l.b16 %v1852
        %v6307 = vunpack.c.h.b16 %v1852
        %v6308 = vunpack.c.l.b16 %v1853
        %v6309 = vunpack.c.h.b16 %v1853
        %v6310 = vunpack.c.l.b16 %v1854
        %v6311 = vunpack.c.h.b16 %v1854
        %v6312 = vunpack.c.l.b16 %v1855
        %v6313 = vunpack.c.h.b16 %v1855
        %v6314 = vunpack.c.l.b16 %v1856
        %v6315 = vunpack.c.h.b16 %v1856
        %v6316 = vunpack.c.l.b16 %v1857
        %v6317 = vunpack.c.h.b16 %v1857
        %v6318 = vunpack.c.l.b16 %v1858
        %v6319 = vunpack.c.h.b16 %v1858
        %v6320 = vunpack.c.l.b16 %v1859
        %v6321 = vunpack.c.h.b16 %v1859
        %v6322 = vunpack.c.l.b16 %v1860
        %v6323 = vunpack.c.h.b16 %v1860
        %v6324 = vunpack.c.l.b16 %v1861
        %v6325 = vunpack.c.h.b16 %v1861
        %v6326 = vunpack.c.l.b16 %v1862
        %v6327 = vunpack.c.h.b16 %v1862
        %v6328 = vunpack.c.l.b16 %v1863
        %v6329 = vunpack.c.h.b16 %v1863
        %v6330 = vunpack.c.l.b16 %v1864
        %v6331 = vunpack.c.h.b16 %v1864
        %v6332 = vunpack.c.l.b16 %v1865
        %v6333 = vunpack.c.h.b16 %v1865
        %v6334 = vunpack.c.l.b16 %v1866
        %v6335 = vunpack.c.h.b16 %v1866
        %v6336 = vunpack.c.l.b16 %v1867
        %v6337 = vunpack.c.h.b16 %v1867
        %v6338 = vunpack.c.l.b16 %v1868
        %v6339 = vunpack.c.h.b16 %v1868
        %v6340 = vunpack.c.l.b16 %v1869
        %v6341 = vunpack.c.h.b16 %v1869
        %v6342 = vunpack.c.l.b16 %v1870
        %v6343 = vunpack.c.h.b16 %v1870
        %v6344 = vunpack.c.l.b16 %v1871
        %v6345 = vunpack.c.h.b16 %v1871
        %v6346 = vunpack.c.l.b16 %v1872
        %v6347 = vunpack.c.h.b16 %v1872
        %v6348 = vunpack.c.l.b16 %v1873
        %v6349 = vunpack.c.h.b16 %v1873
        %v6350 = vunpack.c.l.b16 %v1874
        %v6351 = vunpack.c.h.b16 %v1874
        %v6352 = vunpack.c.l.b16 %v1875
        %v6353 = vunpack.c.h.b16 %v1875
        %v6354 = vunpack.c.l.b16 %v1876
        %v6355 = vunpack.c.h.b16 %v1876
        %v6356 = vunpack.c.l.b16 %v1877
        %v6357 = vunpack.c.h.b16 %v1877
        %v6358 = vunpack.c.l.b16 %v1878
        %v6359 = vunpack.c.h.b16 %v1878
        %v6360 = vunpack.c.l.b16 %v1879
        %v6361 = vunpack.c.h.b16 %v1879
        %v6362 = vunpack.c.l.b16 %v1880
        %v6363 = vunpack.c.h.b16 %v1880
        %v6364 = vunpack.c.l.b16 %v1881
        %v6365 = vunpack.c.h.b16 %v1881
        %v6366 = vunpack.c.l.b16 %v1882
        %v6367 = vunpack.c.h.b16 %v1882
        %v6368 = vunpack.c.l.b16 %v1883
        %v6369 = vunpack.c.h.b16 %v1883
        %v6370 = vunpack.c.l.b16 %v1884
        %v6371 = vunpack.c.h.b16 %v1884
        %v6372 = vunpack.c.l.b16 %v1885
        %v6373 = vunpack.c.h.b16 %v1885
        %v6374 = vunpack.c.l.b16 %v1886
        %v6375 = vunpack.c.h.b16 %v1886
        %v6376 = vunpack.c.l.b16 %v1887
        %v6377 = vunpack.c.h.b16 %v1887
        %v6378 = vunpack.c.l.b16 %v1888
        %v6379 = vunpack.c.h.b16 %v1888
        %v6380 = vunpack.c.l.b16 %v1889
        %v6381 = vunpack.c.h.b16 %v1889
        %v6382 = vunpack.c.l.b16 %v1890
        %v6383 = vunpack.c.h.b16 %v1890
        %v6384 = vunpack.c.l.b16 %v1891
        %v6385 = vunpack.c.h.b16 %v1891
        %v6386 = vunpack.c.l.b16 %v1892
        %v6387 = vunpack.c.h.b16 %v1892
        %v6388 = vunpack.c.l.b16 %v1893
        %v6389 = vunpack.c.h.b16 %v1893
        %v6390 = vunpack.c.l.b16 %v1894
        %v6391 = vunpack.c.h.b16 %v1894
        %v6392 = vunpack.c.l.b16 %v1895
        %v6393 = vunpack.c.h.b16 %v1895
        %v6394 = vunpack.c.l.b16 %v1896
        %v6395 = vunpack.c.h.b16 %v1896
        %v6396 = vunpack.c.l.b16 %v1897
        %v6397 = vunpack.c.h.b16 %v1897
        %v6398 = vunpack.c.l.b16 %v1898
        %v6399 = vunpack.c.h.b16 %v1898
        %v6400 = vunpack.c.l.b16 %v1899
        %v6401 = vunpack.c.h.b16 %v1899
        %v6402 = vunpack.c.l.b16 %v1900
        %v6403 = vunpack.c.h.b16 %v1900
        %v6404 = vunpack.c.l.b16 %v1901
        %v6405 = vunpack.c.h.b16 %v1901
        %v6406 = vunpack.c.l.b16 %v1902
        %v6407 = vunpack.c.h.b16 %v1902
        %v6408 = vunpack.c.l.b16 %v1903
        %v6409 = vunpack.c.h.b16 %v1903
        %v6410 = vunpack.c.l.b16 %v1904
        %v6411 = vunpack.c.h.b16 %v1904
        %v6412 = vunpack.c.l.b16 %v1905
        %v6413 = vunpack.c.h.b16 %v1905
        %v6414 = vunpack.c.l.b16 %v1906
        %v6415 = vunpack.c.h.b16 %v1906
        %v6416 = vunpack.c.l.b16 %v1907
        %v6417 = vunpack.c.h.b16 %v1907
        %v6418 = vunpack.c.l.b16 %v1908
        %v6419 = vunpack.c.h.b16 %v1908
        %v6420 = vunpack.c.l.b16 %v1909
        %v6421 = vunpack.c.h.b16 %v1909
        %v6422 = vunpack.c.l.b16 %v1910
        %v6423 = vunpack.c.h.b16 %v1910
        %v6424 = vunpack.c.l.b16 %v1911
        %v6425 = vunpack.c.h.b16 %v1911
        %v6426 = vunpack.c.l.b16 %v1912
        %v6427 = vunpack.c.h.b16 %v1912
        %v6428 = vunpack.c.l.b16 %v1913
        %v6429 = vunpack.c.h.b16 %v1913
        %v6430 = vunpack.c.l.b16 %v1914
        %v6431 = vunpack.c.h.b16 %v1914
        %v6432 = vunpack.c.l.b16 %v1915
        %v6433 = vunpack.c.h.b16 %v1915
        %v6434 = vunpack.c.l.b16 %v1916
        %v6435 = vunpack.c.h.b16 %v1916
        %v6436 = vunpack.c.l.b16 %v1917
        %v6437 = vunpack.c.h.b16 %v1917
        %v6438 = vunpack.c.l.b16 %v1918
        %v6439 = vunpack.c.h.b16 %v1918
        %v6440 = vunpack.c.l.b16 %v1919
        %v6441 = vunpack.c.h.b16 %v1919
        %v6442 = vunpack.c.l.b16 %v1920
        %v6443 = vunpack.c.h.b16 %v1920
        %v6444 = vunpack.c.l.b16 %v1921
        %v6445 = vunpack.c.h.b16 %v1921
        %v6446 = vunpack.c.l.b16 %v1922
        %v6447 = vunpack.c.h.b16 %v1922
        %v6448 = vunpack.c.l.b16 %v1923
        %v6449 = vunpack.c.h.b16 %v1923
        %v6450 = vunpack.c.l.b16 %v1924
        %v6451 = vunpack.c.h.b16 %v1924
        %v6452 = vunpack.c.l.b16 %v1925
        %v6453 = vunpack.c.h.b16 %v1925
        %v6454 = vunpack.c.l.b16 %v1926
        %v6455 = vunpack.c.h.b16 %v1926
        %v6456 = vunpack.c.l.b16 %v1927
        %v6457 = vunpack.c.h.b16 %v1927
        %v6458 = vunpack.c.l.b16 %v1928
        %v6459 = vunpack.c.h.b16 %v1928
        %v6460 = vunpack.c.l.b16 %v1929
        %v6461 = vunpack.c.h.b16 %v1929
        %v6462 = vunpack.c.l.b16 %v1930
        %v6463 = vunpack.c.h.b16 %v1930
        %v6464 = vunpack.c.l.b16 %v1931
        %v6465 = vunpack.c.h.b16 %v1931
        %v6466 = vunpack.c.l.b16 %v1932
        %v6467 = vunpack.c.h.b16 %v1932
        %v6468 = vunpack.c.l.b16 %v1933
        %v6469 = vunpack.c.h.b16 %v1933
        %v6470 = vunpack.c.l.b16 %v1934
        %v6471 = vunpack.c.h.b16 %v1934
        %v6472 = vunpack.c.l.b16 %v1935
        %v6473 = vunpack.c.h.b16 %v1935
        %v6474 = vunpack.c.l.b16 %v1936
        %v6475 = vunpack.c.h.b16 %v1936
        %v6476 = vunpack.c.l.b16 %v1937
        %v6477 = vunpack.c.h.b16 %v1937
        %v6478 = vunpack.c.l.b16 %v1938
        %v6479 = vunpack.c.h.b16 %v1938
        %v6480 = vunpack.c.l.b16 %v1939
        %v6481 = vunpack.c.h.b16 %v1939
        %v6482 = vunpack.c.l.b16 %v1940
        %v6483 = vunpack.c.h.b16 %v1940
        %v6484 = vunpack.c.l.b16 %v1941
        %v6485 = vunpack.c.h.b16 %v1941
        %v6486 = vunpack.c.l.b16 %v1942
        %v6487 = vunpack.c.h.b16 %v1942
        %v6488 = vunpack.c.l.b16 %v1943
        %v6489 = vunpack.c.h.b16 %v1943
        %v6490 = vunpack.c.l.b16 %v1944
        %v6491 = vunpack.c.h.b16 %v1944
        %v6492 = vunpack.c.l.b16 %v1945
        %v6493 = vunpack.c.h.b16 %v1945
        %v6494 = vunpack.c.l.b16 %v1946
        %v6495 = vunpack.c.h.b16 %v1946
        %v6496 = vunpack.c.l.b16 %v1947
        %v6497 = vunpack.c.h.b16 %v1947
        %v6498 = vunpack.c.l.b16 %v1948
        %v6499 = vunpack.c.h.b16 %v1948
        %v6500 = vunpack.c.l.b16 %v1949
        %v6501 = vunpack.c.h.b16 %v1949
        %v6502 = vunpack.c.l.b16 %v1950
        %v6503 = vunpack.c.h.b16 %v1950
        %v6504 = vunpack.c.l.b16 %v1951
        %v6505 = vunpack.c.h.b16 %v1951
        %v6506 = vunpack.c.l.b16 %v1952
        %v6507 = vunpack.c.h.b16 %v1952
        %v6508 = vunpack.c.l.b16 %v1953
        %v6509 = vunpack.c.h.b16 %v1953
        %v6510 = vunpack.c.l.b16 %v1954
        %v6511 = vunpack.c.h.b16 %v1954
        %v6512 = vunpack.c.l.b16 %v1955
        %v6513 = vunpack.c.h.b16 %v1955
        %v6514 = vunpack.c.l.b16 %v1956
        %v6515 = vunpack.c.h.b16 %v1956
        %v6516 = vunpack.c.l.b16 %v1957
        %v6517 = vunpack.c.h.b16 %v1957
        %v6518 = vunpack.c.l.b16 %v1958
        %v6519 = vunpack.c.h.b16 %v1958
        %v6520 = vunpack.c.l.b16 %v1959
        %v6521 = vunpack.c.h.b16 %v1959
        %v6522 = vunpack.c.l.b16 %v1960
        %v6523 = vunpack.c.h.b16 %v1960
        %v6524 = vunpack.c.l.b16 %v1961
        %v6525 = vunpack.c.h.b16 %v1961
        %v6526 = vunpack.c.l.b16 %v1962
        %v6527 = vunpack.c.h.b16 %v1962
        %v6528 = vunpack.c.l.b16 %v1963
        %v6529 = vunpack.c.h.b16 %v1963
        %v6530 = vunpack.c.l.b16 %v1964
        %v6531 = vunpack.c.h.b16 %v1964
        %v6532 = vunpack.c.l.b16 %v1965
        %v6533 = vunpack.c.h.b16 %v1965
        %v6534 = vunpack.c.l.b16 %v1966
        %v6535 = vunpack.c.h.b16 %v1966
        %v6536 = vunpack.c.l.b16 %v1967
        %v6537 = vunpack.c.h.b16 %v1967
        %v6538 = vunpack.c.l.b16 %v1968
        %v6539 = vunpack.c.h.b16 %v1968
        %v6540 = vunpack.c.l.b16 %v1969
        %v6541 = vunpack.c.h.b16 %v1969
        %v6542 = vunpack.c.l.b16 %v1970
        %v6543 = vunpack.c.h.b16 %v1970
        %v6544 = vunpack.c.l.b16 %v1971
        %v6545 = vunpack.c.h.b16 %v1971
        %v6546 = vunpack.c.l.b16 %v1972
        %v6547 = vunpack.c.h.b16 %v1972
        %v6548 = vunpack.c.l.b16 %v1973
        %v6549 = vunpack.c.h.b16 %v1973
        %v6550 = vunpack.c.l.b16 %v1974
        %v6551 = vunpack.c.h.b16 %v1974
        %v6552 = vunpack.c.l.b16 %v1975
        %v6553 = vunpack.c.h.b16 %v1975
        %v6554 = vunpack.c.l.b16 %v1976
        %v6555 = vunpack.c.h.b16 %v1976
        %v6556 = vunpack.c.l.b16 %v1977
        %v6557 = vunpack.c.h.b16 %v1977
        %v6558 = vunpack.c.l.b16 %v1978
        %v6559 = vunpack.c.h.b16 %v1978
        %v6560 = vunpack.c.l.b16 %v1979
        %v6561 = vunpack.c.h.b16 %v1979
        %v6562 = vunpack.c.l.b16 %v1980
        %v6563 = vunpack.c.h.b16 %v1980
        %v6564 = vunpack.c.l.b16 %v1981
        %v6565 = vunpack.c.h.b16 %v1981
        %v6566 = vunpack.c.l.b16 %v1982
        %v6567 = vunpack.c.h.b16 %v1982
        %v6568 = vunpack.c.l.b16 %v1983
        %v6569 = vunpack.c.h.b16 %v1983
        %v6570 = vunpack.c.l.b16 %v1984
        %v6571 = vunpack.c.h.b16 %v1984
        %v6572 = vunpack.c.l.b16 %v1985
        %v6573 = vunpack.c.h.b16 %v1985
        %v6574 = vunpack.c.l.b16 %v1986
        %v6575 = vunpack.c.h.b16 %v1986
        %v6576 = vunpack.c.l.b16 %v1987
        %v6577 = vunpack.c.h.b16 %v1987
        %v6578 = vunpack.c.l.b16 %v1988
        %v6579 = vunpack.c.h.b16 %v1988
        %v6580 = vunpack.c.l.b16 %v1989
        %v6581 = vunpack.c.h.b16 %v1989
        %v6582 = vunpack.c.l.b16 %v1990
        %v6583 = vunpack.c.h.b16 %v1990
        %v6584 = vunpack.c.l.b16 %v1991
        %v6585 = vunpack.c.h.b16 %v1991
        %v6586 = vunpack.c.l.b16 %v1992
        %v6587 = vunpack.c.h.b16 %v1992
        %v6588 = vunpack.c.l.b16 %v1993
        %v6589 = vunpack.c.h.b16 %v1993
        %v6590 = vunpack.c.l.b16 %v1994
        %v6591 = vunpack.c.h.b16 %v1994
        %v6592 = vunpack.c.l.b16 %v1995
        %v6593 = vunpack.c.h.b16 %v1995
        %v6594 = vunpack.c.l.b16 %v1996
        %v6595 = vunpack.c.h.b16 %v1996
        %v6596 = vunpack.c.l.b16 %v1997
        %v6597 = vunpack.c.h.b16 %v1997
        %v6598 = vunpack.c.l.b16 %v1998
        %v6599 = vunpack.c.h.b16 %v1998
        %v6600 = vunpack.c.l.b16 %v1999
        %v6601 = vunpack.c.h.b16 %v1999
        %v6602 = vunpack.c.l.b16 %v2000
        %v6603 = vunpack.c.h.b16 %v2000
        %v6604 = vunpack.c.l.b16 %v2001
        %v6605 = vunpack.c.h.b16 %v2001
        %v6606 = vunpack.c.l.b16 %v2002
        %v6607 = vunpack.c.h.b16 %v2002
        %v6608 = vunpack.c.l.b16 %v2003
        %v6609 = vunpack.c.h.b16 %v2003
        %v6610 = vunpack.c.l.b16 %v2004
        %v6611 = vunpack.c.h.b16 %v2004
        %v6612 = vunpack.c.l.b16 %v2005
        %v6613 = vunpack.c.h.b16 %v2005
        %v6614 = vunpack.c.l.b16 %v2006
        %v6615 = vunpack.c.h.b16 %v2006
        %v6616 = vunpack.c.l.b16 %v2007
        %v6617 = vunpack.c.h.b16 %v2007
        %v6618 = vunpack.c.l.b16 %v2008
        %v6619 = vunpack.c.h.b16 %v2008
        %v6620 = vunpack.c.l.b16 %v2009
        %v6621 = vunpack.c.h.b16 %v2009
        %v6622 = vunpack.c.l.b16 %v2010
        %v6623 = vunpack.c.h.b16 %v2010
        %v6624 = vunpack.c.l.b16 %v2011
        %v6625 = vunpack.c.h.b16 %v2011
        %v6626 = vunpack.c.l.b16 %v2012
        %v6627 = vunpack.c.h.b16 %v2012
        %v6628 = vunpack.c.l.b16 %v2013
        %v6629 = vunpack.c.h.b16 %v2013
        %v6630 = vunpack.c.l.b16 %v2014
        %v6631 = vunpack.c.h.b16 %v2014
        %v6632 = vunpack.c.l.b16 %v2015
        %v6633 = vunpack.c.h.b16 %v2015
        %v6634 = vunpack.c.l.b16 %v2016
        %v6635 = vunpack.c.h.b16 %v2016
        %v6636 = vunpack.c.l.b16 %v2017
        %v6637 = vunpack.c.h.b16 %v2017
        %v6638 = vunpack.c.l.b16 %v2018
        %v6639 = vunpack.c.h.b16 %v2018
        %v6640 = vunpack.c.l.b16 %v2019
        %v6641 = vunpack.c.h.b16 %v2019
        %v6642 = vunpack.c.l.b16 %v2020
        %v6643 = vunpack.c.h.b16 %v2020
        %v6644 = vunpack.c.l.b16 %v2021
        %v6645 = vunpack.c.h.b16 %v2021
        %v6646 = vunpack.c.l.b16 %v2022
        %v6647 = vunpack.c.h.b16 %v2022
        %v6648 = vunpack.c.l.b16 %v2023
        %v6649 = vunpack.c.h.b16 %v2023
        %v6650 = vunpack.c.l.b16 %v2024
        %v6651 = vunpack.c.h.b16 %v2024
        %v6652 = vunpack.c.l.b16 %v2025
        %v6653 = vunpack.c.h.b16 %v2025
        %v6654 = vunpack.c.l.b16 %v2026
        %v6655 = vunpack.c.h.b16 %v2026
        %v6656 = vunpack.c.l.b16 %v2027
        %v6657 = vunpack.c.h.b16 %v2027
        %v6658 = vunpack.c.l.b16 %v2028
        %v6659 = vunpack.c.h.b16 %v2028
        %v6660 = vunpack.c.l.b16 %v2029
        %v6661 = vunpack.c.h.b16 %v2029
        %v6662 = vunpack.c.l.b16 %v2030
        %v6663 = vunpack.c.h.b16 %v2030
        %v6664 = vunpack.c.l.b16 %v2031
        %v6665 = vunpack.c.h.b16 %v2031
        %v6666 = vunpack.c.l.b16 %v2032
        %v6667 = vunpack.c.h.b16 %v2032
        %v6668 = vunpack.c.l.b16 %v2033
        %v6669 = vunpack.c.h.b16 %v2033
        %v6670 = vunpack.c.l.b16 %v2034
        %v6671 = vunpack.c.h.b16 %v2034
        %v6672 = vunpack.c.l.b16 %v2035
        %v6673 = vunpack.c.h.b16 %v2035
        %v6674 = vunpack.c.l.b16 %v2036
        %v6675 = vunpack.c.h.b16 %v2036
        %v6676 = vunpack.c.l.b16 %v2037
        %v6677 = vunpack.c.h.b16 %v2037
        %v6678 = vunpack.c.l.b16 %v2038
        %v6679 = vunpack.c.h.b16 %v2038
        %v6680 = vunpack.c.l.b16 %v2039
        %v6681 = vunpack.c.h.b16 %v2039
        %v6682 = vunpack.c.l.b16 %v2040
        %v6683 = vunpack.c.h.b16 %v2040
        %v6684 = vunpack.c.l.b16 %v2041
        %v6685 = vunpack.c.h.b16 %v2041
        %v6686 = vunpack.c.l.b16 %v2042
        %v6687 = vunpack.c.h.b16 %v2042
        %v6688 = vunpack.c.l.b16 %v2043
        %v6689 = vunpack.c.h.b16 %v2043
        %v6690 = vunpack.c.l.b16 %v2044
        %v6691 = vunpack.c.h.b16 %v2044
        %v6692 = vunpack.c.l.b16 %v2045
        %v6693 = vunpack.c.h.b16 %v2045
        %v6694 = vunpack.c.l.b16 %v2046
        %v6695 = vunpack.c.h.b16 %v2046
        %v6696 = vunpack.c.l.b16 %v2047
        %v6697 = vunpack.c.h.b16 %v2047
        %v6698 = vunpack.c.l.b16 %v2048
        %v6699 = vunpack.c.h.b16 %v2048
        %v6700 = vunpack.c.l.b16 %v2049
        %v6701 = vunpack.c.h.b16 %v2049
        %v6702 = vunpack.c.l.b16 %v2050
        %v6703 = vunpack.c.h.b16 %v2050
        %v6704 = vunpack.c.l.b16 %v2051
        %v6705 = vunpack.c.h.b16 %v2051
        %v6706 = vunpack.c.l.b16 %v2052
        %v6707 = vunpack.c.h.b16 %v2052
        %v6708 = vunpack.c.l.b16 %v2053
        %v6709 = vunpack.c.h.b16 %v2053
        %v6710 = vunpack.c.l.b16 %v2054
        %v6711 = vunpack.c.h.b16 %v2054
        %v6712 = vunpack.c.l.b16 %v2055
        %v6713 = vunpack.c.h.b16 %v2055
        %v6714 = vunpack.c.l.b16 %v2056
        %v6715 = vunpack.c.h.b16 %v2056
        %v6716 = vunpack.c.l.b16 %v2057
        %v6717 = vunpack.c.h.b16 %v2057
        %v6718 = vunpack.c.l.b16 %v2058
        %v6719 = vunpack.c.h.b16 %v2058
        %v6720 = vunpack.c.l.b16 %v2059
        %v6721 = vunpack.c.h.b16 %v2059
        %v6722 = vunpack.c.l.b16 %v2060
        %v6723 = vunpack.c.h.b16 %v2060
        %v6724 = vunpack.c.l.b16 %v2061
        %v6725 = vunpack.c.h.b16 %v2061
        %v6726 = vunpack.c.l.b16 %v2062
        %v6727 = vunpack.c.h.b16 %v2062
        %v6728 = vunpack.c.l.b16 %v2063
        %v6729 = vunpack.c.h.b16 %v2063
        %v6730 = vunpack.c.l.b16 %v2064
        %v6731 = vunpack.c.h.b16 %v2064
        %v6732 = vunpack.c.l.b16 %v2065
        %v6733 = vunpack.c.h.b16 %v2065
        %v6734 = vunpack.c.l.b16 %v2066
        %v6735 = vunpack.c.h.b16 %v2066
        %v6736 = vunpack.c.l.b16 %v2067
        %v6737 = vunpack.c.h.b16 %v2067
        %v6738 = vunpack.c.l.b16 %v2068
        %v6739 = vunpack.c.h.b16 %v2068
        %v6740 = vunpack.c.l.b16 %v2069
        %v6741 = vunpack.c.h.b16 %v2069
        %v6742 = vunpack.c.l.b16 %v2070
        %v6743 = vunpack.c.h.b16 %v2070
        %v6744 = vunpack.c.l.b16 %v2071
        %v6745 = vunpack.c.h.b16 %v2071
        %v6746 = vunpack.c.l.b16 %v2072
        %v6747 = vunpack.c.h.b16 %v2072
        %v6748 = vunpack.c.l.b16 %v2073
        %v6749 = vunpack.c.h.b16 %v2073
        %v6750 = vunpack.c.l.b16 %v2074
        %v6751 = vunpack.c.h.b16 %v2074
        %v6752 = vunpack.c.l.b16 %v2075
        %v6753 = vunpack.c.h.b16 %v2075
        %v6754 = vunpack.c.l.b16 %v2076
        %v6755 = vunpack.c.h.b16 %v2076
        %v6756 = vunpack.c.l.b16 %v2077
        %v6757 = vunpack.c.h.b16 %v2077
        %v6758 = vunpack.c.l.b16 %v2078
        %v6759 = vunpack.c.h.b16 %v2078
        %v6760 = vunpack.c.l.b16 %v2079
        %v6761 = vunpack.c.h.b16 %v2079
        %v6762 = vunpack.c.l.b16 %v2080
        %v6763 = vunpack.c.h.b16 %v2080
        %v6764 = vunpack.c.l.b16 %v2081
        %v6765 = vunpack.c.h.b16 %v2081
        %v6766 = vunpack.c.l.b16 %v2082
        %v6767 = vunpack.c.h.b16 %v2082
        %v6768 = vunpack.c.l.b16 %v2083
        %v6769 = vunpack.c.h.b16 %v2083
        %v6770 = vunpack.c.l.b16 %v2084
        %v6771 = vunpack.c.h.b16 %v2084
        %v6772 = vunpack.c.l.b16 %v2085
        %v6773 = vunpack.c.h.b16 %v2085
        %v6774 = vunpack.c.l.b16 %v2086
        %v6775 = vunpack.c.h.b16 %v2086
        %v6776 = vunpack.c.l.b16 %v2087
        %v6777 = vunpack.c.h.b16 %v2087
        %v6778 = vunpack.c.l.b16 %v2088
        %v6779 = vunpack.c.h.b16 %v2088
        %v6780 = vunpack.c.l.b16 %v2089
        %v6781 = vunpack.c.h.b16 %v2089
        %v6782 = vunpack.c.l.b16 %v2090
        %v6783 = vunpack.c.h.b16 %v2090
        %v6784 = vunpack.c.l.b16 %v2091
        %v6785 = vunpack.c.h.b16 %v2091
        %v6786 = vunpack.c.l.b16 %v2092
        %v6787 = vunpack.c.h.b16 %v2092
        %v6788 = vunpack.c.l.b16 %v2093
        %v6789 = vunpack.c.h.b16 %v2093
        %v6790 = vunpack.c.l.b16 %v2094
        %v6791 = vunpack.c.h.b16 %v2094
        %v6792 = vunpack.c.l.b16 %v2095
        %v6793 = vunpack.c.h.b16 %v2095
        %v6794 = vunpack.c.l.b16 %v2096
        %v6795 = vunpack.c.h.b16 %v2096
        %v6796 = vunpack.c.l.b16 %v2097
        %v6797 = vunpack.c.h.b16 %v2097
        %v6798 = vunpack.c.l.b16 %v2098
        %v6799 = vunpack.c.h.b16 %v2098
        %v6800 = vunpack.c.l.b16 %v2099
        %v6801 = vunpack.c.h.b16 %v2099
        %v6802 = vunpack.c.l.b16 %v2100
        %v6803 = vunpack.c.h.b16 %v2100
        %v6804 = vunpack.c.l.b16 %v2101
        %v6805 = vunpack.c.h.b16 %v2101
        %v6806 = vunpack.c.l.b16 %v2102
        %v6807 = vunpack.c.h.b16 %v2102
        %v6808 = vunpack.c.l.b16 %v2103
        %v6809 = vunpack.c.h.b16 %v2103
        %v6810 = vunpack.c.l.b16 %v2104
        %v6811 = vunpack.c.h.b16 %v2104
        %v6812 = vunpack.c.l.b16 %v2105
        %v6813 = vunpack.c.h.b16 %v2105
        %v6814 = vunpack.c.l.b16 %v2106
        %v6815 = vunpack.c.h.b16 %v2106
        %v6816 = vunpack.c.l.b16 %v2107
        %v6817 = vunpack.c.h.b16 %v2107
        %v6818 = vunpack.c.l.b16 %v2108
        %v6819 = vunpack.c.h.b16 %v2108
        %v6820 = vunpack.c.l.b16 %v2109
        %v6821 = vunpack.c.h.b16 %v2109
        %v6822 = vunpack.c.l.b16 %v2110
        %v6823 = vunpack.c.h.b16 %v2110
        %v6824 = vunpack.c.l.b16 %v2111
        %v6825 = vunpack.c.h.b16 %v2111
        %v6826 = vunpack.c.l.b16 %v2112
        %v6827 = vunpack.c.h.b16 %v2112
        %v6828 = vunpack.c.l.b16 %v2113
        %v6829 = vunpack.c.h.b16 %v2113
        %v6830 = vunpack.c.l.b16 %v2114
        %v6831 = vunpack.c.h.b16 %v2114
        %v6832 = vunpack.c.l.b16 %v2115
        %v6833 = vunpack.c.h.b16 %v2115
        %v6834 = vunpack.c.l.b16 %v2116
        %v6835 = vunpack.c.h.b16 %v2116
        %v6836 = vunpack.c.l.b16 %v2117
        %v6837 = vunpack.c.h.b16 %v2117
        %v6838 = vunpack.c.l.b16 %v2118
        %v6839 = vunpack.c.h.b16 %v2118
        %v6840 = vunpack.c.l.b16 %v2119
        %v6841 = vunpack.c.h.b16 %v2119
        %v6842 = vunpack.c.l.b16 %v2120
        %v6843 = vunpack.c.h.b16 %v2120
        %v6844 = vunpack.c.l.b16 %v2121
        %v6845 = vunpack.c.h.b16 %v2121
        %v6846 = vunpack.c.l.b16 %v2122
        %v6847 = vunpack.c.h.b16 %v2122
        %v6848 = vunpack.c.l.b16 %v2123
        %v6849 = vunpack.c.h.b16 %v2123
        %v6850 = vunpack.c.l.b16 %v2124
        %v6851 = vunpack.c.h.b16 %v2124
        %v6852 = vunpack.c.l.b16 %v2125
        %v6853 = vunpack.c.h.b16 %v2125
        %v6854 = vunpack.c.l.b16 %v2126
        %v6855 = vunpack.c.h.b16 %v2126
        %v6856 = vunpack.c.l.b16 %v2127
        %v6857 = vunpack.c.h.b16 %v2127
        %v6858 = vunpack.c.l.b16 %v2128
        %v6859 = vunpack.c.h.b16 %v2128
        %v6860 = vunpack.c.l.b16 %v2129
        %v6861 = vunpack.c.h.b16 %v2129
        %v6862 = vunpack.c.l.b16 %v2130
        %v6863 = vunpack.c.h.b16 %v2130
        %v6864 = vunpack.c.l.b16 %v2131
        %v6865 = vunpack.c.h.b16 %v2131
        %v6866 = vunpack.c.l.b16 %v2132
        %v6867 = vunpack.c.h.b16 %v2132
        %v6868 = vunpack.c.l.b16 %v2133
        %v6869 = vunpack.c.h.b16 %v2133
        %v6870 = vunpack.c.l.b16 %v2134
        %v6871 = vunpack.c.h.b16 %v2134
        %v6872 = vunpack.c.l.b16 %v2135
        %v6873 = vunpack.c.h.b16 %v2135
        %v6874 = vunpack.c.l.b16 %v2136
        %v6875 = vunpack.c.h.b16 %v2136
        %v6876 = vunpack.c.l.b16 %v2137
        %v6877 = vunpack.c.h.b16 %v2137
        %v6878 = vunpack.c.l.b16 %v2138
        %v6879 = vunpack.c.h.b16 %v2138
        %v6880 = vunpack.c.l.b16 %v2139
        %v6881 = vunpack.c.h.b16 %v2139
        %v6882 = vunpack.c.l.b16 %v2140
        %v6883 = vunpack.c.h.b16 %v2140
        %v6884 = vunpack.c.l.b16 %v2141
        %v6885 = vunpack.c.h.b16 %v2141
        %v6886 = vunpack.c.l.b16 %v2142
        %v6887 = vunpack.c.h.b16 %v2142
        %v6888 = vunpack.c.l.b16 %v2143
        %v6889 = vunpack.c.h.b16 %v2143
        %v6890 = vunpack.c.l.b16 %v2144
        %v6891 = vunpack.c.h.b16 %v2144
        %v6892 = vunpack.c.l.b16 %v2145
        %v6893 = vunpack.c.h.b16 %v2145
        %v6894 = vunpack.c.l.b16 %v2146
        %v6895 = vunpack.c.h.b16 %v2146
        %v6896 = vunpack.c.l.b16 %v2147
        %v6897 = vunpack.c.h.b16 %v2147
        %v6898 = vunpack.c.l.b16 %v2148
        %v6899 = vunpack.c.h.b16 %v2148
        %v6900 = vunpack.c.l.b16 %v2149
        %v6901 = vunpack.c.h.b16 %v2149
        %v6902 = vunpack.c.l.b16 %v2150
        %v6903 = vunpack.c.h.b16 %v2150
        %v6904 = vunpack.c.l.b16 %v2151
        %v6905 = vunpack.c.h.b16 %v2151
        %v6906 = vunpack.c.l.b16 %v2152
        %v6907 = vunpack.c.h.b16 %v2152
        %v6908 = vunpack.c.l.b16 %v2153
        %v6909 = vunpack.c.h.b16 %v2153
        %v6910 = vunpack.c.l.b16 %v2154
        %v6911 = vunpack.c.h.b16 %v2154
        %v6912 = vunpack.c.l.b16 %v2155
        %v6913 = vunpack.c.h.b16 %v2155
        %v6914 = vunpack.c.l.b16 %v2156
        %v6915 = vunpack.c.h.b16 %v2156
        %v6916 = vunpack.c.l.b16 %v2157
        %v6917 = vunpack.c.h.b16 %v2157
        %v6918 = vunpack.c.l.b16 %v2158
        %v6919 = vunpack.c.h.b16 %v2158
        %v6920 = vunpack.c.l.b16 %v2159
        %v6921 = vunpack.c.h.b16 %v2159
        %v6922 = vunpack.c.l.b16 %v2160
        %v6923 = vunpack.c.h.b16 %v2160
        %v6924 = vunpack.c.l.b16 %v2161
        %v6925 = vunpack.c.h.b16 %v2161
        %v6926 = vunpack.c.l.b16 %v2162
        %v6927 = vunpack.c.h.b16 %v2162
        %v6928 = vunpack.c.l.b16 %v2163
        %v6929 = vunpack.c.h.b16 %v2163
        %v6930 = vunpack.c.l.b16 %v2164
        %v6931 = vunpack.c.h.b16 %v2164
        %v6932 = vunpack.c.l.b16 %v2165
        %v6933 = vunpack.c.h.b16 %v2165
        %v6934 = vunpack.c.l.b16 %v2166
        %v6935 = vunpack.c.h.b16 %v2166
        %v6936 = vunpack.c.l.b16 %v2167
        %v6937 = vunpack.c.h.b16 %v2167
        %v6938 = vunpack.c.l.b16 %v2168
        %v6939 = vunpack.c.h.b16 %v2168
        %v6940 = vunpack.c.l.b16 %v2169
        %v6941 = vunpack.c.h.b16 %v2169
        %v6942 = vunpack.c.l.b16 %v2170
        %v6943 = vunpack.c.h.b16 %v2170
        %v6944 = vunpack.c.l.b16 %v2171
        %v6945 = vunpack.c.h.b16 %v2171
        %v6946 = vunpack.c.l.b16 %v2172
        %v6947 = vunpack.c.h.b16 %v2172
        %v6948 = vunpack.c.l.b16 %v2173
        %v6949 = vunpack.c.h.b16 %v2173
        %v6950 = vunpack.c.l.b16 %v2174
        %v6951 = vunpack.c.h.b16 %v2174
        %v6952 = vunpack.c.l.b16 %v2175
        %v6953 = vunpack.c.h.b16 %v2175
        %v6954 = vunpack.c.l.b16 %v2176
        %v6955 = vunpack.c.h.b16 %v2176
        %v6956 = vunpack.c.l.b16 %v2177
        %v6957 = vunpack.c.h.b16 %v2177
        %v6958 = vunpack.c.l.b16 %v2178
        %v6959 = vunpack.c.h.b16 %v2178
        %v6960 = vunpack.c.l.b16 %v2179
        %v6961 = vunpack.c.h.b16 %v2179
        %v6962 = vunpack.c.l.b16 %v2180
        %v6963 = vunpack.c.h.b16 %v2180
        %v6964 = vunpack.c.l.b16 %v2181
        %v6965 = vunpack.c.h.b16 %v2181
        %v6966 = vunpack.c.l.b16 %v2182
        %v6967 = vunpack.c.h.b16 %v2182
        %v6968 = vunpack.c.l.b16 %v2183
        %v6969 = vunpack.c.h.b16 %v2183
        %v6970 = vunpack.c.l.b16 %v2184
        %v6971 = vunpack.c.h.b16 %v2184
        %v6972 = vunpack.c.l.b16 %v2185
        %v6973 = vunpack.c.h.b16 %v2185
        %v6974 = vunpack.c.l.b16 %v2186
        %v6975 = vunpack.c.h.b16 %v2186
        %v6976 = vunpack.c.l.b16 %v2187
        %v6977 = vunpack.c.h.b16 %v2187
        %v6978 = vunpack.c.l.b16 %v2188
        %v6979 = vunpack.c.h.b16 %v2188
        %v6980 = vunpack.c.l.b16 %v2189
        %v6981 = vunpack.c.h.b16 %v2189
        %v6982 = vunpack.c.l.b16 %v2190
        %v6983 = vunpack.c.h.b16 %v2190
        %v6984 = vunpack.c.l.b16 %v2191
        %v6985 = vunpack.c.h.b16 %v2191
        %v6986 = vunpack.c.l.b16 %v2192
        %v6987 = vunpack.c.h.b16 %v2192
        %v6988 = vunpack.c.l.b16 %v2193
        %v6989 = vunpack.c.h.b16 %v2193
        %v6990 = vunpack.c.l.b16 %v2194
        %v6991 = vunpack.c.h.b16 %v2194
        %v6992 = vunpack.c.l.b16 %v2195
        %v6993 = vunpack.c.h.b16 %v2195
        %v6994 = vunpack.c.l.b16 %v2196
        %v6995 = vunpack.c.h.b16 %v2196
        %v6996 = vunpack.c.l.b16 %v2197
        %v6997 = vunpack.c.h.b16 %v2197
        %v6998 = vpack.c.b16 %v3802, %v3798
        %v6999 = vpack.c.b16 %v3803, %v3799
        %v7000 = vpack.c.b16 %v3804, %v3800
        %v7001 = vpack.c.b16 %v3805, %v3801
        %v7002 = vpack.c.b16 %v3810, %v3806
        %v7003 = vpack.c.b16 %v3811, %v3807
        %v7004 = vpack.c.b16 %v3812, %v3808
        %v7005 = vpack.c.b16 %v3813, %v3809
        %v7006 = vpack.c.b16 %v3818, %v3814
        %v7007 = vpack.c.b16 %v3819, %v3815
        %v7008 = vpack.c.b16 %v3820, %v3816
        %v7009 = vpack.c.b16 %v3821, %v3817
        %v7010 = vpack.c.b16 %v3826, %v3822
        %v7011 = vpack.c.b16 %v3827, %v3823
        %v7012 = vpack.c.b16 %v3828, %v3824
        %v7013 = vpack.c.b16 %v3829, %v3825
        %v7014 = vpack.c.b16 %v3834, %v3830
        %v7015 = vpack.c.b16 %v3835, %v3831
        %v7016 = vpack.c.b16 %v3836, %v3832
        %v7017 = vpack.c.b16 %v3837, %v3833
        %v7018 = vpack.c.b16 %v3842, %v3838
        %v7019 = vpack.c.b16 %v3843, %v3839
        %v7020 = vpack.c.b16 %v3844, %v3840
        %v7021 = vpack.c.b16 %v3845, %v3841
        %v7022 = vpack.c.b16 %v3850, %v3846
        %v7023 = vpack.c.b16 %v3851, %v3847
        %v7024 = vpack.c.b16 %v3852, %v3848
        %v7025 = vpack.c.b16 %v3853, %v3849
        %v7026 = vpack.c.b16 %v3858, %v3854
        %v7027 = vpack.c.b16 %v3859, %v3855
        %v7028 = vpack.c.b16 %v3860, %v3856
        %v7029 = vpack.c.b16 %v3861, %v3857
        %v7030 = vpack.c.b16 %v3866, %v3862
        %v7031 = vpack.c.b16 %v3867, %v3863
        %v7032 = vpack.c.b16 %v3868, %v3864
        %v7033 = vpack.c.b16 %v3869, %v3865
        %v7034 = vpack.c.b16 %v3874, %v3870
        %v7035 = vpack.c.b16 %v3875, %v3871
        %v7036 = vpack.c.b16 %v3876, %v3872
        %v7037 = vpack.c.b16 %v3877, %v3873
        %v7038 = vpack.c.b16 %v3882, %v3878
        %v7039 = vpack.c.b16 %v3883, %v3879
        %v7040 = vpack.c.b16 %v3884, %v3880
        %v7041 = vpack.c.b16 %v3885, %v3881
        %v7042 = vpack.c.b16 %v3890, %v3886
        %v7043 = vpack.c.b16 %v3891, %v3887
        %v7044 = vpack.c.b16 %v3892, %v3888
        %v7045 = vpack.c.b16 %v3893, %v3889
        %v7046 = vpack.c.b16 %v3898, %v3894
        %v7047 = vpack.c.b16 %v3899, %v3895
        %v7048 = vpack.c.b16 %v3900, %v3896
        %v7049 = vpack.c.b16 %v3901, %v3897
        %v7050 = vpack.c.b16 %v3906, %v3902
        %v7051 = vpack.c.b16 %v3907, %v3903
        %v7052 = vpack.c.b16 %v3908, %v3904
        %v7053 = vpack.c.b16 %v3909, %v3905
        %v7054 = vpack.c.b16 %v3914, %v3910
        %v7055 = vpack.c.b16 %v3915, %v3911
        %v7056 = vpack.c.b16 %v3916, %v3912
        %v7057 = vpack.c.b16 %v3917, %v3913
        %v7058 = vpack.c.b16 %v3922, %v3918
        %v7059 = vpack.c.b16 %v3923, %v3919
        %v7060 = vpack.c.b16 %v3924, %v3920
        %v7061 = vpack.c.b16 %v3925, %v3921
        %v7062 = vpack.c.b16 %v3930, %v3926
        %v7063 = vpack.c.b16 %v3931, %v3927
        %v7064 = vpack.c.b16 %v3932, %v3928
        %v7065 = vpack.c.b16 %v3933, %v3929
        %v7066 = vpack.c.b16 %v3938, %v3934
        %v7067 = vpack.c.b16 %v3939, %v3935
        %v7068 = vpack.c.b16 %v3940, %v3936
        %v7069 = vpack.c.b16 %v3941, %v3937
        %v7070 = vpack.c.b16 %v3946, %v3942
        %v7071 = vpack.c.b16 %v3947, %v3943
        %v7072 = vpack.c.b16 %v3948, %v3944
        %v7073 = vpack.c.b16 %v3949, %v3945
        %v7074 = vpack.c.b16 %v3954, %v3950
        %v7075 = vpack.c.b16 %v3955, %v3951
        %v7076 = vpack.c.b16 %v3956, %v3952
        %v7077 = vpack.c.b16 %v3957, %v3953
        %v7078 = vpack.c.b16 %v3962, %v3958
        %v7079 = vpack.c.b16 %v3963, %v3959
        %v7080 = vpack.c.b16 %v3964, %v3960
        %v7081 = vpack.c.b16 %v3965, %v3961
        %v7082 = vpack.c.b16 %v3970, %v3966
        %v7083 = vpack.c.b16 %v3971, %v3967
        %v7084 = vpack.c.b16 %v3972, %v3968
        %v7085 = vpack.c.b16 %v3973, %v3969
        %v7086 = vpack.c.b16 %v3978, %v3974
        %v7087 = vpack.c.b16 %v3979, %v3975
        %v7088 = vpack.c.b16 %v3980, %v3976
        %v7089 = vpack.c.b16 %v3981, %v3977
        %v7090 = vpack.c.b16 %v3986, %v3982
        %v7091 = vpack.c.b16 %v3987, %v3983
        %v7092 = vpack.c.b16 %v3988, %v3984
        %v7093 = vpack.c.b16 %v3989, %v3985
        %v7094 = vpack.c.b16 %v3994, %v3990
        %v7095 = vpack.c.b16 %v3995, %v3991
        %v7096 = vpack.c.b16 %v3996, %v3992
        %v7097 = vpack.c.b16 %v3997, %v3993
        %v7098 = vpack.c.b16 %v4002, %v3998
        %v7099 = vpack.c.b16 %v4003, %v3999
        %v7100 = vpack.c.b16 %v4004, %v4000
        %v7101 = vpack.c.b16 %v4005, %v4001
        %v7102 = vpack.c.b16 %v4010, %v4006
        %v7103 = vpack.c.b16 %v4011, %v4007
        %v7104 = vpack.c.b16 %v4012, %v4008
        %v7105 = vpack.c.b16 %v4013, %v4009
        %v7106 = vpack.c.b16 %v4018, %v4014
        %v7107 = vpack.c.b16 %v4019, %v4015
        %v7108 = vpack.c.b16 %v4020, %v4016
        %v7109 = vpack.c.b16 %v4021, %v4017
        %v7110 = vpack.c.b16 %v4026, %v4022
        %v7111 = vpack.c.b16 %v4027, %v4023
        %v7112 = vpack.c.b16 %v4028, %v4024
        %v7113 = vpack.c.b16 %v4029, %v4025
        %v7114 = vpack.c.b16 %v4034, %v4030
        %v7115 = vpack.c.b16 %v4035, %v4031
        %v7116 = vpack.c.b16 %v4036, %v4032
        %v7117 = vpack.c.b16 %v4037, %v4033
        %v7118 = vpack.c.b16 %v4042, %v4038
        %v7119 = vpack.c.b16 %v4043, %v4039
        %v7120 = vpack.c.b16 %v4044, %v4040
        %v7121 = vpack.c.b16 %v4045, %v4041
        %v7122 = vpack.c.b16 %v4050, %v4046
        %v7123 = vpack.c.b16 %v4051, %v4047
        %v7124 = vpack.c.b16 %v4052, %v4048
        %v7125 = vpack.c.b16 %v4053, %v4049
        %v7126 = vpack.c.b16 %v4058, %v4054
        %v7127 = vpack.c.b16 %v4059, %v4055
        %v7128 = vpack.c.b16 %v4060, %v4056
        %v7129 = vpack.c.b16 %v4061, %v4057
        %v7130 = vpack.c.b16 %v4066, %v4062
        %v7131 = vpack.c.b16 %v4067, %v4063
        %v7132 = vpack.c.b16 %v4068, %v4064
        %v7133 = vpack.c.b16 %v4069, %v4065
        %v7134 = vpack.c.b16 %v4074, %v4070
        %v7135 = vpack.c.b16 %v4075, %v4071
        %v7136 = vpack.c.b16 %v4076, %v4072
        %v7137 = vpack.c.b16 %v4077, %v4073
        %v7138 = vpack.c.b16 %v4082, %v4078
        %v7139 = vpack.c.b16 %v4083, %v4079
        %v7140 = vpack.c.b16 %v4084, %v4080
        %v7141 = vpack.c.b16 %v4085, %v4081
        %v7142 = vpack.c.b16 %v4090, %v4086
        %v7143 = vpack.c.b16 %v4091, %v4087
        %v7144 = vpack.c.b16 %v4092, %v4088
        %v7145 = vpack.c.b16 %v4093, %v4089
        %v7146 = vpack.c.b16 %v4098, %v4094
        %v7147 = vpack.c.b16 %v4099, %v4095
        %v7148 = vpack.c.b16 %v4100, %v4096
        %v7149 = vpack.c.b16 %v4101, %v4097
        %v7150 = vpack.c.b16 %v4106, %v4102
        %v7151 = vpack.c.b16 %v4107, %v4103
        %v7152 = vpack.c.b16 %v4108, %v4104
        %v7153 = vpack.c.b16 %v4109, %v4105
        %v7154 = vpack.c.b16 %v4114, %v4110
        %v7155 = vpack.c.b16 %v4115, %v4111
        %v7156 = vpack.c.b16 %v4116, %v4112
        %v7157 = vpack.c.b16 %v4117, %v4113
        %v7158 = vpack.c.b16 %v4122, %v4118
        %v7159 = vpack.c.b16 %v4123, %v4119
        %v7160 = vpack.c.b16 %v4124, %v4120
        %v7161 = vpack.c.b16 %v4125, %v4121
        %v7162 = vpack.c.b16 %v4130, %v4126
        %v7163 = vpack.c.b16 %v4131, %v4127
        %v7164 = vpack.c.b16 %v4132, %v4128
        %v7165 = vpack.c.b16 %v4133, %v4129
        %v7166 = vpack.c.b16 %v4138, %v4134
        %v7167 = vpack.c.b16 %v4139, %v4135
        %v7168 = vpack.c.b16 %v4140, %v4136
        %v7169 = vpack.c.b16 %v4141, %v4137
        %v7170 = vpack.c.b16 %v4146, %v4142
        %v7171 = vpack.c.b16 %v4147, %v4143
        %v7172 = vpack.c.b16 %v4148, %v4144
        %v7173 = vpack.c.b16 %v4149, %v4145
        %v7174 = vpack.c.b16 %v4154, %v4150
        %v7175 = vpack.c.b16 %v4155, %v4151
        %v7176 = vpack.c.b16 %v4156, %v4152
        %v7177 = vpack.c.b16 %v4157, %v4153
        %v7178 = vpack.c.b16 %v4162, %v4158
        %v7179 = vpack.c.b16 %v4163, %v4159
        %v7180 = vpack.c.b16 %v4164, %v4160
        %v7181 = vpack.c.b16 %v4165, %v4161
        %v7182 = vpack.c.b16 %v4170, %v4166
        %v7183 = vpack.c.b16 %v4171, %v4167
        %v7184 = vpack.c.b16 %v4172, %v4168
        %v7185 = vpack.c.b16 %v4173, %v4169
        %v7186 = vpack.c.b16 %v4178, %v4174
        %v7187 = vpack.c.b16 %v4179, %v4175
        %v7188 = vpack.c.b16 %v4180, %v4176
        %v7189 = vpack.c.b16 %v4181, %v4177
        %v7190 = vpack.c.b16 %v4186, %v4182
        %v7191 = vpack.c.b16 %v4187, %v4183
        %v7192 = vpack.c.b16 %v4188, %v4184
        %v7193 = vpack.c.b16 %v4189, %v4185
        %v7194 = vpack.c.b16 %v4194, %v4190
        %v7195 = vpack.c.b16 %v4195, %v4191
        %v7196 = vpack.c.b16 %v4196, %v4192
        %v7197 = vpack.c.b16 %v4197, %v4193
        %v7198 = vpack.c.b16 %v4202, %v4198
        %v7199 = vpack.c.b16 %v4203, %v4199
        %v7200 = vpack.c.b16 %v4204, %v4200
        %v7201 = vpack.c.b16 %v4205, %v4201
        %v7202 = vpack.c.b16 %v4210, %v4206
        %v7203 = vpack.c.b16 %v4211, %v4207
        %v7204 = vpack.c.b16 %v4212, %v4208
        %v7205 = vpack.c.b16 %v4213, %v4209
        %v7206 = vpack.c.b16 %v4218, %v4214
        %v7207 = vpack.c.b16 %v4219, %v4215
        %v7208 = vpack.c.b16 %v4220, %v4216
        %v7209 = vpack.c.b16 %v4221, %v4217
        %v7210 = vpack.c.b16 %v4226, %v4222
        %v7211 = vpack.c.b16 %v4227, %v4223
        %v7212 = vpack.c.b16 %v4228, %v4224
        %v7213 = vpack.c.b16 %v4229, %v4225
        %v7214 = vpack.c.b16 %v4234, %v4230
        %v7215 = vpack.c.b16 %v4235, %v4231
        %v7216 = vpack.c.b16 %v4236, %v4232
        %v7217 = vpack.c.b16 %v4237, %v4233
        %v7218 = vpack.c.b16 %v4242, %v4238
        %v7219 = vpack.c.b16 %v4243, %v4239
        %v7220 = vpack.c.b16 %v4244, %v4240
        %v7221 = vpack.c.b16 %v4245, %v4241
        %v7222 = vpack.c.b16 %v4250, %v4246
        %v7223 = vpack.c.b16 %v4251, %v4247
        %v7224 = vpack.c.b16 %v4252, %v4248
        %v7225 = vpack.c.b16 %v4253, %v4249
        %v7226 = vpack.c.b16 %v4258, %v4254
        %v7227 = vpack.c.b16 %v4259, %v4255
        %v7228 = vpack.c.b16 %v4260, %v4256
        %v7229 = vpack.c.b16 %v4261, %v4257
        %v7230 = vpack.c.b16 %v4266, %v4262
        %v7231 = vpack.c.b16 %v4267, %v4263
        %v7232 = vpack.c.b16 %v4268, %v4264
        %v7233 = vpack.c.b16 %v4269, %v4265
        %v7234 = vpack.c.b16 %v4274, %v4270
        %v7235 = vpack.c.b16 %v4275, %v4271
        %v7236 = vpack.c.b16 %v4276, %v4272
        %v7237 = vpack.c.b16 %v4277, %v4273
        %v7238 = vpack.c.b16 %v4282, %v4278
        %v7239 = vpack.c.b16 %v4283, %v4279
        %v7240 = vpack.c.b16 %v4284, %v4280
        %v7241 = vpack.c.b16 %v4285, %v4281
        %v7242 = vpack.c.b16 %v4290, %v4286
        %v7243 = vpack.c.b16 %v4291, %v4287
        %v7244 = vpack.c.b16 %v4292, %v4288
        %v7245 = vpack.c.b16 %v4293, %v4289
        %v7246 = vpack.c.b16 %v4298, %v4294
        %v7247 = vpack.c.b16 %v4299, %v4295
        %v7248 = vpack.c.b16 %v4300, %v4296
        %v7249 = vpack.c.b16 %v4301, %v4297
        %v7250 = vpack.c.b16 %v4306, %v4302
        %v7251 = vpack.c.b16 %v4307, %v4303
        %v7252 = vpack.c.b16 %v4308, %v4304
        %v7253 = vpack.c.b16 %v4309, %v4305
        %v7254 = vpack.c.b16 %v4314, %v4310
        %v7255 = vpack.c.b16 %v4315, %v4311
        %v7256 = vpack.c.b16 %v4316, %v4312
        %v7257 = vpack.c.b16 %v4317, %v4313
        %v7258 = vpack.c.b16 %v4322, %v4318
        %v7259 = vpack.c.b16 %v4323, %v4319
        %v7260 = vpack.c.b16 %v4324, %v4320
        %v7261 = vpack.c.b16 %v4325, %v4321
        %v7262 = vpack.c.b16 %v4330, %v4326
        %v7263 = vpack.c.b16 %v4331, %v4327
        %v7264 = vpack.c.b16 %v4332, %v4328
        %v7265 = vpack.c.b16 %v4333, %v4329
        %v7266 = vpack.c.b16 %v4338, %v4334
        %v7267 = vpack.c.b16 %v4339, %v4335
        %v7268 = vpack.c.b16 %v4340, %v4336
        %v7269 = vpack.c.b16 %v4341, %v4337
        %v7270 = vpack.c.b16 %v4346, %v4342
        %v7271 = vpack.c.b16 %v4347, %v4343
        %v7272 = vpack.c.b16 %v4348, %v4344
        %v7273 = vpack.c.b16 %v4349, %v4345
        %v7274 = vpack.c.b16 %v4354, %v4350
        %v7275 = vpack.c.b16 %v4355, %v4351
        %v7276 = vpack.c.b16 %v4356, %v4352
        %v7277 = vpack.c.b16 %v4357, %v4353
        %v7278 = vpack.c.b16 %v4362, %v4358
        %v7279 = vpack.c.b16 %v4363, %v4359
        %v7280 = vpack.c.b16 %v4364, %v4360
        %v7281 = vpack.c.b16 %v4365, %v4361
        %v7282 = vpack.c.b16 %v4370, %v4366
        %v7283 = vpack.c.b16 %v4371, %v4367
        %v7284 = vpack.c.b16 %v4372, %v4368
        %v7285 = vpack.c.b16 %v4373, %v4369
        %v7286 = vpack.c.b16 %v4378, %v4374
        %v7287 = vpack.c.b16 %v4379, %v4375
        %v7288 = vpack.c.b16 %v4380, %v4376
        %v7289 = vpack.c.b16 %v4381, %v4377
        %v7290 = vpack.c.b16 %v4386, %v4382
        %v7291 = vpack.c.b16 %v4387, %v4383
        %v7292 = vpack.c.b16 %v4388, %v4384
        %v7293 = vpack.c.b16 %v4389, %v4385
        %v7294 = vpack.c.b16 %v4394, %v4390
        %v7295 = vpack.c.b16 %v4395, %v4391
        %v7296 = vpack.c.b16 %v4396, %v4392
        %v7297 = vpack.c.b16 %v4397, %v4393
        %v7298 = vpack.c.b16 %v4402, %v4398
        %v7299 = vpack.c.b16 %v4403, %v4399
        %v7300 = vpack.c.b16 %v4404, %v4400
        %v7301 = vpack.c.b16 %v4405, %v4401
        %v7302 = vpack.c.b16 %v4410, %v4406
        %v7303 = vpack.c.b16 %v4411, %v4407
        %v7304 = vpack.c.b16 %v4412, %v4408
        %v7305 = vpack.c.b16 %v4413, %v4409
        %v7306 = vpack.c.b16 %v4418, %v4414
        %v7307 = vpack.c.b16 %v4419, %v4415
        %v7308 = vpack.c.b16 %v4420, %v4416
        %v7309 = vpack.c.b16 %v4421, %v4417
        %v7310 = vpack.c.b16 %v4426, %v4422
        %v7311 = vpack.c.b16 %v4427, %v4423
        %v7312 = vpack.c.b16 %v4428, %v4424
        %v7313 = vpack.c.b16 %v4429, %v4425
        %v7314 = vpack.c.b16 %v4434, %v4430
        %v7315 = vpack.c.b16 %v4435, %v4431
        %v7316 = vpack.c.b16 %v4436, %v4432
        %v7317 = vpack.c.b16 %v4437, %v4433
        %v7318 = vpack.c.b16 %v4442, %v4438
        %v7319 = vpack.c.b16 %v4443, %v4439
        %v7320 = vpack.c.b16 %v4444, %v4440
        %v7321 = vpack.c.b16 %v4445, %v4441
        %v7322 = vpack.c.b16 %v4450, %v4446
        %v7323 = vpack.c.b16 %v4451, %v4447
        %v7324 = vpack.c.b16 %v4452, %v4448
        %v7325 = vpack.c.b16 %v4453, %v4449
        %v7326 = vpack.c.b16 %v4458, %v4454
        %v7327 = vpack.c.b16 %v4459, %v4455
        %v7328 = vpack.c.b16 %v4460, %v4456
        %v7329 = vpack.c.b16 %v4461, %v4457
        %v7330 = vpack.c.b16 %v4466, %v4462
        %v7331 = vpack.c.b16 %v4467, %v4463
        %v7332 = vpack.c.b16 %v4468, %v4464
        %v7333 = vpack.c.b16 %v4469, %v4465
        %v7334 = vpack.c.b16 %v4474, %v4470
        %v7335 = vpack.c.b16 %v4475, %v4471
        %v7336 = vpack.c.b16 %v4476, %v4472
        %v7337 = vpack.c.b16 %v4477, %v4473
        %v7338 = vpack.c.b16 %v4482, %v4478
        %v7339 = vpack.c.b16 %v4483, %v4479
        %v7340 = vpack.c.b16 %v4484, %v4480
        %v7341 = vpack.c.b16 %v4485, %v4481
        %v7342 = vpack.c.b16 %v4490, %v4486
        %v7343 = vpack.c.b16 %v4491, %v4487
        %v7344 = vpack.c.b16 %v4492, %v4488
        %v7345 = vpack.c.b16 %v4493, %v4489
        %v7346 = vpack.c.b16 %v4498, %v4494
        %v7347 = vpack.c.b16 %v4499, %v4495
        %v7348 = vpack.c.b16 %v4500, %v4496
        %v7349 = vpack.c.b16 %v4501, %v4497
        %v7350 = vpack.c.b16 %v4506, %v4502
        %v7351 = vpack.c.b16 %v4507, %v4503
        %v7352 = vpack.c.b16 %v4508, %v4504
        %v7353 = vpack.c.b16 %v4509, %v4505
        %v7354 = vpack.c.b16 %v4514, %v4510
        %v7355 = vpack.c.b16 %v4515, %v4511
        %v7356 = vpack.c.b16 %v4516, %v4512
        %v7357 = vpack.c.b16 %v4517, %v4513
        %v7358 = vpack.c.b16 %v4522, %v4518
        %v7359 = vpack.c.b16 %v4523, %v4519
        %v7360 = vpack.c.b16 %v4524, %v4520
        %v7361 = vpack.c.b16 %v4525, %v4521
        %v7362 = vpack.c.b16 %v4530, %v4526
        %v7363 = vpack.c.b16 %v4531, %v4527
        %v7364 = vpack.c.b16 %v4532, %v4528
        %v7365 = vpack.c.b16 %v4533, %v4529
        %v7366 = vpack.c.b16 %v4538, %v4534
        %v7367 = vpack.c.b16 %v4539, %v4535
        %v7368 = vpack.c.b16 %v4540, %v4536
        %v7369 = vpack.c.b16 %v4541, %v4537
        %v7370 = vpack.c.b16 %v4546, %v4542
        %v7371 = vpack.c.b16 %v4547, %v4543
        %v7372 = vpack.c.b16 %v4548, %v4544
        %v7373 = vpack.c.b16 %v4549, %v4545
        %v7374 = vpack.c.b16 %v4554, %v4550
        %v7375 = vpack.c.b16 %v4555, %v4551
        %v7376 = vpack.c.b16 %v4556, %v4552
        %v7377 = vpack.c.b16 %v4557, %v4553
        %v7378 = vpack.c.b16 %v4562, %v4558
        %v7379 = vpack.c.b16 %v4563, %v4559
        %v7380 = vpack.c.b16 %v4564, %v4560
        %v7381 = vpack.c.b16 %v4565, %v4561
        %v7382 = vpack.c.b16 %v4570, %v4566
        %v7383 = vpack.c.b16 %v4571, %v4567
        %v7384 = vpack.c.b16 %v4572, %v4568
        %v7385 = vpack.c.b16 %v4573, %v4569
        %v7386 = vpack.c.b16 %v4578, %v4574
        %v7387 = vpack.c.b16 %v4579, %v4575
        %v7388 = vpack.c.b16 %v4580, %v4576
        %v7389 = vpack.c.b16 %v4581, %v4577
        %v7390 = vpack.c.b16 %v4586, %v4582
        %v7391 = vpack.c.b16 %v4587, %v4583
        %v7392 = vpack.c.b16 %v4588, %v4584
        %v7393 = vpack.c.b16 %v4589, %v4585
        %v7394 = vpack.c.b16 %v4594, %v4590
        %v7395 = vpack.c.b16 %v4595, %v4591
        %v7396 = vpack.c.b16 %v4596, %v4592
        %v7397 = vpack.c.b16 %v4597, %v4593
        %v7398 = vpack.c.b16 %v4602, %v4598
        %v7399 = vpack.c.b16 %v4603, %v4599
        %v7400 = vpack.c.b16 %v4604, %v4600
        %v7401 = vpack.c.b16 %v4605, %v4601
        %v7402 = vpack.c.b16 %v4610, %v4606
        %v7403 = vpack.c.b16 %v4611, %v4607
        %v7404 = vpack.c.b16 %v4612, %v4608
        %v7405 = vpack.c.b16 %v4613, %v4609
        %v7406 = vpack.c.b16 %v4618, %v4614
        %v7407 = vpack.c.b16 %v4619, %v4615
        %v7408 = vpack.c.b16 %v4620, %v4616
        %v7409 = vpack.c.b16 %v4621, %v4617
        %v7410 = vpack.c.b16 %v4626, %v4622
        %v7411 = vpack.c.b16 %v4627, %v4623
        %v7412 = vpack.c.b16 %v4628, %v4624
        %v7413 = vpack.c.b16 %v4629, %v4625
        %v7414 = vpack.c.b16 %v4634, %v4630
        %v7415 = vpack.c.b16 %v4635, %v4631
        %v7416 = vpack.c.b16 %v4636, %v4632
        %v7417 = vpack.c.b16 %v4637, %v4633
        %v7418 = vpack.c.b16 %v4642, %v4638
        %v7419 = vpack.c.b16 %v4643, %v4639
        %v7420 = vpack.c.b16 %v4644, %v4640
        %v7421 = vpack.c.b16 %v4645, %v4641
        %v7422 = vpack.c.b16 %v4650, %v4646
        %v7423 = vpack.c.b16 %v4651, %v4647
        %v7424 = vpack.c.b16 %v4652, %v4648
        %v7425 = vpack.c.b16 %v4653, %v4649
        %v7426 = vpack.c.b16 %v4658, %v4654
        %v7427 = vpack.c.b16 %v4659, %v4655
        %v7428 = vpack.c.b16 %v4660, %v4656
        %v7429 = vpack.c.b16 %v4661, %v4657
        %v7430 = vpack.c.b16 %v4666, %v4662
        %v7431 = vpack.c.b16 %v4667, %v4663
        %v7432 = vpack.c.b16 %v4668, %v4664
        %v7433 = vpack.c.b16 %v4669, %v4665
        %v7434 = vpack.c.b16 %v4674, %v4670
        %v7435 = vpack.c.b16 %v4675, %v4671
        %v7436 = vpack.c.b16 %v4676, %v4672
        %v7437 = vpack.c.b16 %v4677, %v4673
        %v7438 = vpack.c.b16 %v4682, %v4678
        %v7439 = vpack.c.b16 %v4683, %v4679
        %v7440 = vpack.c.b16 %v4684, %v4680
        %v7441 = vpack.c.b16 %v4685, %v4681
        %v7442 = vpack.c.b16 %v4690, %v4686
        %v7443 = vpack.c.b16 %v4691, %v4687
        %v7444 = vpack.c.b16 %v4692, %v4688
        %v7445 = vpack.c.b16 %v4693, %v4689
        %v7446 = vpack.c.b16 %v4698, %v4694
        %v7447 = vpack.c.b16 %v4699, %v4695
        %v7448 = vpack.c.b16 %v4700, %v4696
        %v7449 = vpack.c.b16 %v4701, %v4697
        %v7450 = vpack.c.b16 %v4706, %v4702
        %v7451 = vpack.c.b16 %v4707, %v4703
        %v7452 = vpack.c.b16 %v4708, %v4704
        %v7453 = vpack.c.b16 %v4709, %v4705
        %v7454 = vpack.c.b16 %v4714, %v4710
        %v7455 = vpack.c.b16 %v4715, %v4711
        %v7456 = vpack.c.b16 %v4716, %v4712
        %v7457 = vpack.c.b16 %v4717, %v4713
        %v7458 = vpack.c.b16 %v4722, %v4718
        %v7459 = vpack.c.b16 %v4723, %v4719
        %v7460 = vpack.c.b16 %v4724, %v4720
        %v7461 = vpack.c.b16 %v4725, %v4721
        %v7462 = vpack.c.b16 %v4730, %v4726
        %v7463 = vpack.c.b16 %v4731, %v4727
        %v7464 = vpack.c.b16 %v4732, %v4728
        %v7465 = vpack.c.b16 %v4733, %v4729
        %v7466 = vpack.c.b16 %v4738, %v4734
        %v7467 = vpack.c.b16 %v4739, %v4735
        %v7468 = vpack.c.b16 %v4740, %v4736
        %v7469 = vpack.c.b16 %v4741, %v4737
        %v7470 = vpack.c.b16 %v4746, %v4742
        %v7471 = vpack.c.b16 %v4747, %v4743
        %v7472 = vpack.c.b16 %v4748, %v4744
        %v7473 = vpack.c.b16 %v4749, %v4745
        %v7474 = vpack.c.b16 %v4754, %v4750
        %v7475 = vpack.c.b16 %v4755, %v4751
        %v7476 = vpack.c.b16 %v4756, %v4752
        %v7477 = vpack.c.b16 %v4757, %v4753
        %v7478 = vpack.c.b16 %v4762, %v4758
        %v7479 = vpack.c.b16 %v4763, %v4759
        %v7480 = vpack.c.b16 %v4764, %v4760
        %v7481 = vpack.c.b16 %v4765, %v4761
        %v7482 = vpack.c.b16 %v4770, %v4766
        %v7483 = vpack.c.b16 %v4771, %v4767
        %v7484 = vpack.c.b16 %v4772, %v4768
        %v7485 = vpack.c.b16 %v4773, %v4769
        %v7486 = vpack.c.b16 %v4778, %v4774
        %v7487 = vpack.c.b16 %v4779, %v4775
        %v7488 = vpack.c.b16 %v4780, %v4776
        %v7489 = vpack.c.b16 %v4781, %v4777
        %v7490 = vpack.c.b16 %v4786, %v4782
        %v7491 = vpack.c.b16 %v4787, %v4783
        %v7492 = vpack.c.b16 %v4788, %v4784
        %v7493 = vpack.c.b16 %v4789, %v4785
        %v7494 = vpack.c.b16 %v4794, %v4790
        %v7495 = vpack.c.b16 %v4795, %v4791
        %v7496 = vpack.c.b16 %v4796, %v4792
        %v7497 = vpack.c.b16 %v4797, %v4793
        %v7498 = vpack.c.b16 %v4802, %v4798
        %v7499 = vpack.c.b16 %v4803, %v4799
        %v7500 = vpack.c.b16 %v4804, %v4800
        %v7501 = vpack.c.b16 %v4805, %v4801
        %v7502 = vpack.c.b16 %v4810, %v4806
        %v7503 = vpack.c.b16 %v4811, %v4807
        %v7504 = vpack.c.b16 %v4812, %v4808
        %v7505 = vpack.c.b16 %v4813, %v4809
        %v7506 = vpack.c.b16 %v4818, %v4814
        %v7507 = vpack.c.b16 %v4819, %v4815
        %v7508 = vpack.c.b16 %v4820, %v4816
        %v7509 = vpack.c.b16 %v4821, %v4817
        %v7510 = vpack.c.b16 %v4826, %v4822
        %v7511 = vpack.c.b16 %v4827, %v4823
        %v7512 = vpack.c.b16 %v4828, %v4824
        %v7513 = vpack.c.b16 %v4829, %v4825
        %v7514 = vpack.c.b16 %v4834, %v4830
        %v7515 = vpack.c.b16 %v4835, %v4831
        %v7516 = vpack.c.b16 %v4836, %v4832
        %v7517 = vpack.c.b16 %v4837, %v4833
        %v7518 = vpack.c.b16 %v4842, %v4838
        %v7519 = vpack.c.b16 %v4843, %v4839
        %v7520 = vpack.c.b16 %v4844, %v4840
        %v7521 = vpack.c.b16 %v4845, %v4841
        %v7522 = vpack.c.b16 %v4850, %v4846
        %v7523 = vpack.c.b16 %v4851, %v4847
        %v7524 = vpack.c.b16 %v4852, %v4848
        %v7525 = vpack.c.b16 %v4853, %v4849
        %v7526 = vpack.c.b16 %v4858, %v4854
        %v7527 = vpack.c.b16 %v4859, %v4855
        %v7528 = vpack.c.b16 %v4860, %v4856
        %v7529 = vpack.c.b16 %v4861, %v4857
        %v7530 = vpack.c.b16 %v4866, %v4862
        %v7531 = vpack.c.b16 %v4867, %v4863
        %v7532 = vpack.c.b16 %v4868, %v4864
        %v7533 = vpack.c.b16 %v4869, %v4865
        %v7534 = vpack.c.b16 %v4874, %v4870
        %v7535 = vpack.c.b16 %v4875, %v4871
        %v7536 = vpack.c.b16 %v4876, %v4872
        %v7537 = vpack.c.b16 %v4877, %v4873
        %v7538 = vpack.c.b16 %v4882, %v4878
        %v7539 = vpack.c.b16 %v4883, %v4879
        %v7540 = vpack.c.b16 %v4884, %v4880
        %v7541 = vpack.c.b16 %v4885, %v4881
        %v7542 = vpack.c.b16 %v4890, %v4886
        %v7543 = vpack.c.b16 %v4891, %v4887
        %v7544 = vpack.c.b16 %v4892, %v4888
        %v7545 = vpack.c.b16 %v4893, %v4889
        %v7546 = vpack.c.b16 %v4898, %v4894
        %v7547 = vpack.c.b16 %v4899, %v4895
        %v7548 = vpack.c.b16 %v4900, %v4896
        %v7549 = vpack.c.b16 %v4901, %v4897
        %v7550 = vpack.c.b16 %v4906, %v4902
        %v7551 = vpack.c.b16 %v4907, %v4903
        %v7552 = vpack.c.b16 %v4908, %v4904
        %v7553 = vpack.c.b16 %v4909, %v4905
        %v7554 = vpack.c.b16 %v4914, %v4910
        %v7555 = vpack.c.b16 %v4915, %v4911
        %v7556 = vpack.c.b16 %v4916, %v4912
        %v7557 = vpack.c.b16 %v4917, %v4913
        %v7558 = vpack.c.b16 %v4922, %v4918
        %v7559 = vpack.c.b16 %v4923, %v4919
        %v7560 = vpack.c.b16 %v4924, %v4920
        %v7561 = vpack.c.b16 %v4925, %v4921
        %v7562 = vpack.c.b16 %v4930, %v4926
        %v7563 = vpack.c.b16 %v4931, %v4927
        %v7564 = vpack.c.b16 %v4932, %v4928
        %v7565 = vpack.c.b16 %v4933, %v4929
        %v7566 = vpack.c.b16 %v4938, %v4934
        %v7567 = vpack.c.b16 %v4939, %v4935
        %v7568 = vpack.c.b16 %v4940, %v4936
        %v7569 = vpack.c.b16 %v4941, %v4937
        %v7570 = vpack.c.b16 %v4946, %v4942
        %v7571 = vpack.c.b16 %v4947, %v4943
        %v7572 = vpack.c.b16 %v4948, %v4944
        %v7573 = vpack.c.b16 %v4949, %v4945
        %v7574 = vpack.c.b16 %v4954, %v4950
        %v7575 = vpack.c.b16 %v4955, %v4951
        %v7576 = vpack.c.b16 %v4956, %v4952
        %v7577 = vpack.c.b16 %v4957, %v4953
        %v7578 = vpack.c.b16 %v4962, %v4958
        %v7579 = vpack.c.b16 %v4963, %v4959
        %v7580 = vpack.c.b16 %v4964, %v4960
        %v7581 = vpack.c.b16 %v4965, %v4961
        %v7582 = vpack.c.b16 %v4970, %v4966
        %v7583 = vpack.c.b16 %v4971, %v4967
        %v7584 = vpack.c.b16 %v4972, %v4968
        %v7585 = vpack.c.b16 %v4973, %v4969
        %v7586 = vpack.c.b16 %v4978, %v4974
        %v7587 = vpack.c.b16 %v4979, %v4975
        %v7588 = vpack.c.b16 %v4980, %v4976
        %v7589 = vpack.c.b16 %v4981, %v4977
        %v7590 = vpack.c.b16 %v4986, %v4982
        %v7591 = vpack.c.b16 %v4987, %v4983
        %v7592 = vpack.c.b16 %v4988, %v4984
        %v7593 = vpack.c.b16 %v4989, %v4985
        %v7594 = vpack.c.b16 %v4994, %v4990
        %v7595 = vpack.c.b16 %v4995, %v4991
        %v7596 = vpack.c.b16 %v4996, %v4992
        %v7597 = vpack.c.b16 %v4997, %v4993
        %v7598 = vpack.c.b16 %v5002, %v4998
        %v7599 = vpack.c.b16 %v5003, %v4999
        %v7600 = vpack.c.b16 %v5004, %v5000
        %v7601 = vpack.c.b16 %v5005, %v5001
        %v7602 = vpack.c.b16 %v5010, %v5006
        %v7603 = vpack.c.b16 %v5011, %v5007
        %v7604 = vpack.c.b16 %v5012, %v5008
        %v7605 = vpack.c.b16 %v5013, %v5009
        %v7606 = vpack.c.b16 %v5018, %v5014
        %v7607 = vpack.c.b16 %v5019, %v5015
        %v7608 = vpack.c.b16 %v5020, %v5016
        %v7609 = vpack.c.b16 %v5021, %v5017
        %v7610 = vpack.c.b16 %v5026, %v5022
        %v7611 = vpack.c.b16 %v5027, %v5023
        %v7612 = vpack.c.b16 %v5028, %v5024
        %v7613 = vpack.c.b16 %v5029, %v5025
        %v7614 = vpack.c.b16 %v5034, %v5030
        %v7615 = vpack.c.b16 %v5035, %v5031
        %v7616 = vpack.c.b16 %v5036, %v5032
        %v7617 = vpack.c.b16 %v5037, %v5033
        %v7618 = vpack.c.b16 %v5042, %v5038
        %v7619 = vpack.c.b16 %v5043, %v5039
        %v7620 = vpack.c.b16 %v5044, %v5040
        %v7621 = vpack.c.b16 %v5045, %v5041
        %v7622 = vpack.c.b16 %v5050, %v5046
        %v7623 = vpack.c.b16 %v5051, %v5047
        %v7624 = vpack.c.b16 %v5052, %v5048
        %v7625 = vpack.c.b16 %v5053, %v5049
        %v7626 = vpack.c.b16 %v5058, %v5054
        %v7627 = vpack.c.b16 %v5059, %v5055
        %v7628 = vpack.c.b16 %v5060, %v5056
        %v7629 = vpack.c.b16 %v5061, %v5057
        %v7630 = vpack.c.b16 %v5066, %v5062
        %v7631 = vpack.c.b16 %v5067, %v5063
        %v7632 = vpack.c.b16 %v5068, %v5064
        %v7633 = vpack.c.b16 %v5069, %v5065
        %v7634 = vpack.c.b16 %v5074, %v5070
        %v7635 = vpack.c.b16 %v5075, %v5071
        %v7636 = vpack.c.b16 %v5076, %v5072
        %v7637 = vpack.c.b16 %v5077, %v5073
        %v7638 = vpack.c.b16 %v5082, %v5078
        %v7639 = vpack.c.b16 %v5083, %v5079
        %v7640 = vpack.c.b16 %v5084, %v5080
        %v7641 = vpack.c.b16 %v5085, %v5081
        %v7642 = vpack.c.b16 %v5090, %v5086
        %v7643 = vpack.c.b16 %v5091, %v5087
        %v7644 = vpack.c.b16 %v5092, %v5088
        %v7645 = vpack.c.b16 %v5093, %v5089
        %v7646 = vpack.c.b16 %v5098, %v5094
        %v7647 = vpack.c.b16 %v5099, %v5095
        %v7648 = vpack.c.b16 %v5100, %v5096
        %v7649 = vpack.c.b16 %v5101, %v5097
        %v7650 = vpack.c.b16 %v5106, %v5102
        %v7651 = vpack.c.b16 %v5107, %v5103
        %v7652 = vpack.c.b16 %v5108, %v5104
        %v7653 = vpack.c.b16 %v5109, %v5105
        %v7654 = vpack.c.b16 %v5114, %v5110
        %v7655 = vpack.c.b16 %v5115, %v5111
        %v7656 = vpack.c.b16 %v5116, %v5112
        %v7657 = vpack.c.b16 %v5117, %v5113
        %v7658 = vpack.c.b16 %v5122, %v5118
        %v7659 = vpack.c.b16 %v5123, %v5119
        %v7660 = vpack.c.b16 %v5124, %v5120
        %v7661 = vpack.c.b16 %v5125, %v5121
        %v7662 = vpack.c.b16 %v5130, %v5126
        %v7663 = vpack.c.b16 %v5131, %v5127
        %v7664 = vpack.c.b16 %v5132, %v5128
        %v7665 = vpack.c.b16 %v5133, %v5129
        %v7666 = vpack.c.b16 %v5138, %v5134
        %v7667 = vpack.c.b16 %v5139, %v5135
        %v7668 = vpack.c.b16 %v5140, %v5136
        %v7669 = vpack.c.b16 %v5141, %v5137
        %v7670 = vpack.c.b16 %v5146, %v5142
        %v7671 = vpack.c.b16 %v5147, %v5143
        %v7672 = vpack.c.b16 %v5148, %v5144
        %v7673 = vpack.c.b16 %v5149, %v5145
        %v7674 = vpack.c.b16 %v5154, %v5150
        %v7675 = vpack.c.b16 %v5155, %v5151
        %v7676 = vpack.c.b16 %v5156, %v5152
        %v7677 = vpack.c.b16 %v5157, %v5153
        %v7678 = vpack.c.b16 %v5162, %v5158
        %v7679 = vpack.c.b16 %v5163, %v5159
        %v7680 = vpack.c.b16 %v5164, %v5160
        %v7681 = vpack.c.b16 %v5165, %v5161
        %v7682 = vpack.c.b16 %v5170, %v5166
        %v7683 = vpack.c.b16 %v5171, %v5167
        %v7684 = vpack.c.b16 %v5172, %v5168
        %v7685 = vpack.c.b16 %v5173, %v5169
        %v7686 = vpack.c.b16 %v5178, %v5174
        %v7687 = vpack.c.b16 %v5179, %v5175
        %v7688 = vpack.c.b16 %v5180, %v5176
        %v7689 = vpack.c.b16 %v5181, %v5177
        %v7690 = vpack.c.b16 %v5186, %v5182
        %v7691 = vpack.c.b16 %v5187, %v5183
        %v7692 = vpack.c.b16 %v5188, %v5184
        %v7693 = vpack.c.b16 %v5189, %v5185
        %v7694 = vpack.c.b16 %v5194, %v5190
        %v7695 = vpack.c.b16 %v5195, %v5191
        %v7696 = vpack.c.b16 %v5196, %v5192
        %v7697 = vpack.c.b16 %v5197, %v5193
        %v7698 = vpack.c.b16 %v5202, %v5198
        %v7699 = vpack.c.b16 %v5203, %v5199
        %v7700 = vpack.c.b16 %v5204, %v5200
        %v7701 = vpack.c.b16 %v5205, %v5201
        %v7702 = vpack.c.b16 %v5210, %v5206
        %v7703 = vpack.c.b16 %v5211, %v5207
        %v7704 = vpack.c.b16 %v5212, %v5208
        %v7705 = vpack.c.b16 %v5213, %v5209
        %v7706 = vpack.c.b16 %v5218, %v5214
        %v7707 = vpack.c.b16 %v5219, %v5215
        %v7708 = vpack.c.b16 %v5220, %v5216
        %v7709 = vpack.c.b16 %v5221, %v5217
        %v7710 = vpack.c.b16 %v5226, %v5222
        %v7711 = vpack.c.b16 %v5227, %v5223
        %v7712 = vpack.c.b16 %v5228, %v5224
        %v7713 = vpack.c.b16 %v5229, %v5225
        %v7714 = vpack.c.b16 %v5234, %v5230
        %v7715 = vpack.c.b16 %v5235, %v5231
        %v7716 = vpack.c.b16 %v5236, %v5232
        %v7717 = vpack.c.b16 %v5237, %v5233
        %v7718 = vpack.c.b16 %v5242, %v5238
        %v7719 = vpack.c.b16 %v5243, %v5239
        %v7720 = vpack.c.b16 %v5244, %v5240
        %v7721 = vpack.c.b16 %v5245, %v5241
        %v7722 = vpack.c.b16 %v5250, %v5246
        %v7723 = vpack.c.b16 %v5251, %v5247
        %v7724 = vpack.c.b16 %v5252, %v5248
        %v7725 = vpack.c.b16 %v5253, %v5249
        %v7726 = vpack.c.b16 %v5258, %v5254
        %v7727 = vpack.c.b16 %v5259, %v5255
        %v7728 = vpack.c.b16 %v5260, %v5256
        %v7729 = vpack.c.b16 %v5261, %v5257
        %v7730 = vpack.c.b16 %v5266, %v5262
        %v7731 = vpack.c.b16 %v5267, %v5263
        %v7732 = vpack.c.b16 %v5268, %v5264
        %v7733 = vpack.c.b16 %v5269, %v5265
        %v7734 = vpack.c.b16 %v5274, %v5270
        %v7735 = vpack.c.b16 %v5275, %v5271
        %v7736 = vpack.c.b16 %v5276, %v5272
        %v7737 = vpack.c.b16 %v5277, %v5273
        %v7738 = vpack.c.b16 %v5282, %v5278
        %v7739 = vpack.c.b16 %v5283, %v5279
        %v7740 = vpack.c.b16 %v5284, %v5280
        %v7741 = vpack.c.b16 %v5285, %v5281
        %v7742 = vpack.c.b16 %v5290, %v5286
        %v7743 = vpack.c.b16 %v5291, %v5287
        %v7744 = vpack.c.b16 %v5292, %v5288
        %v7745 = vpack.c.b16 %v5293, %v5289
        %v7746 = vpack.c.b16 %v5298, %v5294
        %v7747 = vpack.c.b16 %v5299, %v5295
        %v7748 = vpack.c.b16 %v5300, %v5296
        %v7749 = vpack.c.b16 %v5301, %v5297
        %v7750 = vpack.c.b16 %v5306, %v5302
        %v7751 = vpack.c.b16 %v5307, %v5303
        %v7752 = vpack.c.b16 %v5308, %v5304
        %v7753 = vpack.c.b16 %v5309, %v5305
        %v7754 = vpack.c.b16 %v5314, %v5310
        %v7755 = vpack.c.b16 %v5315, %v5311
        %v7756 = vpack.c.b16 %v5316, %v5312
        %v7757 = vpack.c.b16 %v5317, %v5313
        %v7758 = vpack.c.b16 %v5322, %v5318
        %v7759 = vpack.c.b16 %v5323, %v5319
        %v7760 = vpack.c.b16 %v5324, %v5320
        %v7761 = vpack.c.b16 %v5325, %v5321
        %v7762 = vpack.c.b16 %v5330, %v5326
        %v7763 = vpack.c.b16 %v5331, %v5327
        %v7764 = vpack.c.b16 %v5332, %v5328
        %v7765 = vpack.c.b16 %v5333, %v5329
        %v7766 = vpack.c.b16 %v5338, %v5334
        %v7767 = vpack.c.b16 %v5339, %v5335
        %v7768 = vpack.c.b16 %v5340, %v5336
        %v7769 = vpack.c.b16 %v5341, %v5337
        %v7770 = vpack.c.b16 %v5346, %v5342
        %v7771 = vpack.c.b16 %v5347, %v5343
        %v7772 = vpack.c.b16 %v5348, %v5344
        %v7773 = vpack.c.b16 %v5349, %v5345
        %v7774 = vpack.c.b16 %v5354, %v5350
        %v7775 = vpack.c.b16 %v5355, %v5351
        %v7776 = vpack.c.b16 %v5356, %v5352
        %v7777 = vpack.c.b16 %v5357, %v5353
        %v7778 = vpack.c.b16 %v5362, %v5358
        %v7779 = vpack.c.b16 %v5363, %v5359
        %v7780 = vpack.c.b16 %v5364, %v5360
        %v7781 = vpack.c.b16 %v5365, %v5361
        %v7782 = vpack.c.b16 %v5370, %v5366
        %v7783 = vpack.c.b16 %v5371, %v5367
        %v7784 = vpack.c.b16 %v5372, %v5368
        %v7785 = vpack.c.b16 %v5373, %v5369
        %v7786 = vpack.c.b16 %v5378, %v5374
        %v7787 = vpack.c.b16 %v5379, %v5375
        %v7788 = vpack.c.b16 %v5380, %v5376
        %v7789 = vpack.c.b16 %v5381, %v5377
        %v7790 = vpack.c.b16 %v5386, %v5382
        %v7791 = vpack.c.b16 %v5387, %v5383
        %v7792 = vpack.c.b16 %v5388, %v5384
        %v7793 = vpack.c.b16 %v5389, %v5385
        %v7794 = vpack.c.b16 %v5394, %v5390
        %v7795 = vpack.c.b16 %v5395, %v5391
        %v7796 = vpack.c.b16 %v5396, %v5392
        %v7797 = vpack.c.b16 %v5397, %v5393
        %v7798 = vpack.c.b16 %v5402, %v5398
        %v7799 = vpack.c.b16 %v5403, %v5399
        %v7800 = vpack.c.b16 %v5404, %v5400
        %v7801 = vpack.c.b16 %v5405, %v5401
        %v7802 = vpack.c.b16 %v5410, %v5406
        %v7803 = vpack.c.b16 %v5411, %v5407
        %v7804 = vpack.c.b16 %v5412, %v5408
        %v7805 = vpack.c.b16 %v5413, %v5409
        %v7806 = vpack.c.b16 %v5418, %v5414
        %v7807 = vpack.c.b16 %v5419, %v5415
        %v7808 = vpack.c.b16 %v5420, %v5416
        %v7809 = vpack.c.b16 %v5421, %v5417
        %v7810 = vpack.c.b16 %v5426, %v5422
        %v7811 = vpack.c.b16 %v5427, %v5423
        %v7812 = vpack.c.b16 %v5428, %v5424
        %v7813 = vpack.c.b16 %v5429, %v5425
        %v7814 = vpack.c.b16 %v5434, %v5430
        %v7815 = vpack.c.b16 %v5435, %v5431
        %v7816 = vpack.c.b16 %v5436, %v5432
        %v7817 = vpack.c.b16 %v5437, %v5433
        %v7818 = vpack.c.b16 %v5442, %v5438
        %v7819 = vpack.c.b16 %v5443, %v5439
        %v7820 = vpack.c.b16 %v5444, %v5440
        %v7821 = vpack.c.b16 %v5445, %v5441
        %v7822 = vpack.c.b16 %v5450, %v5446
        %v7823 = vpack.c.b16 %v5451, %v5447
        %v7824 = vpack.c.b16 %v5452, %v5448
        %v7825 = vpack.c.b16 %v5453, %v5449
        %v7826 = vpack.c.b16 %v5458, %v5454
        %v7827 = vpack.c.b16 %v5459, %v5455
        %v7828 = vpack.c.b16 %v5460, %v5456
        %v7829 = vpack.c.b16 %v5461, %v5457
        %v7830 = vpack.c.b16 %v5466, %v5462
        %v7831 = vpack.c.b16 %v5467, %v5463
        %v7832 = vpack.c.b16 %v5468, %v5464
        %v7833 = vpack.c.b16 %v5469, %v5465
        %v7834 = vpack.c.b16 %v5474, %v5470
        %v7835 = vpack.c.b16 %v5475, %v5471
        %v7836 = vpack.c.b16 %v5476, %v5472
        %v7837 = vpack.c.b16 %v5477, %v5473
        %v7838 = vpack.c.b16 %v5482, %v5478
        %v7839 = vpack.c.b16 %v5483, %v5479
        %v7840 = vpack.c.b16 %v5484, %v5480
        %v7841 = vpack.c.b16 %v5485, %v5481
        %v7842 = vpack.c.b16 %v5490, %v5486
        %v7843 = vpack.c.b16 %v5491, %v5487
        %v7844 = vpack.c.b16 %v5492, %v5488
        %v7845 = vpack.c.b16 %v5493, %v5489
        %v7846 = vpack.c.b16 %v5498, %v5494
        %v7847 = vpack.c.b16 %v5499, %v5495
        %v7848 = vpack.c.b16 %v5500, %v5496
        %v7849 = vpack.c.b16 %v5501, %v5497
        %v7850 = vpack.c.b16 %v5506, %v5502
        %v7851 = vpack.c.b16 %v5507, %v5503
        %v7852 = vpack.c.b16 %v5508, %v5504
        %v7853 = vpack.c.b16 %v5509, %v5505
        %v7854 = vpack.c.b16 %v5514, %v5510
        %v7855 = vpack.c.b16 %v5515, %v5511
        %v7856 = vpack.c.b16 %v5516, %v5512
        %v7857 = vpack.c.b16 %v5517, %v5513
        %v7858 = vpack.c.b16 %v5522, %v5518
        %v7859 = vpack.c.b16 %v5523, %v5519
        %v7860 = vpack.c.b16 %v5524, %v5520
        %v7861 = vpack.c.b16 %v5525, %v5521
        %v7862 = vpack.c.b16 %v5530, %v5526
        %v7863 = vpack.c.b16 %v5531, %v5527
        %v7864 = vpack.c.b16 %v5532, %v5528
        %v7865 = vpack.c.b16 %v5533, %v5529
        %v7866 = vpack.c.b16 %v5538, %v5534
        %v7867 = vpack.c.b16 %v5539, %v5535
        %v7868 = vpack.c.b16 %v5540, %v5536
        %v7869 = vpack.c.b16 %v5541, %v5537
        %v7870 = vpack.c.b16 %v5546, %v5542
        %v7871 = vpack.c.b16 %v5547, %v5543
        %v7872 = vpack.c.b16 %v5548, %v5544
        %v7873 = vpack.c.b16 %v5549, %v5545
        %v7874 = vpack.c.b16 %v5554, %v5550
        %v7875 = vpack.c.b16 %v5555, %v5551
        %v7876 = vpack.c.b16 %v5556, %v5552
        %v7877 = vpack.c.b16 %v5557, %v5553
        %v7878 = vpack.c.b16 %v5562, %v5558
        %v7879 = vpack.c.b16 %v5563, %v5559
        %v7880 = vpack.c.b16 %v5564, %v5560
        %v7881 = vpack.c.b16 %v5565, %v5561
        %v7882 = vpack.c.b16 %v5570, %v5566
        %v7883 = vpack.c.b16 %v5571, %v5567
        %v7884 = vpack.c.b16 %v5572, %v5568
        %v7885 = vpack.c.b16 %v5573, %v5569
        %v7886 = vpack.c.b16 %v5578, %v5574
        %v7887 = vpack.c.b16 %v5579, %v5575
        %v7888 = vpack.c.b16 %v5580, %v5576
        %v7889 = vpack.c.b16 %v5581, %v5577
        %v7890 = vpack.c.b16 %v5586, %v5582
        %v7891 = vpack.c.b16 %v5587, %v5583
        %v7892 = vpack.c.b16 %v5588, %v5584
        %v7893 = vpack.c.b16 %v5589, %v5585
        %v7894 = vpack.c.b16 %v5594, %v5590
        %v7895 = vpack.c.b16 %v5595, %v5591
        %v7896 = vpack.c.b16 %v5596, %v5592
        %v7897 = vpack.c.b16 %v5597, %v5593
        %v7898 = vpack.c.b16 %v5602, %v5598
        %v7899 = vpack.c.b16 %v5603, %v5599
        %v7900 = vpack.c.b16 %v5604, %v5600
        %v7901 = vpack.c.b16 %v5605, %v5601
        %v7902 = vpack.c.b16 %v5610, %v5606
        %v7903 = vpack.c.b16 %v5611, %v5607
        %v7904 = vpack.c.b16 %v5612, %v5608
        %v7905 = vpack.c.b16 %v5613, %v5609
        %v7906 = vpack.c.b16 %v5618, %v5614
        %v7907 = vpack.c.b16 %v5619, %v5615
        %v7908 = vpack.c.b16 %v5620, %v5616
        %v7909 = vpack.c.b16 %v5621, %v5617
        %v7910 = vpack.c.b16 %v5626, %v5622
        %v7911 = vpack.c.b16 %v5627, %v5623
        %v7912 = vpack.c.b16 %v5628, %v5624
        %v7913 = vpack.c.b16 %v5629, %v5625
        %v7914 = vpack.c.b16 %v5634, %v5630
        %v7915 = vpack.c.b16 %v5635, %v5631
        %v7916 = vpack.c.b16 %v5636, %v5632
        %v7917 = vpack.c.b16 %v5637, %v5633
        %v7918 = vpack.c.b16 %v5642, %v5638
        %v7919 = vpack.c.b16 %v5643, %v5639
        %v7920 = vpack.c.b16 %v5644, %v5640
        %v7921 = vpack.c.b16 %v5645, %v5641
        %v7922 = vpack.c.b16 %v5650, %v5646
        %v7923 = vpack.c.b16 %v5651, %v5647
        %v7924 = vpack.c.b16 %v5652, %v5648
        %v7925 = vpack.c.b16 %v5653, %v5649
        %v7926 = vpack.c.b16 %v5658, %v5654
        %v7927 = vpack.c.b16 %v5659, %v5655
        %v7928 = vpack.c.b16 %v5660, %v5656
        %v7929 = vpack.c.b16 %v5661, %v5657
        %v7930 = vpack.c.b16 %v5666, %v5662
        %v7931 = vpack.c.b16 %v5667, %v5663
        %v7932 = vpack.c.b16 %v5668, %v5664
        %v7933 = vpack.c.b16 %v5669, %v5665
        %v7934 = vpack.c.b16 %v5674, %v5670
        %v7935 = vpack.c.b16 %v5675, %v5671
        %v7936 = vpack.c.b16 %v5676, %v5672
        %v7937 = vpack.c.b16 %v5677, %v5673
        %v7938 = vpack.c.b16 %v5682, %v5678
        %v7939 = vpack.c.b16 %v5683, %v5679
        %v7940 = vpack.c.b16 %v5684, %v5680
        %v7941 = vpack.c.b16 %v5685, %v5681
        %v7942 = vpack.c.b16 %v5690, %v5686
        %v7943 = vpack.c.b16 %v5691, %v5687
        %v7944 = vpack.c.b16 %v5692, %v5688
        %v7945 = vpack.c.b16 %v5693, %v5689
        %v7946 = vpack.c.b16 %v5698, %v5694
        %v7947 = vpack.c.b16 %v5699, %v5695
        %v7948 = vpack.c.b16 %v5700, %v5696
        %v7949 = vpack.c.b16 %v5701, %v5697
        %v7950 = vpack.c.b16 %v5706, %v5702
        %v7951 = vpack.c.b16 %v5707, %v5703
        %v7952 = vpack.c.b16 %v5708, %v5704
        %v7953 = vpack.c.b16 %v5709, %v5705
        %v7954 = vpack.c.b16 %v5714, %v5710
        %v7955 = vpack.c.b16 %v5715, %v5711
        %v7956 = vpack.c.b16 %v5716, %v5712
        %v7957 = vpack.c.b16 %v5717, %v5713
        %v7958 = vpack.c.b16 %v5722, %v5718
        %v7959 = vpack.c.b16 %v5723, %v5719
        %v7960 = vpack.c.b16 %v5724, %v5720
        %v7961 = vpack.c.b16 %v5725, %v5721
        %v7962 = vpack.c.b16 %v5730, %v5726
        %v7963 = vpack.c.b16 %v5731, %v5727
        %v7964 = vpack.c.b16 %v5732, %v5728
        %v7965 = vpack.c.b16 %v5733, %v5729
        %v7966 = vpack.c.b16 %v5738, %v5734
        %v7967 = vpack.c.b16 %v5739, %v5735
        %v7968 = vpack.c.b16 %v5740, %v5736
        %v7969 = vpack.c.b16 %v5741, %v5737
        %v7970 = vpack.c.b16 %v5746, %v5742
        %v7971 = vpack.c.b16 %v5747, %v5743
        %v7972 = vpack.c.b16 %v5748, %v5744
        %v7973 = vpack.c.b16 %v5749, %v5745
        %v7974 = vpack.c.b16 %v5754, %v5750
        %v7975 = vpack.c.b16 %v5755, %v5751
        %v7976 = vpack.c.b16 %v5756, %v5752
        %v7977 = vpack.c.b16 %v5757, %v5753
        %v7978 = vpack.c.b16 %v5762, %v5758
        %v7979 = vpack.c.b16 %v5763, %v5759
        %v7980 = vpack.c.b16 %v5764, %v5760
        %v7981 = vpack.c.b16 %v5765, %v5761
        %v7982 = vpack.c.b16 %v5770, %v5766
        %v7983 = vpack.c.b16 %v5771, %v5767
        %v7984 = vpack.c.b16 %v5772, %v5768
        %v7985 = vpack.c.b16 %v5773, %v5769
        %v7986 = vpack.c.b16 %v5778, %v5774
        %v7987 = vpack.c.b16 %v5779, %v5775
        %v7988 = vpack.c.b16 %v5780, %v5776
        %v7989 = vpack.c.b16 %v5781, %v5777
        %v7990 = vpack.c.b16 %v5786, %v5782
        %v7991 = vpack.c.b16 %v5787, %v5783
        %v7992 = vpack.c.b16 %v5788, %v5784
        %v7993 = vpack.c.b16 %v5789, %v5785
        %v7994 = vpack.c.b16 %v5794, %v5790
        %v7995 = vpack.c.b16 %v5795, %v5791
        %v7996 = vpack.c.b16 %v5796, %v5792
        %v7997 = vpack.c.b16 %v5797, %v5793
        %v7998 = vpack.c.b16 %v5802, %v5798
        %v7999 = vpack.c.b16 %v5803, %v5799
        %v8000 = vpack.c.b16 %v5804, %v5800
        %v8001 = vpack.c.b16 %v5805, %v5801
        %v8002 = vpack.c.b16 %v5810, %v5806
        %v8003 = vpack.c.b16 %v5811, %v5807
        %v8004 = vpack.c.b16 %v5812, %v5808
        %v8005 = vpack.c.b16 %v5813, %v5809
        %v8006 = vpack.c.b16 %v5818, %v5814
        %v8007 = vpack.c.b16 %v5819, %v5815
        %v8008 = vpack.c.b16 %v5820, %v5816
        %v8009 = vpack.c.b16 %v5821, %v5817
        %v8010 = vpack.c.b16 %v5826, %v5822
        %v8011 = vpack.c.b16 %v5827, %v5823
        %v8012 = vpack.c.b16 %v5828, %v5824
        %v8013 = vpack.c.b16 %v5829, %v5825
        %v8014 = vpack.c.b16 %v5834, %v5830
        %v8015 = vpack.c.b16 %v5835, %v5831
        %v8016 = vpack.c.b16 %v5836, %v5832
        %v8017 = vpack.c.b16 %v5837, %v5833
        %v8018 = vpack.c.b16 %v5842, %v5838
        %v8019 = vpack.c.b16 %v5843, %v5839
        %v8020 = vpack.c.b16 %v5844, %v5840
        %v8021 = vpack.c.b16 %v5845, %v5841
        %v8022 = vpack.c.b16 %v5850, %v5846
        %v8023 = vpack.c.b16 %v5851, %v5847
        %v8024 = vpack.c.b16 %v5852, %v5848
        %v8025 = vpack.c.b16 %v5853, %v5849
        %v8026 = vpack.c.b16 %v5858, %v5854
        %v8027 = vpack.c.b16 %v5859, %v5855
        %v8028 = vpack.c.b16 %v5860, %v5856
        %v8029 = vpack.c.b16 %v5861, %v5857
        %v8030 = vpack.c.b16 %v5866, %v5862
        %v8031 = vpack.c.b16 %v5867, %v5863
        %v8032 = vpack.c.b16 %v5868, %v5864
        %v8033 = vpack.c.b16 %v5869, %v5865
        %v8034 = vpack.c.b16 %v5874, %v5870
        %v8035 = vpack.c.b16 %v5875, %v5871
        %v8036 = vpack.c.b16 %v5876, %v5872
        %v8037 = vpack.c.b16 %v5877, %v5873
        %v8038 = vpack.c.b16 %v5882, %v5878
        %v8039 = vpack.c.b16 %v5883, %v5879
        %v8040 = vpack.c.b16 %v5884, %v5880
        %v8041 = vpack.c.b16 %v5885, %v5881
        %v8042 = vpack.c.b16 %v5890, %v5886
        %v8043 = vpack.c.b16 %v5891, %v5887
        %v8044 = vpack.c.b16 %v5892, %v5888
        %v8045 = vpack.c.b16 %v5893, %v5889
        %v8046 = vpack.c.b16 %v5898, %v5894
        %v8047 = vpack.c.b16 %v5899, %v5895
        %v8048 = vpack.c.b16 %v5900, %v5896
        %v8049 = vpack.c.b16 %v5901, %v5897
        %v8050 = vpack.c.b16 %v5906, %v5902
        %v8051 = vpack.c.b16 %v5907, %v5903
        %v8052 = vpack.c.b16 %v5908, %v5904
        %v8053 = vpack.c.b16 %v5909, %v5905
        %v8054 = vpack.c.b16 %v5914, %v5910
        %v8055 = vpack.c.b16 %v5915, %v5911
        %v8056 = vpack.c.b16 %v5916, %v5912
        %v8057 = vpack.c.b16 %v5917, %v5913
        %v8058 = vpack.c.b16 %v5922, %v5918
        %v8059 = vpack.c.b16 %v5923, %v5919
        %v8060 = vpack.c.b16 %v5924, %v5920
        %v8061 = vpack.c.b16 %v5925, %v5921
        %v8062 = vpack.c.b16 %v5930, %v5926
        %v8063 = vpack.c.b16 %v5931, %v5927
        %v8064 = vpack.c.b16 %v5932, %v5928
        %v8065 = vpack.c.b16 %v5933, %v5929
        %v8066 = vpack.c.b16 %v5938, %v5934
        %v8067 = vpack.c.b16 %v5939, %v5935
        %v8068 = vpack.c.b16 %v5940, %v5936
        %v8069 = vpack.c.b16 %v5941, %v5937
        %v8070 = vpack.c.b16 %v5946, %v5942
        %v8071 = vpack.c.b16 %v5947, %v5943
        %v8072 = vpack.c.b16 %v5948, %v5944
        %v8073 = vpack.c.b16 %v5949, %v5945
        %v8074 = vpack.c.b16 %v5954, %v5950
        %v8075 = vpack.c.b16 %v5955, %v5951
        %v8076 = vpack.c.b16 %v5956, %v5952
        %v8077 = vpack.c.b16 %v5957, %v5953
        %v8078 = vpack.c.b16 %v5962, %v5958
        %v8079 = vpack.c.b16 %v5963, %v5959
        %v8080 = vpack.c.b16 %v5964, %v5960
        %v8081 = vpack.c.b16 %v5965, %v5961
        %v8082 = vpack.c.b16 %v5970, %v5966
        %v8083 = vpack.c.b16 %v5971, %v5967
        %v8084 = vpack.c.b16 %v5972, %v5968
        %v8085 = vpack.c.b16 %v5973, %v5969
        %v8086 = vpack.c.b16 %v5978, %v5974
        %v8087 = vpack.c.b16 %v5979, %v5975
        %v8088 = vpack.c.b16 %v5980, %v5976
        %v8089 = vpack.c.b16 %v5981, %v5977
        %v8090 = vpack.c.b16 %v5986, %v5982
        %v8091 = vpack.c.b16 %v5987, %v5983
        %v8092 = vpack.c.b16 %v5988, %v5984
        %v8093 = vpack.c.b16 %v5989, %v5985
        %v8094 = vpack.c.b16 %v5994, %v5990
        %v8095 = vpack.c.b16 %v5995, %v5991
        %v8096 = vpack.c.b16 %v5996, %v5992
        %v8097 = vpack.c.b16 %v5997, %v5993
        %v8098 = vpack.c.b16 %v6002, %v5998
        %v8099 = vpack.c.b16 %v6003, %v5999
        %v8100 = vpack.c.b16 %v6004, %v6000
        %v8101 = vpack.c.b16 %v6005, %v6001
        %v8102 = vpack.c.b16 %v6010, %v6006
        %v8103 = vpack.c.b16 %v6011, %v6007
        %v8104 = vpack.c.b16 %v6012, %v6008
        %v8105 = vpack.c.b16 %v6013, %v6009
        %v8106 = vpack.c.b16 %v6018, %v6014
        %v8107 = vpack.c.b16 %v6019, %v6015
        %v8108 = vpack.c.b16 %v6020, %v6016
        %v8109 = vpack.c.b16 %v6021, %v6017
        %v8110 = vpack.c.b16 %v6026, %v6022
        %v8111 = vpack.c.b16 %v6027, %v6023
        %v8112 = vpack.c.b16 %v6028, %v6024
        %v8113 = vpack.c.b16 %v6029, %v6025
        %v8114 = vpack.c.b16 %v6034, %v6030
        %v8115 = vpack.c.b16 %v6035, %v6031
        %v8116 = vpack.c.b16 %v6036, %v6032
        %v8117 = vpack.c.b16 %v6037, %v6033
        %v8118 = vpack.c.b16 %v6042, %v6038
        %v8119 = vpack.c.b16 %v6043, %v6039
        %v8120 = vpack.c.b16 %v6044, %v6040
        %v8121 = vpack.c.b16 %v6045, %v6041
        %v8122 = vpack.c.b16 %v6050, %v6046
        %v8123 = vpack.c.b16 %v6051, %v6047
        %v8124 = vpack.c.b16 %v6052, %v6048
        %v8125 = vpack.c.b16 %v6053, %v6049
        %v8126 = vpack.c.b16 %v6058, %v6054
        %v8127 = vpack.c.b16 %v6059, %v6055
        %v8128 = vpack.c.b16 %v6060, %v6056
        %v8129 = vpack.c.b16 %v6061, %v6057
        %v8130 = vpack.c.b16 %v6066, %v6062
        %v8131 = vpack.c.b16 %v6067, %v6063
        %v8132 = vpack.c.b16 %v6068, %v6064
        %v8133 = vpack.c.b16 %v6069, %v6065
        %v8134 = vpack.c.b16 %v6074, %v6070
        %v8135 = vpack.c.b16 %v6075, %v6071
        %v8136 = vpack.c.b16 %v6076, %v6072
        %v8137 = vpack.c.b16 %v6077, %v6073
        %v8138 = vpack.c.b16 %v6082, %v6078
        %v8139 = vpack.c.b16 %v6083, %v6079
        %v8140 = vpack.c.b16 %v6084, %v6080
        %v8141 = vpack.c.b16 %v6085, %v6081
        %v8142 = vpack.c.b16 %v6090, %v6086
        %v8143 = vpack.c.b16 %v6091, %v6087
        %v8144 = vpack.c.b16 %v6092, %v6088
        %v8145 = vpack.c.b16 %v6093, %v6089
        %v8146 = vpack.c.b16 %v6098, %v6094
        %v8147 = vpack.c.b16 %v6099, %v6095
        %v8148 = vpack.c.b16 %v6100, %v6096
        %v8149 = vpack.c.b16 %v6101, %v6097
        %v8150 = vpack.c.b16 %v6106, %v6102
        %v8151 = vpack.c.b16 %v6107, %v6103
        %v8152 = vpack.c.b16 %v6108, %v6104
        %v8153 = vpack.c.b16 %v6109, %v6105
        %v8154 = vpack.c.b16 %v6114, %v6110
        %v8155 = vpack.c.b16 %v6115, %v6111
        %v8156 = vpack.c.b16 %v6116, %v6112
        %v8157 = vpack.c.b16 %v6117, %v6113
        %v8158 = vpack.c.b16 %v6122, %v6118
        %v8159 = vpack.c.b16 %v6123, %v6119
        %v8160 = vpack.c.b16 %v6124, %v6120
        %v8161 = vpack.c.b16 %v6125, %v6121
        %v8162 = vpack.c.b16 %v6130, %v6126
        %v8163 = vpack.c.b16 %v6131, %v6127
        %v8164 = vpack.c.b16 %v6132, %v6128
        %v8165 = vpack.c.b16 %v6133, %v6129
        %v8166 = vpack.c.b16 %v6138, %v6134
        %v8167 = vpack.c.b16 %v6139, %v6135
        %v8168 = vpack.c.b16 %v6140, %v6136
        %v8169 = vpack.c.b16 %v6141, %v6137
        %v8170 = vpack.c.b16 %v6146, %v6142
        %v8171 = vpack.c.b16 %v6147, %v6143
        %v8172 = vpack.c.b16 %v6148, %v6144
        %v8173 = vpack.c.b16 %v6149, %v6145
        %v8174 = vpack.c.b16 %v6154, %v6150
        %v8175 = vpack.c.b16 %v6155, %v6151
        %v8176 = vpack.c.b16 %v6156, %v6152
        %v8177 = vpack.c.b16 %v6157, %v6153
        %v8178 = vpack.c.b16 %v6162, %v6158
        %v8179 = vpack.c.b16 %v6163, %v6159
        %v8180 = vpack.c.b16 %v6164, %v6160
        %v8181 = vpack.c.b16 %v6165, %v6161
        %v8182 = vpack.c.b16 %v6170, %v6166
        %v8183 = vpack.c.b16 %v6171, %v6167
        %v8184 = vpack.c.b16 %v6172, %v6168
        %v8185 = vpack.c.b16 %v6173, %v6169
        %v8186 = vpack.c.b16 %v6178, %v6174
        %v8187 = vpack.c.b16 %v6179, %v6175
        %v8188 = vpack.c.b16 %v6180, %v6176
        %v8189 = vpack.c.b16 %v6181, %v6177
        %v8190 = vpack.c.b16 %v6186, %v6182
        %v8191 = vpack.c.b16 %v6187, %v6183
        %v8192 = vpack.c.b16 %v6188, %v6184
        %v8193 = vpack.c.b16 %v6189, %v6185
        %v8194 = vpack.c.b16 %v6194, %v6190
        %v8195 = vpack.c.b16 %v6195, %v6191
        %v8196 = vpack.c.b16 %v6196, %v6192
        %v8197 = vpack.c.b16 %v6197, %v6193
        %v8198 = vpack.c.b16 %v6202, %v6198
        %v8199 = vpack.c.b16 %v6203, %v6199
        %v8200 = vpack.c.b16 %v6204, %v6200
        %v8201 = vpack.c.b16 %v6205, %v6201
        %v8202 = vpack.c.b16 %v6210, %v6206
        %v8203 = vpack.c.b16 %v6211, %v6207
        %v8204 = vpack.c.b16 %v6212, %v6208
        %v8205 = vpack.c.b16 %v6213, %v6209
        %v8206 = vpack.c.b16 %v6218, %v6214
        %v8207 = vpack.c.b16 %v6219, %v6215
        %v8208 = vpack.c.b16 %v6220, %v6216
        %v8209 = vpack.c.b16 %v6221, %v6217
        %v8210 = vpack.c.b16 %v6226, %v6222
        %v8211 = vpack.c.b16 %v6227, %v6223
        %v8212 = vpack.c.b16 %v6228, %v6224
        %v8213 = vpack.c.b16 %v6229, %v6225
        %v8214 = vpack.c.b16 %v6234, %v6230
        %v8215 = vpack.c.b16 %v6235, %v6231
        %v8216 = vpack.c.b16 %v6236, %v6232
        %v8217 = vpack.c.b16 %v6237, %v6233
        %v8218 = vpack.c.b16 %v6242, %v6238
        %v8219 = vpack.c.b16 %v6243, %v6239
        %v8220 = vpack.c.b16 %v6244, %v6240
        %v8221 = vpack.c.b16 %v6245, %v6241
        %v8222 = vpack.c.b16 %v6250, %v6246
        %v8223 = vpack.c.b16 %v6251, %v6247
        %v8224 = vpack.c.b16 %v6252, %v6248
        %v8225 = vpack.c.b16 %v6253, %v6249
        %v8226 = vpack.c.b16 %v6258, %v6254
        %v8227 = vpack.c.b16 %v6259, %v6255
        %v8228 = vpack.c.b16 %v6260, %v6256
        %v8229 = vpack.c.b16 %v6261, %v6257
        %v8230 = vpack.c.b16 %v6266, %v6262
        %v8231 = vpack.c.b16 %v6267, %v6263
        %v8232 = vpack.c.b16 %v6268, %v6264
        %v8233 = vpack.c.b16 %v6269, %v6265
        %v8234 = vpack.c.b16 %v6274, %v6270
        %v8235 = vpack.c.b16 %v6275, %v6271
        %v8236 = vpack.c.b16 %v6276, %v6272
        %v8237 = vpack.c.b16 %v6277, %v6273
        %v8238 = vpack.c.b16 %v6282, %v6278
        %v8239 = vpack.c.b16 %v6283, %v6279
        %v8240 = vpack.c.b16 %v6284, %v6280
        %v8241 = vpack.c.b16 %v6285, %v6281
        %v8242 = vpack.c.b16 %v6290, %v6286
        %v8243 = vpack.c.b16 %v6291, %v6287
        %v8244 = vpack.c.b16 %v6292, %v6288
        %v8245 = vpack.c.b16 %v6293, %v6289
        %v8246 = vpack.c.b16 %v6298, %v6294
        %v8247 = vpack.c.b16 %v6299, %v6295
        %v8248 = vpack.c.b16 %v6300, %v6296
        %v8249 = vpack.c.b16 %v6301, %v6297
        %v8250 = vpack.c.b16 %v6306, %v6302
        %v8251 = vpack.c.b16 %v6307, %v6303
        %v8252 = vpack.c.b16 %v6308, %v6304
        %v8253 = vpack.c.b16 %v6309, %v6305
        %v8254 = vpack.c.b16 %v6314, %v6310
        %v8255 = vpack.c.b16 %v6315, %v6311
        %v8256 = vpack.c.b16 %v6316, %v6312
        %v8257 = vpack.c.b16 %v6317, %v6313
        %v8258 = vpack.c.b16 %v6322, %v6318
        %v8259 = vpack.c.b16 %v6323, %v6319
        %v8260 = vpack.c.b16 %v6324, %v6320
        %v8261 = vpack.c.b16 %v6325, %v6321
        %v8262 = vpack.c.b16 %v6330, %v6326
        %v8263 = vpack.c.b16 %v6331, %v6327
        %v8264 = vpack.c.b16 %v6332, %v6328
        %v8265 = vpack.c.b16 %v6333, %v6329
        %v8266 = vpack.c.b16 %v6338, %v6334
        %v8267 = vpack.c.b16 %v6339, %v6335
        %v8268 = vpack.c.b16 %v6340, %v6336
        %v8269 = vpack.c.b16 %v6341, %v6337
        %v8270 = vpack.c.b16 %v6346, %v6342
        %v8271 = vpack.c.b16 %v6347, %v6343
        %v8272 = vpack.c.b16 %v6348, %v6344
        %v8273 = vpack.c.b16 %v6349, %v6345
        %v8274 = vpack.c.b16 %v6354, %v6350
        %v8275 = vpack.c.b16 %v6355, %v6351
        %v8276 = vpack.c.b16 %v6356, %v6352
        %v8277 = vpack.c.b16 %v6357, %v6353
        %v8278 = vpack.c.b16 %v6362, %v6358
        %v8279 = vpack.c.b16 %v6363, %v6359
        %v8280 = vpack.c.b16 %v6364, %v6360
        %v8281 = vpack.c.b16 %v6365, %v6361
        %v8282 = vpack.c.b16 %v6370, %v6366
        %v8283 = vpack.c.b16 %v6371, %v6367
        %v8284 = vpack.c.b16 %v6372, %v6368
        %v8285 = vpack.c.b16 %v6373, %v6369
        %v8286 = vpack.c.b16 %v6378, %v6374
        %v8287 = vpack.c.b16 %v6379, %v6375
        %v8288 = vpack.c.b16 %v6380, %v6376
        %v8289 = vpack.c.b16 %v6381, %v6377
        %v8290 = vpack.c.b16 %v6386, %v6382
        %v8291 = vpack.c.b16 %v6387, %v6383
        %v8292 = vpack.c.b16 %v6388, %v6384
        %v8293 = vpack.c.b16 %v6389, %v6385
        %v8294 = vpack.c.b16 %v6394, %v6390
        %v8295 = vpack.c.b16 %v6395, %v6391
        %v8296 = vpack.c.b16 %v6396, %v6392
        %v8297 = vpack.c.b16 %v6397, %v6393
        %v8298 = vpack.c.b16 %v6402, %v6398
        %v8299 = vpack.c.b16 %v6403, %v6399
        %v8300 = vpack.c.b16 %v6404, %v6400
        %v8301 = vpack.c.b16 %v6405, %v6401
        %v8302 = vpack.c.b16 %v6410, %v6406
        %v8303 = vpack.c.b16 %v6411, %v6407
        %v8304 = vpack.c.b16 %v6412, %v6408
        %v8305 = vpack.c.b16 %v6413, %v6409
        %v8306 = vpack.c.b16 %v6418, %v6414
        %v8307 = vpack.c.b16 %v6419, %v6415
        %v8308 = vpack.c.b16 %v6420, %v6416
        %v8309 = vpack.c.b16 %v6421, %v6417
        %v8310 = vpack.c.b16 %v6426, %v6422
        %v8311 = vpack.c.b16 %v6427, %v6423
        %v8312 = vpack.c.b16 %v6428, %v6424
        %v8313 = vpack.c.b16 %v6429, %v6425
        %v8314 = vpack.c.b16 %v6434, %v6430
        %v8315 = vpack.c.b16 %v6435, %v6431
        %v8316 = vpack.c.b16 %v6436, %v6432
        %v8317 = vpack.c.b16 %v6437, %v6433
        %v8318 = vpack.c.b16 %v6442, %v6438
        %v8319 = vpack.c.b16 %v6443, %v6439
        %v8320 = vpack.c.b16 %v6444, %v6440
        %v8321 = vpack.c.b16 %v6445, %v6441
        %v8322 = vpack.c.b16 %v6450, %v6446
        %v8323 = vpack.c.b16 %v6451, %v6447
        %v8324 = vpack.c.b16 %v6452, %v6448
        %v8325 = vpack.c.b16 %v6453, %v6449
        %v8326 = vpack.c.b16 %v6458, %v6454
        %v8327 = vpack.c.b16 %v6459, %v6455
        %v8328 = vpack.c.b16 %v6460, %v6456
        %v8329 = vpack.c.b16 %v6461, %v6457
        %v8330 = vpack.c.b16 %v6466, %v6462
        %v8331 = vpack.c.b16 %v6467, %v6463
        %v8332 = vpack.c.b16 %v6468, %v6464
        %v8333 = vpack.c.b16 %v6469, %v6465
        %v8334 = vpack.c.b16 %v6474, %v6470
        %v8335 = vpack.c.b16 %v6475, %v6471
        %v8336 = vpack.c.b16 %v6476, %v6472
        %v8337 = vpack.c.b16 %v6477, %v6473
        %v8338 = vpack.c.b16 %v6482, %v6478
        %v8339 = vpack.c.b16 %v6483, %v6479
        %v8340 = vpack.c.b16 %v6484, %v6480
        %v8341 = vpack.c.b16 %v6485, %v6481
        %v8342 = vpack.c.b16 %v6490, %v6486
        %v8343 = vpack.c.b16 %v6491, %v6487
        %v8344 = vpack.c.b16 %v6492, %v6488
        %v8345 = vpack.c.b16 %v6493, %v6489
        %v8346 = vpack.c.b16 %v6498, %v6494
        %v8347 = vpack.c.b16 %v6499, %v6495
        %v8348 = vpack.c.b16 %v6500, %v6496
        %v8349 = vpack.c.b16 %v6501, %v6497
        %v8350 = vpack.c.b16 %v6506, %v6502
        %v8351 = vpack.c.b16 %v6507, %v6503
        %v8352 = vpack.c.b16 %v6508, %v6504
        %v8353 = vpack.c.b16 %v6509, %v6505
        %v8354 = vpack.c.b16 %v6514, %v6510
        %v8355 = vpack.c.b16 %v6515, %v6511
        %v8356 = vpack.c.b16 %v6516, %v6512
        %v8357 = vpack.c.b16 %v6517, %v6513
        %v8358 = vpack.c.b16 %v6522, %v6518
        %v8359 = vpack.c.b16 %v6523, %v6519
        %v8360 = vpack.c.b16 %v6524, %v6520
        %v8361 = vpack.c.b16 %v6525, %v6521
        %v8362 = vpack.c.b16 %v6530, %v6526
        %v8363 = vpack.c.b16 %v6531, %v6527
        %v8364 = vpack.c.b16 %v6532, %v6528
        %v8365 = vpack.c.b16 %v6533, %v6529
        %v8366 = vpack.c.b16 %v6538, %v6534
        %v8367 = vpack.c.b16 %v6539, %v6535
        %v8368 = vpack.c.b16 %v6540, %v6536
        %v8369 = vpack.c.b16 %v6541, %v6537
        %v8370 = vpack.c.b16 %v6546, %v6542
        %v8371 = vpack.c.b16 %v6547, %v6543
        %v8372 = vpack.c.b16 %v6548, %v6544
        %v8373 = vpack.c.b16 %v6549, %v6545
        %v8374 = vpack.c.b16 %v6554, %v6550
        %v8375 = vpack.c.b16 %v6555, %v6551
        %v8376 = vpack.c.b16 %v6556, %v6552
        %v8377 = vpack.c.b16 %v6557, %v6553
        %v8378 = vpack.c.b16 %v6562, %v6558
        %v8379 = vpack.c.b16 %v6563, %v6559
        %v8380 = vpack.c.b16 %v6564, %v6560
        %v8381 = vpack.c.b16 %v6565, %v6561
        %v8382 = vpack.c.b16 %v6570, %v6566
        %v8383 = vpack.c.b16 %v6571, %v6567
        %v8384 = vpack.c.b16 %v6572, %v6568
        %v8385 = vpack.c.b16 %v6573, %v6569
        %v8386 = vpack.c.b16 %v6578, %v6574
        %v8387 = vpack.c.b16 %v6579, %v6575
        %v8388 = vpack.c.b16 %v6580, %v6576
        %v8389 = vpack.c.b16 %v6581, %v6577
        %v8390 = vpack.c.b16 %v6586, %v6582
        %v8391 = vpack.c.b16 %v6587, %v6583
        %v8392 = vpack.c.b16 %v6588, %v6584
        %v8393 = vpack.c.b16 %v6589, %v6585
        %v8394 = vpack.c.b16 %v6594, %v6590
        %v8395 = vpack.c.b16 %v6595, %v6591
        %v8396 = vpack.c.b16 %v6596, %v6592
        %v8397 = vpack.c.b16 %v6597, %v6593
        %v8398 = vpack.c.b16 %v6602, %v6598
        %v8399 = vpack.c.b16 %v6603, %v6599
        %v8400 = vpack.c.b16 %v6604, %v6600
        %v8401 = vpack.c.b16 %v6605, %v6601
        %v8402 = vpack.c.b16 %v6610, %v6606
        %v8403 = vpack.c.b16 %v6611, %v6607
        %v8404 = vpack.c.b16 %v6612, %v6608
        %v8405 = vpack.c.b16 %v6613, %v6609
        %v8406 = vpack.c.b16 %v6618, %v6614
        %v8407 = vpack.c.b16 %v6619, %v6615
        %v8408 = vpack.c.b16 %v6620, %v6616
        %v8409 = vpack.c.b16 %v6621, %v6617
        %v8410 = vpack.c.b16 %v6626, %v6622
        %v8411 = vpack.c.b16 %v6627, %v6623
        %v8412 = vpack.c.b16 %v6628, %v6624
        %v8413 = vpack.c.b16 %v6629, %v6625
        %v8414 = vpack.c.b16 %v6634, %v6630
        %v8415 = vpack.c.b16 %v6635, %v6631
        %v8416 = vpack.c.b16 %v6636, %v6632
        %v8417 = vpack.c.b16 %v6637, %v6633
        %v8418 = vpack.c.b16 %v6642, %v6638
        %v8419 = vpack.c.b16 %v6643, %v6639
        %v8420 = vpack.c.b16 %v6644, %v6640
        %v8421 = vpack.c.b16 %v6645, %v6641
        %v8422 = vpack.c.b16 %v6650, %v6646
        %v8423 = vpack.c.b16 %v6651, %v6647
        %v8424 = vpack.c.b16 %v6652, %v6648
        %v8425 = vpack.c.b16 %v6653, %v6649
        %v8426 = vpack.c.b16 %v6658, %v6654
        %v8427 = vpack.c.b16 %v6659, %v6655
        %v8428 = vpack.c.b16 %v6660, %v6656
        %v8429 = vpack.c.b16 %v6661, %v6657
        %v8430 = vpack.c.b16 %v6666, %v6662
        %v8431 = vpack.c.b16 %v6667, %v6663
        %v8432 = vpack.c.b16 %v6668, %v6664
        %v8433 = vpack.c.b16 %v6669, %v6665
        %v8434 = vpack.c.b16 %v6674, %v6670
        %v8435 = vpack.c.b16 %v6675, %v6671
        %v8436 = vpack.c.b16 %v6676, %v6672
        %v8437 = vpack.c.b16 %v6677, %v6673
        %v8438 = vpack.c.b16 %v6682, %v6678
        %v8439 = vpack.c.b16 %v6683, %v6679
        %v8440 = vpack.c.b16 %v6684, %v6680
        %v8441 = vpack.c.b16 %v6685, %v6681
        %v8442 = vpack.c.b16 %v6690, %v6686
        %v8443 = vpack.c.b16 %v6691, %v6687
        %v8444 = vpack.c.b16 %v6692, %v6688
        %v8445 = vpack.c.b16 %v6693, %v6689
        %v8446 = vpack.c.b16 %v6698, %v6694
        %v8447 = vpack.c.b16 %v6699, %v6695
        %v8448 = vpack.c.b16 %v6700, %v6696
        %v8449 = vpack.c.b16 %v6701, %v6697
        %v8450 = vpack.c.b16 %v6706, %v6702
        %v8451 = vpack.c.b16 %v6707, %v6703
        %v8452 = vpack.c.b16 %v6708, %v6704
        %v8453 = vpack.c.b16 %v6709, %v6705
        %v8454 = vpack.c.b16 %v6714, %v6710
        %v8455 = vpack.c.b16 %v6715, %v6711
        %v8456 = vpack.c.b16 %v6716, %v6712
        %v8457 = vpack.c.b16 %v6717, %v6713
        %v8458 = vpack.c.b16 %v6722, %v6718
        %v8459 = vpack.c.b16 %v6723, %v6719
        %v8460 = vpack.c.b16 %v6724, %v6720
        %v8461 = vpack.c.b16 %v6725, %v6721
        %v8462 = vpack.c.b16 %v6730, %v6726
        %v8463 = vpack.c.b16 %v6731, %v6727
        %v8464 = vpack.c.b16 %v6732, %v6728
        %v8465 = vpack.c.b16 %v6733, %v6729
        %v8466 = vpack.c.b16 %v6738, %v6734
        %v8467 = vpack.c.b16 %v6739, %v6735
        %v8468 = vpack.c.b16 %v6740, %v6736
        %v8469 = vpack.c.b16 %v6741, %v6737
        %v8470 = vpack.c.b16 %v6746, %v6742
        %v8471 = vpack.c.b16 %v6747, %v6743
        %v8472 = vpack.c.b16 %v6748, %v6744
        %v8473 = vpack.c.b16 %v6749, %v6745
        %v8474 = vpack.c.b16 %v6754, %v6750
        %v8475 = vpack.c.b16 %v6755, %v6751
        %v8476 = vpack.c.b16 %v6756, %v6752
        %v8477 = vpack.c.b16 %v6757, %v6753
        %v8478 = vpack.c.b16 %v6762, %v6758
        %v8479 = vpack.c.b16 %v6763, %v6759
        %v8480 = vpack.c.b16 %v6764, %v6760
        %v8481 = vpack.c.b16 %v6765, %v6761
        %v8482 = vpack.c.b16 %v6770, %v6766
        %v8483 = vpack.c.b16 %v6771, %v6767
        %v8484 = vpack.c.b16 %v6772, %v6768
        %v8485 = vpack.c.b16 %v6773, %v6769
        %v8486 = vpack.c.b16 %v6778, %v6774
        %v8487 = vpack.c.b16 %v6779, %v6775
        %v8488 = vpack.c.b16 %v6780, %v6776
        %v8489 = vpack.c.b16 %v6781, %v6777
        %v8490 = vpack.c.b16 %v6786, %v6782
        %v8491 = vpack.c.b16 %v6787, %v6783
        %v8492 = vpack.c.b16 %v6788, %v6784
        %v8493 = vpack.c.b16 %v6789, %v6785
        %v8494 = vpack.c.b16 %v6794, %v6790
        %v8495 = vpack.c.b16 %v6795, %v6791
        %v8496 = vpack.c.b16 %v6796, %v6792
        %v8497 = vpack.c.b16 %v6797, %v6793
        %v8498 = vpack.c.b16 %v6802, %v6798
        %v8499 = vpack.c.b16 %v6803, %v6799
        %v8500 = vpack.c.b16 %v6804, %v6800
        %v8501 = vpack.c.b16 %v6805, %v6801
        %v8502 = vpack.c.b16 %v6810, %v6806
        %v8503 = vpack.c.b16 %v6811, %v6807
        %v8504 = vpack.c.b16 %v6812, %v6808
        %v8505 = vpack.c.b16 %v6813, %v6809
        %v8506 = vpack.c.b16 %v6818, %v6814
        %v8507 = vpack.c.b16 %v6819, %v6815
        %v8508 = vpack.c.b16 %v6820, %v6816
        %v8509 = vpack.c.b16 %v6821, %v6817
        %v8510 = vpack.c.b16 %v6826, %v6822
        %v8511 = vpack.c.b16 %v6827, %v6823
        %v8512 = vpack.c.b16 %v6828, %v6824
        %v8513 = vpack.c.b16 %v6829, %v6825
        %v8514 = vpack.c.b16 %v6834, %v6830
        %v8515 = vpack.c.b16 %v6835, %v6831
        %v8516 = vpack.c.b16 %v6836, %v6832
        %v8517 = vpack.c.b16 %v6837, %v6833
        %v8518 = vpack.c.b16 %v6842, %v6838
        %v8519 = vpack.c.b16 %v6843, %v6839
        %v8520 = vpack.c.b16 %v6844, %v6840
        %v8521 = vpack.c.b16 %v6845, %v6841
        %v8522 = vpack.c.b16 %v6850, %v6846
        %v8523 = vpack.c.b16 %v6851, %v6847
        %v8524 = vpack.c.b16 %v6852, %v6848
        %v8525 = vpack.c.b16 %v6853, %v6849
        %v8526 = vpack.c.b16 %v6858, %v6854
        %v8527 = vpack.c.b16 %v6859, %v6855
        %v8528 = vpack.c.b16 %v6860, %v6856
        %v8529 = vpack.c.b16 %v6861, %v6857
        %v8530 = vpack.c.b16 %v6866, %v6862
        %v8531 = vpack.c.b16 %v6867, %v6863
        %v8532 = vpack.c.b16 %v6868, %v6864
        %v8533 = vpack.c.b16 %v6869, %v6865
        %v8534 = vpack.c.b16 %v6874, %v6870
        %v8535 = vpack.c.b16 %v6875, %v6871
        %v8536 = vpack.c.b16 %v6876, %v6872
        %v8537 = vpack.c.b16 %v6877, %v6873
        %v8538 = vpack.c.b16 %v6882, %v6878
        %v8539 = vpack.c.b16 %v6883, %v6879
        %v8540 = vpack.c.b16 %v6884, %v6880
        %v8541 = vpack.c.b16 %v6885, %v6881
        %v8542 = vpack.c.b16 %v6890, %v6886
        %v8543 = vpack.c.b16 %v6891, %v6887
        %v8544 = vpack.c.b16 %v6892, %v6888
        %v8545 = vpack.c.b16 %v6893, %v6889
        %v8546 = vpack.c.b16 %v6898, %v6894
        %v8547 = vpack.c.b16 %v6899, %v6895
        %v8548 = vpack.c.b16 %v6900, %v6896
        %v8549 = vpack.c.b16 %v6901, %v6897
        %v8550 = vpack.c.b16 %v6906, %v6902
        %v8551 = vpack.c.b16 %v6907, %v6903
        %v8552 = vpack.c.b16 %v6908, %v6904
        %v8553 = vpack.c.b16 %v6909, %v6905
        %v8554 = vpack.c.b16 %v6914, %v6910
        %v8555 = vpack.c.b16 %v6915, %v6911
        %v8556 = vpack.c.b16 %v6916, %v6912
        %v8557 = vpack.c.b16 %v6917, %v6913
        %v8558 = vpack.c.b16 %v6922, %v6918
        %v8559 = vpack.c.b16 %v6923, %v6919
        %v8560 = vpack.c.b16 %v6924, %v6920
        %v8561 = vpack.c.b16 %v6925, %v6921
        %v8562 = vpack.c.b16 %v6930, %v6926
        %v8563 = vpack.c.b16 %v6931, %v6927
        %v8564 = vpack.c.b16 %v6932, %v6928
        %v8565 = vpack.c.b16 %v6933, %v6929
        %v8566 = vpack.c.b16 %v6938, %v6934
        %v8567 = vpack.c.b16 %v6939, %v6935
        %v8568 = vpack.c.b16 %v6940, %v6936
        %v8569 = vpack.c.b16 %v6941, %v6937
        %v8570 = vpack.c.b16 %v6946, %v6942
        %v8571 = vpack.c.b16 %v6947, %v6943
        %v8572 = vpack.c.b16 %v6948, %v6944
        %v8573 = vpack.c.b16 %v6949, %v6945
        %v8574 = vpack.c.b16 %v6954, %v6950
        %v8575 = vpack.c.b16 %v6955, %v6951
        %v8576 = vpack.c.b16 %v6956, %v6952
        %v8577 = vpack.c.b16 %v6957, %v6953
        %v8578 = vpack.c.b16 %v6962, %v6958
        %v8579 = vpack.c.b16 %v6963, %v6959
        %v8580 = vpack.c.b16 %v6964, %v6960
        %v8581 = vpack.c.b16 %v6965, %v6961
        %v8582 = vpack.c.b16 %v6970, %v6966
        %v8583 = vpack.c.b16 %v6971, %v6967
        %v8584 = vpack.c.b16 %v6972, %v6968
        %v8585 = vpack.c.b16 %v6973, %v6969
        %v8586 = vpack.c.b16 %v6978, %v6974
        %v8587 = vpack.c.b16 %v6979, %v6975
        %v8588 = vpack.c.b16 %v6980, %v6976
        %v8589 = vpack.c.b16 %v6981, %v6977
        %v8590 = vpack.c.b16 %v6986, %v6982
        %v8591 = vpack.c.b16 %v6987, %v6983
        %v8592 = vpack.c.b16 %v6988, %v6984
        %v8593 = vpack.c.b16 %v6989, %v6985
        %v8594 = vpack.c.b16 %v6994, %v6990
        %v8595 = vpack.c.b16 %v6995, %v6991
        %v8596 = vpack.c.b16 %v6996, %v6992
        %v8597 = vpack.c.b16 %v6997, %v6993
        %10198 = vmatprep.subr.bf16.mxu0 %v7027
        %10199 = vmatpush1.bf16.msra.mxu0 %v7026
        %10200 = vmatprep.subr.bf16.mxu0 %v7023
        %10201 = vmatpush1.bf16.msra.mxu0 %v7022
        %10202 = vmatprep.subr.bf16.mxu0 %v7019
        %10203 = vmatpush1.bf16.msra.mxu0 %v7018
        %10204 = vmatprep.subr.bf16.mxu0 %v7015
        %10205 = vmatpush1.bf16.msra.mxu0 %v7014
        %10206 = vmatprep.subr.bf16.mxu0 %v7011
        %10207 = vmatpush1.bf16.msra.mxu0 %v7010
        %10208 = vmatprep.subr.bf16.mxu0 %v7007
        %10209 = vmatpush1.bf16.msra.mxu0 %v7006
        %10210 = vmatprep.subr.bf16.mxu0 %v7003
        %10211 = vmatpush1.bf16.msra.mxu0 %v7002
        %10212 = vmatprep.subr.bf16.mxu0 %v6999
        %10213 = vmatpush1.bf16.msra.mxu0 %v6998
        %10214 = vmatprep.subr.bf16.mxu0 %v7059
        %10215 = vmatpush2.bf16.msra.mxu0 %v7058
        %10216 = vmatprep.subr.bf16.mxu0 %v7055
        %10217 = vmatpush2.bf16.msra.mxu0 %v7054
        %10218 = vmatprep.subr.bf16.mxu0 %v7051
        %10219 = vmatpush2.bf16.msra.mxu0 %v7050
        %10220 = vmatprep.subr.bf16.mxu0 %v7047
        %10221 = vmatpush2.bf16.msra.mxu0 %v7046
        %10222 = vmatprep.subr.bf16.mxu0 %v7043
        %10223 = vmatpush2.bf16.msra.mxu0 %v7042
        %10224 = vmatprep.subr.bf16.mxu0 %v7039
        %10225 = vmatpush2.bf16.msra.mxu0 %v7038
        %10226 = vmatprep.subr.bf16.mxu0 %v7035
        %10227 = vmatpush2.bf16.msra.mxu0 %v7034
        %10228 = vmatprep.subr.bf16.mxu0 %v7031
        %10229 = vmatpush2.bf16.msra.mxu0 %v7030
        %10230 = vmatprep.mubr.bf16.mxu0 %v549
        %10231 = vmatmul.mubr.bf16.gmra.mxu0 %v548
        %v10232 = vpop.f32.mrf.mxu0
        %v10233 = vadd.f32 0.0, %v10232
        %v10234 = vpop.f32.mrf.mxu0
        %v10235 = vadd.f32 0.0, %v10234
        %v10236 = vpop.f32.mrf.mxu0
        %v10237 = vpop.f32.mrf.mxu0
        %10238 = vdwg.mxu0
        %10239 = vmatprep.subr.bf16.mxu0 %v7091
        %10240 = vmatpush1.bf16.msra.mxu0 %v7090
        %10241 = vmatprep.subr.bf16.mxu0 %v7087
        %10242 = vmatpush1.bf16.msra.mxu0 %v7086
        %10243 = vmatprep.subr.bf16.mxu0 %v7083
        %10244 = vmatpush1.bf16.msra.mxu0 %v7082
        %10245 = vmatprep.subr.bf16.mxu0 %v7079
        %10246 = vmatpush1.bf16.msra.mxu0 %v7078
        %10247 = vmatprep.subr.bf16.mxu0 %v7075
        %10248 = vmatpush1.bf16.msra.mxu0 %v7074
        %10249 = vmatprep.subr.bf16.mxu0 %v7071
        %10250 = vmatpush1.bf16.msra.mxu0 %v7070
        %10251 = vmatprep.subr.bf16.mxu0 %v7067
        %10252 = vmatpush1.bf16.msra.mxu0 %v7066
        %10253 = vmatprep.subr.bf16.mxu0 %v7063
        %10254 = vmatpush1.bf16.msra.mxu0 %v7062
        %10255 = vmatprep.subr.bf16.mxu0 %v7123
        %10256 = vmatpush2.bf16.msra.mxu0 %v7122
        %10257 = vmatprep.subr.bf16.mxu0 %v7119
        %10258 = vmatpush2.bf16.msra.mxu0 %v7118
        %10259 = vmatprep.subr.bf16.mxu0 %v7115
        %10260 = vmatpush2.bf16.msra.mxu0 %v7114
        %10261 = vmatprep.subr.bf16.mxu0 %v7111
        %10262 = vmatpush2.bf16.msra.mxu0 %v7110
        %10263 = vmatprep.subr.bf16.mxu0 %v7107
        %10264 = vmatpush2.bf16.msra.mxu0 %v7106
        %10265 = vmatprep.subr.bf16.mxu0 %v7103
        %10266 = vmatpush2.bf16.msra.mxu0 %v7102
        %10267 = vmatprep.subr.bf16.mxu0 %v7099
        %10268 = vmatpush2.bf16.msra.mxu0 %v7098
        %10269 = vmatprep.subr.bf16.mxu0 %v7095
        %10270 = vmatpush2.bf16.msra.mxu0 %v7094
        %10271 = vmatprep.mubr.bf16.mxu0 %v551
        %10272 = vmatmul.mubr.bf16.gmra.mxu0 %v550
        %v10273 = vpop.f32.mrf.mxu0
        %v10274 = vadd.f32 %v10233, %v10273
        %v10275 = vpop.f32.mrf.mxu0
        %v10276 = vadd.f32 %v10235, %v10275
        %v10277 = vpop.f32.mrf.mxu0
        %v10278 = vpop.f32.mrf.mxu0
        %10279 = vdwg.mxu0
        %10280 = vmatprep.subr.bf16.mxu0 %v7155
        %10281 = vmatpush1.bf16.msra.mxu0 %v7154
        %10282 = vmatprep.subr.bf16.mxu0 %v7151
        %10283 = vmatpush1.bf16.msra.mxu0 %v7150
        %10284 = vmatprep.subr.bf16.mxu0 %v7147
        %10285 = vmatpush1.bf16.msra.mxu0 %v7146
        %10286 = vmatprep.subr.bf16.mxu0 %v7143
        %10287 = vmatpush1.bf16.msra.mxu0 %v7142
        %10288 = vmatprep.subr.bf16.mxu0 %v7139
        %10289 = vmatpush1.bf16.msra.mxu0 %v7138
        %10290 = vmatprep.subr.bf16.mxu0 %v7135
        %10291 = vmatpush1.bf16.msra.mxu0 %v7134
        %10292 = vmatprep.subr.bf16.mxu0 %v7131
        %10293 = vmatpush1.bf16.msra.mxu0 %v7130
        %10294 = vmatprep.subr.bf16.mxu0 %v7127
        %10295 = vmatpush1.bf16.msra.mxu0 %v7126
        %10296 = vmatprep.subr.bf16.mxu0 %v7187
        %10297 = vmatpush2.bf16.msra.mxu0 %v7186
        %10298 = vmatprep.subr.bf16.mxu0 %v7183
        %10299 = vmatpush2.bf16.msra.mxu0 %v7182
        %10300 = vmatprep.subr.bf16.mxu0 %v7179
        %10301 = vmatpush2.bf16.msra.mxu0 %v7178
        %10302 = vmatprep.subr.bf16.mxu0 %v7175
        %10303 = vmatpush2.bf16.msra.mxu0 %v7174
        %10304 = vmatprep.subr.bf16.mxu0 %v7171
        %10305 = vmatpush2.bf16.msra.mxu0 %v7170
        %10306 = vmatprep.subr.bf16.mxu0 %v7167
        %10307 = vmatpush2.bf16.msra.mxu0 %v7166
        %10308 = vmatprep.subr.bf16.mxu0 %v7163
        %10309 = vmatpush2.bf16.msra.mxu0 %v7162
        %10310 = vmatprep.subr.bf16.mxu0 %v7159
        %10311 = vmatpush2.bf16.msra.mxu0 %v7158
        %10312 = vmatprep.mubr.bf16.mxu0 %v553
        %10313 = vmatmul.mubr.bf16.gmra.mxu0 %v552
        %v10314 = vpop.f32.mrf.mxu0
        %v10315 = vadd.f32 %v10274, %v10314
        %v10316 = vpop.f32.mrf.mxu0
        %v10317 = vadd.f32 %v10276, %v10316
        %v10318 = vpop.f32.mrf.mxu0
        %v10319 = vpop.f32.mrf.mxu0
        %10320 = vdwg.mxu0
        %10321 = vmatprep.subr.bf16.mxu0 %v7219
        %10322 = vmatpush1.bf16.msra.mxu0 %v7218
        %10323 = vmatprep.subr.bf16.mxu0 %v7215
        %10324 = vmatpush1.bf16.msra.mxu0 %v7214
        %10325 = vmatprep.subr.bf16.mxu0 %v7211
        %10326 = vmatpush1.bf16.msra.mxu0 %v7210
        %10327 = vmatprep.subr.bf16.mxu0 %v7207
        %10328 = vmatpush1.bf16.msra.mxu0 %v7206
        %10329 = vmatprep.subr.bf16.mxu0 %v7203
        %10330 = vmatpush1.bf16.msra.mxu0 %v7202
        %10331 = vmatprep.subr.bf16.mxu0 %v7199
        %10332 = vmatpush1.bf16.msra.mxu0 %v7198
        %10333 = vmatprep.subr.bf16.mxu0 %v7195
        %10334 = vmatpush1.bf16.msra.mxu0 %v7194
        %10335 = vmatprep.subr.bf16.mxu0 %v7191
        %10336 = vmatpush1.bf16.msra.mxu0 %v7190
        %10337 = vmatprep.subr.bf16.mxu0 %v7251
        %10338 = vmatpush2.bf16.msra.mxu0 %v7250
        %10339 = vmatprep.subr.bf16.mxu0 %v7247
        %10340 = vmatpush2.bf16.msra.mxu0 %v7246
        %10341 = vmatprep.subr.bf16.mxu0 %v7243
        %10342 = vmatpush2.bf16.msra.mxu0 %v7242
        %10343 = vmatprep.subr.bf16.mxu0 %v7239
        %10344 = vmatpush2.bf16.msra.mxu0 %v7238
        %10345 = vmatprep.subr.bf16.mxu0 %v7235
        %10346 = vmatpush2.bf16.msra.mxu0 %v7234
        %10347 = vmatprep.subr.bf16.mxu0 %v7231
        %10348 = vmatpush2.bf16.msra.mxu0 %v7230
        %10349 = vmatprep.subr.bf16.mxu0 %v7227
        %10350 = vmatpush2.bf16.msra.mxu0 %v7226
        %10351 = vmatprep.subr.bf16.mxu0 %v7223
        %10352 = vmatpush2.bf16.msra.mxu0 %v7222
        %10353 = vmatprep.mubr.bf16.mxu0 %v555
        %10354 = vmatmul.mubr.bf16.gmra.mxu0 %v554
        %v10355 = vpop.f32.mrf.mxu0
        %v10356 = vadd.f32 %v10315, %v10355
        %v10357 = vpop.f32.mrf.mxu0
        %v10358 = vadd.f32 %v10317, %v10357
        %v10359 = vpop.f32.mrf.mxu0
        %v10360 = vpop.f32.mrf.mxu0
        %10361 = vdwg.mxu0
        %10362 = vmatprep.subr.bf16.mxu0 %v7283
        %10363 = vmatpush1.bf16.msra.mxu0 %v7282
        %10364 = vmatprep.subr.bf16.mxu0 %v7279
        %10365 = vmatpush1.bf16.msra.mxu0 %v7278
        %10366 = vmatprep.subr.bf16.mxu0 %v7275
        %10367 = vmatpush1.bf16.msra.mxu0 %v7274
        %10368 = vmatprep.subr.bf16.mxu0 %v7271
        %10369 = vmatpush1.bf16.msra.mxu0 %v7270
        %10370 = vmatprep.subr.bf16.mxu0 %v7267
        %10371 = vmatpush1.bf16.msra.mxu0 %v7266
        %10372 = vmatprep.subr.bf16.mxu0 %v7263
        %10373 = vmatpush1.bf16.msra.mxu0 %v7262
        %10374 = vmatprep.subr.bf16.mxu0 %v7259
        %10375 = vmatpush1.bf16.msra.mxu0 %v7258
        %10376 = vmatprep.subr.bf16.mxu0 %v7255
        %10377 = vmatpush1.bf16.msra.mxu0 %v7254
        %10378 = vmatprep.subr.bf16.mxu0 %v7315
        %10379 = vmatpush2.bf16.msra.mxu0 %v7314
        %10380 = vmatprep.subr.bf16.mxu0 %v7311
        %10381 = vmatpush2.bf16.msra.mxu0 %v7310
        %10382 = vmatprep.subr.bf16.mxu0 %v7307
        %10383 = vmatpush2.bf16.msra.mxu0 %v7306
        %10384 = vmatprep.subr.bf16.mxu0 %v7303
        %10385 = vmatpush2.bf16.msra.mxu0 %v7302
        %10386 = vmatprep.subr.bf16.mxu0 %v7299
        %10387 = vmatpush2.bf16.msra.mxu0 %v7298
        %10388 = vmatprep.subr.bf16.mxu0 %v7295
        %10389 = vmatpush2.bf16.msra.mxu0 %v7294
        %10390 = vmatprep.subr.bf16.mxu0 %v7291
        %10391 = vmatpush2.bf16.msra.mxu0 %v7290
        %10392 = vmatprep.subr.bf16.mxu0 %v7287
        %10393 = vmatpush2.bf16.msra.mxu0 %v7286
        %10394 = vmatprep.mubr.bf16.mxu0 %v557
        %10395 = vmatmul.mubr.bf16.gmra.mxu0 %v556
        %v10396 = vpop.f32.mrf.mxu0
        %v10397 = vadd.f32 %v10356, %v10396
        %v10398 = vpop.f32.mrf.mxu0
        %v10399 = vadd.f32 %v10358, %v10398
        %v10400 = vpop.f32.mrf.mxu0
        %v10401 = vpop.f32.mrf.mxu0
        %10402 = vdwg.mxu0
        %10403 = vmatprep.subr.bf16.mxu0 %v7347
        %10404 = vmatpush1.bf16.msra.mxu0 %v7346
        %10405 = vmatprep.subr.bf16.mxu0 %v7343
        %10406 = vmatpush1.bf16.msra.mxu0 %v7342
        %10407 = vmatprep.subr.bf16.mxu0 %v7339
        %10408 = vmatpush1.bf16.msra.mxu0 %v7338
        %10409 = vmatprep.subr.bf16.mxu0 %v7335
        %10410 = vmatpush1.bf16.msra.mxu0 %v7334
        %10411 = vmatprep.subr.bf16.mxu0 %v7331
        %10412 = vmatpush1.bf16.msra.mxu0 %v7330
        %10413 = vmatprep.subr.bf16.mxu0 %v7327
        %10414 = vmatpush1.bf16.msra.mxu0 %v7326
        %10415 = vmatprep.subr.bf16.mxu0 %v7323
        %10416 = vmatpush1.bf16.msra.mxu0 %v7322
        %10417 = vmatprep.subr.bf16.mxu0 %v7319
        %10418 = vmatpush1.bf16.msra.mxu0 %v7318
        %10419 = vmatprep.subr.bf16.mxu0 %v7379
        %10420 = vmatpush2.bf16.msra.mxu0 %v7378
        %10421 = vmatprep.subr.bf16.mxu0 %v7375
        %10422 = vmatpush2.bf16.msra.mxu0 %v7374
        %10423 = vmatprep.subr.bf16.mxu0 %v7371
        %10424 = vmatpush2.bf16.msra.mxu0 %v7370
        %10425 = vmatprep.subr.bf16.mxu0 %v7367
        %10426 = vmatpush2.bf16.msra.mxu0 %v7366
        %10427 = vmatprep.subr.bf16.mxu0 %v7363
        %10428 = vmatpush2.bf16.msra.mxu0 %v7362
        %10429 = vmatprep.subr.bf16.mxu0 %v7359
        %10430 = vmatpush2.bf16.msra.mxu0 %v7358
        %10431 = vmatprep.subr.bf16.mxu0 %v7355
        %10432 = vmatpush2.bf16.msra.mxu0 %v7354
        %10433 = vmatprep.subr.bf16.mxu0 %v7351
        %10434 = vmatpush2.bf16.msra.mxu0 %v7350
        %10435 = vmatprep.mubr.bf16.mxu0 %v559
        %10436 = vmatmul.mubr.bf16.gmra.mxu0 %v558
        %v10437 = vpop.f32.mrf.mxu0
        %v10438 = vadd.f32 %v10397, %v10437
        %v10439 = vpop.f32.mrf.mxu0
        %v10440 = vadd.f32 %v10399, %v10439
        %v10441 = vpop.f32.mrf.mxu0
        %v10442 = vpop.f32.mrf.mxu0
        %10443 = vdwg.mxu0
        %10444 = vmatprep.subr.bf16.mxu0 %v7411
        %10445 = vmatpush1.bf16.msra.mxu0 %v7410
        %10446 = vmatprep.subr.bf16.mxu0 %v7407
        %10447 = vmatpush1.bf16.msra.mxu0 %v7406
        %10448 = vmatprep.subr.bf16.mxu0 %v7403
        %10449 = vmatpush1.bf16.msra.mxu0 %v7402
        %10450 = vmatprep.subr.bf16.mxu0 %v7399
        %10451 = vmatpush1.bf16.msra.mxu0 %v7398
        %10452 = vmatprep.subr.bf16.mxu0 %v7395
        %10453 = vmatpush1.bf16.msra.mxu0 %v7394
        %10454 = vmatprep.subr.bf16.mxu0 %v7391
        %10455 = vmatpush1.bf16.msra.mxu0 %v7390
        %10456 = vmatprep.subr.bf16.mxu0 %v7387
        %10457 = vmatpush1.bf16.msra.mxu0 %v7386
        %10458 = vmatprep.subr.bf16.mxu0 %v7383
        %10459 = vmatpush1.bf16.msra.mxu0 %v7382
        %10460 = vmatprep.subr.bf16.mxu0 %v7443
        %10461 = vmatpush2.bf16.msra.mxu0 %v7442
        %10462 = vmatprep.subr.bf16.mxu0 %v7439
        %10463 = vmatpush2.bf16.msra.mxu0 %v7438
        %10464 = vmatprep.subr.bf16.mxu0 %v7435
        %10465 = vmatpush2.bf16.msra.mxu0 %v7434
        %10466 = vmatprep.subr.bf16.mxu0 %v7431
        %10467 = vmatpush2.bf16.msra.mxu0 %v7430
        %10468 = vmatprep.subr.bf16.mxu0 %v7427
        %10469 = vmatpush2.bf16.msra.mxu0 %v7426
        %10470 = vmatprep.subr.bf16.mxu0 %v7423
        %10471 = vmatpush2.bf16.msra.mxu0 %v7422
        %10472 = vmatprep.subr.bf16.mxu0 %v7419
        %10473 = vmatpush2.bf16.msra.mxu0 %v7418
        %10474 = vmatprep.subr.bf16.mxu0 %v7415
        %10475 = vmatpush2.bf16.msra.mxu0 %v7414
        %10476 = vmatprep.mubr.bf16.mxu0 %v561
        %10477 = vmatmul.mubr.bf16.gmra.mxu0 %v560
        %v10478 = vpop.f32.mrf.mxu0
        %v10479 = vadd.f32 %v10438, %v10478
        %v10480 = vpop.f32.mrf.mxu0
        %v10481 = vadd.f32 %v10440, %v10480
        %v10482 = vpop.f32.mrf.mxu0
        %v10483 = vpop.f32.mrf.mxu0
        %10484 = vdwg.mxu0
        %10485 = vmatprep.subr.bf16.mxu0 %v7475
        %10486 = vmatpush1.bf16.msra.mxu0 %v7474
        %10487 = vmatprep.subr.bf16.mxu0 %v7471
        %10488 = vmatpush1.bf16.msra.mxu0 %v7470
        %10489 = vmatprep.subr.bf16.mxu0 %v7467
        %10490 = vmatpush1.bf16.msra.mxu0 %v7466
        %10491 = vmatprep.subr.bf16.mxu0 %v7463
        %10492 = vmatpush1.bf16.msra.mxu0 %v7462
        %10493 = vmatprep.subr.bf16.mxu0 %v7459
        %10494 = vmatpush1.bf16.msra.mxu0 %v7458
        %10495 = vmatprep.subr.bf16.mxu0 %v7455
        %10496 = vmatpush1.bf16.msra.mxu0 %v7454
        %10497 = vmatprep.subr.bf16.mxu0 %v7451
        %10498 = vmatpush1.bf16.msra.mxu0 %v7450
        %10499 = vmatprep.subr.bf16.mxu0 %v7447
        %10500 = vmatpush1.bf16.msra.mxu0 %v7446
        %10501 = vmatprep.subr.bf16.mxu0 %v7507
        %10502 = vmatpush2.bf16.msra.mxu0 %v7506
        %10503 = vmatprep.subr.bf16.mxu0 %v7503
        %10504 = vmatpush2.bf16.msra.mxu0 %v7502
        %10505 = vmatprep.subr.bf16.mxu0 %v7499
        %10506 = vmatpush2.bf16.msra.mxu0 %v7498
        %10507 = vmatprep.subr.bf16.mxu0 %v7495
        %10508 = vmatpush2.bf16.msra.mxu0 %v7494
        %10509 = vmatprep.subr.bf16.mxu0 %v7491
        %10510 = vmatpush2.bf16.msra.mxu0 %v7490
        %10511 = vmatprep.subr.bf16.mxu0 %v7487
        %10512 = vmatpush2.bf16.msra.mxu0 %v7486
        %10513 = vmatprep.subr.bf16.mxu0 %v7483
        %10514 = vmatpush2.bf16.msra.mxu0 %v7482
        %10515 = vmatprep.subr.bf16.mxu0 %v7479
        %10516 = vmatpush2.bf16.msra.mxu0 %v7478
        %10517 = vmatprep.mubr.bf16.mxu0 %v563
        %10518 = vmatmul.mubr.bf16.gmra.mxu0 %v562
        %v10519 = vpop.f32.mrf.mxu0
        %v10520 = vadd.f32 %v10479, %v10519
        %v10521 = vpop.f32.mrf.mxu0
        %v10522 = vadd.f32 %v10481, %v10521
        %v10523 = vpop.f32.mrf.mxu0
        %v10524 = vpop.f32.mrf.mxu0
        %10525 = vdwg.mxu0
        %10526 = vmatprep.subr.bf16.mxu0 %v7539
        %10527 = vmatpush1.bf16.msra.mxu0 %v7538
        %10528 = vmatprep.subr.bf16.mxu0 %v7535
        %10529 = vmatpush1.bf16.msra.mxu0 %v7534
        %10530 = vmatprep.subr.bf16.mxu0 %v7531
        %10531 = vmatpush1.bf16.msra.mxu0 %v7530
        %10532 = vmatprep.subr.bf16.mxu0 %v7527
        %10533 = vmatpush1.bf16.msra.mxu0 %v7526
        %10534 = vmatprep.subr.bf16.mxu0 %v7523
        %10535 = vmatpush1.bf16.msra.mxu0 %v7522
        %10536 = vmatprep.subr.bf16.mxu0 %v7519
        %10537 = vmatpush1.bf16.msra.mxu0 %v7518
        %10538 = vmatprep.subr.bf16.mxu0 %v7515
        %10539 = vmatpush1.bf16.msra.mxu0 %v7514
        %10540 = vmatprep.subr.bf16.mxu0 %v7511
        %10541 = vmatpush1.bf16.msra.mxu0 %v7510
        %10542 = vmatprep.subr.bf16.mxu0 %v7571
        %10543 = vmatpush2.bf16.msra.mxu0 %v7570
        %10544 = vmatprep.subr.bf16.mxu0 %v7567
        %10545 = vmatpush2.bf16.msra.mxu0 %v7566
        %10546 = vmatprep.subr.bf16.mxu0 %v7563
        %10547 = vmatpush2.bf16.msra.mxu0 %v7562
        %10548 = vmatprep.subr.bf16.mxu0 %v7559
        %10549 = vmatpush2.bf16.msra.mxu0 %v7558
        %10550 = vmatprep.subr.bf16.mxu0 %v7555
        %10551 = vmatpush2.bf16.msra.mxu0 %v7554
        %10552 = vmatprep.subr.bf16.mxu0 %v7551
        %10553 = vmatpush2.bf16.msra.mxu0 %v7550
        %10554 = vmatprep.subr.bf16.mxu0 %v7547
        %10555 = vmatpush2.bf16.msra.mxu0 %v7546
        %10556 = vmatprep.subr.bf16.mxu0 %v7543
        %10557 = vmatpush2.bf16.msra.mxu0 %v7542
        %10558 = vmatprep.mubr.bf16.mxu0 %v565
        %10559 = vmatmul.mubr.bf16.gmra.mxu0 %v564
        %v10560 = vpop.f32.mrf.mxu0
        %v10561 = vadd.f32 %v10520, %v10560
        %v10562 = vpop.f32.mrf.mxu0
        %v10563 = vadd.f32 %v10522, %v10562
        %v10564 = vpop.f32.mrf.mxu0
        %v10565 = vpop.f32.mrf.mxu0
        %10566 = vdwg.mxu0
        %10567 = vmatprep.subr.bf16.mxu0 %v7603
        %10568 = vmatpush1.bf16.msra.mxu0 %v7602
        %10569 = vmatprep.subr.bf16.mxu0 %v7599
        %10570 = vmatpush1.bf16.msra.mxu0 %v7598
        %10571 = vmatprep.subr.bf16.mxu0 %v7595
        %10572 = vmatpush1.bf16.msra.mxu0 %v7594
        %10573 = vmatprep.subr.bf16.mxu0 %v7591
        %10574 = vmatpush1.bf16.msra.mxu0 %v7590
        %10575 = vmatprep.subr.bf16.mxu0 %v7587
        %10576 = vmatpush1.bf16.msra.mxu0 %v7586
        %10577 = vmatprep.subr.bf16.mxu0 %v7583
        %10578 = vmatpush1.bf16.msra.mxu0 %v7582
        %10579 = vmatprep.subr.bf16.mxu0 %v7579
        %10580 = vmatpush1.bf16.msra.mxu0 %v7578
        %10581 = vmatprep.subr.bf16.mxu0 %v7575
        %10582 = vmatpush1.bf16.msra.mxu0 %v7574
        %10583 = vmatprep.subr.bf16.mxu0 %v7635
        %10584 = vmatpush2.bf16.msra.mxu0 %v7634
        %10585 = vmatprep.subr.bf16.mxu0 %v7631
        %10586 = vmatpush2.bf16.msra.mxu0 %v7630
        %10587 = vmatprep.subr.bf16.mxu0 %v7627
        %10588 = vmatpush2.bf16.msra.mxu0 %v7626
        %10589 = vmatprep.subr.bf16.mxu0 %v7623
        %10590 = vmatpush2.bf16.msra.mxu0 %v7622
        %10591 = vmatprep.subr.bf16.mxu0 %v7619
        %10592 = vmatpush2.bf16.msra.mxu0 %v7618
        %10593 = vmatprep.subr.bf16.mxu0 %v7615
        %10594 = vmatpush2.bf16.msra.mxu0 %v7614
        %10595 = vmatprep.subr.bf16.mxu0 %v7611
        %10596 = vmatpush2.bf16.msra.mxu0 %v7610
        %10597 = vmatprep.subr.bf16.mxu0 %v7607
        %10598 = vmatpush2.bf16.msra.mxu0 %v7606
        %10599 = vmatprep.mubr.bf16.mxu0 %v567
        %10600 = vmatmul.mubr.bf16.gmra.mxu0 %v566
        %v10601 = vpop.f32.mrf.mxu0
        %v10602 = vadd.f32 %v10561, %v10601
        %v10603 = vpop.f32.mrf.mxu0
        %v10604 = vadd.f32 %v10563, %v10603
        %v10605 = vpop.f32.mrf.mxu0
        %v10606 = vpop.f32.mrf.mxu0
        %10607 = vdwg.mxu0
        %10608 = vmatprep.subr.bf16.mxu0 %v7667
        %10609 = vmatpush1.bf16.msra.mxu0 %v7666
        %10610 = vmatprep.subr.bf16.mxu0 %v7663
        %10611 = vmatpush1.bf16.msra.mxu0 %v7662
        %10612 = vmatprep.subr.bf16.mxu0 %v7659
        %10613 = vmatpush1.bf16.msra.mxu0 %v7658
        %10614 = vmatprep.subr.bf16.mxu0 %v7655
        %10615 = vmatpush1.bf16.msra.mxu0 %v7654
        %10616 = vmatprep.subr.bf16.mxu0 %v7651
        %10617 = vmatpush1.bf16.msra.mxu0 %v7650
        %10618 = vmatprep.subr.bf16.mxu0 %v7647
        %10619 = vmatpush1.bf16.msra.mxu0 %v7646
        %10620 = vmatprep.subr.bf16.mxu0 %v7643
        %10621 = vmatpush1.bf16.msra.mxu0 %v7642
        %10622 = vmatprep.subr.bf16.mxu0 %v7639
        %10623 = vmatpush1.bf16.msra.mxu0 %v7638
        %10624 = vmatprep.subr.bf16.mxu0 %v7699
        %10625 = vmatpush2.bf16.msra.mxu0 %v7698
        %10626 = vmatprep.subr.bf16.mxu0 %v7695
        %10627 = vmatpush2.bf16.msra.mxu0 %v7694
        %10628 = vmatprep.subr.bf16.mxu0 %v7691
        %10629 = vmatpush2.bf16.msra.mxu0 %v7690
        %10630 = vmatprep.subr.bf16.mxu0 %v7687
        %10631 = vmatpush2.bf16.msra.mxu0 %v7686
        %10632 = vmatprep.subr.bf16.mxu0 %v7683
        %10633 = vmatpush2.bf16.msra.mxu0 %v7682
        %10634 = vmatprep.subr.bf16.mxu0 %v7679
        %10635 = vmatpush2.bf16.msra.mxu0 %v7678
        %10636 = vmatprep.subr.bf16.mxu0 %v7675
        %10637 = vmatpush2.bf16.msra.mxu0 %v7674
        %10638 = vmatprep.subr.bf16.mxu0 %v7671
        %10639 = vmatpush2.bf16.msra.mxu0 %v7670
        %10640 = vmatprep.mubr.bf16.mxu0 %v569
        %10641 = vmatmul.mubr.bf16.gmra.mxu0 %v568
        %v10642 = vpop.f32.mrf.mxu0
        %v10643 = vadd.f32 %v10602, %v10642
        %v10644 = vpop.f32.mrf.mxu0
        %v10645 = vadd.f32 %v10604, %v10644
        %v10646 = vpop.f32.mrf.mxu0
        %v10647 = vpop.f32.mrf.mxu0
        %10648 = vdwg.mxu0
        %10649 = vmatprep.subr.bf16.mxu0 %v7731
        %10650 = vmatpush1.bf16.msra.mxu0 %v7730
        %10651 = vmatprep.subr.bf16.mxu0 %v7727
        %10652 = vmatpush1.bf16.msra.mxu0 %v7726
        %10653 = vmatprep.subr.bf16.mxu0 %v7723
        %10654 = vmatpush1.bf16.msra.mxu0 %v7722
        %10655 = vmatprep.subr.bf16.mxu0 %v7719
        %10656 = vmatpush1.bf16.msra.mxu0 %v7718
        %10657 = vmatprep.subr.bf16.mxu0 %v7715
        %10658 = vmatpush1.bf16.msra.mxu0 %v7714
        %10659 = vmatprep.subr.bf16.mxu0 %v7711
        %10660 = vmatpush1.bf16.msra.mxu0 %v7710
        %10661 = vmatprep.subr.bf16.mxu0 %v7707
        %10662 = vmatpush1.bf16.msra.mxu0 %v7706
        %10663 = vmatprep.subr.bf16.mxu0 %v7703
        %10664 = vmatpush1.bf16.msra.mxu0 %v7702
        %10665 = vmatprep.subr.bf16.mxu0 %v7763
        %10666 = vmatpush2.bf16.msra.mxu0 %v7762
        %10667 = vmatprep.subr.bf16.mxu0 %v7759
        %10668 = vmatpush2.bf16.msra.mxu0 %v7758
        %10669 = vmatprep.subr.bf16.mxu0 %v7755
        %10670 = vmatpush2.bf16.msra.mxu0 %v7754
        %10671 = vmatprep.subr.bf16.mxu0 %v7751
        %10672 = vmatpush2.bf16.msra.mxu0 %v7750
        %10673 = vmatprep.subr.bf16.mxu0 %v7747
        %10674 = vmatpush2.bf16.msra.mxu0 %v7746
        %10675 = vmatprep.subr.bf16.mxu0 %v7743
        %10676 = vmatpush2.bf16.msra.mxu0 %v7742
        %10677 = vmatprep.subr.bf16.mxu0 %v7739
        %10678 = vmatpush2.bf16.msra.mxu0 %v7738
        %10679 = vmatprep.subr.bf16.mxu0 %v7735
        %10680 = vmatpush2.bf16.msra.mxu0 %v7734
        %10681 = vmatprep.mubr.bf16.mxu0 %v571
        %10682 = vmatmul.mubr.bf16.gmra.mxu0 %v570
        %v10683 = vpop.f32.mrf.mxu0
        %v10684 = vadd.f32 %v10643, %v10683
        %v10685 = vpop.f32.mrf.mxu0
        %v10686 = vadd.f32 %v10645, %v10685
        %v10687 = vpop.f32.mrf.mxu0
        %v10688 = vpop.f32.mrf.mxu0
        %10689 = vdwg.mxu0
        %10690 = vmatprep.subr.bf16.mxu0 %v7795
        %10691 = vmatpush1.bf16.msra.mxu0 %v7794
        %10692 = vmatprep.subr.bf16.mxu0 %v7791
        %10693 = vmatpush1.bf16.msra.mxu0 %v7790
        %10694 = vmatprep.subr.bf16.mxu0 %v7787
        %10695 = vmatpush1.bf16.msra.mxu0 %v7786
        %10696 = vmatprep.subr.bf16.mxu0 %v7783
        %10697 = vmatpush1.bf16.msra.mxu0 %v7782
        %10698 = vmatprep.subr.bf16.mxu0 %v7779
        %10699 = vmatpush1.bf16.msra.mxu0 %v7778
        %10700 = vmatprep.subr.bf16.mxu0 %v7775
        %10701 = vmatpush1.bf16.msra.mxu0 %v7774
        %10702 = vmatprep.subr.bf16.mxu0 %v7771
        %10703 = vmatpush1.bf16.msra.mxu0 %v7770
        %10704 = vmatprep.subr.bf16.mxu0 %v7767
        %10705 = vmatpush1.bf16.msra.mxu0 %v7766
        %10706 = vmatprep.subr.bf16.mxu0 %v7827
        %10707 = vmatpush2.bf16.msra.mxu0 %v7826
        %10708 = vmatprep.subr.bf16.mxu0 %v7823
        %10709 = vmatpush2.bf16.msra.mxu0 %v7822
        %10710 = vmatprep.subr.bf16.mxu0 %v7819
        %10711 = vmatpush2.bf16.msra.mxu0 %v7818
        %10712 = vmatprep.subr.bf16.mxu0 %v7815
        %10713 = vmatpush2.bf16.msra.mxu0 %v7814
        %10714 = vmatprep.subr.bf16.mxu0 %v7811
        %10715 = vmatpush2.bf16.msra.mxu0 %v7810
        %10716 = vmatprep.subr.bf16.mxu0 %v7807
        %10717 = vmatpush2.bf16.msra.mxu0 %v7806
        %10718 = vmatprep.subr.bf16.mxu0 %v7803
        %10719 = vmatpush2.bf16.msra.mxu0 %v7802
        %10720 = vmatprep.subr.bf16.mxu0 %v7799
        %10721 = vmatpush2.bf16.msra.mxu0 %v7798
        %10722 = vmatprep.mubr.bf16.mxu0 %v573
        %10723 = vmatmul.mubr.bf16.gmra.mxu0 %v572
        %v10724 = vpop.f32.mrf.mxu0
        %v10725 = vadd.f32 %v10684, %v10724
        %v10726 = vpop.f32.mrf.mxu0
        %v10727 = vadd.f32 %v10686, %v10726
        %v10728 = vpop.f32.mrf.mxu0
        %v10729 = vpop.f32.mrf.mxu0
        %10730 = vdwg.mxu0
        %10731 = vmatprep.subr.bf16.mxu0 %v7859
        %10732 = vmatpush1.bf16.msra.mxu0 %v7858
        %10733 = vmatprep.subr.bf16.mxu0 %v7855
        %10734 = vmatpush1.bf16.msra.mxu0 %v7854
        %10735 = vmatprep.subr.bf16.mxu0 %v7851
        %10736 = vmatpush1.bf16.msra.mxu0 %v7850
        %10737 = vmatprep.subr.bf16.mxu0 %v7847
        %10738 = vmatpush1.bf16.msra.mxu0 %v7846
        %10739 = vmatprep.subr.bf16.mxu0 %v7843
        %10740 = vmatpush1.bf16.msra.mxu0 %v7842
        %10741 = vmatprep.subr.bf16.mxu0 %v7839
        %10742 = vmatpush1.bf16.msra.mxu0 %v7838
        %10743 = vmatprep.subr.bf16.mxu0 %v7835
        %10744 = vmatpush1.bf16.msra.mxu0 %v7834
        %10745 = vmatprep.subr.bf16.mxu0 %v7831
        %10746 = vmatpush1.bf16.msra.mxu0 %v7830
        %10747 = vmatprep.subr.bf16.mxu0 %v7891
        %10748 = vmatpush2.bf16.msra.mxu0 %v7890
        %10749 = vmatprep.subr.bf16.mxu0 %v7887
        %10750 = vmatpush2.bf16.msra.mxu0 %v7886
        %10751 = vmatprep.subr.bf16.mxu0 %v7883
        %10752 = vmatpush2.bf16.msra.mxu0 %v7882
        %10753 = vmatprep.subr.bf16.mxu0 %v7879
        %10754 = vmatpush2.bf16.msra.mxu0 %v7878
        %10755 = vmatprep.subr.bf16.mxu0 %v7875
        %10756 = vmatpush2.bf16.msra.mxu0 %v7874
        %10757 = vmatprep.subr.bf16.mxu0 %v7871
        %10758 = vmatpush2.bf16.msra.mxu0 %v7870
        %10759 = vmatprep.subr.bf16.mxu0 %v7867
        %10760 = vmatpush2.bf16.msra.mxu0 %v7866
        %10761 = vmatprep.subr.bf16.mxu0 %v7863
        %10762 = vmatpush2.bf16.msra.mxu0 %v7862
        %10763 = vmatprep.mubr.bf16.mxu0 %v575
        %10764 = vmatmul.mubr.bf16.gmra.mxu0 %v574
        %v10765 = vpop.f32.mrf.mxu0
        %v10766 = vadd.f32 %v10725, %v10765
        %v10767 = vpop.f32.mrf.mxu0
        %v10768 = vadd.f32 %v10727, %v10767
        %v10769 = vpop.f32.mrf.mxu0
        %v10770 = vpop.f32.mrf.mxu0
        %10771 = vdwg.mxu0
        %10772 = vmatprep.subr.bf16.mxu0 %v7923
        %10773 = vmatpush1.bf16.msra.mxu0 %v7922
        %10774 = vmatprep.subr.bf16.mxu0 %v7919
        %10775 = vmatpush1.bf16.msra.mxu0 %v7918
        %10776 = vmatprep.subr.bf16.mxu0 %v7915
        %10777 = vmatpush1.bf16.msra.mxu0 %v7914
        %10778 = vmatprep.subr.bf16.mxu0 %v7911
        %10779 = vmatpush1.bf16.msra.mxu0 %v7910
        %10780 = vmatprep.subr.bf16.mxu0 %v7907
        %10781 = vmatpush1.bf16.msra.mxu0 %v7906
        %10782 = vmatprep.subr.bf16.mxu0 %v7903
        %10783 = vmatpush1.bf16.msra.mxu0 %v7902
        %10784 = vmatprep.subr.bf16.mxu0 %v7899
        %10785 = vmatpush1.bf16.msra.mxu0 %v7898
        %10786 = vmatprep.subr.bf16.mxu0 %v7895
        %10787 = vmatpush1.bf16.msra.mxu0 %v7894
        %10788 = vmatprep.subr.bf16.mxu0 %v7955
        %10789 = vmatpush2.bf16.msra.mxu0 %v7954
        %10790 = vmatprep.subr.bf16.mxu0 %v7951
        %10791 = vmatpush2.bf16.msra.mxu0 %v7950
        %10792 = vmatprep.subr.bf16.mxu0 %v7947
        %10793 = vmatpush2.bf16.msra.mxu0 %v7946
        %10794 = vmatprep.subr.bf16.mxu0 %v7943
        %10795 = vmatpush2.bf16.msra.mxu0 %v7942
        %10796 = vmatprep.subr.bf16.mxu0 %v7939
        %10797 = vmatpush2.bf16.msra.mxu0 %v7938
        %10798 = vmatprep.subr.bf16.mxu0 %v7935
        %10799 = vmatpush2.bf16.msra.mxu0 %v7934
        %10800 = vmatprep.subr.bf16.mxu0 %v7931
        %10801 = vmatpush2.bf16.msra.mxu0 %v7930
        %10802 = vmatprep.subr.bf16.mxu0 %v7927
        %10803 = vmatpush2.bf16.msra.mxu0 %v7926
        %10804 = vmatprep.mubr.bf16.mxu0 %v577
        %10805 = vmatmul.mubr.bf16.gmra.mxu0 %v576
        %v10806 = vpop.f32.mrf.mxu0
        %v10807 = vadd.f32 %v10766, %v10806
        %v10808 = vpop.f32.mrf.mxu0
        %v10809 = vadd.f32 %v10768, %v10808
        %v10810 = vpop.f32.mrf.mxu0
        %v10811 = vpop.f32.mrf.mxu0
        %10812 = vdwg.mxu0
        %10813 = vmatprep.subr.bf16.mxu0 %v7987
        %10814 = vmatpush1.bf16.msra.mxu0 %v7986
        %10815 = vmatprep.subr.bf16.mxu0 %v7983
        %10816 = vmatpush1.bf16.msra.mxu0 %v7982
        %10817 = vmatprep.subr.bf16.mxu0 %v7979
        %10818 = vmatpush1.bf16.msra.mxu0 %v7978
        %10819 = vmatprep.subr.bf16.mxu0 %v7975
        %10820 = vmatpush1.bf16.msra.mxu0 %v7974
        %10821 = vmatprep.subr.bf16.mxu0 %v7971
        %10822 = vmatpush1.bf16.msra.mxu0 %v7970
        %10823 = vmatprep.subr.bf16.mxu0 %v7967
        %10824 = vmatpush1.bf16.msra.mxu0 %v7966
        %10825 = vmatprep.subr.bf16.mxu0 %v7963
        %10826 = vmatpush1.bf16.msra.mxu0 %v7962
        %10827 = vmatprep.subr.bf16.mxu0 %v7959
        %10828 = vmatpush1.bf16.msra.mxu0 %v7958
        %10829 = vmatprep.subr.bf16.mxu0 %v8019
        %10830 = vmatpush2.bf16.msra.mxu0 %v8018
        %10831 = vmatprep.subr.bf16.mxu0 %v8015
        %10832 = vmatpush2.bf16.msra.mxu0 %v8014
        %10833 = vmatprep.subr.bf16.mxu0 %v8011
        %10834 = vmatpush2.bf16.msra.mxu0 %v8010
        %10835 = vmatprep.subr.bf16.mxu0 %v8007
        %10836 = vmatpush2.bf16.msra.mxu0 %v8006
        %10837 = vmatprep.subr.bf16.mxu0 %v8003
        %10838 = vmatpush2.bf16.msra.mxu0 %v8002
        %10839 = vmatprep.subr.bf16.mxu0 %v7999
        %10840 = vmatpush2.bf16.msra.mxu0 %v7998
        %10841 = vmatprep.subr.bf16.mxu0 %v7995
        %10842 = vmatpush2.bf16.msra.mxu0 %v7994
        %10843 = vmatprep.subr.bf16.mxu0 %v7991
        %10844 = vmatpush2.bf16.msra.mxu0 %v7990
        %10845 = vmatprep.mubr.bf16.mxu0 %v579
        %10846 = vmatmul.mubr.bf16.gmra.mxu0 %v578
        %v10847 = vpop.f32.mrf.mxu0
        %v10848 = vadd.f32 %v10807, %v10847
        %v10849 = vpop.f32.mrf.mxu0
        %v10850 = vadd.f32 %v10809, %v10849
        %v10851 = vpop.f32.mrf.mxu0
        %v10852 = vpop.f32.mrf.mxu0
        %10853 = vdwg.mxu0
        %10854 = vmatprep.subr.bf16.mxu0 %v8051
        %10855 = vmatpush1.bf16.msra.mxu0 %v8050
        %10856 = vmatprep.subr.bf16.mxu0 %v8047
        %10857 = vmatpush1.bf16.msra.mxu0 %v8046
        %10858 = vmatprep.subr.bf16.mxu0 %v8043
        %10859 = vmatpush1.bf16.msra.mxu0 %v8042
        %10860 = vmatprep.subr.bf16.mxu0 %v8039
        %10861 = vmatpush1.bf16.msra.mxu0 %v8038
        %10862 = vmatprep.subr.bf16.mxu0 %v8035
        %10863 = vmatpush1.bf16.msra.mxu0 %v8034
        %10864 = vmatprep.subr.bf16.mxu0 %v8031
        %10865 = vmatpush1.bf16.msra.mxu0 %v8030
        %10866 = vmatprep.subr.bf16.mxu0 %v8027
        %10867 = vmatpush1.bf16.msra.mxu0 %v8026
        %10868 = vmatprep.subr.bf16.mxu0 %v8023
        %10869 = vmatpush1.bf16.msra.mxu0 %v8022
        %10870 = vmatprep.subr.bf16.mxu0 %v8083
        %10871 = vmatpush2.bf16.msra.mxu0 %v8082
        %10872 = vmatprep.subr.bf16.mxu0 %v8079
        %10873 = vmatpush2.bf16.msra.mxu0 %v8078
        %10874 = vmatprep.subr.bf16.mxu0 %v8075
        %10875 = vmatpush2.bf16.msra.mxu0 %v8074
        %10876 = vmatprep.subr.bf16.mxu0 %v8071
        %10877 = vmatpush2.bf16.msra.mxu0 %v8070
        %10878 = vmatprep.subr.bf16.mxu0 %v8067
        %10879 = vmatpush2.bf16.msra.mxu0 %v8066
        %10880 = vmatprep.subr.bf16.mxu0 %v8063
        %10881 = vmatpush2.bf16.msra.mxu0 %v8062
        %10882 = vmatprep.subr.bf16.mxu0 %v8059
        %10883 = vmatpush2.bf16.msra.mxu0 %v8058
        %10884 = vmatprep.subr.bf16.mxu0 %v8055
        %10885 = vmatpush2.bf16.msra.mxu0 %v8054
        %10886 = vmatprep.mubr.bf16.mxu0 %v581
        %10887 = vmatmul.mubr.bf16.gmra.mxu0 %v580
        %v10888 = vpop.f32.mrf.mxu0
        %v10889 = vadd.f32 %v10848, %v10888
        %v10890 = vpop.f32.mrf.mxu0
        %v10891 = vadd.f32 %v10850, %v10890
        %v10892 = vpop.f32.mrf.mxu0
        %v10893 = vpop.f32.mrf.mxu0
        %10894 = vdwg.mxu0
        %10895 = vmatprep.subr.bf16.mxu0 %v8115
        %10896 = vmatpush1.bf16.msra.mxu0 %v8114
        %10897 = vmatprep.subr.bf16.mxu0 %v8111
        %10898 = vmatpush1.bf16.msra.mxu0 %v8110
        %10899 = vmatprep.subr.bf16.mxu0 %v8107
        %10900 = vmatpush1.bf16.msra.mxu0 %v8106
        %10901 = vmatprep.subr.bf16.mxu0 %v8103
        %10902 = vmatpush1.bf16.msra.mxu0 %v8102
        %10903 = vmatprep.subr.bf16.mxu0 %v8099
        %10904 = vmatpush1.bf16.msra.mxu0 %v8098
        %10905 = vmatprep.subr.bf16.mxu0 %v8095
        %10906 = vmatpush1.bf16.msra.mxu0 %v8094
        %10907 = vmatprep.subr.bf16.mxu0 %v8091
        %10908 = vmatpush1.bf16.msra.mxu0 %v8090
        %10909 = vmatprep.subr.bf16.mxu0 %v8087
        %10910 = vmatpush1.bf16.msra.mxu0 %v8086
        %10911 = vmatprep.subr.bf16.mxu0 %v8147
        %10912 = vmatpush2.bf16.msra.mxu0 %v8146
        %10913 = vmatprep.subr.bf16.mxu0 %v8143
        %10914 = vmatpush2.bf16.msra.mxu0 %v8142
        %10915 = vmatprep.subr.bf16.mxu0 %v8139
        %10916 = vmatpush2.bf16.msra.mxu0 %v8138
        %10917 = vmatprep.subr.bf16.mxu0 %v8135
        %10918 = vmatpush2.bf16.msra.mxu0 %v8134
        %10919 = vmatprep.subr.bf16.mxu0 %v8131
        %10920 = vmatpush2.bf16.msra.mxu0 %v8130
        %10921 = vmatprep.subr.bf16.mxu0 %v8127
        %10922 = vmatpush2.bf16.msra.mxu0 %v8126
        %10923 = vmatprep.subr.bf16.mxu0 %v8123
        %10924 = vmatpush2.bf16.msra.mxu0 %v8122
        %10925 = vmatprep.subr.bf16.mxu0 %v8119
        %10926 = vmatpush2.bf16.msra.mxu0 %v8118
        %10927 = vmatprep.mubr.bf16.mxu0 %v583
        %10928 = vmatmul.mubr.bf16.gmra.mxu0 %v582
        %v10929 = vpop.f32.mrf.mxu0
        %v10930 = vadd.f32 %v10889, %v10929
        %v10931 = vpop.f32.mrf.mxu0
        %v10932 = vadd.f32 %v10891, %v10931
        %v10933 = vpop.f32.mrf.mxu0
        %v10934 = vpop.f32.mrf.mxu0
        %10935 = vdwg.mxu0
        %10936 = vmatprep.subr.bf16.mxu0 %v8179
        %10937 = vmatpush1.bf16.msra.mxu0 %v8178
        %10938 = vmatprep.subr.bf16.mxu0 %v8175
        %10939 = vmatpush1.bf16.msra.mxu0 %v8174
        %10940 = vmatprep.subr.bf16.mxu0 %v8171
        %10941 = vmatpush1.bf16.msra.mxu0 %v8170
        %10942 = vmatprep.subr.bf16.mxu0 %v8167
        %10943 = vmatpush1.bf16.msra.mxu0 %v8166
        %10944 = vmatprep.subr.bf16.mxu0 %v8163
        %10945 = vmatpush1.bf16.msra.mxu0 %v8162
        %10946 = vmatprep.subr.bf16.mxu0 %v8159
        %10947 = vmatpush1.bf16.msra.mxu0 %v8158
        %10948 = vmatprep.subr.bf16.mxu0 %v8155
        %10949 = vmatpush1.bf16.msra.mxu0 %v8154
        %10950 = vmatprep.subr.bf16.mxu0 %v8151
        %10951 = vmatpush1.bf16.msra.mxu0 %v8150
        %10952 = vmatprep.subr.bf16.mxu0 %v8211
        %10953 = vmatpush2.bf16.msra.mxu0 %v8210
        %10954 = vmatprep.subr.bf16.mxu0 %v8207
        %10955 = vmatpush2.bf16.msra.mxu0 %v8206
        %10956 = vmatprep.subr.bf16.mxu0 %v8203
        %10957 = vmatpush2.bf16.msra.mxu0 %v8202
        %10958 = vmatprep.subr.bf16.mxu0 %v8199
        %10959 = vmatpush2.bf16.msra.mxu0 %v8198
        %10960 = vmatprep.subr.bf16.mxu0 %v8195
        %10961 = vmatpush2.bf16.msra.mxu0 %v8194
        %10962 = vmatprep.subr.bf16.mxu0 %v8191
        %10963 = vmatpush2.bf16.msra.mxu0 %v8190
        %10964 = vmatprep.subr.bf16.mxu0 %v8187
        %10965 = vmatpush2.bf16.msra.mxu0 %v8186
        %10966 = vmatprep.subr.bf16.mxu0 %v8183
        %10967 = vmatpush2.bf16.msra.mxu0 %v8182
        %10968 = vmatprep.mubr.bf16.mxu0 %v585
        %10969 = vmatmul.mubr.bf16.gmra.mxu0 %v584
        %v10970 = vpop.f32.mrf.mxu0
        %v10971 = vadd.f32 %v10930, %v10970
        %v10972 = vpop.f32.mrf.mxu0
        %v10973 = vadd.f32 %v10932, %v10972
        %v10974 = vpop.f32.mrf.mxu0
        %v10975 = vpop.f32.mrf.mxu0
        %10976 = vdwg.mxu0
        %10977 = vmatprep.subr.bf16.mxu0 %v8243
        %10978 = vmatpush1.bf16.msra.mxu0 %v8242
        %10979 = vmatprep.subr.bf16.mxu0 %v8239
        %10980 = vmatpush1.bf16.msra.mxu0 %v8238
        %10981 = vmatprep.subr.bf16.mxu0 %v8235
        %10982 = vmatpush1.bf16.msra.mxu0 %v8234
        %10983 = vmatprep.subr.bf16.mxu0 %v8231
        %10984 = vmatpush1.bf16.msra.mxu0 %v8230
        %10985 = vmatprep.subr.bf16.mxu0 %v8227
        %10986 = vmatpush1.bf16.msra.mxu0 %v8226
        %10987 = vmatprep.subr.bf16.mxu0 %v8223
        %10988 = vmatpush1.bf16.msra.mxu0 %v8222
        %10989 = vmatprep.subr.bf16.mxu0 %v8219
        %10990 = vmatpush1.bf16.msra.mxu0 %v8218
        %10991 = vmatprep.subr.bf16.mxu0 %v8215
        %10992 = vmatpush1.bf16.msra.mxu0 %v8214
        %10993 = vmatprep.subr.bf16.mxu0 %v8275
        %10994 = vmatpush2.bf16.msra.mxu0 %v8274
        %10995 = vmatprep.subr.bf16.mxu0 %v8271
        %10996 = vmatpush2.bf16.msra.mxu0 %v8270
        %10997 = vmatprep.subr.bf16.mxu0 %v8267
        %10998 = vmatpush2.bf16.msra.mxu0 %v8266
        %10999 = vmatprep.subr.bf16.mxu0 %v8263
        %11000 = vmatpush2.bf16.msra.mxu0 %v8262
        %11001 = vmatprep.subr.bf16.mxu0 %v8259
        %11002 = vmatpush2.bf16.msra.mxu0 %v8258
        %11003 = vmatprep.subr.bf16.mxu0 %v8255
        %11004 = vmatpush2.bf16.msra.mxu0 %v8254
        %11005 = vmatprep.subr.bf16.mxu0 %v8251
        %11006 = vmatpush2.bf16.msra.mxu0 %v8250
        %11007 = vmatprep.subr.bf16.mxu0 %v8247
        %11008 = vmatpush2.bf16.msra.mxu0 %v8246
        %11009 = vmatprep.mubr.bf16.mxu0 %v587
        %11010 = vmatmul.mubr.bf16.gmra.mxu0 %v586
        %v11011 = vpop.f32.mrf.mxu0
        %v11012 = vadd.f32 %v10971, %v11011
        %v11013 = vpop.f32.mrf.mxu0
        %v11014 = vadd.f32 %v10973, %v11013
        %v11015 = vpop.f32.mrf.mxu0
        %v11016 = vpop.f32.mrf.mxu0
        %11017 = vdwg.mxu0
        %11018 = vmatprep.subr.bf16.mxu0 %v8307
        %11019 = vmatpush1.bf16.msra.mxu0 %v8306
        %11020 = vmatprep.subr.bf16.mxu0 %v8303
        %11021 = vmatpush1.bf16.msra.mxu0 %v8302
        %11022 = vmatprep.subr.bf16.mxu0 %v8299
        %11023 = vmatpush1.bf16.msra.mxu0 %v8298
        %11024 = vmatprep.subr.bf16.mxu0 %v8295
        %11025 = vmatpush1.bf16.msra.mxu0 %v8294
        %11026 = vmatprep.subr.bf16.mxu0 %v8291
        %11027 = vmatpush1.bf16.msra.mxu0 %v8290
        %11028 = vmatprep.subr.bf16.mxu0 %v8287
        %11029 = vmatpush1.bf16.msra.mxu0 %v8286
        %11030 = vmatprep.subr.bf16.mxu0 %v8283
        %11031 = vmatpush1.bf16.msra.mxu0 %v8282
        %11032 = vmatprep.subr.bf16.mxu0 %v8279
        %11033 = vmatpush1.bf16.msra.mxu0 %v8278
        %11034 = vmatprep.subr.bf16.mxu0 %v8339
        %11035 = vmatpush2.bf16.msra.mxu0 %v8338
        %11036 = vmatprep.subr.bf16.mxu0 %v8335
        %11037 = vmatpush2.bf16.msra.mxu0 %v8334
        %11038 = vmatprep.subr.bf16.mxu0 %v8331
        %11039 = vmatpush2.bf16.msra.mxu0 %v8330
        %11040 = vmatprep.subr.bf16.mxu0 %v8327
        %11041 = vmatpush2.bf16.msra.mxu0 %v8326
        %11042 = vmatprep.subr.bf16.mxu0 %v8323
        %11043 = vmatpush2.bf16.msra.mxu0 %v8322
        %11044 = vmatprep.subr.bf16.mxu0 %v8319
        %11045 = vmatpush2.bf16.msra.mxu0 %v8318
        %11046 = vmatprep.subr.bf16.mxu0 %v8315
        %11047 = vmatpush2.bf16.msra.mxu0 %v8314
        %11048 = vmatprep.subr.bf16.mxu0 %v8311
        %11049 = vmatpush2.bf16.msra.mxu0 %v8310
        %11050 = vmatprep.mubr.bf16.mxu0 %v589
        %11051 = vmatmul.mubr.bf16.gmra.mxu0 %v588
        %v11052 = vpop.f32.mrf.mxu0
        %v11053 = vadd.f32 %v11012, %v11052
        %v11054 = vpop.f32.mrf.mxu0
        %v11055 = vadd.f32 %v11014, %v11054
        %v11056 = vpop.f32.mrf.mxu0
        %v11057 = vpop.f32.mrf.mxu0
        %11058 = vdwg.mxu0
        %11059 = vmatprep.subr.bf16.mxu0 %v8371
        %11060 = vmatpush1.bf16.msra.mxu0 %v8370
        %11061 = vmatprep.subr.bf16.mxu0 %v8367
        %11062 = vmatpush1.bf16.msra.mxu0 %v8366
        %11063 = vmatprep.subr.bf16.mxu0 %v8363
        %11064 = vmatpush1.bf16.msra.mxu0 %v8362
        %11065 = vmatprep.subr.bf16.mxu0 %v8359
        %11066 = vmatpush1.bf16.msra.mxu0 %v8358
        %11067 = vmatprep.subr.bf16.mxu0 %v8355
        %11068 = vmatpush1.bf16.msra.mxu0 %v8354
        %11069 = vmatprep.subr.bf16.mxu0 %v8351
        %11070 = vmatpush1.bf16.msra.mxu0 %v8350
        %11071 = vmatprep.subr.bf16.mxu0 %v8347
        %11072 = vmatpush1.bf16.msra.mxu0 %v8346
        %11073 = vmatprep.subr.bf16.mxu0 %v8343
        %11074 = vmatpush1.bf16.msra.mxu0 %v8342
        %11075 = vmatprep.subr.bf16.mxu0 %v8403
        %11076 = vmatpush2.bf16.msra.mxu0 %v8402
        %11077 = vmatprep.subr.bf16.mxu0 %v8399
        %11078 = vmatpush2.bf16.msra.mxu0 %v8398
        %11079 = vmatprep.subr.bf16.mxu0 %v8395
        %11080 = vmatpush2.bf16.msra.mxu0 %v8394
        %11081 = vmatprep.subr.bf16.mxu0 %v8391
        %11082 = vmatpush2.bf16.msra.mxu0 %v8390
        %11083 = vmatprep.subr.bf16.mxu0 %v8387
        %11084 = vmatpush2.bf16.msra.mxu0 %v8386
        %11085 = vmatprep.subr.bf16.mxu0 %v8383
        %11086 = vmatpush2.bf16.msra.mxu0 %v8382
        %11087 = vmatprep.subr.bf16.mxu0 %v8379
        %11088 = vmatpush2.bf16.msra.mxu0 %v8378
        %11089 = vmatprep.subr.bf16.mxu0 %v8375
        %11090 = vmatpush2.bf16.msra.mxu0 %v8374
        %11091 = vmatprep.mubr.bf16.mxu0 %v591
        %11092 = vmatmul.mubr.bf16.gmra.mxu0 %v590
        %v11093 = vpop.f32.mrf.mxu0
        %v11094 = vadd.f32 %v11053, %v11093
        %v11095 = vpop.f32.mrf.mxu0
        %v11096 = vadd.f32 %v11055, %v11095
        %v11097 = vpop.f32.mrf.mxu0
        %v11098 = vpop.f32.mrf.mxu0
        %11099 = vdwg.mxu0
        %11100 = vmatprep.subr.bf16.mxu0 %v8435
        %11101 = vmatpush1.bf16.msra.mxu0 %v8434
        %11102 = vmatprep.subr.bf16.mxu0 %v8431
        %11103 = vmatpush1.bf16.msra.mxu0 %v8430
        %11104 = vmatprep.subr.bf16.mxu0 %v8427
        %11105 = vmatpush1.bf16.msra.mxu0 %v8426
        %11106 = vmatprep.subr.bf16.mxu0 %v8423
        %11107 = vmatpush1.bf16.msra.mxu0 %v8422
        %11108 = vmatprep.subr.bf16.mxu0 %v8419
        %11109 = vmatpush1.bf16.msra.mxu0 %v8418
        %11110 = vmatprep.subr.bf16.mxu0 %v8415
        %11111 = vmatpush1.bf16.msra.mxu0 %v8414
        %11112 = vmatprep.subr.bf16.mxu0 %v8411
        %11113 = vmatpush1.bf16.msra.mxu0 %v8410
        %11114 = vmatprep.subr.bf16.mxu0 %v8407
        %11115 = vmatpush1.bf16.msra.mxu0 %v8406
        %11116 = vmatprep.subr.bf16.mxu0 %v8467
        %11117 = vmatpush2.bf16.msra.mxu0 %v8466
        %11118 = vmatprep.subr.bf16.mxu0 %v8463
        %11119 = vmatpush2.bf16.msra.mxu0 %v8462
        %11120 = vmatprep.subr.bf16.mxu0 %v8459
        %11121 = vmatpush2.bf16.msra.mxu0 %v8458
        %11122 = vmatprep.subr.bf16.mxu0 %v8455
        %11123 = vmatpush2.bf16.msra.mxu0 %v8454
        %11124 = vmatprep.subr.bf16.mxu0 %v8451
        %11125 = vmatpush2.bf16.msra.mxu0 %v8450
        %11126 = vmatprep.subr.bf16.mxu0 %v8447
        %11127 = vmatpush2.bf16.msra.mxu0 %v8446
        %11128 = vmatprep.subr.bf16.mxu0 %v8443
        %11129 = vmatpush2.bf16.msra.mxu0 %v8442
        %11130 = vmatprep.subr.bf16.mxu0 %v8439
        %11131 = vmatpush2.bf16.msra.mxu0 %v8438
        %11132 = vmatprep.mubr.bf16.mxu0 %v593
        %11133 = vmatmul.mubr.bf16.gmra.mxu0 %v592
        %v11134 = vpop.f32.mrf.mxu0
        %v11135 = vadd.f32 %v11094, %v11134
        %v11136 = vpop.f32.mrf.mxu0
        %v11137 = vadd.f32 %v11096, %v11136
        %v11138 = vpop.f32.mrf.mxu0
        %v11139 = vpop.f32.mrf.mxu0
        %11140 = vdwg.mxu0
        %11141 = vmatprep.subr.bf16.mxu0 %v8499
        %11142 = vmatpush1.bf16.msra.mxu0 %v8498
        %11143 = vmatprep.subr.bf16.mxu0 %v8495
        %11144 = vmatpush1.bf16.msra.mxu0 %v8494
        %11145 = vmatprep.subr.bf16.mxu0 %v8491
        %11146 = vmatpush1.bf16.msra.mxu0 %v8490
        %11147 = vmatprep.subr.bf16.mxu0 %v8487
        %11148 = vmatpush1.bf16.msra.mxu0 %v8486
        %11149 = vmatprep.subr.bf16.mxu0 %v8483
        %11150 = vmatpush1.bf16.msra.mxu0 %v8482
        %11151 = vmatprep.subr.bf16.mxu0 %v8479
        %11152 = vmatpush1.bf16.msra.mxu0 %v8478
        %11153 = vmatprep.subr.bf16.mxu0 %v8475
        %11154 = vmatpush1.bf16.msra.mxu0 %v8474
        %11155 = vmatprep.subr.bf16.mxu0 %v8471
        %11156 = vmatpush1.bf16.msra.mxu0 %v8470
        %11157 = vmatprep.subr.bf16.mxu0 %v8531
        %11158 = vmatpush2.bf16.msra.mxu0 %v8530
        %11159 = vmatprep.subr.bf16.mxu0 %v8527
        %11160 = vmatpush2.bf16.msra.mxu0 %v8526
        %11161 = vmatprep.subr.bf16.mxu0 %v8523
        %11162 = vmatpush2.bf16.msra.mxu0 %v8522
        %11163 = vmatprep.subr.bf16.mxu0 %v8519
        %11164 = vmatpush2.bf16.msra.mxu0 %v8518
        %11165 = vmatprep.subr.bf16.mxu0 %v8515
        %11166 = vmatpush2.bf16.msra.mxu0 %v8514
        %11167 = vmatprep.subr.bf16.mxu0 %v8511
        %11168 = vmatpush2.bf16.msra.mxu0 %v8510
        %11169 = vmatprep.subr.bf16.mxu0 %v8507
        %11170 = vmatpush2.bf16.msra.mxu0 %v8506
        %11171 = vmatprep.subr.bf16.mxu0 %v8503
        %11172 = vmatpush2.bf16.msra.mxu0 %v8502
        %11173 = vmatprep.mubr.bf16.mxu0 %v595
        %11174 = vmatmul.mubr.bf16.gmra.mxu0 %v594
        %v11175 = vpop.f32.mrf.mxu0
        %v11176 = vadd.f32 %v11135, %v11175
        %v11177 = vpop.f32.mrf.mxu0
        %v11178 = vadd.f32 %v11137, %v11177
        %v11179 = vpop.f32.mrf.mxu0
        %v11180 = vpop.f32.mrf.mxu0
        %11181 = vdwg.mxu0
        %11182 = vmatprep.subr.bf16.mxu0 %v8563
        %11183 = vmatpush1.bf16.msra.mxu0 %v8562
        %11184 = vmatprep.subr.bf16.mxu0 %v8559
        %11185 = vmatpush1.bf16.msra.mxu0 %v8558
        %11186 = vmatprep.subr.bf16.mxu0 %v8555
        %11187 = vmatpush1.bf16.msra.mxu0 %v8554
        %11188 = vmatprep.subr.bf16.mxu0 %v8551
        %11189 = vmatpush1.bf16.msra.mxu0 %v8550
        %11190 = vmatprep.subr.bf16.mxu0 %v8547
        %11191 = vmatpush1.bf16.msra.mxu0 %v8546
        %11192 = vmatprep.subr.bf16.mxu0 %v8543
        %11193 = vmatpush1.bf16.msra.mxu0 %v8542
        %11194 = vmatprep.subr.bf16.mxu0 %v8539
        %11195 = vmatpush1.bf16.msra.mxu0 %v8538
        %11196 = vmatprep.subr.bf16.mxu0 %v8535
        %11197 = vmatpush1.bf16.msra.mxu0 %v8534
        %11198 = vmatprep.subr.bf16.mxu0 %v8595
        %11199 = vmatpush2.bf16.msra.mxu0 %v8594
        %11200 = vmatprep.subr.bf16.mxu0 %v8591
        %11201 = vmatpush2.bf16.msra.mxu0 %v8590
        %11202 = vmatprep.subr.bf16.mxu0 %v8587
        %11203 = vmatpush2.bf16.msra.mxu0 %v8586
        %11204 = vmatprep.subr.bf16.mxu0 %v8583
        %11205 = vmatpush2.bf16.msra.mxu0 %v8582
        %11206 = vmatprep.subr.bf16.mxu0 %v8579
        %11207 = vmatpush2.bf16.msra.mxu0 %v8578
        %11208 = vmatprep.subr.bf16.mxu0 %v8575
        %11209 = vmatpush2.bf16.msra.mxu0 %v8574
        %11210 = vmatprep.subr.bf16.mxu0 %v8571
        %11211 = vmatpush2.bf16.msra.mxu0 %v8570
        %11212 = vmatprep.subr.bf16.mxu0 %v8567
        %11213 = vmatpush2.bf16.msra.mxu0 %v8566
        %11214 = vmatprep.mubr.bf16.mxu0 %v597
        %11215 = vmatmul.mubr.bf16.gmra.mxu0 %v596
        %v11216 = vpop.f32.mrf.mxu0
        %v11217 = vadd.f32 %v11176, %v11216
        %v11218 = vpop.f32.mrf.mxu0
        %v11219 = vadd.f32 %v11178, %v11218
        %v11220 = vpop.f32.mrf.mxu0
        %v11221 = vpop.f32.mrf.mxu0
        %11222 = vdwg.mxu0
        %11223 = vmatprep.subr.bf16.mxu0 %v7029
        %11224 = vmatpush1.bf16.msra.mxu0 %v7028
        %11225 = vmatprep.subr.bf16.mxu0 %v7025
        %11226 = vmatpush1.bf16.msra.mxu0 %v7024
        %11227 = vmatprep.subr.bf16.mxu0 %v7021
        %11228 = vmatpush1.bf16.msra.mxu0 %v7020
        %11229 = vmatprep.subr.bf16.mxu0 %v7017
        %11230 = vmatpush1.bf16.msra.mxu0 %v7016
        %11231 = vmatprep.subr.bf16.mxu0 %v7013
        %11232 = vmatpush1.bf16.msra.mxu0 %v7012
        %11233 = vmatprep.subr.bf16.mxu0 %v7009
        %11234 = vmatpush1.bf16.msra.mxu0 %v7008
        %11235 = vmatprep.subr.bf16.mxu0 %v7005
        %11236 = vmatpush1.bf16.msra.mxu0 %v7004
        %11237 = vmatprep.subr.bf16.mxu0 %v7001
        %11238 = vmatpush1.bf16.msra.mxu0 %v7000
        %11239 = vmatprep.subr.bf16.mxu0 %v7061
        %11240 = vmatpush2.bf16.msra.mxu0 %v7060
        %11241 = vmatprep.subr.bf16.mxu0 %v7057
        %11242 = vmatpush2.bf16.msra.mxu0 %v7056
        %11243 = vmatprep.subr.bf16.mxu0 %v7053
        %11244 = vmatpush2.bf16.msra.mxu0 %v7052
        %11245 = vmatprep.subr.bf16.mxu0 %v7049
        %11246 = vmatpush2.bf16.msra.mxu0 %v7048
        %11247 = vmatprep.subr.bf16.mxu0 %v7045
        %11248 = vmatpush2.bf16.msra.mxu0 %v7044
        %11249 = vmatprep.subr.bf16.mxu0 %v7041
        %11250 = vmatpush2.bf16.msra.mxu0 %v7040
        %11251 = vmatprep.subr.bf16.mxu0 %v7037
        %11252 = vmatpush2.bf16.msra.mxu0 %v7036
        %11253 = vmatprep.subr.bf16.mxu0 %v7033
        %11254 = vmatpush2.bf16.msra.mxu0 %v7032
        %11255 = vmatprep.mubr.bf16.mxu0 %v549
        %11256 = vmatmul.mubr.bf16.gmra.mxu0 %v548
        %v11257 = vpop.f32.mrf.mxu0
        %v11258 = vadd.f32 0.0, %v11257
        %v11259 = vpop.f32.mrf.mxu0
        %v11260 = vadd.f32 0.0, %v11259
        %v11261 = vpop.f32.mrf.mxu0
        %v11262 = vpop.f32.mrf.mxu0
        %11263 = vdwg.mxu0
        %11264 = vmatprep.subr.bf16.mxu0 %v7093
        %11265 = vmatpush1.bf16.msra.mxu0 %v7092
        %11266 = vmatprep.subr.bf16.mxu0 %v7089
        %11267 = vmatpush1.bf16.msra.mxu0 %v7088
        %11268 = vmatprep.subr.bf16.mxu0 %v7085
        %11269 = vmatpush1.bf16.msra.mxu0 %v7084
        %11270 = vmatprep.subr.bf16.mxu0 %v7081
        %11271 = vmatpush1.bf16.msra.mxu0 %v7080
        %11272 = vmatprep.subr.bf16.mxu0 %v7077
        %11273 = vmatpush1.bf16.msra.mxu0 %v7076
        %11274 = vmatprep.subr.bf16.mxu0 %v7073
        %11275 = vmatpush1.bf16.msra.mxu0 %v7072
        %11276 = vmatprep.subr.bf16.mxu0 %v7069
        %11277 = vmatpush1.bf16.msra.mxu0 %v7068
        %11278 = vmatprep.subr.bf16.mxu0 %v7065
        %11279 = vmatpush1.bf16.msra.mxu0 %v7064
        %11280 = vmatprep.subr.bf16.mxu0 %v7125
        %11281 = vmatpush2.bf16.msra.mxu0 %v7124
        %11282 = vmatprep.subr.bf16.mxu0 %v7121
        %11283 = vmatpush2.bf16.msra.mxu0 %v7120
        %11284 = vmatprep.subr.bf16.mxu0 %v7117
        %11285 = vmatpush2.bf16.msra.mxu0 %v7116
        %11286 = vmatprep.subr.bf16.mxu0 %v7113
        %11287 = vmatpush2.bf16.msra.mxu0 %v7112
        %11288 = vmatprep.subr.bf16.mxu0 %v7109
        %11289 = vmatpush2.bf16.msra.mxu0 %v7108
        %11290 = vmatprep.subr.bf16.mxu0 %v7105
        %11291 = vmatpush2.bf16.msra.mxu0 %v7104
        %11292 = vmatprep.subr.bf16.mxu0 %v7101
        %11293 = vmatpush2.bf16.msra.mxu0 %v7100
        %11294 = vmatprep.subr.bf16.mxu0 %v7097
        %11295 = vmatpush2.bf16.msra.mxu0 %v7096
        %11296 = vmatprep.mubr.bf16.mxu0 %v551
        %11297 = vmatmul.mubr.bf16.gmra.mxu0 %v550
        %v11298 = vpop.f32.mrf.mxu0
        %v11299 = vadd.f32 %v11258, %v11298
        %v11300 = vpop.f32.mrf.mxu0
        %v11301 = vadd.f32 %v11260, %v11300
        %v11302 = vpop.f32.mrf.mxu0
        %v11303 = vpop.f32.mrf.mxu0
        %11304 = vdwg.mxu0
        %11305 = vmatprep.subr.bf16.mxu0 %v7157
        %11306 = vmatpush1.bf16.msra.mxu0 %v7156
        %11307 = vmatprep.subr.bf16.mxu0 %v7153
        %11308 = vmatpush1.bf16.msra.mxu0 %v7152
        %11309 = vmatprep.subr.bf16.mxu0 %v7149
        %11310 = vmatpush1.bf16.msra.mxu0 %v7148
        %11311 = vmatprep.subr.bf16.mxu0 %v7145
        %11312 = vmatpush1.bf16.msra.mxu0 %v7144
        %11313 = vmatprep.subr.bf16.mxu0 %v7141
        %11314 = vmatpush1.bf16.msra.mxu0 %v7140
        %11315 = vmatprep.subr.bf16.mxu0 %v7137
        %11316 = vmatpush1.bf16.msra.mxu0 %v7136
        %11317 = vmatprep.subr.bf16.mxu0 %v7133
        %11318 = vmatpush1.bf16.msra.mxu0 %v7132
        %11319 = vmatprep.subr.bf16.mxu0 %v7129
        %11320 = vmatpush1.bf16.msra.mxu0 %v7128
        %11321 = vmatprep.subr.bf16.mxu0 %v7189
        %11322 = vmatpush2.bf16.msra.mxu0 %v7188
        %11323 = vmatprep.subr.bf16.mxu0 %v7185
        %11324 = vmatpush2.bf16.msra.mxu0 %v7184
        %11325 = vmatprep.subr.bf16.mxu0 %v7181
        %11326 = vmatpush2.bf16.msra.mxu0 %v7180
        %11327 = vmatprep.subr.bf16.mxu0 %v7177
        %11328 = vmatpush2.bf16.msra.mxu0 %v7176
        %11329 = vmatprep.subr.bf16.mxu0 %v7173
        %11330 = vmatpush2.bf16.msra.mxu0 %v7172
        %11331 = vmatprep.subr.bf16.mxu0 %v7169
        %11332 = vmatpush2.bf16.msra.mxu0 %v7168
        %11333 = vmatprep.subr.bf16.mxu0 %v7165
        %11334 = vmatpush2.bf16.msra.mxu0 %v7164
        %11335 = vmatprep.subr.bf16.mxu0 %v7161
        %11336 = vmatpush2.bf16.msra.mxu0 %v7160
        %11337 = vmatprep.mubr.bf16.mxu0 %v553
        %11338 = vmatmul.mubr.bf16.gmra.mxu0 %v552
        %v11339 = vpop.f32.mrf.mxu0
        %v11340 = vadd.f32 %v11299, %v11339
        %v11341 = vpop.f32.mrf.mxu0
        %v11342 = vadd.f32 %v11301, %v11341
        %v11343 = vpop.f32.mrf.mxu0
        %v11344 = vpop.f32.mrf.mxu0
        %11345 = vdwg.mxu0
        %11346 = vmatprep.subr.bf16.mxu0 %v7221
        %11347 = vmatpush1.bf16.msra.mxu0 %v7220
        %11348 = vmatprep.subr.bf16.mxu0 %v7217
        %11349 = vmatpush1.bf16.msra.mxu0 %v7216
        %11350 = vmatprep.subr.bf16.mxu0 %v7213
        %11351 = vmatpush1.bf16.msra.mxu0 %v7212
        %11352 = vmatprep.subr.bf16.mxu0 %v7209
        %11353 = vmatpush1.bf16.msra.mxu0 %v7208
        %11354 = vmatprep.subr.bf16.mxu0 %v7205
        %11355 = vmatpush1.bf16.msra.mxu0 %v7204
        %11356 = vmatprep.subr.bf16.mxu0 %v7201
        %11357 = vmatpush1.bf16.msra.mxu0 %v7200
        %11358 = vmatprep.subr.bf16.mxu0 %v7197
        %11359 = vmatpush1.bf16.msra.mxu0 %v7196
        %11360 = vmatprep.subr.bf16.mxu0 %v7193
        %11361 = vmatpush1.bf16.msra.mxu0 %v7192
        %11362 = vmatprep.subr.bf16.mxu0 %v7253
        %11363 = vmatpush2.bf16.msra.mxu0 %v7252
        %11364 = vmatprep.subr.bf16.mxu0 %v7249
        %11365 = vmatpush2.bf16.msra.mxu0 %v7248
        %11366 = vmatprep.subr.bf16.mxu0 %v7245
        %11367 = vmatpush2.bf16.msra.mxu0 %v7244
        %11368 = vmatprep.subr.bf16.mxu0 %v7241
        %11369 = vmatpush2.bf16.msra.mxu0 %v7240
        %11370 = vmatprep.subr.bf16.mxu0 %v7237
        %11371 = vmatpush2.bf16.msra.mxu0 %v7236
        %11372 = vmatprep.subr.bf16.mxu0 %v7233
        %11373 = vmatpush2.bf16.msra.mxu0 %v7232
        %11374 = vmatprep.subr.bf16.mxu0 %v7229
        %11375 = vmatpush2.bf16.msra.mxu0 %v7228
        %11376 = vmatprep.subr.bf16.mxu0 %v7225
        %11377 = vmatpush2.bf16.msra.mxu0 %v7224
        %11378 = vmatprep.mubr.bf16.mxu0 %v555
        %11379 = vmatmul.mubr.bf16.gmra.mxu0 %v554
        %v11380 = vpop.f32.mrf.mxu0
        %v11381 = vadd.f32 %v11340, %v11380
        %v11382 = vpop.f32.mrf.mxu0
        %v11383 = vadd.f32 %v11342, %v11382
        %v11384 = vpop.f32.mrf.mxu0
        %v11385 = vpop.f32.mrf.mxu0
        %11386 = vdwg.mxu0
        %11387 = vmatprep.subr.bf16.mxu0 %v7285
        %11388 = vmatpush1.bf16.msra.mxu0 %v7284
        %11389 = vmatprep.subr.bf16.mxu0 %v7281
        %11390 = vmatpush1.bf16.msra.mxu0 %v7280
        %11391 = vmatprep.subr.bf16.mxu0 %v7277
        %11392 = vmatpush1.bf16.msra.mxu0 %v7276
        %11393 = vmatprep.subr.bf16.mxu0 %v7273
        %11394 = vmatpush1.bf16.msra.mxu0 %v7272
        %11395 = vmatprep.subr.bf16.mxu0 %v7269
        %11396 = vmatpush1.bf16.msra.mxu0 %v7268
        %11397 = vmatprep.subr.bf16.mxu0 %v7265
        %11398 = vmatpush1.bf16.msra.mxu0 %v7264
        %11399 = vmatprep.subr.bf16.mxu0 %v7261
        %11400 = vmatpush1.bf16.msra.mxu0 %v7260
        %11401 = vmatprep.subr.bf16.mxu0 %v7257
        %11402 = vmatpush1.bf16.msra.mxu0 %v7256
        %11403 = vmatprep.subr.bf16.mxu0 %v7317
        %11404 = vmatpush2.bf16.msra.mxu0 %v7316
        %11405 = vmatprep.subr.bf16.mxu0 %v7313
        %11406 = vmatpush2.bf16.msra.mxu0 %v7312
        %11407 = vmatprep.subr.bf16.mxu0 %v7309
        %11408 = vmatpush2.bf16.msra.mxu0 %v7308
        %11409 = vmatprep.subr.bf16.mxu0 %v7305
        %11410 = vmatpush2.bf16.msra.mxu0 %v7304
        %11411 = vmatprep.subr.bf16.mxu0 %v7301
        %11412 = vmatpush2.bf16.msra.mxu0 %v7300
        %11413 = vmatprep.subr.bf16.mxu0 %v7297
        %11414 = vmatpush2.bf16.msra.mxu0 %v7296
        %11415 = vmatprep.subr.bf16.mxu0 %v7293
        %11416 = vmatpush2.bf16.msra.mxu0 %v7292
        %11417 = vmatprep.subr.bf16.mxu0 %v7289
        %11418 = vmatpush2.bf16.msra.mxu0 %v7288
        %11419 = vmatprep.mubr.bf16.mxu0 %v557
        %11420 = vmatmul.mubr.bf16.gmra.mxu0 %v556
        %v11421 = vpop.f32.mrf.mxu0
        %v11422 = vadd.f32 %v11381, %v11421
        %v11423 = vpop.f32.mrf.mxu0
        %v11424 = vadd.f32 %v11383, %v11423
        %v11425 = vpop.f32.mrf.mxu0
        %v11426 = vpop.f32.mrf.mxu0
        %11427 = vdwg.mxu0
        %11428 = vmatprep.subr.bf16.mxu0 %v7349
        %11429 = vmatpush1.bf16.msra.mxu0 %v7348
        %11430 = vmatprep.subr.bf16.mxu0 %v7345
        %11431 = vmatpush1.bf16.msra.mxu0 %v7344
        %11432 = vmatprep.subr.bf16.mxu0 %v7341
        %11433 = vmatpush1.bf16.msra.mxu0 %v7340
        %11434 = vmatprep.subr.bf16.mxu0 %v7337
        %11435 = vmatpush1.bf16.msra.mxu0 %v7336
        %11436 = vmatprep.subr.bf16.mxu0 %v7333
        %11437 = vmatpush1.bf16.msra.mxu0 %v7332
        %11438 = vmatprep.subr.bf16.mxu0 %v7329
        %11439 = vmatpush1.bf16.msra.mxu0 %v7328
        %11440 = vmatprep.subr.bf16.mxu0 %v7325
        %11441 = vmatpush1.bf16.msra.mxu0 %v7324
        %11442 = vmatprep.subr.bf16.mxu0 %v7321
        %11443 = vmatpush1.bf16.msra.mxu0 %v7320
        %11444 = vmatprep.subr.bf16.mxu0 %v7381
        %11445 = vmatpush2.bf16.msra.mxu0 %v7380
        %11446 = vmatprep.subr.bf16.mxu0 %v7377
        %11447 = vmatpush2.bf16.msra.mxu0 %v7376
        %11448 = vmatprep.subr.bf16.mxu0 %v7373
        %11449 = vmatpush2.bf16.msra.mxu0 %v7372
        %11450 = vmatprep.subr.bf16.mxu0 %v7369
        %11451 = vmatpush2.bf16.msra.mxu0 %v7368
        %11452 = vmatprep.subr.bf16.mxu0 %v7365
        %11453 = vmatpush2.bf16.msra.mxu0 %v7364
        %11454 = vmatprep.subr.bf16.mxu0 %v7361
        %11455 = vmatpush2.bf16.msra.mxu0 %v7360
        %11456 = vmatprep.subr.bf16.mxu0 %v7357
        %11457 = vmatpush2.bf16.msra.mxu0 %v7356
        %11458 = vmatprep.subr.bf16.mxu0 %v7353
        %11459 = vmatpush2.bf16.msra.mxu0 %v7352
        %11460 = vmatprep.mubr.bf16.mxu0 %v559
        %11461 = vmatmul.mubr.bf16.gmra.mxu0 %v558
        %v11462 = vpop.f32.mrf.mxu0
        %v11463 = vadd.f32 %v11422, %v11462
        %v11464 = vpop.f32.mrf.mxu0
        %v11465 = vadd.f32 %v11424, %v11464
        %v11466 = vpop.f32.mrf.mxu0
        %v11467 = vpop.f32.mrf.mxu0
        %11468 = vdwg.mxu0
        %11469 = vmatprep.subr.bf16.mxu0 %v7413
        %11470 = vmatpush1.bf16.msra.mxu0 %v7412
        %11471 = vmatprep.subr.bf16.mxu0 %v7409
        %11472 = vmatpush1.bf16.msra.mxu0 %v7408
        %11473 = vmatprep.subr.bf16.mxu0 %v7405
        %11474 = vmatpush1.bf16.msra.mxu0 %v7404
        %11475 = vmatprep.subr.bf16.mxu0 %v7401
        %11476 = vmatpush1.bf16.msra.mxu0 %v7400
        %11477 = vmatprep.subr.bf16.mxu0 %v7397
        %11478 = vmatpush1.bf16.msra.mxu0 %v7396
        %11479 = vmatprep.subr.bf16.mxu0 %v7393
        %11480 = vmatpush1.bf16.msra.mxu0 %v7392
        %11481 = vmatprep.subr.bf16.mxu0 %v7389
        %11482 = vmatpush1.bf16.msra.mxu0 %v7388
        %11483 = vmatprep.subr.bf16.mxu0 %v7385
        %11484 = vmatpush1.bf16.msra.mxu0 %v7384
        %11485 = vmatprep.subr.bf16.mxu0 %v7445
        %11486 = vmatpush2.bf16.msra.mxu0 %v7444
        %11487 = vmatprep.subr.bf16.mxu0 %v7441
        %11488 = vmatpush2.bf16.msra.mxu0 %v7440
        %11489 = vmatprep.subr.bf16.mxu0 %v7437
        %11490 = vmatpush2.bf16.msra.mxu0 %v7436
        %11491 = vmatprep.subr.bf16.mxu0 %v7433
        %11492 = vmatpush2.bf16.msra.mxu0 %v7432
        %11493 = vmatprep.subr.bf16.mxu0 %v7429
        %11494 = vmatpush2.bf16.msra.mxu0 %v7428
        %11495 = vmatprep.subr.bf16.mxu0 %v7425
        %11496 = vmatpush2.bf16.msra.mxu0 %v7424
        %11497 = vmatprep.subr.bf16.mxu0 %v7421
        %11498 = vmatpush2.bf16.msra.mxu0 %v7420
        %11499 = vmatprep.subr.bf16.mxu0 %v7417
        %11500 = vmatpush2.bf16.msra.mxu0 %v7416
        %11501 = vmatprep.mubr.bf16.mxu0 %v561
        %11502 = vmatmul.mubr.bf16.gmra.mxu0 %v560
        %v11503 = vpop.f32.mrf.mxu0
        %v11504 = vadd.f32 %v11463, %v11503
        %v11505 = vpop.f32.mrf.mxu0
        %v11506 = vadd.f32 %v11465, %v11505
        %v11507 = vpop.f32.mrf.mxu0
        %v11508 = vpop.f32.mrf.mxu0
        %11509 = vdwg.mxu0
        %11510 = vmatprep.subr.bf16.mxu0 %v7477
        %11511 = vmatpush1.bf16.msra.mxu0 %v7476
        %11512 = vmatprep.subr.bf16.mxu0 %v7473
        %11513 = vmatpush1.bf16.msra.mxu0 %v7472
        %11514 = vmatprep.subr.bf16.mxu0 %v7469
        %11515 = vmatpush1.bf16.msra.mxu0 %v7468
        %11516 = vmatprep.subr.bf16.mxu0 %v7465
        %11517 = vmatpush1.bf16.msra.mxu0 %v7464
        %11518 = vmatprep.subr.bf16.mxu0 %v7461
        %11519 = vmatpush1.bf16.msra.mxu0 %v7460
        %11520 = vmatprep.subr.bf16.mxu0 %v7457
        %11521 = vmatpush1.bf16.msra.mxu0 %v7456
        %11522 = vmatprep.subr.bf16.mxu0 %v7453
        %11523 = vmatpush1.bf16.msra.mxu0 %v7452
        %11524 = vmatprep.subr.bf16.mxu0 %v7449
        %11525 = vmatpush1.bf16.msra.mxu0 %v7448
        %11526 = vmatprep.subr.bf16.mxu0 %v7509
        %11527 = vmatpush2.bf16.msra.mxu0 %v7508
        %11528 = vmatprep.subr.bf16.mxu0 %v7505
        %11529 = vmatpush2.bf16.msra.mxu0 %v7504
        %11530 = vmatprep.subr.bf16.mxu0 %v7501
        %11531 = vmatpush2.bf16.msra.mxu0 %v7500
        %11532 = vmatprep.subr.bf16.mxu0 %v7497
        %11533 = vmatpush2.bf16.msra.mxu0 %v7496
        %11534 = vmatprep.subr.bf16.mxu0 %v7493
        %11535 = vmatpush2.bf16.msra.mxu0 %v7492
        %11536 = vmatprep.subr.bf16.mxu0 %v7489
        %11537 = vmatpush2.bf16.msra.mxu0 %v7488
        %11538 = vmatprep.subr.bf16.mxu0 %v7485
        %11539 = vmatpush2.bf16.msra.mxu0 %v7484
        %11540 = vmatprep.subr.bf16.mxu0 %v7481
        %11541 = vmatpush2.bf16.msra.mxu0 %v7480
        %11542 = vmatprep.mubr.bf16.mxu0 %v563
        %11543 = vmatmul.mubr.bf16.gmra.mxu0 %v562
        %v11544 = vpop.f32.mrf.mxu0
        %v11545 = vadd.f32 %v11504, %v11544
        %v11546 = vpop.f32.mrf.mxu0
        %v11547 = vadd.f32 %v11506, %v11546
        %v11548 = vpop.f32.mrf.mxu0
        %v11549 = vpop.f32.mrf.mxu0
        %11550 = vdwg.mxu0
        %11551 = vmatprep.subr.bf16.mxu0 %v7541
        %11552 = vmatpush1.bf16.msra.mxu0 %v7540
        %11553 = vmatprep.subr.bf16.mxu0 %v7537
        %11554 = vmatpush1.bf16.msra.mxu0 %v7536
        %11555 = vmatprep.subr.bf16.mxu0 %v7533
        %11556 = vmatpush1.bf16.msra.mxu0 %v7532
        %11557 = vmatprep.subr.bf16.mxu0 %v7529
        %11558 = vmatpush1.bf16.msra.mxu0 %v7528
        %11559 = vmatprep.subr.bf16.mxu0 %v7525
        %11560 = vmatpush1.bf16.msra.mxu0 %v7524
        %11561 = vmatprep.subr.bf16.mxu0 %v7521
        %11562 = vmatpush1.bf16.msra.mxu0 %v7520
        %11563 = vmatprep.subr.bf16.mxu0 %v7517
        %11564 = vmatpush1.bf16.msra.mxu0 %v7516
        %11565 = vmatprep.subr.bf16.mxu0 %v7513
        %11566 = vmatpush1.bf16.msra.mxu0 %v7512
        %11567 = vmatprep.subr.bf16.mxu0 %v7573
        %11568 = vmatpush2.bf16.msra.mxu0 %v7572
        %11569 = vmatprep.subr.bf16.mxu0 %v7569
        %11570 = vmatpush2.bf16.msra.mxu0 %v7568
        %11571 = vmatprep.subr.bf16.mxu0 %v7565
        %11572 = vmatpush2.bf16.msra.mxu0 %v7564
        %11573 = vmatprep.subr.bf16.mxu0 %v7561
        %11574 = vmatpush2.bf16.msra.mxu0 %v7560
        %11575 = vmatprep.subr.bf16.mxu0 %v7557
        %11576 = vmatpush2.bf16.msra.mxu0 %v7556
        %11577 = vmatprep.subr.bf16.mxu0 %v7553
        %11578 = vmatpush2.bf16.msra.mxu0 %v7552
        %11579 = vmatprep.subr.bf16.mxu0 %v7549
        %11580 = vmatpush2.bf16.msra.mxu0 %v7548
        %11581 = vmatprep.subr.bf16.mxu0 %v7545
        %11582 = vmatpush2.bf16.msra.mxu0 %v7544
        %11583 = vmatprep.mubr.bf16.mxu0 %v565
        %11584 = vmatmul.mubr.bf16.gmra.mxu0 %v564
        %v11585 = vpop.f32.mrf.mxu0
        %v11586 = vadd.f32 %v11545, %v11585
        %v11587 = vpop.f32.mrf.mxu0
        %v11588 = vadd.f32 %v11547, %v11587
        %v11589 = vpop.f32.mrf.mxu0
        %v11590 = vpop.f32.mrf.mxu0
        %11591 = vdwg.mxu0
        %11592 = vmatprep.subr.bf16.mxu0 %v7605
        %11593 = vmatpush1.bf16.msra.mxu0 %v7604
        %11594 = vmatprep.subr.bf16.mxu0 %v7601
        %11595 = vmatpush1.bf16.msra.mxu0 %v7600
        %11596 = vmatprep.subr.bf16.mxu0 %v7597
        %11597 = vmatpush1.bf16.msra.mxu0 %v7596
        %11598 = vmatprep.subr.bf16.mxu0 %v7593
        %11599 = vmatpush1.bf16.msra.mxu0 %v7592
        %11600 = vmatprep.subr.bf16.mxu0 %v7589
        %11601 = vmatpush1.bf16.msra.mxu0 %v7588
        %11602 = vmatprep.subr.bf16.mxu0 %v7585
        %11603 = vmatpush1.bf16.msra.mxu0 %v7584
        %11604 = vmatprep.subr.bf16.mxu0 %v7581
        %11605 = vmatpush1.bf16.msra.mxu0 %v7580
        %11606 = vmatprep.subr.bf16.mxu0 %v7577
        %11607 = vmatpush1.bf16.msra.mxu0 %v7576
        %11608 = vmatprep.subr.bf16.mxu0 %v7637
        %11609 = vmatpush2.bf16.msra.mxu0 %v7636
        %11610 = vmatprep.subr.bf16.mxu0 %v7633
        %11611 = vmatpush2.bf16.msra.mxu0 %v7632
        %11612 = vmatprep.subr.bf16.mxu0 %v7629
        %11613 = vmatpush2.bf16.msra.mxu0 %v7628
        %11614 = vmatprep.subr.bf16.mxu0 %v7625
        %11615 = vmatpush2.bf16.msra.mxu0 %v7624
        %11616 = vmatprep.subr.bf16.mxu0 %v7621
        %11617 = vmatpush2.bf16.msra.mxu0 %v7620
        %11618 = vmatprep.subr.bf16.mxu0 %v7617
        %11619 = vmatpush2.bf16.msra.mxu0 %v7616
        %11620 = vmatprep.subr.bf16.mxu0 %v7613
        %11621 = vmatpush2.bf16.msra.mxu0 %v7612
        %11622 = vmatprep.subr.bf16.mxu0 %v7609
        %11623 = vmatpush2.bf16.msra.mxu0 %v7608
        %11624 = vmatprep.mubr.bf16.mxu0 %v567
        %11625 = vmatmul.mubr.bf16.gmra.mxu0 %v566
        %v11626 = vpop.f32.mrf.mxu0
        %v11627 = vadd.f32 %v11586, %v11626
        %v11628 = vpop.f32.mrf.mxu0
        %v11629 = vadd.f32 %v11588, %v11628
        %v11630 = vpop.f32.mrf.mxu0
        %v11631 = vpop.f32.mrf.mxu0
        %11632 = vdwg.mxu0
        %11633 = vmatprep.subr.bf16.mxu0 %v7669
        %11634 = vmatpush1.bf16.msra.mxu0 %v7668
        %11635 = vmatprep.subr.bf16.mxu0 %v7665
        %11636 = vmatpush1.bf16.msra.mxu0 %v7664
        %11637 = vmatprep.subr.bf16.mxu0 %v7661
        %11638 = vmatpush1.bf16.msra.mxu0 %v7660
        %11639 = vmatprep.subr.bf16.mxu0 %v7657
        %11640 = vmatpush1.bf16.msra.mxu0 %v7656
        %11641 = vmatprep.subr.bf16.mxu0 %v7653
        %11642 = vmatpush1.bf16.msra.mxu0 %v7652
        %11643 = vmatprep.subr.bf16.mxu0 %v7649
        %11644 = vmatpush1.bf16.msra.mxu0 %v7648
        %11645 = vmatprep.subr.bf16.mxu0 %v7645
        %11646 = vmatpush1.bf16.msra.mxu0 %v7644
        %11647 = vmatprep.subr.bf16.mxu0 %v7641
        %11648 = vmatpush1.bf16.msra.mxu0 %v7640
        %11649 = vmatprep.subr.bf16.mxu0 %v7701
        %11650 = vmatpush2.bf16.msra.mxu0 %v7700
        %11651 = vmatprep.subr.bf16.mxu0 %v7697
        %11652 = vmatpush2.bf16.msra.mxu0 %v7696
        %11653 = vmatprep.subr.bf16.mxu0 %v7693
        %11654 = vmatpush2.bf16.msra.mxu0 %v7692
        %11655 = vmatprep.subr.bf16.mxu0 %v7689
        %11656 = vmatpush2.bf16.msra.mxu0 %v7688
        %11657 = vmatprep.subr.bf16.mxu0 %v7685
        %11658 = vmatpush2.bf16.msra.mxu0 %v7684
        %11659 = vmatprep.subr.bf16.mxu0 %v7681
        %11660 = vmatpush2.bf16.msra.mxu0 %v7680
        %11661 = vmatprep.subr.bf16.mxu0 %v7677
        %11662 = vmatpush2.bf16.msra.mxu0 %v7676
        %11663 = vmatprep.subr.bf16.mxu0 %v7673
        %11664 = vmatpush2.bf16.msra.mxu0 %v7672
        %11665 = vmatprep.mubr.bf16.mxu0 %v569
        %11666 = vmatmul.mubr.bf16.gmra.mxu0 %v568
        %v11667 = vpop.f32.mrf.mxu0
        %v11668 = vadd.f32 %v11627, %v11667
        %v11669 = vpop.f32.mrf.mxu0
        %v11670 = vadd.f32 %v11629, %v11669
        %v11671 = vpop.f32.mrf.mxu0
        %v11672 = vpop.f32.mrf.mxu0
        %11673 = vdwg.mxu0
        %11674 = vmatprep.subr.bf16.mxu0 %v7733
        %11675 = vmatpush1.bf16.msra.mxu0 %v7732
        %11676 = vmatprep.subr.bf16.mxu0 %v7729
        %11677 = vmatpush1.bf16.msra.mxu0 %v7728
        %11678 = vmatprep.subr.bf16.mxu0 %v7725
        %11679 = vmatpush1.bf16.msra.mxu0 %v7724
        %11680 = vmatprep.subr.bf16.mxu0 %v7721
        %11681 = vmatpush1.bf16.msra.mxu0 %v7720
        %11682 = vmatprep.subr.bf16.mxu0 %v7717
        %11683 = vmatpush1.bf16.msra.mxu0 %v7716
        %11684 = vmatprep.subr.bf16.mxu0 %v7713
        %11685 = vmatpush1.bf16.msra.mxu0 %v7712
        %11686 = vmatprep.subr.bf16.mxu0 %v7709
        %11687 = vmatpush1.bf16.msra.mxu0 %v7708
        %11688 = vmatprep.subr.bf16.mxu0 %v7705
        %11689 = vmatpush1.bf16.msra.mxu0 %v7704
        %11690 = vmatprep.subr.bf16.mxu0 %v7765
        %11691 = vmatpush2.bf16.msra.mxu0 %v7764
        %11692 = vmatprep.subr.bf16.mxu0 %v7761
        %11693 = vmatpush2.bf16.msra.mxu0 %v7760
        %11694 = vmatprep.subr.bf16.mxu0 %v7757
        %11695 = vmatpush2.bf16.msra.mxu0 %v7756
        %11696 = vmatprep.subr.bf16.mxu0 %v7753
        %11697 = vmatpush2.bf16.msra.mxu0 %v7752
        %11698 = vmatprep.subr.bf16.mxu0 %v7749
        %11699 = vmatpush2.bf16.msra.mxu0 %v7748
        %11700 = vmatprep.subr.bf16.mxu0 %v7745
        %11701 = vmatpush2.bf16.msra.mxu0 %v7744
        %11702 = vmatprep.subr.bf16.mxu0 %v7741
        %11703 = vmatpush2.bf16.msra.mxu0 %v7740
        %11704 = vmatprep.subr.bf16.mxu0 %v7737
        %11705 = vmatpush2.bf16.msra.mxu0 %v7736
        %11706 = vmatprep.mubr.bf16.mxu0 %v571
        %11707 = vmatmul.mubr.bf16.gmra.mxu0 %v570
        %v11708 = vpop.f32.mrf.mxu0
        %v11709 = vadd.f32 %v11668, %v11708
        %v11710 = vpop.f32.mrf.mxu0
        %v11711 = vadd.f32 %v11670, %v11710
        %v11712 = vpop.f32.mrf.mxu0
        %v11713 = vpop.f32.mrf.mxu0
        %11714 = vdwg.mxu0
        %11715 = vmatprep.subr.bf16.mxu0 %v7797
        %11716 = vmatpush1.bf16.msra.mxu0 %v7796
        %11717 = vmatprep.subr.bf16.mxu0 %v7793
        %11718 = vmatpush1.bf16.msra.mxu0 %v7792
        %11719 = vmatprep.subr.bf16.mxu0 %v7789
        %11720 = vmatpush1.bf16.msra.mxu0 %v7788
        %11721 = vmatprep.subr.bf16.mxu0 %v7785
        %11722 = vmatpush1.bf16.msra.mxu0 %v7784
        %11723 = vmatprep.subr.bf16.mxu0 %v7781
        %11724 = vmatpush1.bf16.msra.mxu0 %v7780
        %11725 = vmatprep.subr.bf16.mxu0 %v7777
        %11726 = vmatpush1.bf16.msra.mxu0 %v7776
        %11727 = vmatprep.subr.bf16.mxu0 %v7773
        %11728 = vmatpush1.bf16.msra.mxu0 %v7772
        %11729 = vmatprep.subr.bf16.mxu0 %v7769
        %11730 = vmatpush1.bf16.msra.mxu0 %v7768
        %11731 = vmatprep.subr.bf16.mxu0 %v7829
        %11732 = vmatpush2.bf16.msra.mxu0 %v7828
        %11733 = vmatprep.subr.bf16.mxu0 %v7825
        %11734 = vmatpush2.bf16.msra.mxu0 %v7824
        %11735 = vmatprep.subr.bf16.mxu0 %v7821
        %11736 = vmatpush2.bf16.msra.mxu0 %v7820
        %11737 = vmatprep.subr.bf16.mxu0 %v7817
        %11738 = vmatpush2.bf16.msra.mxu0 %v7816
        %11739 = vmatprep.subr.bf16.mxu0 %v7813
        %11740 = vmatpush2.bf16.msra.mxu0 %v7812
        %11741 = vmatprep.subr.bf16.mxu0 %v7809
        %11742 = vmatpush2.bf16.msra.mxu0 %v7808
        %11743 = vmatprep.subr.bf16.mxu0 %v7805
        %11744 = vmatpush2.bf16.msra.mxu0 %v7804
        %11745 = vmatprep.subr.bf16.mxu0 %v7801
        %11746 = vmatpush2.bf16.msra.mxu0 %v7800
        %11747 = vmatprep.mubr.bf16.mxu0 %v573
        %11748 = vmatmul.mubr.bf16.gmra.mxu0 %v572
        %v11749 = vpop.f32.mrf.mxu0
        %v11750 = vadd.f32 %v11709, %v11749
        %v11751 = vpop.f32.mrf.mxu0
        %v11752 = vadd.f32 %v11711, %v11751
        %v11753 = vpop.f32.mrf.mxu0
        %v11754 = vpop.f32.mrf.mxu0
        %11755 = vdwg.mxu0
        %11756 = vmatprep.subr.bf16.mxu0 %v7861
        %11757 = vmatpush1.bf16.msra.mxu0 %v7860
        %11758 = vmatprep.subr.bf16.mxu0 %v7857
        %11759 = vmatpush1.bf16.msra.mxu0 %v7856
        %11760 = vmatprep.subr.bf16.mxu0 %v7853
        %11761 = vmatpush1.bf16.msra.mxu0 %v7852
        %11762 = vmatprep.subr.bf16.mxu0 %v7849
        %11763 = vmatpush1.bf16.msra.mxu0 %v7848
        %11764 = vmatprep.subr.bf16.mxu0 %v7845
        %11765 = vmatpush1.bf16.msra.mxu0 %v7844
        %11766 = vmatprep.subr.bf16.mxu0 %v7841
        %11767 = vmatpush1.bf16.msra.mxu0 %v7840
        %11768 = vmatprep.subr.bf16.mxu0 %v7837
        %11769 = vmatpush1.bf16.msra.mxu0 %v7836
        %11770 = vmatprep.subr.bf16.mxu0 %v7833
        %11771 = vmatpush1.bf16.msra.mxu0 %v7832
        %11772 = vmatprep.subr.bf16.mxu0 %v7893
        %11773 = vmatpush2.bf16.msra.mxu0 %v7892
        %11774 = vmatprep.subr.bf16.mxu0 %v7889
        %11775 = vmatpush2.bf16.msra.mxu0 %v7888
        %11776 = vmatprep.subr.bf16.mxu0 %v7885
        %11777 = vmatpush2.bf16.msra.mxu0 %v7884
        %11778 = vmatprep.subr.bf16.mxu0 %v7881
        %11779 = vmatpush2.bf16.msra.mxu0 %v7880
        %11780 = vmatprep.subr.bf16.mxu0 %v7877
        %11781 = vmatpush2.bf16.msra.mxu0 %v7876
        %11782 = vmatprep.subr.bf16.mxu0 %v7873
        %11783 = vmatpush2.bf16.msra.mxu0 %v7872
        %11784 = vmatprep.subr.bf16.mxu0 %v7869
        %11785 = vmatpush2.bf16.msra.mxu0 %v7868
        %11786 = vmatprep.subr.bf16.mxu0 %v7865
        %11787 = vmatpush2.bf16.msra.mxu0 %v7864
        %11788 = vmatprep.mubr.bf16.mxu0 %v575
        %11789 = vmatmul.mubr.bf16.gmra.mxu0 %v574
        %v11790 = vpop.f32.mrf.mxu0
        %v11791 = vadd.f32 %v11750, %v11790
        %v11792 = vpop.f32.mrf.mxu0
        %v11793 = vadd.f32 %v11752, %v11792
        %v11794 = vpop.f32.mrf.mxu0
        %v11795 = vpop.f32.mrf.mxu0
        %11796 = vdwg.mxu0
        %11797 = vmatprep.subr.bf16.mxu0 %v7925
        %11798 = vmatpush1.bf16.msra.mxu0 %v7924
        %11799 = vmatprep.subr.bf16.mxu0 %v7921
        %11800 = vmatpush1.bf16.msra.mxu0 %v7920
        %11801 = vmatprep.subr.bf16.mxu0 %v7917
        %11802 = vmatpush1.bf16.msra.mxu0 %v7916
        %11803 = vmatprep.subr.bf16.mxu0 %v7913
        %11804 = vmatpush1.bf16.msra.mxu0 %v7912
        %11805 = vmatprep.subr.bf16.mxu0 %v7909
        %11806 = vmatpush1.bf16.msra.mxu0 %v7908
        %11807 = vmatprep.subr.bf16.mxu0 %v7905
        %11808 = vmatpush1.bf16.msra.mxu0 %v7904
        %11809 = vmatprep.subr.bf16.mxu0 %v7901
        %11810 = vmatpush1.bf16.msra.mxu0 %v7900
        %11811 = vmatprep.subr.bf16.mxu0 %v7897
        %11812 = vmatpush1.bf16.msra.mxu0 %v7896
        %11813 = vmatprep.subr.bf16.mxu0 %v7957
        %11814 = vmatpush2.bf16.msra.mxu0 %v7956
        %11815 = vmatprep.subr.bf16.mxu0 %v7953
        %11816 = vmatpush2.bf16.msra.mxu0 %v7952
        %11817 = vmatprep.subr.bf16.mxu0 %v7949
        %11818 = vmatpush2.bf16.msra.mxu0 %v7948
        %11819 = vmatprep.subr.bf16.mxu0 %v7945
        %11820 = vmatpush2.bf16.msra.mxu0 %v7944
        %11821 = vmatprep.subr.bf16.mxu0 %v7941
        %11822 = vmatpush2.bf16.msra.mxu0 %v7940
        %11823 = vmatprep.subr.bf16.mxu0 %v7937
        %11824 = vmatpush2.bf16.msra.mxu0 %v7936
        %11825 = vmatprep.subr.bf16.mxu0 %v7933
        %11826 = vmatpush2.bf16.msra.mxu0 %v7932
        %11827 = vmatprep.subr.bf16.mxu0 %v7929
        %11828 = vmatpush2.bf16.msra.mxu0 %v7928
        %11829 = vmatprep.mubr.bf16.mxu0 %v577
        %11830 = vmatmul.mubr.bf16.gmra.mxu0 %v576
        %v11831 = vpop.f32.mrf.mxu0
        %v11832 = vadd.f32 %v11791, %v11831
        %v11833 = vpop.f32.mrf.mxu0
        %v11834 = vadd.f32 %v11793, %v11833
        %v11835 = vpop.f32.mrf.mxu0
        %v11836 = vpop.f32.mrf.mxu0
        %11837 = vdwg.mxu0
        %11838 = vmatprep.subr.bf16.mxu0 %v7989
        %11839 = vmatpush1.bf16.msra.mxu0 %v7988
        %11840 = vmatprep.subr.bf16.mxu0 %v7985
        %11841 = vmatpush1.bf16.msra.mxu0 %v7984
        %11842 = vmatprep.subr.bf16.mxu0 %v7981
        %11843 = vmatpush1.bf16.msra.mxu0 %v7980
        %11844 = vmatprep.subr.bf16.mxu0 %v7977
        %11845 = vmatpush1.bf16.msra.mxu0 %v7976
        %11846 = vmatprep.subr.bf16.mxu0 %v7973
        %11847 = vmatpush1.bf16.msra.mxu0 %v7972
        %11848 = vmatprep.subr.bf16.mxu0 %v7969
        %11849 = vmatpush1.bf16.msra.mxu0 %v7968
        %11850 = vmatprep.subr.bf16.mxu0 %v7965
        %11851 = vmatpush1.bf16.msra.mxu0 %v7964
        %11852 = vmatprep.subr.bf16.mxu0 %v7961
        %11853 = vmatpush1.bf16.msra.mxu0 %v7960
        %11854 = vmatprep.subr.bf16.mxu0 %v8021
        %11855 = vmatpush2.bf16.msra.mxu0 %v8020
        %11856 = vmatprep.subr.bf16.mxu0 %v8017
        %11857 = vmatpush2.bf16.msra.mxu0 %v8016
        %11858 = vmatprep.subr.bf16.mxu0 %v8013
        %11859 = vmatpush2.bf16.msra.mxu0 %v8012
        %11860 = vmatprep.subr.bf16.mxu0 %v8009
        %11861 = vmatpush2.bf16.msra.mxu0 %v8008
        %11862 = vmatprep.subr.bf16.mxu0 %v8005
        %11863 = vmatpush2.bf16.msra.mxu0 %v8004
        %11864 = vmatprep.subr.bf16.mxu0 %v8001
        %11865 = vmatpush2.bf16.msra.mxu0 %v8000
        %11866 = vmatprep.subr.bf16.mxu0 %v7997
        %11867 = vmatpush2.bf16.msra.mxu0 %v7996
        %11868 = vmatprep.subr.bf16.mxu0 %v7993
        %11869 = vmatpush2.bf16.msra.mxu0 %v7992
        %11870 = vmatprep.mubr.bf16.mxu0 %v579
        %11871 = vmatmul.mubr.bf16.gmra.mxu0 %v578
        %v11872 = vpop.f32.mrf.mxu0
        %v11873 = vadd.f32 %v11832, %v11872
        %v11874 = vpop.f32.mrf.mxu0
        %v11875 = vadd.f32 %v11834, %v11874
        %v11876 = vpop.f32.mrf.mxu0
        %v11877 = vpop.f32.mrf.mxu0
        %11878 = vdwg.mxu0
        %11879 = vmatprep.subr.bf16.mxu0 %v8053
        %11880 = vmatpush1.bf16.msra.mxu0 %v8052
        %11881 = vmatprep.subr.bf16.mxu0 %v8049
        %11882 = vmatpush1.bf16.msra.mxu0 %v8048
        %11883 = vmatprep.subr.bf16.mxu0 %v8045
        %11884 = vmatpush1.bf16.msra.mxu0 %v8044
        %11885 = vmatprep.subr.bf16.mxu0 %v8041
        %11886 = vmatpush1.bf16.msra.mxu0 %v8040
        %11887 = vmatprep.subr.bf16.mxu0 %v8037
        %11888 = vmatpush1.bf16.msra.mxu0 %v8036
        %11889 = vmatprep.subr.bf16.mxu0 %v8033
        %11890 = vmatpush1.bf16.msra.mxu0 %v8032
        %11891 = vmatprep.subr.bf16.mxu0 %v8029
        %11892 = vmatpush1.bf16.msra.mxu0 %v8028
        %11893 = vmatprep.subr.bf16.mxu0 %v8025
        %11894 = vmatpush1.bf16.msra.mxu0 %v8024
        %11895 = vmatprep.subr.bf16.mxu0 %v8085
        %11896 = vmatpush2.bf16.msra.mxu0 %v8084
        %11897 = vmatprep.subr.bf16.mxu0 %v8081
        %11898 = vmatpush2.bf16.msra.mxu0 %v8080
        %11899 = vmatprep.subr.bf16.mxu0 %v8077
        %11900 = vmatpush2.bf16.msra.mxu0 %v8076
        %11901 = vmatprep.subr.bf16.mxu0 %v8073
        %11902 = vmatpush2.bf16.msra.mxu0 %v8072
        %11903 = vmatprep.subr.bf16.mxu0 %v8069
        %11904 = vmatpush2.bf16.msra.mxu0 %v8068
        %11905 = vmatprep.subr.bf16.mxu0 %v8065
        %11906 = vmatpush2.bf16.msra.mxu0 %v8064
        %11907 = vmatprep.subr.bf16.mxu0 %v8061
        %11908 = vmatpush2.bf16.msra.mxu0 %v8060
        %11909 = vmatprep.subr.bf16.mxu0 %v8057
        %11910 = vmatpush2.bf16.msra.mxu0 %v8056
        %11911 = vmatprep.mubr.bf16.mxu0 %v581
        %11912 = vmatmul.mubr.bf16.gmra.mxu0 %v580
        %v11913 = vpop.f32.mrf.mxu0
        %v11914 = vadd.f32 %v11873, %v11913
        %v11915 = vpop.f32.mrf.mxu0
        %v11916 = vadd.f32 %v11875, %v11915
        %v11917 = vpop.f32.mrf.mxu0
        %v11918 = vpop.f32.mrf.mxu0
        %11919 = vdwg.mxu0
        %11920 = vmatprep.subr.bf16.mxu0 %v8117
        %11921 = vmatpush1.bf16.msra.mxu0 %v8116
        %11922 = vmatprep.subr.bf16.mxu0 %v8113
        %11923 = vmatpush1.bf16.msra.mxu0 %v8112
        %11924 = vmatprep.subr.bf16.mxu0 %v8109
        %11925 = vmatpush1.bf16.msra.mxu0 %v8108
        %11926 = vmatprep.subr.bf16.mxu0 %v8105
        %11927 = vmatpush1.bf16.msra.mxu0 %v8104
        %11928 = vmatprep.subr.bf16.mxu0 %v8101
        %11929 = vmatpush1.bf16.msra.mxu0 %v8100
        %11930 = vmatprep.subr.bf16.mxu0 %v8097
        %11931 = vmatpush1.bf16.msra.mxu0 %v8096
        %11932 = vmatprep.subr.bf16.mxu0 %v8093
        %11933 = vmatpush1.bf16.msra.mxu0 %v8092
        %11934 = vmatprep.subr.bf16.mxu0 %v8089
        %11935 = vmatpush1.bf16.msra.mxu0 %v8088
        %11936 = vmatprep.subr.bf16.mxu0 %v8149
        %11937 = vmatpush2.bf16.msra.mxu0 %v8148
        %11938 = vmatprep.subr.bf16.mxu0 %v8145
        %11939 = vmatpush2.bf16.msra.mxu0 %v8144
        %11940 = vmatprep.subr.bf16.mxu0 %v8141
        %11941 = vmatpush2.bf16.msra.mxu0 %v8140
        %11942 = vmatprep.subr.bf16.mxu0 %v8137
        %11943 = vmatpush2.bf16.msra.mxu0 %v8136
        %11944 = vmatprep.subr.bf16.mxu0 %v8133
        %11945 = vmatpush2.bf16.msra.mxu0 %v8132
        %11946 = vmatprep.subr.bf16.mxu0 %v8129
        %11947 = vmatpush2.bf16.msra.mxu0 %v8128
        %11948 = vmatprep.subr.bf16.mxu0 %v8125
        %11949 = vmatpush2.bf16.msra.mxu0 %v8124
        %11950 = vmatprep.subr.bf16.mxu0 %v8121
        %11951 = vmatpush2.bf16.msra.mxu0 %v8120
        %11952 = vmatprep.mubr.bf16.mxu0 %v583
        %11953 = vmatmul.mubr.bf16.gmra.mxu0 %v582
        %v11954 = vpop.f32.mrf.mxu0
        %v11955 = vadd.f32 %v11914, %v11954
        %v11956 = vpop.f32.mrf.mxu0
        %v11957 = vadd.f32 %v11916, %v11956
        %v11958 = vpop.f32.mrf.mxu0
        %v11959 = vpop.f32.mrf.mxu0
        %11960 = vdwg.mxu0
        %11961 = vmatprep.subr.bf16.mxu0 %v8181
        %11962 = vmatpush1.bf16.msra.mxu0 %v8180
        %11963 = vmatprep.subr.bf16.mxu0 %v8177
        %11964 = vmatpush1.bf16.msra.mxu0 %v8176
        %11965 = vmatprep.subr.bf16.mxu0 %v8173
        %11966 = vmatpush1.bf16.msra.mxu0 %v8172
        %11967 = vmatprep.subr.bf16.mxu0 %v8169
        %11968 = vmatpush1.bf16.msra.mxu0 %v8168
        %11969 = vmatprep.subr.bf16.mxu0 %v8165
        %11970 = vmatpush1.bf16.msra.mxu0 %v8164
        %11971 = vmatprep.subr.bf16.mxu0 %v8161
        %11972 = vmatpush1.bf16.msra.mxu0 %v8160
        %11973 = vmatprep.subr.bf16.mxu0 %v8157
        %11974 = vmatpush1.bf16.msra.mxu0 %v8156
        %11975 = vmatprep.subr.bf16.mxu0 %v8153
        %11976 = vmatpush1.bf16.msra.mxu0 %v8152
        %11977 = vmatprep.subr.bf16.mxu0 %v8213
        %11978 = vmatpush2.bf16.msra.mxu0 %v8212
        %11979 = vmatprep.subr.bf16.mxu0 %v8209
        %11980 = vmatpush2.bf16.msra.mxu0 %v8208
        %11981 = vmatprep.subr.bf16.mxu0 %v8205
        %11982 = vmatpush2.bf16.msra.mxu0 %v8204
        %11983 = vmatprep.subr.bf16.mxu0 %v8201
        %11984 = vmatpush2.bf16.msra.mxu0 %v8200
        %11985 = vmatprep.subr.bf16.mxu0 %v8197
        %11986 = vmatpush2.bf16.msra.mxu0 %v8196
        %11987 = vmatprep.subr.bf16.mxu0 %v8193
        %11988 = vmatpush2.bf16.msra.mxu0 %v8192
        %11989 = vmatprep.subr.bf16.mxu0 %v8189
        %11990 = vmatpush2.bf16.msra.mxu0 %v8188
        %11991 = vmatprep.subr.bf16.mxu0 %v8185
        %11992 = vmatpush2.bf16.msra.mxu0 %v8184
        %11993 = vmatprep.mubr.bf16.mxu0 %v585
        %11994 = vmatmul.mubr.bf16.gmra.mxu0 %v584
        %v11995 = vpop.f32.mrf.mxu0
        %v11996 = vadd.f32 %v11955, %v11995
        %v11997 = vpop.f32.mrf.mxu0
        %v11998 = vadd.f32 %v11957, %v11997
        %v11999 = vpop.f32.mrf.mxu0
        %v12000 = vpop.f32.mrf.mxu0
        %12001 = vdwg.mxu0
        %12002 = vmatprep.subr.bf16.mxu0 %v8245
        %12003 = vmatpush1.bf16.msra.mxu0 %v8244
        %12004 = vmatprep.subr.bf16.mxu0 %v8241
        %12005 = vmatpush1.bf16.msra.mxu0 %v8240
        %12006 = vmatprep.subr.bf16.mxu0 %v8237
        %12007 = vmatpush1.bf16.msra.mxu0 %v8236
        %12008 = vmatprep.subr.bf16.mxu0 %v8233
        %12009 = vmatpush1.bf16.msra.mxu0 %v8232
        %12010 = vmatprep.subr.bf16.mxu0 %v8229
        %12011 = vmatpush1.bf16.msra.mxu0 %v8228
        %12012 = vmatprep.subr.bf16.mxu0 %v8225
        %12013 = vmatpush1.bf16.msra.mxu0 %v8224
        %12014 = vmatprep.subr.bf16.mxu0 %v8221
        %12015 = vmatpush1.bf16.msra.mxu0 %v8220
        %12016 = vmatprep.subr.bf16.mxu0 %v8217
        %12017 = vmatpush1.bf16.msra.mxu0 %v8216
        %12018 = vmatprep.subr.bf16.mxu0 %v8277
        %12019 = vmatpush2.bf16.msra.mxu0 %v8276
        %12020 = vmatprep.subr.bf16.mxu0 %v8273
        %12021 = vmatpush2.bf16.msra.mxu0 %v8272
        %12022 = vmatprep.subr.bf16.mxu0 %v8269
        %12023 = vmatpush2.bf16.msra.mxu0 %v8268
        %12024 = vmatprep.subr.bf16.mxu0 %v8265
        %12025 = vmatpush2.bf16.msra.mxu0 %v8264
        %12026 = vmatprep.subr.bf16.mxu0 %v8261
        %12027 = vmatpush2.bf16.msra.mxu0 %v8260
        %12028 = vmatprep.subr.bf16.mxu0 %v8257
        %12029 = vmatpush2.bf16.msra.mxu0 %v8256
        %12030 = vmatprep.subr.bf16.mxu0 %v8253
        %12031 = vmatpush2.bf16.msra.mxu0 %v8252
        %12032 = vmatprep.subr.bf16.mxu0 %v8249
        %12033 = vmatpush2.bf16.msra.mxu0 %v8248
        %12034 = vmatprep.mubr.bf16.mxu0 %v587
        %12035 = vmatmul.mubr.bf16.gmra.mxu0 %v586
        %v12036 = vpop.f32.mrf.mxu0
        %v12037 = vadd.f32 %v11996, %v12036
        %v12038 = vpop.f32.mrf.mxu0
        %v12039 = vadd.f32 %v11998, %v12038
        %v12040 = vpop.f32.mrf.mxu0
        %v12041 = vpop.f32.mrf.mxu0
        %12042 = vdwg.mxu0
        %12043 = vmatprep.subr.bf16.mxu0 %v8309
        %12044 = vmatpush1.bf16.msra.mxu0 %v8308
        %12045 = vmatprep.subr.bf16.mxu0 %v8305
        %12046 = vmatpush1.bf16.msra.mxu0 %v8304
        %12047 = vmatprep.subr.bf16.mxu0 %v8301
        %12048 = vmatpush1.bf16.msra.mxu0 %v8300
        %12049 = vmatprep.subr.bf16.mxu0 %v8297
        %12050 = vmatpush1.bf16.msra.mxu0 %v8296
        %12051 = vmatprep.subr.bf16.mxu0 %v8293
        %12052 = vmatpush1.bf16.msra.mxu0 %v8292
        %12053 = vmatprep.subr.bf16.mxu0 %v8289
        %12054 = vmatpush1.bf16.msra.mxu0 %v8288
        %12055 = vmatprep.subr.bf16.mxu0 %v8285
        %12056 = vmatpush1.bf16.msra.mxu0 %v8284
        %12057 = vmatprep.subr.bf16.mxu0 %v8281
        %12058 = vmatpush1.bf16.msra.mxu0 %v8280
        %12059 = vmatprep.subr.bf16.mxu0 %v8341
        %12060 = vmatpush2.bf16.msra.mxu0 %v8340
        %12061 = vmatprep.subr.bf16.mxu0 %v8337
        %12062 = vmatpush2.bf16.msra.mxu0 %v8336
        %12063 = vmatprep.subr.bf16.mxu0 %v8333
        %12064 = vmatpush2.bf16.msra.mxu0 %v8332
        %12065 = vmatprep.subr.bf16.mxu0 %v8329
        %12066 = vmatpush2.bf16.msra.mxu0 %v8328
        %12067 = vmatprep.subr.bf16.mxu0 %v8325
        %12068 = vmatpush2.bf16.msra.mxu0 %v8324
        %12069 = vmatprep.subr.bf16.mxu0 %v8321
        %12070 = vmatpush2.bf16.msra.mxu0 %v8320
        %12071 = vmatprep.subr.bf16.mxu0 %v8317
        %12072 = vmatpush2.bf16.msra.mxu0 %v8316
        %12073 = vmatprep.subr.bf16.mxu0 %v8313
        %12074 = vmatpush2.bf16.msra.mxu0 %v8312
        %12075 = vmatprep.mubr.bf16.mxu0 %v589
        %12076 = vmatmul.mubr.bf16.gmra.mxu0 %v588
        %v12077 = vpop.f32.mrf.mxu0
        %v12078 = vadd.f32 %v12037, %v12077
        %v12079 = vpop.f32.mrf.mxu0
        %v12080 = vadd.f32 %v12039, %v12079
        %v12081 = vpop.f32.mrf.mxu0
        %v12082 = vpop.f32.mrf.mxu0
        %12083 = vdwg.mxu0
        %12084 = vmatprep.subr.bf16.mxu0 %v8373
        %12085 = vmatpush1.bf16.msra.mxu0 %v8372
        %12086 = vmatprep.subr.bf16.mxu0 %v8369
        %12087 = vmatpush1.bf16.msra.mxu0 %v8368
        %12088 = vmatprep.subr.bf16.mxu0 %v8365
        %12089 = vmatpush1.bf16.msra.mxu0 %v8364
        %12090 = vmatprep.subr.bf16.mxu0 %v8361
        %12091 = vmatpush1.bf16.msra.mxu0 %v8360
        %12092 = vmatprep.subr.bf16.mxu0 %v8357
        %12093 = vmatpush1.bf16.msra.mxu0 %v8356
        %12094 = vmatprep.subr.bf16.mxu0 %v8353
        %12095 = vmatpush1.bf16.msra.mxu0 %v8352
        %12096 = vmatprep.subr.bf16.mxu0 %v8349
        %12097 = vmatpush1.bf16.msra.mxu0 %v8348
        %12098 = vmatprep.subr.bf16.mxu0 %v8345
        %12099 = vmatpush1.bf16.msra.mxu0 %v8344
        %12100 = vmatprep.subr.bf16.mxu0 %v8405
        %12101 = vmatpush2.bf16.msra.mxu0 %v8404
        %12102 = vmatprep.subr.bf16.mxu0 %v8401
        %12103 = vmatpush2.bf16.msra.mxu0 %v8400
        %12104 = vmatprep.subr.bf16.mxu0 %v8397
        %12105 = vmatpush2.bf16.msra.mxu0 %v8396
        %12106 = vmatprep.subr.bf16.mxu0 %v8393
        %12107 = vmatpush2.bf16.msra.mxu0 %v8392
        %12108 = vmatprep.subr.bf16.mxu0 %v8389
        %12109 = vmatpush2.bf16.msra.mxu0 %v8388
        %12110 = vmatprep.subr.bf16.mxu0 %v8385
        %12111 = vmatpush2.bf16.msra.mxu0 %v8384
        %12112 = vmatprep.subr.bf16.mxu0 %v8381
        %12113 = vmatpush2.bf16.msra.mxu0 %v8380
        %12114 = vmatprep.subr.bf16.mxu0 %v8377
        %12115 = vmatpush2.bf16.msra.mxu0 %v8376
        %12116 = vmatprep.mubr.bf16.mxu0 %v591
        %12117 = vmatmul.mubr.bf16.gmra.mxu0 %v590
        %v12118 = vpop.f32.mrf.mxu0
        %v12119 = vadd.f32 %v12078, %v12118
        %v12120 = vpop.f32.mrf.mxu0
        %v12121 = vadd.f32 %v12080, %v12120
        %v12122 = vpop.f32.mrf.mxu0
        %v12123 = vpop.f32.mrf.mxu0
        %12124 = vdwg.mxu0
        %12125 = vmatprep.subr.bf16.mxu0 %v8437
        %12126 = vmatpush1.bf16.msra.mxu0 %v8436
        %12127 = vmatprep.subr.bf16.mxu0 %v8433
        %12128 = vmatpush1.bf16.msra.mxu0 %v8432
        %12129 = vmatprep.subr.bf16.mxu0 %v8429
        %12130 = vmatpush1.bf16.msra.mxu0 %v8428
        %12131 = vmatprep.subr.bf16.mxu0 %v8425
        %12132 = vmatpush1.bf16.msra.mxu0 %v8424
        %12133 = vmatprep.subr.bf16.mxu0 %v8421
        %12134 = vmatpush1.bf16.msra.mxu0 %v8420
        %12135 = vmatprep.subr.bf16.mxu0 %v8417
        %12136 = vmatpush1.bf16.msra.mxu0 %v8416
        %12137 = vmatprep.subr.bf16.mxu0 %v8413
        %12138 = vmatpush1.bf16.msra.mxu0 %v8412
        %12139 = vmatprep.subr.bf16.mxu0 %v8409
        %12140 = vmatpush1.bf16.msra.mxu0 %v8408
        %12141 = vmatprep.subr.bf16.mxu0 %v8469
        %12142 = vmatpush2.bf16.msra.mxu0 %v8468
        %12143 = vmatprep.subr.bf16.mxu0 %v8465
        %12144 = vmatpush2.bf16.msra.mxu0 %v8464
        %12145 = vmatprep.subr.bf16.mxu0 %v8461
        %12146 = vmatpush2.bf16.msra.mxu0 %v8460
        %12147 = vmatprep.subr.bf16.mxu0 %v8457
        %12148 = vmatpush2.bf16.msra.mxu0 %v8456
        %12149 = vmatprep.subr.bf16.mxu0 %v8453
        %12150 = vmatpush2.bf16.msra.mxu0 %v8452
        %12151 = vmatprep.subr.bf16.mxu0 %v8449
        %12152 = vmatpush2.bf16.msra.mxu0 %v8448
        %12153 = vmatprep.subr.bf16.mxu0 %v8445
        %12154 = vmatpush2.bf16.msra.mxu0 %v8444
        %12155 = vmatprep.subr.bf16.mxu0 %v8441
        %12156 = vmatpush2.bf16.msra.mxu0 %v8440
        %12157 = vmatprep.mubr.bf16.mxu0 %v593
        %12158 = vmatmul.mubr.bf16.gmra.mxu0 %v592
        %v12159 = vpop.f32.mrf.mxu0
        %v12160 = vadd.f32 %v12119, %v12159
        %v12161 = vpop.f32.mrf.mxu0
        %v12162 = vadd.f32 %v12121, %v12161
        %v12163 = vpop.f32.mrf.mxu0
        %v12164 = vpop.f32.mrf.mxu0
        %12165 = vdwg.mxu0
        %12166 = vmatprep.subr.bf16.mxu0 %v8501
        %12167 = vmatpush1.bf16.msra.mxu0 %v8500
        %12168 = vmatprep.subr.bf16.mxu0 %v8497
        %12169 = vmatpush1.bf16.msra.mxu0 %v8496
        %12170 = vmatprep.subr.bf16.mxu0 %v8493
        %12171 = vmatpush1.bf16.msra.mxu0 %v8492
        %12172 = vmatprep.subr.bf16.mxu0 %v8489
        %12173 = vmatpush1.bf16.msra.mxu0 %v8488
        %12174 = vmatprep.subr.bf16.mxu0 %v8485
        %12175 = vmatpush1.bf16.msra.mxu0 %v8484
        %12176 = vmatprep.subr.bf16.mxu0 %v8481
        %12177 = vmatpush1.bf16.msra.mxu0 %v8480
        %12178 = vmatprep.subr.bf16.mxu0 %v8477
        %12179 = vmatpush1.bf16.msra.mxu0 %v8476
        %12180 = vmatprep.subr.bf16.mxu0 %v8473
        %12181 = vmatpush1.bf16.msra.mxu0 %v8472
        %12182 = vmatprep.subr.bf16.mxu0 %v8533
        %12183 = vmatpush2.bf16.msra.mxu0 %v8532
        %12184 = vmatprep.subr.bf16.mxu0 %v8529
        %12185 = vmatpush2.bf16.msra.mxu0 %v8528
        %12186 = vmatprep.subr.bf16.mxu0 %v8525
        %12187 = vmatpush2.bf16.msra.mxu0 %v8524
        %12188 = vmatprep.subr.bf16.mxu0 %v8521
        %12189 = vmatpush2.bf16.msra.mxu0 %v8520
        %12190 = vmatprep.subr.bf16.mxu0 %v8517
        %12191 = vmatpush2.bf16.msra.mxu0 %v8516
        %12192 = vmatprep.subr.bf16.mxu0 %v8513
        %12193 = vmatpush2.bf16.msra.mxu0 %v8512
        %12194 = vmatprep.subr.bf16.mxu0 %v8509
        %12195 = vmatpush2.bf16.msra.mxu0 %v8508
        %12196 = vmatprep.subr.bf16.mxu0 %v8505
        %12197 = vmatpush2.bf16.msra.mxu0 %v8504
        %12198 = vmatprep.mubr.bf16.mxu0 %v595
        %12199 = vmatmul.mubr.bf16.gmra.mxu0 %v594
        %v12200 = vpop.f32.mrf.mxu0
        %v12201 = vadd.f32 %v12160, %v12200
        %v12202 = vpop.f32.mrf.mxu0
        %v12203 = vadd.f32 %v12162, %v12202
        %v12204 = vpop.f32.mrf.mxu0
        %v12205 = vpop.f32.mrf.mxu0
        %12206 = vdwg.mxu0
        %12207 = vmatprep.subr.bf16.mxu0 %v8565
        %12208 = vmatpush1.bf16.msra.mxu0 %v8564
        %12209 = vmatprep.subr.bf16.mxu0 %v8561
        %12210 = vmatpush1.bf16.msra.mxu0 %v8560
        %12211 = vmatprep.subr.bf16.mxu0 %v8557
        %12212 = vmatpush1.bf16.msra.mxu0 %v8556
        %12213 = vmatprep.subr.bf16.mxu0 %v8553
        %12214 = vmatpush1.bf16.msra.mxu0 %v8552
        %12215 = vmatprep.subr.bf16.mxu0 %v8549
        %12216 = vmatpush1.bf16.msra.mxu0 %v8548
        %12217 = vmatprep.subr.bf16.mxu0 %v8545
        %12218 = vmatpush1.bf16.msra.mxu0 %v8544
        %12219 = vmatprep.subr.bf16.mxu0 %v8541
        %12220 = vmatpush1.bf16.msra.mxu0 %v8540
        %12221 = vmatprep.subr.bf16.mxu0 %v8537
        %12222 = vmatpush1.bf16.msra.mxu0 %v8536
        %12223 = vmatprep.subr.bf16.mxu0 %v8597
        %12224 = vmatpush2.bf16.msra.mxu0 %v8596
        %12225 = vmatprep.subr.bf16.mxu0 %v8593
        %12226 = vmatpush2.bf16.msra.mxu0 %v8592
        %12227 = vmatprep.subr.bf16.mxu0 %v8589
        %12228 = vmatpush2.bf16.msra.mxu0 %v8588
        %12229 = vmatprep.subr.bf16.mxu0 %v8585
        %12230 = vmatpush2.bf16.msra.mxu0 %v8584
        %12231 = vmatprep.subr.bf16.mxu0 %v8581
        %12232 = vmatpush2.bf16.msra.mxu0 %v8580
        %12233 = vmatprep.subr.bf16.mxu0 %v8577
        %12234 = vmatpush2.bf16.msra.mxu0 %v8576
        %12235 = vmatprep.subr.bf16.mxu0 %v8573
        %12236 = vmatpush2.bf16.msra.mxu0 %v8572
        %12237 = vmatprep.subr.bf16.mxu0 %v8569
        %12238 = vmatpush2.bf16.msra.mxu0 %v8568
        %12239 = vmatprep.mubr.bf16.mxu0 %v597
        %12240 = vmatmul.mubr.bf16.gmra.mxu0 %v596
        %v12241 = vpop.f32.mrf.mxu0
        %v12242 = vadd.f32 %v12201, %v12241
        %v12243 = vpop.f32.mrf.mxu0
        %v12244 = vadd.f32 %v12203, %v12243
        %v12245 = vpop.f32.mrf.mxu0
        %v12246 = vpop.f32.mrf.mxu0
        %12247 = vdwg.mxu0
        %v12252 = vcombine.low %v11217, %v11219
        %v12253 = vcombine.low %v12242, %v12244
        %v12255 = vunpack.c.l.s4 1983009808
        %v12256 = vunpack.c.0.s8 %v12255
        %v12257 = vlaneseq
        %v12258 = vshrl.u32 %v12257, 7
        %v12259 = vsub.s32 %v12256, %v12258
        %v12260 = vrot.slane %v12252, %v12259
        %v12262 = vunpack.c.l.s4 1983009808
        %v12263 = vunpack.c.0.s8 %v12262
        %v12264 = vlaneseq
        %v12265 = vshrl.u32 %v12264, 7
        %v12266 = vsub.s32 %v12263, %v12265
        %v12267 = vrot.slane %v12253, %v12266
        %v12268 = vcombine.low %v12260, %v12267
        %v12270 = vadd.f32 %v259, %v12268
        %12271 = vst [vmem:[%s252] sm:$0xff] %v12270
        %p12272 = scmp.eq.s32.totalorder %s23, 1
        // Predicated region
        $region45: #{my_res50_head.1} parent=31 // pred_check
          %p12273 = pneg %p12272
        $region46: #{my_res50_head.1} parent=31 // pred_check_branch
          %12275 = sbr.rel (%p12273) target = $region48
        $region47: #{my_res50_head.1} parent=31 // pred_region
          %v12276 = vld [vmem:[%s252] sm:$0xff]
          %v12277 = vld [vmem:[#allocation4] sm:$0xf]
          %v12279 = vlaneseq
          %v12280 = vshrl.u32 %v12279, 7
          %v12281 = vsub.s32 0, %v12280
          %v12282 = vrot.slane %v12277, %v12281
          %v12283 = vlaneseq
          %v12284 = vshrl.u32 %v12283, 7
          %v12285 = vsub.s32 1, %v12284
          %v12286 = vrot.slane %v12277, %v12285
          %v12287 = vlaneseq
          %v12288 = vshrl.u32 %v12287, 7
          %v12289 = vsub.s32 2, %v12288
          %v12290 = vrot.slane %v12277, %v12289
          %v12291 = vlaneseq
          %v12292 = vshrl.u32 %v12291, 7
          %v12293 = vsub.s32 3, %v12292
          %v12294 = vrot.slane %v12277, %v12293
          %v12295 = vcombine.low %v12282, %v12286
          %v12296 = vcombine.low %v12290, %v12294
          %v12298 = vunpack.c.l.s4 1983009808
          %v12299 = vunpack.c.0.s8 %v12298
          %v12300 = vlaneseq
          %v12301 = vshrl.u32 %v12300, 7
          %v12302 = vsub.s32 %v12299, %v12301
          %v12303 = vrot.slane %v12295, %v12302
          %v12305 = vunpack.c.l.s4 1983009808
          %v12306 = vunpack.c.0.s8 %v12305
          %v12307 = vlaneseq
          %v12308 = vshrl.u32 %v12307, 7
          %v12309 = vsub.s32 %v12306, %v12308
          %v12310 = vrot.slane %v12296, %v12309
          %v12311 = vcombine.low %v12303, %v12310
          %v12313 = vadd.f32 %v12276, %v12311
          %12314 = vst [vmem:[%s252] sm:$0xff] %v12313
        $region48: #{my_res50_head.1} parent=31 // pred_fallthru
          _
        %s12315 = smul.u32 4, %s22
        %p12316 = scmp.lt.s32.totalorder %s12315, 3
        %s12317 = scalar_select %p12316, %s12315, 3
        %s12318 = smul.addr %s12317, 2
        %s12319 = scalar_lea.vmem %s3, %s12318
        // Predicated region
        $region49: #{my_res50_head.1} parent=31 // pred_check
          %p12320 = pneg %p128
        $region50: #{my_res50_head.1} parent=31 // pred_check_branch
          %12322 = sbr.rel (%p12320) target = $region52
        $region51: #{my_res50_head.1} parent=31 // pred_region
          %s12323 = smul.u32 4, %s22
        $region52: #{my_res50_head.1} parent=31 // pred_fallthru
          _
        // Predicated region
        $region53: #{my_res50_head.1} parent=31 // pred_check
          %p12324 = pneg %p128
        $region54: #{my_res50_head.1} parent=31 // pred_check_branch
          %12326 = sbr.rel (%p12324) target = $region56
        $region55: #{my_res50_head.1} parent=31 // pred_region
          %s12327 = smul.u32 4, %s22
          %p12328 = scmp.lt.s32.totalorder %s12327, 3
          %s12329 = scalar_select %p12328, %s12327, 3
          %s12330 = smul.addr %s12329, 2
          %s12331 = scalar_lea.vmem %s3, %s12330
        $region56: #{my_res50_head.1} parent=31 // pred_fallthru
          _
      $region32: #{my_res50_head.1} parent=5 // pred_fallthru
        _
      %p12332 = scmp.le.s32.totalorder 2, %s13
      // Predicated region
      $region57: #{my_res50_head.1} parent=5 // pred_check
        %p12333 = pneg %p12332
      $region58: #{my_res50_head.1} parent=5 // pred_check_branch
        %12335 = sbr.rel (%p12333) target = $region60
      $region59: #{my_res50_head.1} parent=5 // pred_region
        %s12336 = ssub.s32 %s13, 2
      $region60: #{my_res50_head.1} parent=5 // pred_fallthru
        _
    $region6: #{my_res50_head.1} parent=1 // loop_footer
      %s17 = sadd.s32 1, %s13
    $region7: #{my_res50_head.1} parent=1 // loop_footer_branch
      %12 = sbr.rel target = $region3
    $region8: #{my_res50_head.1} parent=1 // loop_exit
      _
    %12337 = vsyncpa [#allocation3], 1
    %s12338 = scalar_lea.sflag [#allocation3], 1
    %12339 = vsyncpa %s12338, 1
    %12340 = vsyncpa [#allocation5], 1

</llo_original>
